<compile_context>
chip_gen: v6e
topology: v6e:2x2x1
jax: 0.10.0
libtpu: 0.0.40
codegen_flags: <defaults>
</compile_context>

<pallas_src>
import jax
import jax.numpy as jnp
from jax import lax
from jax.experimental import pallas as pl
from jax.experimental.pallas import tpu as pltpu

TB = 128  # images per grid step == lane width on v5e/v6e/v7x


# ----------------------------- in-kernel helpers ---------------------------

def _pool_pairs_h(a, n_out):
    # a: (H, W, NB) -> (n_out, W, NB), out[i] = max(a[2i], a[2i+1])   (floor mode)
    w, nb = a.shape[1], a.shape[2]
    # leading-dim-only reshape (free) + reduction over a leading dim
    return jnp.max(a[:2 * n_out].reshape(n_out, 2, w, nb), axis=1)


def _pool_pairs_w(r, n_out):
    # r: (H, W, NB) -> (H, n_out, NB), out[:, j] = max(r[:, 2j], r[:, 2j+1])
    s = jnp.maximum(r[:, 0:2 * n_out - 1, :], r[:, 1:2 * n_out, :])   # s[:, i] = max(r[:,i], r[:,i+1])
    return jnp.concatenate([s[:, 2 * j:2 * j + 1, :] for j in range(n_out)], axis=1)


# ----------------------------- fused forward kernel ------------------------

def _lenet_kernel(x_ref, w1_ref, b1_ref, w2_ref, b2_ref,
                  fc1w_ref, fc1b_ref, fc2w_ref, fc2b_ref, fc3w_ref, fc3b_ref,
                  out_ref, pool1_s, pool2_s):
    f32 = jnp.float32

    # ---- conv1 (1->6, 3x3, valid) + ReLU + 2x2/2 max pool ------------------
    # 9 shifted taps are loop-invariant w.r.t. the output channel -> hoist.
    taps1 = [x_ref[di:di + 26, dj:dj + 26, :] for di in range(3) for dj in range(3)]

    def conv1_body(o, carry):
        acc = w1_ref[o, 0] * taps1[0]
        for k in range(1, 9):
            acc = acc + w1_ref[o, k] * taps1[k]
        a = jnp.maximum(acc + b1_ref[o], 0.0)                 # (26, 26, TB)
        r = _pool_pairs_h(a, 13)                              # (13, 26, TB)
        pool1_s[o] = _pool_pairs_w(r, 13)                     # (13, 13, TB)
        return carry

    lax.fori_loop(0, 6, conv1_body, 0)

    # ---- conv2 (6->16, 3x3, valid) + ReLU + 2x2/2 max pool -----------------
    # 54 taps (c, di, dj), hoisted out of the 16-channel loop.
    taps2 = [pool1_s[c, di:di + 11, dj:dj + 11, :]
             for c in range(6) for di in range(3) for dj in range(3)]

    def conv2_body(o, carry):
        acc = w2_ref[o, 0] * taps2[0]
        for k in range(1, 54):
            acc = acc + w2_ref[o, k] * taps2[k]
        a = jnp.maximum(acc + b2_ref[o], 0.0)                 # (11, 11, TB)
        r = _pool_pairs_h(a, 5)                               # (5, 11, TB)
        pw = _pool_pairs_w(r, 5)                              # (5, 5, TB)
        # flatten to (25, TB) in torch's (h, w) row-major order
        pool2_s[o] = jnp.concatenate([pw[h] for h in range(5)], axis=0)
        return carry

    lax.fori_loop(0, 16, conv2_body, 0)

    # ---- flatten (channel-major == torch .view(-1, 16*5*5)) ----------------
    act = jnp.concatenate([pool2_s[c] for c in range(16)], axis=0)       # (400, TB)

    # ---- fc1 -> fc2 -> fc3 -> log_softmax (batch in the MXU N dimension) ---
    h1 = jnp.dot(fc1w_ref[...], act, preferred_element_type=f32) + fc1b_ref[...]
    h1 = jnp.maximum(h1, 0.0)                                            # (120, TB)
    h2 = jnp.dot(fc2w_ref[...], h1, preferred_element_type=f32) + fc2b_ref[...]
    h2 = jnp.maximum(h2, 0.0)                                            # (84, TB)
    z = jnp.dot(fc3w_ref[...], h2, preferred_element_type=f32) + fc3b_ref[...]
    z = z - jnp.max(z, axis=0, keepdims=True)                            # (10, TB)
    out_ref[...] = z - jnp.log(jnp.sum(jnp.exp(z), axis=0, keepdims=True))


# ----------------------------- wrapper --------------------------------------

def forward(params, x):
    # x: (B, 1, 28, 28) float32 (MNIST-sized; required by the 16*5*5 flatten)
    B = x.shape[0]
    b_pad = ((B + TB - 1) // TB) * TB
    xi = x.reshape(B, 28, 28).astype(jnp.float32)
    if b_pad != B:
        xi = jnp.pad(xi, ((0, b_pad - B), (0, 0), (0, 0)))
    xt = jnp.transpose(xi, (1, 2, 0))                        # (28, 28, B_pad): batch in lanes

    w1 = params["conv1_w"].reshape(6, 9).astype(jnp.float32)      # k = di*3 + dj
    b1 = params["conv1_b"].astype(jnp.float32)
    w2 = params["conv2_w"].reshape(16, 54).astype(jnp.float32)    # k = c*9 + di*3 + dj
    b2 = params["conv2_b"].astype(jnp.float32)
    fc1w = params["fc1_w"].astype(jnp.float32)                    # (120, 400) torch layout as-is
    fc1b = params["fc1_b"].reshape(120, 1).astype(jnp.float32)
    fc2w = params["fc2_w"].astype(jnp.float32)                    # (84, 120)
    fc2b = params["fc2_b"].reshape(84, 1).astype(jnp.float32)
    fc3w = params["fc3_w"].astype(jnp.float32)                    # (10, 84)
    fc3b = params["fc3_b"].reshape(10, 1).astype(jnp.float32)

    smem = pl.BlockSpec(memory_space=pltpu.MemorySpace.SMEM)

    out = pl.pallas_call(
        _lenet_kernel,
        out_shape=jax.ShapeDtypeStruct((10, b_pad), jnp.float32),
        grid=(b_pad // TB,),
        in_specs=[
            pl.BlockSpec((28, 28, TB), lambda i: (0, 0, i)),       # x, one batch block per step
            smem,                                                  # conv1 w (6, 9)   scalars
            smem,                                                  # conv1 b (6,)
            smem,                                                  # conv2 w (16, 54)
            smem,                                                  # conv2 b (16,)
            pl.BlockSpec((120, 400), lambda i: (0, 0)),            # fc1 w
            pl.BlockSpec((120, 1), lambda i: (0, 0)),              # fc1 b
            pl.BlockSpec((84, 120), lambda i: (0, 0)),             # fc2 w
            pl.BlockSpec((84, 1), lambda i: (0, 0)),               # fc2 b
            pl.BlockSpec((10, 84), lambda i: (0, 0)),              # fc3 w
            pl.BlockSpec((10, 1), lambda i: (0, 0)),               # fc3 b
        ],
        out_specs=pl.BlockSpec((10, TB), lambda i: (0, i)),        # lane-dense output block
        scratch_shapes=[
            pltpu.VMEM((6, 13, 13, TB), jnp.float32),              # pooled conv1 activations
            pltpu.VMEM((16, 25, TB), jnp.float32),                 # pooled conv2 (flatten-ready)
        ],
        compiler_params=pltpu.CompilerParams(
            dimension_semantics=("parallel",),                     # shard batch blocks across TCs
            vmem_limit_bytes=48 * 1024 * 1024,
        ),
    )(xt, w1, b1, w2, b2, fc1w, fc1b, fc2w, fc2b, fc3w, fc3b)

    return out.T[:B]                                               # (B, 10)


# ----------------------------- params / reference / main --------------------

def init_params(key):
    ks = jax.random.split(key, 10)

    def u(k, shape, fan_in):
        bound = 1.0 / float(fan_in) ** 0.5
        return jax.random.uniform(k, shape, jnp.float32, -bound, bound)

    return dict(
        conv1_w=u(ks[0], (6, 1, 3, 3), 1 * 9),
        conv1_b=u(ks[1], (6,), 1 * 9),
        conv2_w=u(ks[2], (16, 6, 3, 3), 6 * 9),
        conv2_b=u(ks[3], (16,), 6 * 9),
        fc1_w=u(ks[4], (120, 400), 400),
        fc1_b=u(ks[5], (120,), 400),
        fc2_w=u(ks[6], (84, 120), 120),
        fc2_b=u(ks[7], (84,), 120),
        fc3_w=u(ks[8], (10, 84), 84),
        fc3_b=u(ks[9], (10,), 84),
    )


def reference_forward(params, x):
    # pure-JAX/XLA reference of the PyTorch module (correctness check only)
    y = lax.conv_general_dilated(x, params["conv1_w"], (1, 1), "VALID",
                                 dimension_numbers=("NCHW", "OIHW", "NCHW"))
    y = jax.nn.relu(y + params["conv1_b"].reshape(1, -1, 1, 1))
    y = lax.reduce_window(y, -jnp.inf, lax.max, (1, 1, 2, 2), (1, 1, 2, 2), "VALID")
    y = lax.conv_general_dilated(y, params["conv2_w"], (1, 1), "VALID",
                                 dimension_numbers=("NCHW", "OIHW", "NCHW"))
    y = jax.nn.relu(y + params["conv2_b"].reshape(1, -1, 1, 1))
    y = lax.reduce_window(y, -jnp.inf, lax.max, (1, 1, 2, 2), (1, 1, 2, 2), "VALID")
    y = y.reshape(y.shape[0], -1)
    y = jax.nn.relu(y @ params["fc1_w"].T + params["fc1_b"])
    y = jax.nn.relu(y @ params["fc2_w"].T + params["fc2_b"])
    y = y @ params["fc3_w"].T + params["fc3_b"]
    return jax.nn.log_softmax(y, axis=-1)


if __name__ == "__main__":
    key = jax.random.PRNGKey(0)
    pkey, xkey = jax.random.split(key)
    params = init_params(pkey)
    x = jax.random.normal(xkey, (2, 1, 28, 28), dtype=jnp.float32)

    out = jax.jit(forward)(params, x)
    out = jax.block_until_ready(out)

    assert out.shape == (2, 10) and out.dtype == jnp.float32
    # log_softmax rows must exponentiate to probability distributions
    row_sums = jnp.sum(jnp.exp(out), axis=1)
    assert bool(jnp.all(jnp.abs(row_sums - 1.0) < 1e-3))
    # match the pure-JAX reference of the PyTorch module
    ref = reference_forward(params, x)
    assert bool(jnp.max(jnp.abs(out - ref)) < 5e-3), float(jnp.max(jnp.abs(out - ref)))
    print("KERNEL_OK")
</pallas_src>

<mosaic_0001>
module attributes {stable_mosaic.version = 11 : i64} {
  func.func @_lenet_kernel(%arg0: i32, %arg1: memref<28x28x128xf32, #tpu.memory_space<vmem>>, %arg2: memref<6x9xf32, #tpu.memory_space<smem>>, %arg3: memref<6xf32, #tpu.memory_space<smem>>, %arg4: memref<16x54xf32, #tpu.memory_space<smem>>, %arg5: memref<16xf32, #tpu.memory_space<smem>>, %arg6: memref<120x400xf32, #tpu.memory_space<vmem>>, %arg7: memref<120x1xf32, #tpu.memory_space<vmem>>, %arg8: memref<84x120xf32, #tpu.memory_space<vmem>>, %arg9: memref<84x1xf32, #tpu.memory_space<vmem>>, %arg10: memref<10x84xf32, #tpu.memory_space<vmem>>, %arg11: memref<10x1xf32, #tpu.memory_space<vmem>>, %arg12: memref<10x128xf32, #tpu.memory_space<vmem>>, %arg13: memref<6x13x13x128xf32, #tpu.memory_space<vmem>>, %arg14: memref<16x25x128xf32, #tpu.memory_space<vmem>>) attributes {dimension_semantics = [#tpu.dimension_semantics<parallel>], iteration_bounds = array<i64: 1>, scalar_prefetch = 0 : i64, scratch_operands = 2 : i64, tpu.core_type = #tpu.core_type<tc>, window_params = [{transform_indices = @transform_0, window_bounds = array<i64: 28, 28, 128>}, {transform_indices = @transform_1, window_bounds = array<i64: 6, 9>}, {transform_indices = @transform_2, window_bounds = array<i64: 6>}, {transform_indices = @transform_3, window_bounds = array<i64: 16, 54>}, {transform_indices = @transform_4, window_bounds = array<i64: 16>}, {pipeline_mode = #tpu.pipeline_mode<synchronous>, transform_indices = @transform_5, window_bounds = array<i64: 120, 400>}, {pipeline_mode = #tpu.pipeline_mode<synchronous>, transform_indices = @transform_6, window_bounds = array<i64: 120, 1>}, {pipeline_mode = #tpu.pipeline_mode<synchronous>, transform_indices = @transform_7, window_bounds = array<i64: 84, 120>}, {pipeline_mode = #tpu.pipeline_mode<synchronous>, transform_indices = @transform_8, window_bounds = array<i64: 84, 1>}, {pipeline_mode = #tpu.pipeline_mode<synchronous>, transform_indices = @transform_9, window_bounds = array<i64: 10, 84>}, {pipeline_mode = #tpu.pipeline_mode<synchronous>, transform_indices = @transform_10, window_bounds = array<i64: 10, 1>}, {transform_indices = @transform_11, window_bounds = array<i64: 10, 128>}]} {
    %c0 = arith.constant 0 : index
    %c0_0 = arith.constant 0 : index
    %c0_1 = arith.constant 0 : index
    %0 = vector.load %arg1[%c0, %c0_0, %c0_1] : memref<28x28x128xf32, #tpu.memory_space<vmem>>, vector<26x26x128xf32>
    %c0_2 = arith.constant 0 : index
    %c1 = arith.constant 1 : index
    %c0_3 = arith.constant 0 : index
    %1 = vector.load %arg1[%c0_2, %c1, %c0_3] : memref<28x28x128xf32, #tpu.memory_space<vmem>>, vector<26x26x128xf32>
    %c0_4 = arith.constant 0 : index
    %c2 = arith.constant 2 : index
    %c0_5 = arith.constant 0 : index
    %2 = vector.load %arg1[%c0_4, %c2, %c0_5] : memref<28x28x128xf32, #tpu.memory_space<vmem>>, vector<26x26x128xf32>
    %c1_6 = arith.constant 1 : index
    %c0_7 = arith.constant 0 : index
    %c0_8 = arith.constant 0 : index
    %3 = vector.load %arg1[%c1_6, %c0_7, %c0_8] : memref<28x28x128xf32, #tpu.memory_space<vmem>>, vector<26x26x128xf32>
    %c1_9 = arith.constant 1 : index
    %c1_10 = arith.constant 1 : index
    %c0_11 = arith.constant 0 : index
    %4 = vector.load %arg1[%c1_9, %c1_10, %c0_11] : memref<28x28x128xf32, #tpu.memory_space<vmem>>, vector<26x26x128xf32>
    %c1_12 = arith.constant 1 : index
    %c2_13 = arith.constant 2 : index
    %c0_14 = arith.constant 0 : index
    %5 = vector.load %arg1[%c1_12, %c2_13, %c0_14] : memref<28x28x128xf32, #tpu.memory_space<vmem>>, vector<26x26x128xf32>
    %c2_15 = arith.constant 2 : index
    %c0_16 = arith.constant 0 : index
    %c0_17 = arith.constant 0 : index
    %6 = vector.load %arg1[%c2_15, %c0_16, %c0_17] : memref<28x28x128xf32, #tpu.memory_space<vmem>>, vector<26x26x128xf32>
    %c2_18 = arith.constant 2 : index
    %c1_19 = arith.constant 1 : index
    %c0_20 = arith.constant 0 : index
    %7 = vector.load %arg1[%c2_18, %c1_19, %c0_20] : memref<28x28x128xf32, #tpu.memory_space<vmem>>, vector<26x26x128xf32>
    %c2_21 = arith.constant 2 : index
    %c2_22 = arith.constant 2 : index
    %c0_23 = arith.constant 0 : index
    %8 = vector.load %arg1[%c2_21, %c2_22, %c0_23] : memref<28x28x128xf32, #tpu.memory_space<vmem>>, vector<26x26x128xf32>
    %c0_i32 = arith.constant 0 : i32
    %c6_i32 = arith.constant 6 : i32
    %9 = arith.addi %c0_i32, %c6_i32 : i32
    %c1_i32 = arith.constant 1 : i32
    scf.for %arg15 = %c0_i32 to %9 step %c1_i32  : i32 {
      %182 = arith.index_cast %arg15 : i32 to index
      %c0_299 = arith.constant 0 : index
      %183 = memref.load %arg2[%182, %c0_299] : memref<6x9xf32, #tpu.memory_space<smem>>
      %184 = vector.broadcast %183 : f32 to vector<26x26x128xf32>
      %185 = arith.mulf %184, %0 : vector<26x26x128xf32>
      %186 = arith.index_cast %arg15 : i32 to index
      %c1_300 = arith.constant 1 : index
      %187 = memref.load %arg2[%186, %c1_300] : memref<6x9xf32, #tpu.memory_space<smem>>
      %188 = vector.broadcast %187 : f32 to vector<26x26x128xf32>
      %189 = arith.mulf %188, %1 : vector<26x26x128xf32>
      %190 = arith.addf %185, %189 : vector<26x26x128xf32>
      %191 = arith.index_cast %arg15 : i32 to index
      %c2_301 = arith.constant 2 : index
      %192 = memref.load %arg2[%191, %c2_301] : memref<6x9xf32, #tpu.memory_space<smem>>
      %193 = vector.broadcast %192 : f32 to vector<26x26x128xf32>
      %194 = arith.mulf %193, %2 : vector<26x26x128xf32>
      %195 = arith.addf %190, %194 : vector<26x26x128xf32>
      %196 = arith.index_cast %arg15 : i32 to index
      %c3_302 = arith.constant 3 : index
      %197 = memref.load %arg2[%196, %c3_302] : memref<6x9xf32, #tpu.memory_space<smem>>
      %198 = vector.broadcast %197 : f32 to vector<26x26x128xf32>
      %199 = arith.mulf %198, %3 : vector<26x26x128xf32>
      %200 = arith.addf %195, %199 : vector<26x26x128xf32>
      %201 = arith.index_cast %arg15 : i32 to index
      %c4_303 = arith.constant 4 : index
      %202 = memref.load %arg2[%201, %c4_303] : memref<6x9xf32, #tpu.memory_space<smem>>
      %203 = vector.broadcast %202 : f32 to vector<26x26x128xf32>
      %204 = arith.mulf %203, %4 : vector<26x26x128xf32>
      %205 = arith.addf %200, %204 : vector<26x26x128xf32>
      %206 = arith.index_cast %arg15 : i32 to index
      %c5_304 = arith.constant 5 : index
      %207 = memref.load %arg2[%206, %c5_304] : memref<6x9xf32, #tpu.memory_space<smem>>
      %208 = vector.broadcast %207 : f32 to vector<26x26x128xf32>
      %209 = arith.mulf %208, %5 : vector<26x26x128xf32>
      %210 = arith.addf %205, %209 : vector<26x26x128xf32>
      %211 = arith.index_cast %arg15 : i32 to index
      %c6_305 = arith.constant 6 : index
      %212 = memref.load %arg2[%211, %c6_305] : memref<6x9xf32, #tpu.memory_space<smem>>
      %213 = vector.broadcast %212 : f32 to vector<26x26x128xf32>
      %214 = arith.mulf %213, %6 : vector<26x26x128xf32>
      %215 = arith.addf %210, %214 : vector<26x26x128xf32>
      %216 = arith.index_cast %arg15 : i32 to index
      %c7_306 = arith.constant 7 : index
      %217 = memref.load %arg2[%216, %c7_306] : memref<6x9xf32, #tpu.memory_space<smem>>
      %218 = vector.broadcast %217 : f32 to vector<26x26x128xf32>
      %219 = arith.mulf %218, %7 : vector<26x26x128xf32>
      %220 = arith.addf %215, %219 : vector<26x26x128xf32>
      %221 = arith.index_cast %arg15 : i32 to index
      %c8_307 = arith.constant 8 : index
      %222 = memref.load %arg2[%221, %c8_307] : memref<6x9xf32, #tpu.memory_space<smem>>
      %223 = vector.broadcast %222 : f32 to vector<26x26x128xf32>
      %224 = arith.mulf %223, %8 : vector<26x26x128xf32>
      %225 = arith.addf %220, %224 : vector<26x26x128xf32>
      %226 = arith.index_cast %arg15 : i32 to index
      %227 = memref.load %arg3[%226] : memref<6xf32, #tpu.memory_space<smem>>
      %228 = vector.broadcast %227 : f32 to vector<26x26x128xf32>
      %229 = arith.addf %225, %228 : vector<26x26x128xf32>
      %cst_308 = arith.constant 0.000000e+00 : f32
      %230 = vector.broadcast %cst_308 : f32 to vector<26x26x128xf32>
      %231 = arith.maximumf %229, %230 : vector<26x26x128xf32>
      %232 = vector.shape_cast %231 : vector<26x26x128xf32> to vector<13x2x26x128xf32>
      %cst_309 = arith.constant dense<0xFF800000> : vector<13x26x128xf32>
      %233 = vector.multi_reduction <maximumf>, %232, %cst_309 [1] : vector<13x2x26x128xf32> to vector<13x26x128xf32>
      %234 = vector.extract_strided_slice %233 {offsets = [0, 0, 0], sizes = [13, 25, 128], strides = [1, 1, 1]} : vector<13x26x128xf32> to vector<13x25x128xf32>
      %235 = vector.extract_strided_slice %233 {offsets = [0, 1, 0], sizes = [13, 25, 128], strides = [1, 1, 1]} : vector<13x26x128xf32> to vector<13x25x128xf32>
      %236 = arith.maximumf %234, %235 : vector<13x25x128xf32>
      %237 = vector.extract_strided_slice %236 {offsets = [0, 0, 0], sizes = [13, 1, 128], strides = [1, 1, 1]} : vector<13x25x128xf32> to vector<13x1x128xf32>
      %238 = vector.extract_strided_slice %236 {offsets = [0, 2, 0], sizes = [13, 1, 128], strides = [1, 1, 1]} : vector<13x25x128xf32> to vector<13x1x128xf32>
      %239 = vector.extract_strided_slice %236 {offsets = [0, 4, 0], sizes = [13, 1, 128], strides = [1, 1, 1]} : vector<13x25x128xf32> to vector<13x1x128xf32>
      %240 = vector.extract_strided_slice %236 {offsets = [0, 6, 0], sizes = [13, 1, 128], strides = [1, 1, 1]} : vector<13x25x128xf32> to vector<13x1x128xf32>
      %241 = vector.extract_strided_slice %236 {offsets = [0, 8, 0], sizes = [13, 1, 128], strides = [1, 1, 1]} : vector<13x25x128xf32> to vector<13x1x128xf32>
      %242 = vector.extract_strided_slice %236 {offsets = [0, 10, 0], sizes = [13, 1, 128], strides = [1, 1, 1]} : vector<13x25x128xf32> to vector<13x1x128xf32>
      %243 = vector.extract_strided_slice %236 {offsets = [0, 12, 0], sizes = [13, 1, 128], strides = [1, 1, 1]} : vector<13x25x128xf32> to vector<13x1x128xf32>
      %244 = vector.extract_strided_slice %236 {offsets = [0, 14, 0], sizes = [13, 1, 128], strides = [1, 1, 1]} : vector<13x25x128xf32> to vector<13x1x128xf32>
      %245 = vector.extract_strided_slice %236 {offsets = [0, 16, 0], sizes = [13, 1, 128], strides = [1, 1, 1]} : vector<13x25x128xf32> to vector<13x1x128xf32>
      %246 = vector.extract_strided_slice %236 {offsets = [0, 18, 0], sizes = [13, 1, 128], strides = [1, 1, 1]} : vector<13x25x128xf32> to vector<13x1x128xf32>
      %247 = vector.extract_strided_slice %236 {offsets = [0, 20, 0], sizes = [13, 1, 128], strides = [1, 1, 1]} : vector<13x25x128xf32> to vector<13x1x128xf32>
      %248 = vector.extract_strided_slice %236 {offsets = [0, 22, 0], sizes = [13, 1, 128], strides = [1, 1, 1]} : vector<13x25x128xf32> to vector<13x1x128xf32>
      %249 = vector.extract_strided_slice %236 {offsets = [0, 24, 0], sizes = [13, 1, 128], strides = [1, 1, 1]} : vector<13x25x128xf32> to vector<13x1x128xf32>
      %250 = tpu.concatenate %237, %238, %239, %240, %241, %242, %243, %244, %245, %246, %247, %248, %249 in 1 : vector<13x1x128xf32>, vector<13x1x128xf32>, vector<13x1x128xf32>, vector<13x1x128xf32>, vector<13x1x128xf32>, vector<13x1x128xf32>, vector<13x1x128xf32>, vector<13x1x128xf32>, vector<13x1x128xf32>, vector<13x1x128xf32>, vector<13x1x128xf32>, vector<13x1x128xf32>, vector<13x1x128xf32> -> vector<13x13x128xf32>
      %251 = arith.index_cast %arg15 : i32 to index
      %c0_310 = arith.constant 0 : index
      %c0_311 = arith.constant 0 : index
      %c0_312 = arith.constant 0 : index
      %252 = vector.load %arg13[%251, %c0_310, %c0_311, %c0_312] : memref<6x13x13x128xf32, #tpu.memory_space<vmem>>, vector<1x13x13x128xf32>
      %253 = vector.shape_cast %252 : vector<1x13x13x128xf32> to vector<13x13x128xf32>
      %254 = vector.shape_cast %250 : vector<13x13x128xf32> to vector<1x13x13x128xf32>
      tpu.vector_store %arg13[%251, %c0_310, %c0_311, %c0_312], %254 {strides = array<i32>} : memref<6x13x13x128xf32, #tpu.memory_space<vmem>>, vector<1x13x13x128xf32>,
    }
    %c6_i32_24 = arith.constant 6 : i32
    %c0_25 = arith.constant 0 : index
    %c0_26 = arith.constant 0 : index
    %c0_27 = arith.constant 0 : index
    %c0_28 = arith.constant 0 : index
    %10 = vector.load %arg13[%c0_25, %c0_26, %c0_27, %c0_28] : memref<6x13x13x128xf32, #tpu.memory_space<vmem>>, vector<1x11x11x128xf32>
    %11 = vector.shape_cast %10 : vector<1x11x11x128xf32> to vector<11x11x128xf32>
    %c0_29 = arith.constant 0 : index
    %c0_30 = arith.constant 0 : index
    %c1_31 = arith.constant 1 : index
    %c0_32 = arith.constant 0 : index
    %12 = vector.load %arg13[%c0_29, %c0_30, %c1_31, %c0_32] : memref<6x13x13x128xf32, #tpu.memory_space<vmem>>, vector<1x11x11x128xf32>
    %13 = vector.shape_cast %12 : vector<1x11x11x128xf32> to vector<11x11x128xf32>
    %c0_33 = arith.constant 0 : index
    %c0_34 = arith.constant 0 : index
    %c2_35 = arith.constant 2 : index
    %c0_36 = arith.constant 0 : index
    %14 = vector.load %arg13[%c0_33, %c0_34, %c2_35, %c0_36] : memref<6x13x13x128xf32, #tpu.memory_space<vmem>>, vector<1x11x11x128xf32>
    %15 = vector.shape_cast %14 : vector<1x11x11x128xf32> to vector<11x11x128xf32>
    %c0_37 = arith.constant 0 : index
    %c1_38 = arith.constant 1 : index
    %c0_39 = arith.constant 0 : index
    %c0_40 = arith.constant 0 : index
    %16 = vector.load %arg13[%c0_37, %c1_38, %c0_39, %c0_40] : memref<6x13x13x128xf32, #tpu.memory_space<vmem>>, vector<1x11x11x128xf32>
    %17 = vector.shape_cast %16 : vector<1x11x11x128xf32> to vector<11x11x128xf32>
    %c0_41 = arith.constant 0 : index
    %c1_42 = arith.constant 1 : index
    %c1_43 = arith.constant 1 : index
    %c0_44 = arith.constant 0 : index
    %18 = vector.load %arg13[%c0_41, %c1_42, %c1_43, %c0_44] : memref<6x13x13x128xf32, #tpu.memory_space<vmem>>, vector<1x11x11x128xf32>
    %19 = vector.shape_cast %18 : vector<1x11x11x128xf32> to vector<11x11x128xf32>
    %c0_45 = arith.constant 0 : index
    %c1_46 = arith.constant 1 : index
    %c2_47 = arith.constant 2 : index
    %c0_48 = arith.constant 0 : index
    %20 = vector.load %arg13[%c0_45, %c1_46, %c2_47, %c0_48] : memref<6x13x13x128xf32, #tpu.memory_space<vmem>>, vector<1x11x11x128xf32>
    %21 = vector.shape_cast %20 : vector<1x11x11x128xf32> to vector<11x11x128xf32>
    %c0_49 = arith.constant 0 : index
    %c2_50 = arith.constant 2 : index
    %c0_51 = arith.constant 0 : index
    %c0_52 = arith.constant 0 : index
    %22 = vector.load %arg13[%c0_49, %c2_50, %c0_51, %c0_52] : memref<6x13x13x128xf32, #tpu.memory_space<vmem>>, vector<1x11x11x128xf32>
    %23 = vector.shape_cast %22 : vector<1x11x11x128xf32> to vector<11x11x128xf32>
    %c0_53 = arith.constant 0 : index
    %c2_54 = arith.constant 2 : index
    %c1_55 = arith.constant 1 : index
    %c0_56 = arith.constant 0 : index
    %24 = vector.load %arg13[%c0_53, %c2_54, %c1_55, %c0_56] : memref<6x13x13x128xf32, #tpu.memory_space<vmem>>, vector<1x11x11x128xf32>
    %25 = vector.shape_cast %24 : vector<1x11x11x128xf32> to vector<11x11x128xf32>
    %c0_57 = arith.constant 0 : index
    %c2_58 = arith.constant 2 : index
    %c2_59 = arith.constant 2 : index
    %c0_60 = arith.constant 0 : index
    %26 = vector.load %arg13[%c0_57, %c2_58, %c2_59, %c0_60] : memref<6x13x13x128xf32, #tpu.memory_space<vmem>>, vector<1x11x11x128xf32>
    %27 = vector.shape_cast %26 : vector<1x11x11x128xf32> to vector<11x11x128xf32>
    %c1_61 = arith.constant 1 : index
    %c0_62 = arith.constant 0 : index
    %c0_63 = arith.constant 0 : index
    %c0_64 = arith.constant 0 : index
    %28 = vector.load %arg13[%c1_61, %c0_62, %c0_63, %c0_64] : memref<6x13x13x128xf32, #tpu.memory_space<vmem>>, vector<1x11x11x128xf32>
    %29 = vector.shape_cast %28 : vector<1x11x11x128xf32> to vector<11x11x128xf32>
    %c1_65 = arith.constant 1 : index
    %c0_66 = arith.constant 0 : index
    %c1_67 = arith.constant 1 : index
    %c0_68 = arith.constant 0 : index
    %30 = vector.load %arg13[%c1_65, %c0_66, %c1_67, %c0_68] : memref<6x13x13x128xf32, #tpu.memory_space<vmem>>, vector<1x11x11x128xf32>
    %31 = vector.shape_cast %30 : vector<1x11x11x128xf32> to vector<11x11x128xf32>
    %c1_69 = arith.constant 1 : index
    %c0_70 = arith.constant 0 : index
    %c2_71 = arith.constant 2 : index
    %c0_72 = arith.constant 0 : index
    %32 = vector.load %arg13[%c1_69, %c0_70, %c2_71, %c0_72] : memref<6x13x13x128xf32, #tpu.memory_space<vmem>>, vector<1x11x11x128xf32>
    %33 = vector.shape_cast %32 : vector<1x11x11x128xf32> to vector<11x11x128xf32>
    %c1_73 = arith.constant 1 : index
    %c1_74 = arith.constant 1 : index
    %c0_75 = arith.constant 0 : index
    %c0_76 = arith.constant 0 : index
    %34 = vector.load %arg13[%c1_73, %c1_74, %c0_75, %c0_76] : memref<6x13x13x128xf32, #tpu.memory_space<vmem>>, vector<1x11x11x128xf32>
    %35 = vector.shape_cast %34 : vector<1x11x11x128xf32> to vector<11x11x128xf32>
    %c1_77 = arith.constant 1 : index
    %c1_78 = arith.constant 1 : index
    %c1_79 = arith.constant 1 : index
    %c0_80 = arith.constant 0 : index
    %36 = vector.load %arg13[%c1_77, %c1_78, %c1_79, %c0_80] : memref<6x13x13x128xf32, #tpu.memory_space<vmem>>, vector<1x11x11x128xf32>
    %37 = vector.shape_cast %36 : vector<1x11x11x128xf32> to vector<11x11x128xf32>
    %c1_81 = arith.constant 1 : index
    %c1_82 = arith.constant 1 : index
    %c2_83 = arith.constant 2 : index
    %c0_84 = arith.constant 0 : index
    %38 = vector.load %arg13[%c1_81, %c1_82, %c2_83, %c0_84] : memref<6x13x13x128xf32, #tpu.memory_space<vmem>>, vector<1x11x11x128xf32>
    %39 = vector.shape_cast %38 : vector<1x11x11x128xf32> to vector<11x11x128xf32>
    %c1_85 = arith.constant 1 : index
    %c2_86 = arith.constant 2 : index
    %c0_87 = arith.constant 0 : index
    %c0_88 = arith.constant 0 : index
    %40 = vector.load %arg13[%c1_85, %c2_86, %c0_87, %c0_88] : memref<6x13x13x128xf32, #tpu.memory_space<vmem>>, vector<1x11x11x128xf32>
    %41 = vector.shape_cast %40 : vector<1x11x11x128xf32> to vector<11x11x128xf32>
    %c1_89 = arith.constant 1 : index
    %c2_90 = arith.constant 2 : index
    %c1_91 = arith.constant 1 : index
    %c0_92 = arith.constant 0 : index
    %42 = vector.load %arg13[%c1_89, %c2_90, %c1_91, %c0_92] : memref<6x13x13x128xf32, #tpu.memory_space<vmem>>, vector<1x11x11x128xf32>
    %43 = vector.shape_cast %42 : vector<1x11x11x128xf32> to vector<11x11x128xf32>
    %c1_93 = arith.constant 1 : index
    %c2_94 = arith.constant 2 : index
    %c2_95 = arith.constant 2 : index
    %c0_96 = arith.constant 0 : index
    %44 = vector.load %arg13[%c1_93, %c2_94, %c2_95, %c0_96] : memref<6x13x13x128xf32, #tpu.memory_space<vmem>>, vector<1x11x11x128xf32>
    %45 = vector.shape_cast %44 : vector<1x11x11x128xf32> to vector<11x11x128xf32>
    %c2_97 = arith.constant 2 : index
    %c0_98 = arith.constant 0 : index
    %c0_99 = arith.constant 0 : index
    %c0_100 = arith.constant 0 : index
    %46 = vector.load %arg13[%c2_97, %c0_98, %c0_99, %c0_100] : memref<6x13x13x128xf32, #tpu.memory_space<vmem>>, vector<1x11x11x128xf32>
    %47 = vector.shape_cast %46 : vector<1x11x11x128xf32> to vector<11x11x128xf32>
    %c2_101 = arith.constant 2 : index
    %c0_102 = arith.constant 0 : index
    %c1_103 = arith.constant 1 : index
    %c0_104 = arith.constant 0 : index
    %48 = vector.load %arg13[%c2_101, %c0_102, %c1_103, %c0_104] : memref<6x13x13x128xf32, #tpu.memory_space<vmem>>, vector<1x11x11x128xf32>
    %49 = vector.shape_cast %48 : vector<1x11x11x128xf32> to vector<11x11x128xf32>
    %c2_105 = arith.constant 2 : index
    %c0_106 = arith.constant 0 : index
    %c2_107 = arith.constant 2 : index
    %c0_108 = arith.constant 0 : index
    %50 = vector.load %arg13[%c2_105, %c0_106, %c2_107, %c0_108] : memref<6x13x13x128xf32, #tpu.memory_space<vmem>>, vector<1x11x11x128xf32>
    %51 = vector.shape_cast %50 : vector<1x11x11x128xf32> to vector<11x11x128xf32>
    %c2_109 = arith.constant 2 : index
    %c1_110 = arith.constant 1 : index
    %c0_111 = arith.constant 0 : index
    %c0_112 = arith.constant 0 : index
    %52 = vector.load %arg13[%c2_109, %c1_110, %c0_111, %c0_112] : memref<6x13x13x128xf32, #tpu.memory_space<vmem>>, vector<1x11x11x128xf32>
    %53 = vector.shape_cast %52 : vector<1x11x11x128xf32> to vector<11x11x128xf32>
    %c2_113 = arith.constant 2 : index
    %c1_114 = arith.constant 1 : index
    %c1_115 = arith.constant 1 : index
    %c0_116 = arith.constant 0 : index
    %54 = vector.load %arg13[%c2_113, %c1_114, %c1_115, %c0_116] : memref<6x13x13x128xf32, #tpu.memory_space<vmem>>, vector<1x11x11x128xf32>
    %55 = vector.shape_cast %54 : vector<1x11x11x128xf32> to vector<11x11x128xf32>
    %c2_117 = arith.constant 2 : index
    %c1_118 = arith.constant 1 : index
    %c2_119 = arith.constant 2 : index
    %c0_120 = arith.constant 0 : index
    %56 = vector.load %arg13[%c2_117, %c1_118, %c2_119, %c0_120] : memref<6x13x13x128xf32, #tpu.memory_space<vmem>>, vector<1x11x11x128xf32>
    %57 = vector.shape_cast %56 : vector<1x11x11x128xf32> to vector<11x11x128xf32>
    %c2_121 = arith.constant 2 : index
    %c2_122 = arith.constant 2 : index
    %c0_123 = arith.constant 0 : index
    %c0_124 = arith.constant 0 : index
    %58 = vector.load %arg13[%c2_121, %c2_122, %c0_123, %c0_124] : memref<6x13x13x128xf32, #tpu.memory_space<vmem>>, vector<1x11x11x128xf32>
    %59 = vector.shape_cast %58 : vector<1x11x11x128xf32> to vector<11x11x128xf32>
    %c2_125 = arith.constant 2 : index
    %c2_126 = arith.constant 2 : index
    %c1_127 = arith.constant 1 : index
    %c0_128 = arith.constant 0 : index
    %60 = vector.load %arg13[%c2_125, %c2_126, %c1_127, %c0_128] : memref<6x13x13x128xf32, #tpu.memory_space<vmem>>, vector<1x11x11x128xf32>
    %61 = vector.shape_cast %60 : vector<1x11x11x128xf32> to vector<11x11x128xf32>
    %c2_129 = arith.constant 2 : index
    %c2_130 = arith.constant 2 : index
    %c2_131 = arith.constant 2 : index
    %c0_132 = arith.constant 0 : index
    %62 = vector.load %arg13[%c2_129, %c2_130, %c2_131, %c0_132] : memref<6x13x13x128xf32, #tpu.memory_space<vmem>>, vector<1x11x11x128xf32>
    %63 = vector.shape_cast %62 : vector<1x11x11x128xf32> to vector<11x11x128xf32>
    %c3 = arith.constant 3 : index
    %c0_133 = arith.constant 0 : index
    %c0_134 = arith.constant 0 : index
    %c0_135 = arith.constant 0 : index
    %64 = vector.load %arg13[%c3, %c0_133, %c0_134, %c0_135] : memref<6x13x13x128xf32, #tpu.memory_space<vmem>>, vector<1x11x11x128xf32>
    %65 = vector.shape_cast %64 : vector<1x11x11x128xf32> to vector<11x11x128xf32>
    %c3_136 = arith.constant 3 : index
    %c0_137 = arith.constant 0 : index
    %c1_138 = arith.constant 1 : index
    %c0_139 = arith.constant 0 : index
    %66 = vector.load %arg13[%c3_136, %c0_137, %c1_138, %c0_139] : memref<6x13x13x128xf32, #tpu.memory_space<vmem>>, vector<1x11x11x128xf32>
    %67 = vector.shape_cast %66 : vector<1x11x11x128xf32> to vector<11x11x128xf32>
    %c3_140 = arith.constant 3 : index
    %c0_141 = arith.constant 0 : index
    %c2_142 = arith.constant 2 : index
    %c0_143 = arith.constant 0 : index
    %68 = vector.load %arg13[%c3_140, %c0_141, %c2_142, %c0_143] : memref<6x13x13x128xf32, #tpu.memory_space<vmem>>, vector<1x11x11x128xf32>
    %69 = vector.shape_cast %68 : vector<1x11x11x128xf32> to vector<11x11x128xf32>
    %c3_144 = arith.constant 3 : index
    %c1_145 = arith.constant 1 : index
    %c0_146 = arith.constant 0 : index
    %c0_147 = arith.constant 0 : index
    %70 = vector.load %arg13[%c3_144, %c1_145, %c0_146, %c0_147] : memref<6x13x13x128xf32, #tpu.memory_space<vmem>>, vector<1x11x11x128xf32>
    %71 = vector.shape_cast %70 : vector<1x11x11x128xf32> to vector<11x11x128xf32>
    %c3_148 = arith.constant 3 : index
    %c1_149 = arith.constant 1 : index
    %c1_150 = arith.constant 1 : index
    %c0_151 = arith.constant 0 : index
    %72 = vector.load %arg13[%c3_148, %c1_149, %c1_150, %c0_151] : memref<6x13x13x128xf32, #tpu.memory_space<vmem>>, vector<1x11x11x128xf32>
    %73 = vector.shape_cast %72 : vector<1x11x11x128xf32> to vector<11x11x128xf32>
    %c3_152 = arith.constant 3 : index
    %c1_153 = arith.constant 1 : index
    %c2_154 = arith.constant 2 : index
    %c0_155 = arith.constant 0 : index
    %74 = vector.load %arg13[%c3_152, %c1_153, %c2_154, %c0_155] : memref<6x13x13x128xf32, #tpu.memory_space<vmem>>, vector<1x11x11x128xf32>
    %75 = vector.shape_cast %74 : vector<1x11x11x128xf32> to vector<11x11x128xf32>
    %c3_156 = arith.constant 3 : index
    %c2_157 = arith.constant 2 : index
    %c0_158 = arith.constant 0 : index
    %c0_159 = arith.constant 0 : index
    %76 = vector.load %arg13[%c3_156, %c2_157, %c0_158, %c0_159] : memref<6x13x13x128xf32, #tpu.memory_space<vmem>>, vector<1x11x11x128xf32>
    %77 = vector.shape_cast %76 : vector<1x11x11x128xf32> to vector<11x11x128xf32>
    %c3_160 = arith.constant 3 : index
    %c2_161 = arith.constant 2 : index
    %c1_162 = arith.constant 1 : index
    %c0_163 = arith.constant 0 : index
    %78 = vector.load %arg13[%c3_160, %c2_161, %c1_162, %c0_163] : memref<6x13x13x128xf32, #tpu.memory_space<vmem>>, vector<1x11x11x128xf32>
    %79 = vector.shape_cast %78 : vector<1x11x11x128xf32> to vector<11x11x128xf32>
    %c3_164 = arith.constant 3 : index
    %c2_165 = arith.constant 2 : index
    %c2_166 = arith.constant 2 : index
    %c0_167 = arith.constant 0 : index
    %80 = vector.load %arg13[%c3_164, %c2_165, %c2_166, %c0_167] : memref<6x13x13x128xf32, #tpu.memory_space<vmem>>, vector<1x11x11x128xf32>
    %81 = vector.shape_cast %80 : vector<1x11x11x128xf32> to vector<11x11x128xf32>
    %c4 = arith.constant 4 : index
    %c0_168 = arith.constant 0 : index
    %c0_169 = arith.constant 0 : index
    %c0_170 = arith.constant 0 : index
    %82 = vector.load %arg13[%c4, %c0_168, %c0_169, %c0_170] : memref<6x13x13x128xf32, #tpu.memory_space<vmem>>, vector<1x11x11x128xf32>
    %83 = vector.shape_cast %82 : vector<1x11x11x128xf32> to vector<11x11x128xf32>
    %c4_171 = arith.constant 4 : index
    %c0_172 = arith.constant 0 : index
    %c1_173 = arith.constant 1 : index
    %c0_174 = arith.constant 0 : index
    %84 = vector.load %arg13[%c4_171, %c0_172, %c1_173, %c0_174] : memref<6x13x13x128xf32, #tpu.memory_space<vmem>>, vector<1x11x11x128xf32>
    %85 = vector.shape_cast %84 : vector<1x11x11x128xf32> to vector<11x11x128xf32>
    %c4_175 = arith.constant 4 : index
    %c0_176 = arith.constant 0 : index
    %c2_177 = arith.constant 2 : index
    %c0_178 = arith.constant 0 : index
    %86 = vector.load %arg13[%c4_175, %c0_176, %c2_177, %c0_178] : memref<6x13x13x128xf32, #tpu.memory_space<vmem>>, vector<1x11x11x128xf32>
    %87 = vector.shape_cast %86 : vector<1x11x11x128xf32> to vector<11x11x128xf32>
    %c4_179 = arith.constant 4 : index
    %c1_180 = arith.constant 1 : index
    %c0_181 = arith.constant 0 : index
    %c0_182 = arith.constant 0 : index
    %88 = vector.load %arg13[%c4_179, %c1_180, %c0_181, %c0_182] : memref<6x13x13x128xf32, #tpu.memory_space<vmem>>, vector<1x11x11x128xf32>
    %89 = vector.shape_cast %88 : vector<1x11x11x128xf32> to vector<11x11x128xf32>
    %c4_183 = arith.constant 4 : index
    %c1_184 = arith.constant 1 : index
    %c1_185 = arith.constant 1 : index
    %c0_186 = arith.constant 0 : index
    %90 = vector.load %arg13[%c4_183, %c1_184, %c1_185, %c0_186] : memref<6x13x13x128xf32, #tpu.memory_space<vmem>>, vector<1x11x11x128xf32>
    %91 = vector.shape_cast %90 : vector<1x11x11x128xf32> to vector<11x11x128xf32>
    %c4_187 = arith.constant 4 : index
    %c1_188 = arith.constant 1 : index
    %c2_189 = arith.constant 2 : index
    %c0_190 = arith.constant 0 : index
    %92 = vector.load %arg13[%c4_187, %c1_188, %c2_189, %c0_190] : memref<6x13x13x128xf32, #tpu.memory_space<vmem>>, vector<1x11x11x128xf32>
    %93 = vector.shape_cast %92 : vector<1x11x11x128xf32> to vector<11x11x128xf32>
    %c4_191 = arith.constant 4 : index
    %c2_192 = arith.constant 2 : index
    %c0_193 = arith.constant 0 : index
    %c0_194 = arith.constant 0 : index
    %94 = vector.load %arg13[%c4_191, %c2_192, %c0_193, %c0_194] : memref<6x13x13x128xf32, #tpu.memory_space<vmem>>, vector<1x11x11x128xf32>
    %95 = vector.shape_cast %94 : vector<1x11x11x128xf32> to vector<11x11x128xf32>
    %c4_195 = arith.constant 4 : index
    %c2_196 = arith.constant 2 : index
    %c1_197 = arith.constant 1 : index
    %c0_198 = arith.constant 0 : index
    %96 = vector.load %arg13[%c4_195, %c2_196, %c1_197, %c0_198] : memref<6x13x13x128xf32, #tpu.memory_space<vmem>>, vector<1x11x11x128xf32>
    %97 = vector.shape_cast %96 : vector<1x11x11x128xf32> to vector<11x11x128xf32>
    %c4_199 = arith.constant 4 : index
    %c2_200 = arith.constant 2 : index
    %c2_201 = arith.constant 2 : index
    %c0_202 = arith.constant 0 : index
    %98 = vector.load %arg13[%c4_199, %c2_200, %c2_201, %c0_202] : memref<6x13x13x128xf32, #tpu.memory_space<vmem>>, vector<1x11x11x128xf32>
    %99 = vector.shape_cast %98 : vector<1x11x11x128xf32> to vector<11x11x128xf32>
    %c5 = arith.constant 5 : index
    %c0_203 = arith.constant 0 : index
    %c0_204 = arith.constant 0 : index
    %c0_205 = arith.constant 0 : index
    %100 = vector.load %arg13[%c5, %c0_203, %c0_204, %c0_205] : memref<6x13x13x128xf32, #tpu.memory_space<vmem>>, vector<1x11x11x128xf32>
    %101 = vector.shape_cast %100 : vector<1x11x11x128xf32> to vector<11x11x128xf32>
    %c5_206 = arith.constant 5 : index
    %c0_207 = arith.constant 0 : index
    %c1_208 = arith.constant 1 : index
    %c0_209 = arith.constant 0 : index
    %102 = vector.load %arg13[%c5_206, %c0_207, %c1_208, %c0_209] : memref<6x13x13x128xf32, #tpu.memory_space<vmem>>, vector<1x11x11x128xf32>
    %103 = vector.shape_cast %102 : vector<1x11x11x128xf32> to vector<11x11x128xf32>
    %c5_210 = arith.constant 5 : index
    %c0_211 = arith.constant 0 : index
    %c2_212 = arith.constant 2 : index
    %c0_213 = arith.constant 0 : index
    %104 = vector.load %arg13[%c5_210, %c0_211, %c2_212, %c0_213] : memref<6x13x13x128xf32, #tpu.memory_space<vmem>>, vector<1x11x11x128xf32>
    %105 = vector.shape_cast %104 : vector<1x11x11x128xf32> to vector<11x11x128xf32>
    %c5_214 = arith.constant 5 : index
    %c1_215 = arith.constant 1 : index
    %c0_216 = arith.constant 0 : index
    %c0_217 = arith.constant 0 : index
    %106 = vector.load %arg13[%c5_214, %c1_215, %c0_216, %c0_217] : memref<6x13x13x128xf32, #tpu.memory_space<vmem>>, vector<1x11x11x128xf32>
    %107 = vector.shape_cast %106 : vector<1x11x11x128xf32> to vector<11x11x128xf32>
    %c5_218 = arith.constant 5 : index
    %c1_219 = arith.constant 1 : index
    %c1_220 = arith.constant 1 : index
    %c0_221 = arith.constant 0 : index
    %108 = vector.load %arg13[%c5_218, %c1_219, %c1_220, %c0_221] : memref<6x13x13x128xf32, #tpu.memory_space<vmem>>, vector<1x11x11x128xf32>
    %109 = vector.shape_cast %108 : vector<1x11x11x128xf32> to vector<11x11x128xf32>
    %c5_222 = arith.constant 5 : index
    %c1_223 = arith.constant 1 : index
    %c2_224 = arith.constant 2 : index
    %c0_225 = arith.constant 0 : index
    %110 = vector.load %arg13[%c5_222, %c1_223, %c2_224, %c0_225] : memref<6x13x13x128xf32, #tpu.memory_space<vmem>>, vector<1x11x11x128xf32>
    %111 = vector.shape_cast %110 : vector<1x11x11x128xf32> to vector<11x11x128xf32>
    %c5_226 = arith.constant 5 : index
    %c2_227 = arith.constant 2 : index
    %c0_228 = arith.constant 0 : index
    %c0_229 = arith.constant 0 : index
    %112 = vector.load %arg13[%c5_226, %c2_227, %c0_228, %c0_229] : memref<6x13x13x128xf32, #tpu.memory_space<vmem>>, vector<1x11x11x128xf32>
    %113 = vector.shape_cast %112 : vector<1x11x11x128xf32> to vector<11x11x128xf32>
    %c5_230 = arith.constant 5 : index
    %c2_231 = arith.constant 2 : index
    %c1_232 = arith.constant 1 : index
    %c0_233 = arith.constant 0 : index
    %114 = vector.load %arg13[%c5_230, %c2_231, %c1_232, %c0_233] : memref<6x13x13x128xf32, #tpu.memory_space<vmem>>, vector<1x11x11x128xf32>
    %115 = vector.shape_cast %114 : vector<1x11x11x128xf32> to vector<11x11x128xf32>
    %c5_234 = arith.constant 5 : index
    %c2_235 = arith.constant 2 : index
    %c2_236 = arith.constant 2 : index
    %c0_237 = arith.constant 0 : index
    %116 = vector.load %arg13[%c5_234, %c2_235, %c2_236, %c0_237] : memref<6x13x13x128xf32, #tpu.memory_space<vmem>>, vector<1x11x11x128xf32>
    %117 = vector.shape_cast %116 : vector<1x11x11x128xf32> to vector<11x11x128xf32>
    %c0_i32_238 = arith.constant 0 : i32
    %c16_i32 = arith.constant 16 : i32
    %118 = arith.addi %c0_i32_238, %c16_i32 : i32
    %c1_i32_239 = arith.constant 1 : i32
    scf.for %arg15 = %c0_i32_238 to %118 step %c1_i32_239  : i32 {
      %182 = arith.index_cast %arg15 : i32 to index
      %c0_299 = arith.constant 0 : index
      %183 = memref.load %arg4[%182, %c0_299] : memref<16x54xf32, #tpu.memory_space<smem>>
      %184 = vector.broadcast %183 : f32 to vector<11x11x128xf32>
      %185 = arith.mulf %184, %11 : vector<11x11x128xf32>
      %186 = arith.index_cast %arg15 : i32 to index
      %c1_300 = arith.constant 1 : index
      %187 = memref.load %arg4[%186, %c1_300] : memref<16x54xf32, #tpu.memory_space<smem>>
      %188 = vector.broadcast %187 : f32 to vector<11x11x128xf32>
      %189 = arith.mulf %188, %13 : vector<11x11x128xf32>
      %190 = arith.addf %185, %189 : vector<11x11x128xf32>
      %191 = arith.index_cast %arg15 : i32 to index
      %c2_301 = arith.constant 2 : index
      %192 = memref.load %arg4[%191, %c2_301] : memref<16x54xf32, #tpu.memory_space<smem>>
      %193 = vector.broadcast %192 : f32 to vector<11x11x128xf32>
      %194 = arith.mulf %193, %15 : vector<11x11x128xf32>
      %195 = arith.addf %190, %194 : vector<11x11x128xf32>
      %196 = arith.index_cast %arg15 : i32 to index
      %c3_302 = arith.constant 3 : index
      %197 = memref.load %arg4[%196, %c3_302] : memref<16x54xf32, #tpu.memory_space<smem>>
      %198 = vector.broadcast %197 : f32 to vector<11x11x128xf32>
      %199 = arith.mulf %198, %17 : vector<11x11x128xf32>
      %200 = arith.addf %195, %199 : vector<11x11x128xf32>
      %201 = arith.index_cast %arg15 : i32 to index
      %c4_303 = arith.constant 4 : index
      %202 = memref.load %arg4[%201, %c4_303] : memref<16x54xf32, #tpu.memory_space<smem>>
      %203 = vector.broadcast %202 : f32 to vector<11x11x128xf32>
      %204 = arith.mulf %203, %19 : vector<11x11x128xf32>
      %205 = arith.addf %200, %204 : vector<11x11x128xf32>
      %206 = arith.index_cast %arg15 : i32 to index
      %c5_304 = arith.constant 5 : index
      %207 = memref.load %arg4[%206, %c5_304] : memref<16x54xf32, #tpu.memory_space<smem>>
      %208 = vector.broadcast %207 : f32 to vector<11x11x128xf32>
      %209 = arith.mulf %208, %21 : vector<11x11x128xf32>
      %210 = arith.addf %205, %209 : vector<11x11x128xf32>
      %211 = arith.index_cast %arg15 : i32 to index
      %c6_305 = arith.constant 6 : index
      %212 = memref.load %arg4[%211, %c6_305] : memref<16x54xf32, #tpu.memory_space<smem>>
      %213 = vector.broadcast %212 : f32 to vector<11x11x128xf32>
      %214 = arith.mulf %213, %23 : vector<11x11x128xf32>
      %215 = arith.addf %210, %214 : vector<11x11x128xf32>
      %216 = arith.index_cast %arg15 : i32 to index
      %c7_306 = arith.constant 7 : index
      %217 = memref.load %arg4[%216, %c7_306] : memref<16x54xf32, #tpu.memory_space<smem>>
      %218 = vector.broadcast %217 : f32 to vector<11x11x128xf32>
      %219 = arith.mulf %218, %25 : vector<11x11x128xf32>
      %220 = arith.addf %215, %219 : vector<11x11x128xf32>
      %221 = arith.index_cast %arg15 : i32 to index
      %c8_307 = arith.constant 8 : index
      %222 = memref.load %arg4[%221, %c8_307] : memref<16x54xf32, #tpu.memory_space<smem>>
      %223 = vector.broadcast %222 : f32 to vector<11x11x128xf32>
      %224 = arith.mulf %223, %27 : vector<11x11x128xf32>
      %225 = arith.addf %220, %224 : vector<11x11x128xf32>
      %226 = arith.index_cast %arg15 : i32 to index
      %c9_308 = arith.constant 9 : index
      %227 = memref.load %arg4[%226, %c9_308] : memref<16x54xf32, #tpu.memory_space<smem>>
      %228 = vector.broadcast %227 : f32 to vector<11x11x128xf32>
      %229 = arith.mulf %228, %29 : vector<11x11x128xf32>
      %230 = arith.addf %225, %229 : vector<11x11x128xf32>
      %231 = arith.index_cast %arg15 : i32 to index
      %c10_309 = arith.constant 10 : index
      %232 = memref.load %arg4[%231, %c10_309] : memref<16x54xf32, #tpu.memory_space<smem>>
      %233 = vector.broadcast %232 : f32 to vector<11x11x128xf32>
      %234 = arith.mulf %233, %31 : vector<11x11x128xf32>
      %235 = arith.addf %230, %234 : vector<11x11x128xf32>
      %236 = arith.index_cast %arg15 : i32 to index
      %c11_310 = arith.constant 11 : index
      %237 = memref.load %arg4[%236, %c11_310] : memref<16x54xf32, #tpu.memory_space<smem>>
      %238 = vector.broadcast %237 : f32 to vector<11x11x128xf32>
      %239 = arith.mulf %238, %33 : vector<11x11x128xf32>
      %240 = arith.addf %235, %239 : vector<11x11x128xf32>
      %241 = arith.index_cast %arg15 : i32 to index
      %c12_311 = arith.constant 12 : index
      %242 = memref.load %arg4[%241, %c12_311] : memref<16x54xf32, #tpu.memory_space<smem>>
      %243 = vector.broadcast %242 : f32 to vector<11x11x128xf32>
      %244 = arith.mulf %243, %35 : vector<11x11x128xf32>
      %245 = arith.addf %240, %244 : vector<11x11x128xf32>
      %246 = arith.index_cast %arg15 : i32 to index
      %c13_312 = arith.constant 13 : index
      %247 = memref.load %arg4[%246, %c13_312] : memref<16x54xf32, #tpu.memory_space<smem>>
      %248 = vector.broadcast %247 : f32 to vector<11x11x128xf32>
      %249 = arith.mulf %248, %37 : vector<11x11x128xf32>
      %250 = arith.addf %245, %249 : vector<11x11x128xf32>
      %251 = arith.index_cast %arg15 : i32 to index
      %c14_313 = arith.constant 14 : index
      %252 = memref.load %arg4[%251, %c14_313] : memref<16x54xf32, #tpu.memory_space<smem>>
      %253 = vector.broadcast %252 : f32 to vector<11x11x128xf32>
      %254 = arith.mulf %253, %39 : vector<11x11x128xf32>
      %255 = arith.addf %250, %254 : vector<11x11x128xf32>
      %256 = arith.index_cast %arg15 : i32 to index
      %c15_314 = arith.constant 15 : index
      %257 = memref.load %arg4[%256, %c15_314] : memref<16x54xf32, #tpu.memory_space<smem>>
      %258 = vector.broadcast %257 : f32 to vector<11x11x128xf32>
      %259 = arith.mulf %258, %41 : vector<11x11x128xf32>
      %260 = arith.addf %255, %259 : vector<11x11x128xf32>
      %261 = arith.index_cast %arg15 : i32 to index
      %c16 = arith.constant 16 : index
      %262 = memref.load %arg4[%261, %c16] : memref<16x54xf32, #tpu.memory_space<smem>>
      %263 = vector.broadcast %262 : f32 to vector<11x11x128xf32>
      %264 = arith.mulf %263, %43 : vector<11x11x128xf32>
      %265 = arith.addf %260, %264 : vector<11x11x128xf32>
      %266 = arith.index_cast %arg15 : i32 to index
      %c17 = arith.constant 17 : index
      %267 = memref.load %arg4[%266, %c17] : memref<16x54xf32, #tpu.memory_space<smem>>
      %268 = vector.broadcast %267 : f32 to vector<11x11x128xf32>
      %269 = arith.mulf %268, %45 : vector<11x11x128xf32>
      %270 = arith.addf %265, %269 : vector<11x11x128xf32>
      %271 = arith.index_cast %arg15 : i32 to index
      %c18 = arith.constant 18 : index
      %272 = memref.load %arg4[%271, %c18] : memref<16x54xf32, #tpu.memory_space<smem>>
      %273 = vector.broadcast %272 : f32 to vector<11x11x128xf32>
      %274 = arith.mulf %273, %47 : vector<11x11x128xf32>
      %275 = arith.addf %270, %274 : vector<11x11x128xf32>
      %276 = arith.index_cast %arg15 : i32 to index
      %c19 = arith.constant 19 : index
      %277 = memref.load %arg4[%276, %c19] : memref<16x54xf32, #tpu.memory_space<smem>>
      %278 = vector.broadcast %277 : f32 to vector<11x11x128xf32>
      %279 = arith.mulf %278, %49 : vector<11x11x128xf32>
      %280 = arith.addf %275, %279 : vector<11x11x128xf32>
      %281 = arith.index_cast %arg15 : i32 to index
      %c20 = arith.constant 20 : index
      %282 = memref.load %arg4[%281, %c20] : memref<16x54xf32, #tpu.memory_space<smem>>
      %283 = vector.broadcast %282 : f32 to vector<11x11x128xf32>
      %284 = arith.mulf %283, %51 : vector<11x11x128xf32>
      %285 = arith.addf %280, %284 : vector<11x11x128xf32>
      %286 = arith.index_cast %arg15 : i32 to index
      %c21 = arith.constant 21 : index
      %287 = memref.load %arg4[%286, %c21] : memref<16x54xf32, #tpu.memory_space<smem>>
      %288 = vector.broadcast %287 : f32 to vector<11x11x128xf32>
      %289 = arith.mulf %288, %53 : vector<11x11x128xf32>
      %290 = arith.addf %285, %289 : vector<11x11x128xf32>
      %291 = arith.index_cast %arg15 : i32 to index
      %c22 = arith.constant 22 : index
      %292 = memref.load %arg4[%291, %c22] : memref<16x54xf32, #tpu.memory_space<smem>>
      %293 = vector.broadcast %292 : f32 to vector<11x11x128xf32>
      %294 = arith.mulf %293, %55 : vector<11x11x128xf32>
      %295 = arith.addf %290, %294 : vector<11x11x128xf32>
      %296 = arith.index_cast %arg15 : i32 to index
      %c23 = arith.constant 23 : index
      %297 = memref.load %arg4[%296, %c23] : memref<16x54xf32, #tpu.memory_space<smem>>
      %298 = vector.broadcast %297 : f32 to vector<11x11x128xf32>
      %299 = arith.mulf %298, %57 : vector<11x11x128xf32>
      %300 = arith.addf %295, %299 : vector<11x11x128xf32>
      %301 = arith.index_cast %arg15 : i32 to index
      %c24 = arith.constant 24 : index
      %302 = memref.load %arg4[%301, %c24] : memref<16x54xf32, #tpu.memory_space<smem>>
      %303 = vector.broadcast %302 : f32 to vector<11x11x128xf32>
      %304 = arith.mulf %303, %59 : vector<11x11x128xf32>
      %305 = arith.addf %300, %304 : vector<11x11x128xf32>
      %306 = arith.index_cast %arg15 : i32 to index
      %c25 = arith.constant 25 : index
      %307 = memref.load %arg4[%306, %c25] : memref<16x54xf32, #tpu.memory_space<smem>>
      %308 = vector.broadcast %307 : f32 to vector<11x11x128xf32>
      %309 = arith.mulf %308, %61 : vector<11x11x128xf32>
      %310 = arith.addf %305, %309 : vector<11x11x128xf32>
      %311 = arith.index_cast %arg15 : i32 to index
      %c26 = arith.constant 26 : index
      %312 = memref.load %arg4[%311, %c26] : memref<16x54xf32, #tpu.memory_space<smem>>
      %313 = vector.broadcast %312 : f32 to vector<11x11x128xf32>
      %314 = arith.mulf %313, %63 : vector<11x11x128xf32>
      %315 = arith.addf %310, %314 : vector<11x11x128xf32>
      %316 = arith.index_cast %arg15 : i32 to index
      %c27 = arith.constant 27 : index
      %317 = memref.load %arg4[%316, %c27] : memref<16x54xf32, #tpu.memory_space<smem>>
      %318 = vector.broadcast %317 : f32 to vector<11x11x128xf32>
      %319 = arith.mulf %318, %65 : vector<11x11x128xf32>
      %320 = arith.addf %315, %319 : vector<11x11x128xf32>
      %321 = arith.index_cast %arg15 : i32 to index
      %c28 = arith.constant 28 : index
      %322 = memref.load %arg4[%321, %c28] : memref<16x54xf32, #tpu.memory_space<smem>>
      %323 = vector.broadcast %322 : f32 to vector<11x11x128xf32>
      %324 = arith.mulf %323, %67 : vector<11x11x128xf32>
      %325 = arith.addf %320, %324 : vector<11x11x128xf32>
      %326 = arith.index_cast %arg15 : i32 to index
      %c29 = arith.constant 29 : index
      %327 = memref.load %arg4[%326, %c29] : memref<16x54xf32, #tpu.memory_space<smem>>
      %328 = vector.broadcast %327 : f32 to vector<11x11x128xf32>
      %329 = arith.mulf %328, %69 : vector<11x11x128xf32>
      %330 = arith.addf %325, %329 : vector<11x11x128xf32>
      %331 = arith.index_cast %arg15 : i32 to index
      %c30 = arith.constant 30 : index
      %332 = memref.load %arg4[%331, %c30] : memref<16x54xf32, #tpu.memory_space<smem>>
      %333 = vector.broadcast %332 : f32 to vector<11x11x128xf32>
      %334 = arith.mulf %333, %71 : vector<11x11x128xf32>
      %335 = arith.addf %330, %334 : vector<11x11x128xf32>
      %336 = arith.index_cast %arg15 : i32 to index
      %c31 = arith.constant 31 : index
      %337 = memref.load %arg4[%336, %c31] : memref<16x54xf32, #tpu.memory_space<smem>>
      %338 = vector.broadcast %337 : f32 to vector<11x11x128xf32>
      %339 = arith.mulf %338, %73 : vector<11x11x128xf32>
      %340 = arith.addf %335, %339 : vector<11x11x128xf32>
      %341 = arith.index_cast %arg15 : i32 to index
      %c32 = arith.constant 32 : index
      %342 = memref.load %arg4[%341, %c32] : memref<16x54xf32, #tpu.memory_space<smem>>
      %343 = vector.broadcast %342 : f32 to vector<11x11x128xf32>
      %344 = arith.mulf %343, %75 : vector<11x11x128xf32>
      %345 = arith.addf %340, %344 : vector<11x11x128xf32>
      %346 = arith.index_cast %arg15 : i32 to index
      %c33 = arith.constant 33 : index
      %347 = memref.load %arg4[%346, %c33] : memref<16x54xf32, #tpu.memory_space<smem>>
      %348 = vector.broadcast %347 : f32 to vector<11x11x128xf32>
      %349 = arith.mulf %348, %77 : vector<11x11x128xf32>
      %350 = arith.addf %345, %349 : vector<11x11x128xf32>
      %351 = arith.index_cast %arg15 : i32 to index
      %c34 = arith.constant 34 : index
      %352 = memref.load %arg4[%351, %c34] : memref<16x54xf32, #tpu.memory_space<smem>>
      %353 = vector.broadcast %352 : f32 to vector<11x11x128xf32>
      %354 = arith.mulf %353, %79 : vector<11x11x128xf32>
      %355 = arith.addf %350, %354 : vector<11x11x128xf32>
      %356 = arith.index_cast %arg15 : i32 to index
      %c35 = arith.constant 35 : index
      %357 = memref.load %arg4[%356, %c35] : memref<16x54xf32, #tpu.memory_space<smem>>
      %358 = vector.broadcast %357 : f32 to vector<11x11x128xf32>
      %359 = arith.mulf %358, %81 : vector<11x11x128xf32>
      %360 = arith.addf %355, %359 : vector<11x11x128xf32>
      %361 = arith.index_cast %arg15 : i32 to index
      %c36 = arith.constant 36 : index
      %362 = memref.load %arg4[%361, %c36] : memref<16x54xf32, #tpu.memory_space<smem>>
      %363 = vector.broadcast %362 : f32 to vector<11x11x128xf32>
      %364 = arith.mulf %363, %83 : vector<11x11x128xf32>
      %365 = arith.addf %360, %364 : vector<11x11x128xf32>
      %366 = arith.index_cast %arg15 : i32 to index
      %c37 = arith.constant 37 : index
      %367 = memref.load %arg4[%366, %c37] : memref<16x54xf32, #tpu.memory_space<smem>>
      %368 = vector.broadcast %367 : f32 to vector<11x11x128xf32>
      %369 = arith.mulf %368, %85 : vector<11x11x128xf32>
      %370 = arith.addf %365, %369 : vector<11x11x128xf32>
      %371 = arith.index_cast %arg15 : i32 to index
      %c38 = arith.constant 38 : index
      %372 = memref.load %arg4[%371, %c38] : memref<16x54xf32, #tpu.memory_space<smem>>
      %373 = vector.broadcast %372 : f32 to vector<11x11x128xf32>
      %374 = arith.mulf %373, %87 : vector<11x11x128xf32>
      %375 = arith.addf %370, %374 : vector<11x11x128xf32>
      %376 = arith.index_cast %arg15 : i32 to index
      %c39 = arith.constant 39 : index
      %377 = memref.load %arg4[%376, %c39] : memref<16x54xf32, #tpu.memory_space<smem>>
      %378 = vector.broadcast %377 : f32 to vector<11x11x128xf32>
      %379 = arith.mulf %378, %89 : vector<11x11x128xf32>
      %380 = arith.addf %375, %379 : vector<11x11x128xf32>
      %381 = arith.index_cast %arg15 : i32 to index
      %c40 = arith.constant 40 : index
      %382 = memref.load %arg4[%381, %c40] : memref<16x54xf32, #tpu.memory_space<smem>>
      %383 = vector.broadcast %382 : f32 to vector<11x11x128xf32>
      %384 = arith.mulf %383, %91 : vector<11x11x128xf32>
      %385 = arith.addf %380, %384 : vector<11x11x128xf32>
      %386 = arith.index_cast %arg15 : i32 to index
      %c41 = arith.constant 41 : index
      %387 = memref.load %arg4[%386, %c41] : memref<16x54xf32, #tpu.memory_space<smem>>
      %388 = vector.broadcast %387 : f32 to vector<11x11x128xf32>
      %389 = arith.mulf %388, %93 : vector<11x11x128xf32>
      %390 = arith.addf %385, %389 : vector<11x11x128xf32>
      %391 = arith.index_cast %arg15 : i32 to index
      %c42 = arith.constant 42 : index
      %392 = memref.load %arg4[%391, %c42] : memref<16x54xf32, #tpu.memory_space<smem>>
      %393 = vector.broadcast %392 : f32 to vector<11x11x128xf32>
      %394 = arith.mulf %393, %95 : vector<11x11x128xf32>
      %395 = arith.addf %390, %394 : vector<11x11x128xf32>
      %396 = arith.index_cast %arg15 : i32 to index
      %c43 = arith.constant 43 : index
      %397 = memref.load %arg4[%396, %c43] : memref<16x54xf32, #tpu.memory_space<smem>>
      %398 = vector.broadcast %397 : f32 to vector<11x11x128xf32>
      %399 = arith.mulf %398, %97 : vector<11x11x128xf32>
      %400 = arith.addf %395, %399 : vector<11x11x128xf32>
      %401 = arith.index_cast %arg15 : i32 to index
      %c44 = arith.constant 44 : index
      %402 = memref.load %arg4[%401, %c44] : memref<16x54xf32, #tpu.memory_space<smem>>
      %403 = vector.broadcast %402 : f32 to vector<11x11x128xf32>
      %404 = arith.mulf %403, %99 : vector<11x11x128xf32>
      %405 = arith.addf %400, %404 : vector<11x11x128xf32>
      %406 = arith.index_cast %arg15 : i32 to index
      %c45 = arith.constant 45 : index
      %407 = memref.load %arg4[%406, %c45] : memref<16x54xf32, #tpu.memory_space<smem>>
      %408 = vector.broadcast %407 : f32 to vector<11x11x128xf32>
      %409 = arith.mulf %408, %101 : vector<11x11x128xf32>
      %410 = arith.addf %405, %409 : vector<11x11x128xf32>
      %411 = arith.index_cast %arg15 : i32 to index
      %c46 = arith.constant 46 : index
      %412 = memref.load %arg4[%411, %c46] : memref<16x54xf32, #tpu.memory_space<smem>>
      %413 = vector.broadcast %412 : f32 to vector<11x11x128xf32>
      %414 = arith.mulf %413, %103 : vector<11x11x128xf32>
      %415 = arith.addf %410, %414 : vector<11x11x128xf32>
      %416 = arith.index_cast %arg15 : i32 to index
      %c47 = arith.constant 47 : index
      %417 = memref.load %arg4[%416, %c47] : memref<16x54xf32, #tpu.memory_space<smem>>
      %418 = vector.broadcast %417 : f32 to vector<11x11x128xf32>
      %419 = arith.mulf %418, %105 : vector<11x11x128xf32>
      %420 = arith.addf %415, %419 : vector<11x11x128xf32>
      %421 = arith.index_cast %arg15 : i32 to index
      %c48 = arith.constant 48 : index
      %422 = memref.load %arg4[%421, %c48] : memref<16x54xf32, #tpu.memory_space<smem>>
      %423 = vector.broadcast %422 : f32 to vector<11x11x128xf32>
      %424 = arith.mulf %423, %107 : vector<11x11x128xf32>
      %425 = arith.addf %420, %424 : vector<11x11x128xf32>
      %426 = arith.index_cast %arg15 : i32 to index
      %c49 = arith.constant 49 : index
      %427 = memref.load %arg4[%426, %c49] : memref<16x54xf32, #tpu.memory_space<smem>>
      %428 = vector.broadcast %427 : f32 to vector<11x11x128xf32>
      %429 = arith.mulf %428, %109 : vector<11x11x128xf32>
      %430 = arith.addf %425, %429 : vector<11x11x128xf32>
      %431 = arith.index_cast %arg15 : i32 to index
      %c50 = arith.constant 50 : index
      %432 = memref.load %arg4[%431, %c50] : memref<16x54xf32, #tpu.memory_space<smem>>
      %433 = vector.broadcast %432 : f32 to vector<11x11x128xf32>
      %434 = arith.mulf %433, %111 : vector<11x11x128xf32>
      %435 = arith.addf %430, %434 : vector<11x11x128xf32>
      %436 = arith.index_cast %arg15 : i32 to index
      %c51 = arith.constant 51 : index
      %437 = memref.load %arg4[%436, %c51] : memref<16x54xf32, #tpu.memory_space<smem>>
      %438 = vector.broadcast %437 : f32 to vector<11x11x128xf32>
      %439 = arith.mulf %438, %113 : vector<11x11x128xf32>
      %440 = arith.addf %435, %439 : vector<11x11x128xf32>
      %441 = arith.index_cast %arg15 : i32 to index
      %c52 = arith.constant 52 : index
      %442 = memref.load %arg4[%441, %c52] : memref<16x54xf32, #tpu.memory_space<smem>>
      %443 = vector.broadcast %442 : f32 to vector<11x11x128xf32>
      %444 = arith.mulf %443, %115 : vector<11x11x128xf32>
      %445 = arith.addf %440, %444 : vector<11x11x128xf32>
      %446 = arith.index_cast %arg15 : i32 to index
      %c53 = arith.constant 53 : index
      %447 = memref.load %arg4[%446, %c53] : memref<16x54xf32, #tpu.memory_space<smem>>
      %448 = vector.broadcast %447 : f32 to vector<11x11x128xf32>
      %449 = arith.mulf %448, %117 : vector<11x11x128xf32>
      %450 = arith.addf %445, %449 : vector<11x11x128xf32>
      %451 = arith.index_cast %arg15 : i32 to index
      %452 = memref.load %arg5[%451] : memref<16xf32, #tpu.memory_space<smem>>
      %453 = vector.broadcast %452 : f32 to vector<11x11x128xf32>
      %454 = arith.addf %450, %453 : vector<11x11x128xf32>
      %cst_315 = arith.constant 0.000000e+00 : f32
      %455 = vector.broadcast %cst_315 : f32 to vector<11x11x128xf32>
      %456 = arith.maximumf %454, %455 : vector<11x11x128xf32>
      %457 = vector.extract_strided_slice %456 {offsets = [0, 0, 0], sizes = [10, 11, 128], strides = [1, 1, 1]} : vector<11x11x128xf32> to vector<10x11x128xf32>
      %458 = vector.shape_cast %457 : vector<10x11x128xf32> to vector<5x2x11x128xf32>
      %cst_316 = arith.constant dense<0xFF800000> : vector<5x11x128xf32>
      %459 = vector.multi_reduction <maximumf>, %458, %cst_316 [1] : vector<5x2x11x128xf32> to vector<5x11x128xf32>
      %460 = vector.extract_strided_slice %459 {offsets = [0, 0, 0], sizes = [5, 9, 128], strides = [1, 1, 1]} : vector<5x11x128xf32> to vector<5x9x128xf32>
      %461 = vector.extract_strided_slice %459 {offsets = [0, 1, 0], sizes = [5, 9, 128], strides = [1, 1, 1]} : vector<5x11x128xf32> to vector<5x9x128xf32>
      %462 = arith.maximumf %460, %461 : vector<5x9x128xf32>
      %463 = vector.extract_strided_slice %462 {offsets = [0, 0, 0], sizes = [5, 1, 128], strides = [1, 1, 1]} : vector<5x9x128xf32> to vector<5x1x128xf32>
      %464 = vector.extract_strided_slice %462 {offsets = [0, 2, 0], sizes = [5, 1, 128], strides = [1, 1, 1]} : vector<5x9x128xf32> to vector<5x1x128xf32>
      %465 = vector.extract_strided_slice %462 {offsets = [0, 4, 0], sizes = [5, 1, 128], strides = [1, 1, 1]} : vector<5x9x128xf32> to vector<5x1x128xf32>
      %466 = vector.extract_strided_slice %462 {offsets = [0, 6, 0], sizes = [5, 1, 128], strides = [1, 1, 1]} : vector<5x9x128xf32> to vector<5x1x128xf32>
      %467 = vector.extract_strided_slice %462 {offsets = [0, 8, 0], sizes = [5, 1, 128], strides = [1, 1, 1]} : vector<5x9x128xf32> to vector<5x1x128xf32>
      %468 = tpu.concatenate %463, %464, %465, %466, %467 in 1 : vector<5x1x128xf32>, vector<5x1x128xf32>, vector<5x1x128xf32>, vector<5x1x128xf32>, vector<5x1x128xf32> -> vector<5x5x128xf32>
      %469 = vector.extract_strided_slice %468 {offsets = [0, 0, 0], sizes = [1, 5, 128], strides = [1, 1, 1]} : vector<5x5x128xf32> to vector<1x5x128xf32>
      %470 = vector.shape_cast %469 : vector<1x5x128xf32> to vector<5x128xf32>
      %471 = vector.extract_strided_slice %468 {offsets = [1, 0, 0], sizes = [1, 5, 128], strides = [1, 1, 1]} : vector<5x5x128xf32> to vector<1x5x128xf32>
      %472 = vector.shape_cast %471 : vector<1x5x128xf32> to vector<5x128xf32>
      %473 = vector.extract_strided_slice %468 {offsets = [2, 0, 0], sizes = [1, 5, 128], strides = [1, 1, 1]} : vector<5x5x128xf32> to vector<1x5x128xf32>
      %474 = vector.shape_cast %473 : vector<1x5x128xf32> to vector<5x128xf32>
      %475 = vector.extract_strided_slice %468 {offsets = [3, 0, 0], sizes = [1, 5, 128], strides = [1, 1, 1]} : vector<5x5x128xf32> to vector<1x5x128xf32>
      %476 = vector.shape_cast %475 : vector<1x5x128xf32> to vector<5x128xf32>
      %477 = vector.extract_strided_slice %468 {offsets = [4, 0, 0], sizes = [1, 5, 128], strides = [1, 1, 1]} : vector<5x5x128xf32> to vector<1x5x128xf32>
      %478 = vector.shape_cast %477 : vector<1x5x128xf32> to vector<5x128xf32>
      %479 = tpu.concatenate %470, %472, %474, %476, %478 in 0 : vector<5x128xf32>, vector<5x128xf32>, vector<5x128xf32>, vector<5x128xf32>, vector<5x128xf32> -> vector<25x128xf32>
      %480 = arith.index_cast %arg15 : i32 to index
      %c0_317 = arith.constant 0 : index
      %c0_318 = arith.constant 0 : index
      %481 = vector.load %arg14[%480, %c0_317, %c0_318] : memref<16x25x128xf32, #tpu.memory_space<vmem>>, vector<1x25x128xf32>
      %482 = vector.shape_cast %481 : vector<1x25x128xf32> to vector<25x128xf32>
      %483 = vector.shape_cast %479 : vector<25x128xf32> to vector<1x25x128xf32>
      tpu.vector_store %arg14[%480, %c0_317, %c0_318], %483 {strides = array<i32>} : memref<16x25x128xf32, #tpu.memory_space<vmem>>, vector<1x25x128xf32>,
    }
    %c16_i32_240 = arith.constant 16 : i32
    %c0_241 = arith.constant 0 : index
    %c0_242 = arith.constant 0 : index
    %c0_243 = arith.constant 0 : index
    %119 = vector.load %arg14[%c0_241, %c0_242, %c0_243] : memref<16x25x128xf32, #tpu.memory_space<vmem>>, vector<1x25x128xf32>
    %120 = vector.shape_cast %119 : vector<1x25x128xf32> to vector<25x128xf32>
    %c1_244 = arith.constant 1 : index
    %c0_245 = arith.constant 0 : index
    %c0_246 = arith.constant 0 : index
    %121 = vector.load %arg14[%c1_244, %c0_245, %c0_246] : memref<16x25x128xf32, #tpu.memory_space<vmem>>, vector<1x25x128xf32>
    %122 = vector.shape_cast %121 : vector<1x25x128xf32> to vector<25x128xf32>
    %c2_247 = arith.constant 2 : index
    %c0_248 = arith.constant 0 : index
    %c0_249 = arith.constant 0 : index
    %123 = vector.load %arg14[%c2_247, %c0_248, %c0_249] : memref<16x25x128xf32, #tpu.memory_space<vmem>>, vector<1x25x128xf32>
    %124 = vector.shape_cast %123 : vector<1x25x128xf32> to vector<25x128xf32>
    %c3_250 = arith.constant 3 : index
    %c0_251 = arith.constant 0 : index
    %c0_252 = arith.constant 0 : index
    %125 = vector.load %arg14[%c3_250, %c0_251, %c0_252] : memref<16x25x128xf32, #tpu.memory_space<vmem>>, vector<1x25x128xf32>
    %126 = vector.shape_cast %125 : vector<1x25x128xf32> to vector<25x128xf32>
    %c4_253 = arith.constant 4 : index
    %c0_254 = arith.constant 0 : index
    %c0_255 = arith.constant 0 : index
    %127 = vector.load %arg14[%c4_253, %c0_254, %c0_255] : memref<16x25x128xf32, #tpu.memory_space<vmem>>, vector<1x25x128xf32>
    %128 = vector.shape_cast %127 : vector<1x25x128xf32> to vector<25x128xf32>
    %c5_256 = arith.constant 5 : index
    %c0_257 = arith.constant 0 : index
    %c0_258 = arith.constant 0 : index
    %129 = vector.load %arg14[%c5_256, %c0_257, %c0_258] : memref<16x25x128xf32, #tpu.memory_space<vmem>>, vector<1x25x128xf32>
    %130 = vector.shape_cast %129 : vector<1x25x128xf32> to vector<25x128xf32>
    %c6 = arith.constant 6 : index
    %c0_259 = arith.constant 0 : index
    %c0_260 = arith.constant 0 : index
    %131 = vector.load %arg14[%c6, %c0_259, %c0_260] : memref<16x25x128xf32, #tpu.memory_space<vmem>>, vector<1x25x128xf32>
    %132 = vector.shape_cast %131 : vector<1x25x128xf32> to vector<25x128xf32>
    %c7 = arith.constant 7 : index
    %c0_261 = arith.constant 0 : index
    %c0_262 = arith.constant 0 : index
    %133 = vector.load %arg14[%c7, %c0_261, %c0_262] : memref<16x25x128xf32, #tpu.memory_space<vmem>>, vector<1x25x128xf32>
    %134 = vector.shape_cast %133 : vector<1x25x128xf32> to vector<25x128xf32>
    %c8 = arith.constant 8 : index
    %c0_263 = arith.constant 0 : index
    %c0_264 = arith.constant 0 : index
    %135 = vector.load %arg14[%c8, %c0_263, %c0_264] : memref<16x25x128xf32, #tpu.memory_space<vmem>>, vector<1x25x128xf32>
    %136 = vector.shape_cast %135 : vector<1x25x128xf32> to vector<25x128xf32>
    %c9 = arith.constant 9 : index
    %c0_265 = arith.constant 0 : index
    %c0_266 = arith.constant 0 : index
    %137 = vector.load %arg14[%c9, %c0_265, %c0_266] : memref<16x25x128xf32, #tpu.memory_space<vmem>>, vector<1x25x128xf32>
    %138 = vector.shape_cast %137 : vector<1x25x128xf32> to vector<25x128xf32>
    %c10 = arith.constant 10 : index
    %c0_267 = arith.constant 0 : index
    %c0_268 = arith.constant 0 : index
    %139 = vector.load %arg14[%c10, %c0_267, %c0_268] : memref<16x25x128xf32, #tpu.memory_space<vmem>>, vector<1x25x128xf32>
    %140 = vector.shape_cast %139 : vector<1x25x128xf32> to vector<25x128xf32>
    %c11 = arith.constant 11 : index
    %c0_269 = arith.constant 0 : index
    %c0_270 = arith.constant 0 : index
    %141 = vector.load %arg14[%c11, %c0_269, %c0_270] : memref<16x25x128xf32, #tpu.memory_space<vmem>>, vector<1x25x128xf32>
    %142 = vector.shape_cast %141 : vector<1x25x128xf32> to vector<25x128xf32>
    %c12 = arith.constant 12 : index
    %c0_271 = arith.constant 0 : index
    %c0_272 = arith.constant 0 : index
    %143 = vector.load %arg14[%c12, %c0_271, %c0_272] : memref<16x25x128xf32, #tpu.memory_space<vmem>>, vector<1x25x128xf32>
    %144 = vector.shape_cast %143 : vector<1x25x128xf32> to vector<25x128xf32>
    %c13 = arith.constant 13 : index
    %c0_273 = arith.constant 0 : index
    %c0_274 = arith.constant 0 : index
    %145 = vector.load %arg14[%c13, %c0_273, %c0_274] : memref<16x25x128xf32, #tpu.memory_space<vmem>>, vector<1x25x128xf32>
    %146 = vector.shape_cast %145 : vector<1x25x128xf32> to vector<25x128xf32>
    %c14 = arith.constant 14 : index
    %c0_275 = arith.constant 0 : index
    %c0_276 = arith.constant 0 : index
    %147 = vector.load %arg14[%c14, %c0_275, %c0_276] : memref<16x25x128xf32, #tpu.memory_space<vmem>>, vector<1x25x128xf32>
    %148 = vector.shape_cast %147 : vector<1x25x128xf32> to vector<25x128xf32>
    %c15 = arith.constant 15 : index
    %c0_277 = arith.constant 0 : index
    %c0_278 = arith.constant 0 : index
    %149 = vector.load %arg14[%c15, %c0_277, %c0_278] : memref<16x25x128xf32, #tpu.memory_space<vmem>>, vector<1x25x128xf32>
    %150 = vector.shape_cast %149 : vector<1x25x128xf32> to vector<25x128xf32>
    %151 = tpu.concatenate %120, %122, %124, %126, %128, %130, %132, %134, %136, %138, %140, %142, %144, %146, %148, %150 in 0 : vector<25x128xf32>, vector<25x128xf32>, vector<25x128xf32>, vector<25x128xf32>, vector<25x128xf32>, vector<25x128xf32>, vector<25x128xf32>, vector<25x128xf32>, vector<25x128xf32>, vector<25x128xf32>, vector<25x128xf32>, vector<25x128xf32>, vector<25x128xf32>, vector<25x128xf32>, vector<25x128xf32>, vector<25x128xf32> -> vector<400x128xf32>
    %c0_279 = arith.constant 0 : index
    %c0_280 = arith.constant 0 : index
    %152 = vector.load %arg6[%c0_279, %c0_280] : memref<120x400xf32, #tpu.memory_space<vmem>>, vector<120x400xf32>
    %cst = arith.constant dense<0.000000e+00> : vector<120x128xf32>
    %153 = tpu.matmul %152, %151, %cst {dimension_numbers = #tpu.dot_dimension_numbers<[1], [0], [0], [1], [0, 0, 1, 1], [], []>} : vector<120x400xf32>, vector<400x128xf32>, vector<120x128xf32> -> vector<120x128xf32>
    %c0_281 = arith.constant 0 : index
    %c0_282 = arith.constant 0 : index
    %154 = vector.load %arg7[%c0_281, %c0_282] : memref<120x1xf32, #tpu.memory_space<vmem>>, vector<120x1xf32>
    %155 = vector.broadcast %154 : vector<120x1xf32> to vector<120x128xf32>
    %156 = arith.addf %153, %155 : vector<120x128xf32>
    %cst_283 = arith.constant 0.000000e+00 : f32
    %157 = vector.broadcast %cst_283 : f32 to vector<120x128xf32>
    %158 = arith.maximumf %156, %157 : vector<120x128xf32>
    %c0_284 = arith.constant 0 : index
    %c0_285 = arith.constant 0 : index
    %159 = vector.load %arg8[%c0_284, %c0_285] : memref<84x120xf32, #tpu.memory_space<vmem>>, vector<84x120xf32>
    %cst_286 = arith.constant dense<0.000000e+00> : vector<84x128xf32>
    %160 = tpu.matmul %159, %158, %cst_286 {dimension_numbers = #tpu.dot_dimension_numbers<[1], [0], [0], [1], [0, 0, 1, 1], [], []>} : vector<84x120xf32>, vector<120x128xf32>, vector<84x128xf32> -> vector<84x128xf32>
    %c0_287 = arith.constant 0 : index
    %c0_288 = arith.constant 0 : index
    %161 = vector.load %arg9[%c0_287, %c0_288] : memref<84x1xf32, #tpu.memory_space<vmem>>, vector<84x1xf32>
    %162 = vector.broadcast %161 : vector<84x1xf32> to vector<84x128xf32>
    %163 = arith.addf %160, %162 : vector<84x128xf32>
    %cst_289 = arith.constant 0.000000e+00 : f32
    %164 = vector.broadcast %cst_289 : f32 to vector<84x128xf32>
    %165 = arith.maximumf %163, %164 : vector<84x128xf32>
    %c0_290 = arith.constant 0 : index
    %c0_291 = arith.constant 0 : index
    %166 = vector.load %arg10[%c0_290, %c0_291] : memref<10x84xf32, #tpu.memory_space<vmem>>, vector<10x84xf32>
    %cst_292 = arith.constant dense<0.000000e+00> : vector<10x128xf32>
    %167 = tpu.matmul %166, %165, %cst_292 {dimension_numbers = #tpu.dot_dimension_numbers<[1], [0], [0], [1], [0, 0, 1, 1], [], []>} : vector<10x84xf32>, vector<84x128xf32>, vector<10x128xf32> -> vector<10x128xf32>
    %c0_293 = arith.constant 0 : index
    %c0_294 = arith.constant 0 : index
    %168 = vector.load %arg11[%c0_293, %c0_294] : memref<10x1xf32, #tpu.memory_space<vmem>>, vector<10x1xf32>
    %169 = vector.broadcast %168 : vector<10x1xf32> to vector<10x128xf32>
    %170 = arith.addf %167, %169 : vector<10x128xf32>
    %cst_295 = arith.constant dense<0xFF800000> : vector<128xf32>
    %171 = vector.multi_reduction <maximumf>, %170, %cst_295 [0] : vector<10x128xf32> to vector<128xf32>
    %172 = vector.shape_cast %171 : vector<128xf32> to vector<1x128xf32>
    %173 = vector.broadcast %172 : vector<1x128xf32> to vector<10x128xf32>
    %174 = arith.subf %170, %173 : vector<10x128xf32>
    %175 = math.exp %174 : vector<10x128xf32>
    %cst_296 = arith.constant dense<0.000000e+00> : vector<128xf32>
    %176 = vector.multi_reduction <add>, %175, %cst_296 [0] : vector<10x128xf32> to vector<128xf32>
    %177 = vector.shape_cast %176 : vector<128xf32> to vector<1x128xf32>
    %178 = math.log %177 : vector<1x128xf32>
    %179 = vector.broadcast %178 : vector<1x128xf32> to vector<10x128xf32>
    %180 = arith.subf %174, %179 : vector<10x128xf32>
    %c0_297 = arith.constant 0 : index
    %c0_298 = arith.constant 0 : index
    %181 = vector.load %arg12[%c0_297, %c0_298] : memref<10x128xf32, #tpu.memory_space<vmem>>, vector<10x128xf32>
    tpu.vector_store %arg12[%c0_297, %c0_298], %180 {strides = array<i32>} : memref<10x128xf32, #tpu.memory_space<vmem>>, vector<10x128xf32>,
    return
  }
  func.func @transform_0(%arg0: i32) -> (i32, i32, i32) {
    %c0_i32 = arith.constant 0 : i32
    %c0_i32_0 = arith.constant 0 : i32
    %c0_i32_1 = arith.constant 0 : i32
    return %c0_i32, %c0_i32_0, %arg0 : i32, i32, i32
  }
  func.func @transform_1(%arg0: i32) -> (i32, i32) {
    %c0_i32 = arith.constant 0 : i32
    %c0_i32_0 = arith.constant 0 : i32
    %c0_i32_1 = arith.constant 0 : i32
    return %c0_i32, %c0_i32_0 : i32, i32
  }
  func.func @transform_2(%arg0: i32) -> i32 {
    %c0_i32 = arith.constant 0 : i32
    %c0_i32_0 = arith.constant 0 : i32
    return %c0_i32 : i32
  }
  func.func @transform_3(%arg0: i32) -> (i32, i32) {
    %c0_i32 = arith.constant 0 : i32
    %c0_i32_0 = arith.constant 0 : i32
    %c0_i32_1 = arith.constant 0 : i32
    return %c0_i32, %c0_i32_0 : i32, i32
  }
  func.func @transform_4(%arg0: i32) -> i32 {
    %c0_i32 = arith.constant 0 : i32
    %c0_i32_0 = arith.constant 0 : i32
    return %c0_i32 : i32
  }
  func.func @transform_5(%arg0: i32) -> (i32, i32) {
    %c0_i32 = arith.constant 0 : i32
    %c0_i32_0 = arith.constant 0 : i32
    %c0_i32_1 = arith.constant 0 : i32
    return %c0_i32, %c0_i32_0 : i32, i32
  }
  func.func @transform_6(%arg0: i32) -> (i32, i32) {
    %c0_i32 = arith.constant 0 : i32
    %c0_i32_0 = arith.constant 0 : i32
    %c0_i32_1 = arith.constant 0 : i32
    return %c0_i32, %c0_i32_0 : i32, i32
  }
  func.func @transform_7(%arg0: i32) -> (i32, i32) {
    %c0_i32 = arith.constant 0 : i32
    %c0_i32_0 = arith.constant 0 : i32
    %c0_i32_1 = arith.constant 0 : i32
    return %c0_i32, %c0_i32_0 : i32, i32
  }
  func.func @transform_8(%arg0: i32) -> (i32, i32) {
    %c0_i32 = arith.constant 0 : i32
    %c0_i32_0 = arith.constant 0 : i32
    %c0_i32_1 = arith.constant 0 : i32
    return %c0_i32, %c0_i32_0 : i32, i32
  }
  func.func @transform_9(%arg0: i32) -> (i32, i32) {
    %c0_i32 = arith.constant 0 : i32
    %c0_i32_0 = arith.constant 0 : i32
    %c0_i32_1 = arith.constant 0 : i32
    return %c0_i32, %c0_i32_0 : i32, i32
  }
  func.func @transform_10(%arg0: i32) -> (i32, i32) {
    %c0_i32 = arith.constant 0 : i32
    %c0_i32_0 = arith.constant 0 : i32
    %c0_i32_1 = arith.constant 0 : i32
    return %c0_i32, %c0_i32_0 : i32, i32
  }
  func.func @transform_11(%arg0: i32) -> (i32, i32) {
    %c0_i32 = arith.constant 0 : i32
    %c0_i32_0 = arith.constant 0 : i32
    return %c0_i32, %arg0 : i32, i32
  }
}

</mosaic_0001>

<llo_original>
// kernel: forward.1
$region0: #{forward.1}
  #allocation0 [shape = 'u32[]', space=smem, size = 0x4, offset = 0x4, fixed_abs, tag = 'smem constant byte address 0x4 - core index']
  #allocation1 [shape = 'u32[144,128]{1,0:T(1,128)}', space=vmem, size = 0x12000, scoped, tag = 'internal scratch']
  #allocation2 [shape = 'f32[6,13,13,128]{3,2,1,0:T(8,128)}', space=vmem, size = 0x9c000, scoped, tag = 'scratch operand']
  #allocation3 [shape = 'f32[16,25,128]{2,1,0:T(8,128)}', space=vmem, size = 0x40000, scoped, tag = 'scratch operand']
  %s0 = inlined_call_operand.vmem [shape: f32[28,28,128], index: 0, kind: input, shape index: {}]
  %s1 = inlined_call_operand.vmem [shape: f32[6,9], index: 1, kind: input, shape index: {}]
  %s2 = inlined_call_operand.vmem [shape: f32[6], index: 2, kind: input, shape index: {}]
  %s3 = inlined_call_operand.vmem [shape: f32[16,54], index: 3, kind: input, shape index: {}]
  %s4 = inlined_call_operand.vmem [shape: f32[16], index: 4, kind: input, shape index: {}]
  %s5 = inlined_call_operand.vmem [shape: f32[120,400], index: 5, kind: input, shape index: {}]
  %s6 = inlined_call_operand.vmem [shape: f32[120,1], index: 6, kind: input, shape index: {}]
  %s7 = inlined_call_operand.vmem [shape: f32[84,120], index: 7, kind: input, shape index: {}]
  %s8 = inlined_call_operand.vmem [shape: f32[84,1], index: 8, kind: input, shape index: {}]
  %s9 = inlined_call_operand.vmem [shape: f32[10,84], index: 9, kind: input, shape index: {}]
  %s10 = inlined_call_operand.vmem [shape: f32[10,1], index: 10, kind: input, shape index: {}]
  %s11 = inlined_call_operand.vmem [shape: f32[10,128], index: 11, kind: output, shape index: {}]
  %s12 = sld [smem:[#allocation0]]
  $region84: #{forward.1} parent=0
    _
  %s14 = ssub.s32 1, %s12
  %s15 = scalar_select 0, %s14, %s12
  $region1: #{forward.1} parent=0
    #allocation4 [shape = 'u8[4096]{0}', space=smem, size = 0x1000, scoped, tag = 'input window, operand 1, single buffered']
    #allocation5 [shape = 's32[1]{0}', space=sflag, size = 0x4, scoped, tag = 'scoped memory for forward.1']
    #allocation6 [shape = 'u8[512]{0}', space=smem, size = 0x200, scoped, tag = 'input window, operand 2, single buffered']
    #allocation7 [shape = 's32[1]{0}', space=sflag, size = 0x4, scoped, tag = 'scoped memory for forward.1']
    #allocation8 [shape = 'u8[8192]{0}', space=smem, size = 0x2000, scoped, tag = 'input window, operand 3, single buffered']
    #allocation9 [shape = 'u8[512]{0}', space=smem, size = 0x200, scoped, tag = 'input window, operand 4, single buffered']
    #allocation10 [shape = 's32[1]{0}', space=sflag, size = 0x4, scoped, tag = 'scoped memory for forward.1']
    %16 = vsyncpa [#allocation5], 0
    %17 = vsyncpa [#allocation7], 0
    %18 = vsyncpa [#allocation10], 0
    // Predicated region
    $region2: #{forward.1} parent=1 // pred_check
      _
    $region3: #{forward.1} parent=1 // pred_check_branch
      %20 = sbr.rel (0) target = $region5
    $region4: #{forward.1} parent=1 // pred_region
      _
    $region5: #{forward.1} parent=1 // pred_fallthru
      _
    // Predicated region
    $region6: #{forward.1} parent=1 // pred_check
      _
    $region7: #{forward.1} parent=1 // pred_check_branch
      %22 = sbr.rel (0) target = $region9
    $region8: #{forward.1} parent=1 // pred_region
      %s24 = ssub.s32 128, 128
      %25 = vsyncadd [#allocation5], %s24
      %s27 = sshll.u32 %s1, 4
      %s28 = int_to_ptr.vmem [resolvable:$true] %s27
      %30 = dma.vmem_to_smem %s28, 128, [#allocation4], [#allocation5]
    $region9: #{forward.1} parent=1 // pred_fallthru
      _
    // Predicated region
    $region10: #{forward.1} parent=1 // pred_check
      _
    $region11: #{forward.1} parent=1 // pred_check_branch
      %32 = sbr.rel (0) target = $region13
    $region12: #{forward.1} parent=1 // pred_region
      %s34 = ssub.s32 16, 16
      %35 = vsyncadd [#allocation7], %s34
      %s37 = sshll.u32 %s2, 4
      %s38 = int_to_ptr.vmem [resolvable:$true] %s37
      %40 = dma.vmem_to_smem %s38, 16, [#allocation6], [#allocation7]
    $region13: #{forward.1} parent=1 // pred_fallthru
      _
    // Predicated region
    $region14: #{forward.1} parent=1 // pred_check
      _
    $region15: #{forward.1} parent=1 // pred_check_branch
      %42 = sbr.rel (0) target = $region17
    $region16: #{forward.1} parent=1 // pred_region
      %s44 = ssub.s32 256, 256
      %45 = vsyncadd [#allocation7], %s44
      %s46 = sshll.u32 %s3, 4
      %s47 = int_to_ptr.vmem [resolvable:$true] %s46
      %52 = dma.vmem_to_smem %s47, 256, [#allocation8], [#allocation7], 128, 128, 8
    $region17: #{forward.1} parent=1 // pred_fallthru
      _
    // Predicated region
    $region18: #{forward.1} parent=1 // pred_check
      _
    $region19: #{forward.1} parent=1 // pred_check_branch
      %54 = sbr.rel (0) target = $region21
    $region20: #{forward.1} parent=1 // pred_region
      %s56 = ssub.s32 16, 16
      %57 = vsyncadd [#allocation10], %s56
      %s59 = sshll.u32 %s4, 4
      %s60 = int_to_ptr.vmem [resolvable:$true] %s59
      %62 = dma.vmem_to_smem %s60, 16, [#allocation9], [#allocation10]
    $region21: #{forward.1} parent=1 // pred_fallthru
      _
    // Predicated region
    $region22: #{forward.1} parent=1 // pred_check
      _
    $region23: #{forward.1} parent=1 // pred_check_branch
      %64 = sbr.rel (0) target = $region25
    $region24: #{forward.1} parent=1 // pred_region
      _
    $region25: #{forward.1} parent=1 // pred_fallthru
      _
    // Predicated region
    $region26: #{forward.1} parent=1 // pred_check
      _
    $region27: #{forward.1} parent=1 // pred_check_branch
      %66 = sbr.rel (0) target = $region29
    $region28: #{forward.1} parent=1 // pred_region
      _
    $region29: #{forward.1} parent=1 // pred_fallthru
      _
    // Predicated region
    $region30: #{forward.1} parent=1 // pred_check
      _
    $region31: #{forward.1} parent=1 // pred_check_branch
      %68 = sbr.rel (0) target = $region33
    $region32: #{forward.1} parent=1 // pred_region
      _
    $region33: #{forward.1} parent=1 // pred_fallthru
      _
    // Predicated region
    $region34: #{forward.1} parent=1 // pred_check
      _
    $region35: #{forward.1} parent=1 // pred_check_branch
      %70 = sbr.rel (0) target = $region37
    $region36: #{forward.1} parent=1 // pred_region
      _
    $region37: #{forward.1} parent=1 // pred_fallthru
      _
    // Predicated region
    $region38: #{forward.1} parent=1 // pred_check
      _
    $region39: #{forward.1} parent=1 // pred_check_branch
      %72 = sbr.rel (0) target = $region41
    $region40: #{forward.1} parent=1 // pred_region
      _
    $region41: #{forward.1} parent=1 // pred_fallthru
      _
    // Predicated region
    $region42: #{forward.1} parent=1 // pred_check
      _
    $region43: #{forward.1} parent=1 // pred_check_branch
      %74 = sbr.rel (0) target = $region45
    $region44: #{forward.1} parent=1 // pred_region
      _
    $region45: #{forward.1} parent=1 // pred_fallthru
      _
    // Predicated region
    $region46: #{forward.1} parent=1 // pred_check
      _
    $region47: #{forward.1} parent=1 // pred_check_branch
      %76 = sbr.rel (0) target = $region49
    $region48: #{forward.1} parent=1 // pred_region
      %77 = dma.done [#allocation5], 128
    $region49: #{forward.1} parent=1 // pred_fallthru
      _
    // Predicated region
    $region50: #{forward.1} parent=1 // pred_check
      _
    $region51: #{forward.1} parent=1 // pred_check_branch
      %79 = sbr.rel (0) target = $region53
    $region52: #{forward.1} parent=1 // pred_region
      %80 = dma.done [#allocation7], 16
    $region53: #{forward.1} parent=1 // pred_fallthru
      _
    // Predicated region
    $region54: #{forward.1} parent=1 // pred_check
      _
    $region55: #{forward.1} parent=1 // pred_check_branch
      %82 = sbr.rel (0) target = $region57
    $region56: #{forward.1} parent=1 // pred_region
      %83 = dma.done [#allocation7], 256
    $region57: #{forward.1} parent=1 // pred_fallthru
      _
    // Predicated region
    $region58: #{forward.1} parent=1 // pred_check
      _
    $region59: #{forward.1} parent=1 // pred_check_branch
      %85 = sbr.rel (0) target = $region61
    $region60: #{forward.1} parent=1 // pred_region
      %86 = dma.done [#allocation10], 16
    $region61: #{forward.1} parent=1 // pred_fallthru
      _
    %87 = sfence
    %v88 = vld [vmem:[%s0] sm:$0xff]
    %v89 = vld [vmem:[%s0 + $0x8] sm:$0xff]
    %v90 = vld [vmem:[%s0 + $0x10] sm:$0xff]
    %v91 = vld [vmem:[%s0 + $0x18] sm:$0x3]
    %v92 = vld [vmem:[%s0 + $0x20] sm:$0xff]
    %v93 = vld [vmem:[%s0 + $0x28] sm:$0xff]
    %v94 = vld [vmem:[%s0 + $0x30] sm:$0xff]
    %v95 = vld [vmem:[%s0 + $0x38] sm:$0x3]
    %v96 = vld [vmem:[%s0 + $0x40] sm:$0xff]
    %v97 = vld [vmem:[%s0 + $0x48] sm:$0xff]
    %v98 = vld [vmem:[%s0 + $0x50] sm:$0xff]
    %v99 = vld [vmem:[%s0 + $0x58] sm:$0x3]
    %v100 = vld [vmem:[%s0 + $0x60] sm:$0xff]
    %v101 = vld [vmem:[%s0 + $0x68] sm:$0xff]
    %v102 = vld [vmem:[%s0 + $0x70] sm:$0xff]
    %v103 = vld [vmem:[%s0 + $0x78] sm:$0x3]
    %v104 = vld [vmem:[%s0 + $0x80] sm:$0xff]
    %v105 = vld [vmem:[%s0 + $0x88] sm:$0xff]
    %v106 = vld [vmem:[%s0 + $0x90] sm:$0xff]
    %v107 = vld [vmem:[%s0 + $0x98] sm:$0x3]
    %v108 = vld [vmem:[%s0 + $0xa0] sm:$0xff]
    %v109 = vld [vmem:[%s0 + $0xa8] sm:$0xff]
    %v110 = vld [vmem:[%s0 + $0xb0] sm:$0xff]
    %v111 = vld [vmem:[%s0 + $0xb8] sm:$0x3]
    %v112 = vld [vmem:[%s0 + $0xc0] sm:$0xff]
    %v113 = vld [vmem:[%s0 + $0xc8] sm:$0xff]
    %v114 = vld [vmem:[%s0 + $0xd0] sm:$0xff]
    %v115 = vld [vmem:[%s0 + $0xd8] sm:$0x3]
    %v116 = vld [vmem:[%s0 + $0xe0] sm:$0xff]
    %v117 = vld [vmem:[%s0 + $0xe8] sm:$0xff]
    %v118 = vld [vmem:[%s0 + $0xf0] sm:$0xff]
    %v119 = vld [vmem:[%s0 + $0xf8] sm:$0x3]
    %v120 = vld [vmem:[%s0 + $0x100] sm:$0xff]
    %v121 = vld [vmem:[%s0 + $0x108] sm:$0xff]
    %v122 = vld [vmem:[%s0 + $0x110] sm:$0xff]
    %v123 = vld [vmem:[%s0 + $0x118] sm:$0x3]
    %v124 = vld [vmem:[%s0 + $0x120] sm:$0xff]
    %v125 = vld [vmem:[%s0 + $0x128] sm:$0xff]
    %v126 = vld [vmem:[%s0 + $0x130] sm:$0xff]
    %v127 = vld [vmem:[%s0 + $0x138] sm:$0x3]
    %v128 = vld [vmem:[%s0 + $0x140] sm:$0xff]
    %v129 = vld [vmem:[%s0 + $0x148] sm:$0xff]
    %v130 = vld [vmem:[%s0 + $0x150] sm:$0xff]
    %v131 = vld [vmem:[%s0 + $0x158] sm:$0x3]
    %v132 = vld [vmem:[%s0 + $0x160] sm:$0xff]
    %v133 = vld [vmem:[%s0 + $0x168] sm:$0xff]
    %v134 = vld [vmem:[%s0 + $0x170] sm:$0xff]
    %v135 = vld [vmem:[%s0 + $0x178] sm:$0x3]
    %v136 = vld [vmem:[%s0 + $0x180] sm:$0xff]
    %v137 = vld [vmem:[%s0 + $0x188] sm:$0xff]
    %v138 = vld [vmem:[%s0 + $0x190] sm:$0xff]
    %v139 = vld [vmem:[%s0 + $0x198] sm:$0x3]
    %v140 = vld [vmem:[%s0 + $0x1a0] sm:$0xff]
    %v141 = vld [vmem:[%s0 + $0x1a8] sm:$0xff]
    %v142 = vld [vmem:[%s0 + $0x1b0] sm:$0xff]
    %v143 = vld [vmem:[%s0 + $0x1b8] sm:$0x3]
    %v144 = vld [vmem:[%s0 + $0x1c0] sm:$0xff]
    %v145 = vld [vmem:[%s0 + $0x1c8] sm:$0xff]
    %v146 = vld [vmem:[%s0 + $0x1d0] sm:$0xff]
    %v147 = vld [vmem:[%s0 + $0x1d8] sm:$0x3]
    %v148 = vld [vmem:[%s0 + $0x1e0] sm:$0xff]
    %v149 = vld [vmem:[%s0 + $0x1e8] sm:$0xff]
    %v150 = vld [vmem:[%s0 + $0x1f0] sm:$0xff]
    %v151 = vld [vmem:[%s0 + $0x1f8] sm:$0x3]
    %v152 = vld [vmem:[%s0 + $0x200] sm:$0xff]
    %v153 = vld [vmem:[%s0 + $0x208] sm:$0xff]
    %v154 = vld [vmem:[%s0 + $0x210] sm:$0xff]
    %v155 = vld [vmem:[%s0 + $0x218] sm:$0x3]
    %v156 = vld [vmem:[%s0 + $0x220] sm:$0xff]
    %v157 = vld [vmem:[%s0 + $0x228] sm:$0xff]
    %v158 = vld [vmem:[%s0 + $0x230] sm:$0xff]
    %v159 = vld [vmem:[%s0 + $0x238] sm:$0x3]
    %v160 = vld [vmem:[%s0 + $0x240] sm:$0xff]
    %v161 = vld [vmem:[%s0 + $0x248] sm:$0xff]
    %v162 = vld [vmem:[%s0 + $0x250] sm:$0xff]
    %v163 = vld [vmem:[%s0 + $0x258] sm:$0x3]
    %v164 = vld [vmem:[%s0 + $0x260] sm:$0xff]
    %v165 = vld [vmem:[%s0 + $0x268] sm:$0xff]
    %v166 = vld [vmem:[%s0 + $0x270] sm:$0xff]
    %v167 = vld [vmem:[%s0 + $0x278] sm:$0x3]
    %v168 = vld [vmem:[%s0 + $0x280] sm:$0xff]
    %v169 = vld [vmem:[%s0 + $0x288] sm:$0xff]
    %v170 = vld [vmem:[%s0 + $0x290] sm:$0xff]
    %v171 = vld [vmem:[%s0 + $0x298] sm:$0x3]
    %v172 = vld [vmem:[%s0 + $0x2a0] sm:$0xff]
    %v173 = vld [vmem:[%s0 + $0x2a8] sm:$0xff]
    %v174 = vld [vmem:[%s0 + $0x2b0] sm:$0xff]
    %v175 = vld [vmem:[%s0 + $0x2b8] sm:$0x3]
    %v176 = vld [vmem:[%s0 + $0x2c0] sm:$0xff]
    %v177 = vld [vmem:[%s0 + $0x2c8] sm:$0xff]
    %v178 = vld [vmem:[%s0 + $0x2d0] sm:$0xff]
    %v179 = vld [vmem:[%s0 + $0x2d8] sm:$0x3]
    %v180 = vld [vmem:[%s0 + $0x2e0] sm:$0xff]
    %v181 = vld [vmem:[%s0 + $0x2e8] sm:$0xff]
    %v182 = vld [vmem:[%s0 + $0x2f0] sm:$0xff]
    %v183 = vld [vmem:[%s0 + $0x2f8] sm:$0x3]
    %v184 = vld [vmem:[%s0 + $0x300] sm:$0xff]
    %v185 = vld [vmem:[%s0 + $0x308] sm:$0xff]
    %v186 = vld [vmem:[%s0 + $0x310] sm:$0xff]
    %v187 = vld [vmem:[%s0 + $0x318] sm:$0x3]
    %v188 = vld [vmem:[%s0 + $0x320] sm:$0xff]
    %v189 = vld [vmem:[%s0 + $0x328] sm:$0xff]
    %v190 = vld [vmem:[%s0 + $0x330] sm:$0xff]
    %v191 = vld [vmem:[%s0 + $0x338] sm:$0x3]
    %v192 = vld [vmem:[%s0 + $0x1] sm:$0xff]
    %v193 = vld [vmem:[%s0 + $0x9] sm:$0xff]
    %v194 = vld [vmem:[%s0 + $0x11] sm:$0xff]
    %v195 = vld [vmem:[%s0 + $0x19] sm:$0x3]
    %v196 = vld [vmem:[%s0 + $0x21] sm:$0xff]
    %v197 = vld [vmem:[%s0 + $0x29] sm:$0xff]
    %v198 = vld [vmem:[%s0 + $0x31] sm:$0xff]
    %v199 = vld [vmem:[%s0 + $0x39] sm:$0x3]
    %v200 = vld [vmem:[%s0 + $0x41] sm:$0xff]
    %v201 = vld [vmem:[%s0 + $0x49] sm:$0xff]
    %v202 = vld [vmem:[%s0 + $0x51] sm:$0xff]
    %v203 = vld [vmem:[%s0 + $0x59] sm:$0x3]
    %v204 = vld [vmem:[%s0 + $0x61] sm:$0xff]
    %v205 = vld [vmem:[%s0 + $0x69] sm:$0xff]
    %v206 = vld [vmem:[%s0 + $0x71] sm:$0xff]
    %v207 = vld [vmem:[%s0 + $0x79] sm:$0x3]
    %v208 = vld [vmem:[%s0 + $0x81] sm:$0xff]
    %v209 = vld [vmem:[%s0 + $0x89] sm:$0xff]
    %v210 = vld [vmem:[%s0 + $0x91] sm:$0xff]
    %v211 = vld [vmem:[%s0 + $0x99] sm:$0x3]
    %v212 = vld [vmem:[%s0 + $0xa1] sm:$0xff]
    %v213 = vld [vmem:[%s0 + $0xa9] sm:$0xff]
    %v214 = vld [vmem:[%s0 + $0xb1] sm:$0xff]
    %v215 = vld [vmem:[%s0 + $0xb9] sm:$0x3]
    %v216 = vld [vmem:[%s0 + $0xc1] sm:$0xff]
    %v217 = vld [vmem:[%s0 + $0xc9] sm:$0xff]
    %v218 = vld [vmem:[%s0 + $0xd1] sm:$0xff]
    %v219 = vld [vmem:[%s0 + $0xd9] sm:$0x3]
    %v220 = vld [vmem:[%s0 + $0xe1] sm:$0xff]
    %v221 = vld [vmem:[%s0 + $0xe9] sm:$0xff]
    %v222 = vld [vmem:[%s0 + $0xf1] sm:$0xff]
    %v223 = vld [vmem:[%s0 + $0xf9] sm:$0x3]
    %v224 = vld [vmem:[%s0 + $0x101] sm:$0xff]
    %v225 = vld [vmem:[%s0 + $0x109] sm:$0xff]
    %v226 = vld [vmem:[%s0 + $0x111] sm:$0xff]
    %v227 = vld [vmem:[%s0 + $0x119] sm:$0x3]
    %v228 = vld [vmem:[%s0 + $0x121] sm:$0xff]
    %v229 = vld [vmem:[%s0 + $0x129] sm:$0xff]
    %v230 = vld [vmem:[%s0 + $0x131] sm:$0xff]
    %v231 = vld [vmem:[%s0 + $0x139] sm:$0x3]
    %v232 = vld [vmem:[%s0 + $0x141] sm:$0xff]
    %v233 = vld [vmem:[%s0 + $0x149] sm:$0xff]
    %v234 = vld [vmem:[%s0 + $0x151] sm:$0xff]
    %v235 = vld [vmem:[%s0 + $0x159] sm:$0x3]
    %v236 = vld [vmem:[%s0 + $0x161] sm:$0xff]
    %v237 = vld [vmem:[%s0 + $0x169] sm:$0xff]
    %v238 = vld [vmem:[%s0 + $0x171] sm:$0xff]
    %v239 = vld [vmem:[%s0 + $0x179] sm:$0x3]
    %v240 = vld [vmem:[%s0 + $0x181] sm:$0xff]
    %v241 = vld [vmem:[%s0 + $0x189] sm:$0xff]
    %v242 = vld [vmem:[%s0 + $0x191] sm:$0xff]
    %v243 = vld [vmem:[%s0 + $0x199] sm:$0x3]
    %v244 = vld [vmem:[%s0 + $0x1a1] sm:$0xff]
    %v245 = vld [vmem:[%s0 + $0x1a9] sm:$0xff]
    %v246 = vld [vmem:[%s0 + $0x1b1] sm:$0xff]
    %v247 = vld [vmem:[%s0 + $0x1b9] sm:$0x3]
    %v248 = vld [vmem:[%s0 + $0x1c1] sm:$0xff]
    %v249 = vld [vmem:[%s0 + $0x1c9] sm:$0xff]
    %v250 = vld [vmem:[%s0 + $0x1d1] sm:$0xff]
    %v251 = vld [vmem:[%s0 + $0x1d9] sm:$0x3]
    %v252 = vld [vmem:[%s0 + $0x1e1] sm:$0xff]
    %v253 = vld [vmem:[%s0 + $0x1e9] sm:$0xff]
    %v254 = vld [vmem:[%s0 + $0x1f1] sm:$0xff]
    %v255 = vld [vmem:[%s0 + $0x1f9] sm:$0x3]
    %v256 = vld [vmem:[%s0 + $0x201] sm:$0xff]
    %v257 = vld [vmem:[%s0 + $0x209] sm:$0xff]
    %v258 = vld [vmem:[%s0 + $0x211] sm:$0xff]
    %v259 = vld [vmem:[%s0 + $0x219] sm:$0x3]
    %v260 = vld [vmem:[%s0 + $0x221] sm:$0xff]
    %v261 = vld [vmem:[%s0 + $0x229] sm:$0xff]
    %v262 = vld [vmem:[%s0 + $0x231] sm:$0xff]
    %v263 = vld [vmem:[%s0 + $0x239] sm:$0x3]
    %v264 = vld [vmem:[%s0 + $0x241] sm:$0xff]
    %v265 = vld [vmem:[%s0 + $0x249] sm:$0xff]
    %v266 = vld [vmem:[%s0 + $0x251] sm:$0xff]
    %v267 = vld [vmem:[%s0 + $0x259] sm:$0x3]
    %v268 = vld [vmem:[%s0 + $0x261] sm:$0xff]
    %v269 = vld [vmem:[%s0 + $0x269] sm:$0xff]
    %v270 = vld [vmem:[%s0 + $0x271] sm:$0xff]
    %v271 = vld [vmem:[%s0 + $0x279] sm:$0x3]
    %v272 = vld [vmem:[%s0 + $0x281] sm:$0xff]
    %v273 = vld [vmem:[%s0 + $0x289] sm:$0xff]
    %v274 = vld [vmem:[%s0 + $0x291] sm:$0xff]
    %v275 = vld [vmem:[%s0 + $0x299] sm:$0x3]
    %v276 = vld [vmem:[%s0 + $0x2a1] sm:$0xff]
    %v277 = vld [vmem:[%s0 + $0x2a9] sm:$0xff]
    %v278 = vld [vmem:[%s0 + $0x2b1] sm:$0xff]
    %v279 = vld [vmem:[%s0 + $0x2b9] sm:$0x3]
    %v280 = vld [vmem:[%s0 + $0x2c1] sm:$0xff]
    %v281 = vld [vmem:[%s0 + $0x2c9] sm:$0xff]
    %v282 = vld [vmem:[%s0 + $0x2d1] sm:$0xff]
    %v283 = vld [vmem:[%s0 + $0x2d9] sm:$0x3]
    %v284 = vld [vmem:[%s0 + $0x2e1] sm:$0xff]
    %v285 = vld [vmem:[%s0 + $0x2e9] sm:$0xff]
    %v286 = vld [vmem:[%s0 + $0x2f1] sm:$0xff]
    %v287 = vld [vmem:[%s0 + $0x2f9] sm:$0x3]
    %v288 = vld [vmem:[%s0 + $0x301] sm:$0xff]
    %v289 = vld [vmem:[%s0 + $0x309] sm:$0xff]
    %v290 = vld [vmem:[%s0 + $0x311] sm:$0xff]
    %v291 = vld [vmem:[%s0 + $0x319] sm:$0x3]
    %v292 = vld [vmem:[%s0 + $0x321] sm:$0xff]
    %v293 = vld [vmem:[%s0 + $0x329] sm:$0xff]
    %v294 = vld [vmem:[%s0 + $0x331] sm:$0xff]
    %v295 = vld [vmem:[%s0 + $0x339] sm:$0x3]
    %v296 = vld [vmem:[%s0 + $0x2] sm:$0xff]
    %v297 = vld [vmem:[%s0 + $0xa] sm:$0xff]
    %v298 = vld [vmem:[%s0 + $0x12] sm:$0xff]
    %v299 = vld [vmem:[%s0 + $0x1a] sm:$0x3]
    %v300 = vld [vmem:[%s0 + $0x22] sm:$0xff]
    %v301 = vld [vmem:[%s0 + $0x2a] sm:$0xff]
    %v302 = vld [vmem:[%s0 + $0x32] sm:$0xff]
    %v303 = vld [vmem:[%s0 + $0x3a] sm:$0x3]
    %v304 = vld [vmem:[%s0 + $0x42] sm:$0xff]
    %v305 = vld [vmem:[%s0 + $0x4a] sm:$0xff]
    %v306 = vld [vmem:[%s0 + $0x52] sm:$0xff]
    %v307 = vld [vmem:[%s0 + $0x5a] sm:$0x3]
    %v308 = vld [vmem:[%s0 + $0x62] sm:$0xff]
    %v309 = vld [vmem:[%s0 + $0x6a] sm:$0xff]
    %v310 = vld [vmem:[%s0 + $0x72] sm:$0xff]
    %v311 = vld [vmem:[%s0 + $0x7a] sm:$0x3]
    %v312 = vld [vmem:[%s0 + $0x82] sm:$0xff]
    %v313 = vld [vmem:[%s0 + $0x8a] sm:$0xff]
    %v314 = vld [vmem:[%s0 + $0x92] sm:$0xff]
    %v315 = vld [vmem:[%s0 + $0x9a] sm:$0x3]
    %v316 = vld [vmem:[%s0 + $0xa2] sm:$0xff]
    %v317 = vld [vmem:[%s0 + $0xaa] sm:$0xff]
    %v318 = vld [vmem:[%s0 + $0xb2] sm:$0xff]
    %v319 = vld [vmem:[%s0 + $0xba] sm:$0x3]
    %v320 = vld [vmem:[%s0 + $0xc2] sm:$0xff]
    %v321 = vld [vmem:[%s0 + $0xca] sm:$0xff]
    %v322 = vld [vmem:[%s0 + $0xd2] sm:$0xff]
    %v323 = vld [vmem:[%s0 + $0xda] sm:$0x3]
    %v324 = vld [vmem:[%s0 + $0xe2] sm:$0xff]
    %v325 = vld [vmem:[%s0 + $0xea] sm:$0xff]
    %v326 = vld [vmem:[%s0 + $0xf2] sm:$0xff]
    %v327 = vld [vmem:[%s0 + $0xfa] sm:$0x3]
    %v328 = vld [vmem:[%s0 + $0x102] sm:$0xff]
    %v329 = vld [vmem:[%s0 + $0x10a] sm:$0xff]
    %v330 = vld [vmem:[%s0 + $0x112] sm:$0xff]
    %v331 = vld [vmem:[%s0 + $0x11a] sm:$0x3]
    %v332 = vld [vmem:[%s0 + $0x122] sm:$0xff]
    %v333 = vld [vmem:[%s0 + $0x12a] sm:$0xff]
    %v334 = vld [vmem:[%s0 + $0x132] sm:$0xff]
    %v335 = vld [vmem:[%s0 + $0x13a] sm:$0x3]
    %v336 = vld [vmem:[%s0 + $0x142] sm:$0xff]
    %v337 = vld [vmem:[%s0 + $0x14a] sm:$0xff]
    %v338 = vld [vmem:[%s0 + $0x152] sm:$0xff]
    %v339 = vld [vmem:[%s0 + $0x15a] sm:$0x3]
    %v340 = vld [vmem:[%s0 + $0x162] sm:$0xff]
    %v341 = vld [vmem:[%s0 + $0x16a] sm:$0xff]
    %v342 = vld [vmem:[%s0 + $0x172] sm:$0xff]
    %v343 = vld [vmem:[%s0 + $0x17a] sm:$0x3]
    %v344 = vld [vmem:[%s0 + $0x182] sm:$0xff]
    %v345 = vld [vmem:[%s0 + $0x18a] sm:$0xff]
    %v346 = vld [vmem:[%s0 + $0x192] sm:$0xff]
    %v347 = vld [vmem:[%s0 + $0x19a] sm:$0x3]
    %v348 = vld [vmem:[%s0 + $0x1a2] sm:$0xff]
    %v349 = vld [vmem:[%s0 + $0x1aa] sm:$0xff]
    %v350 = vld [vmem:[%s0 + $0x1b2] sm:$0xff]
    %v351 = vld [vmem:[%s0 + $0x1ba] sm:$0x3]
    %v352 = vld [vmem:[%s0 + $0x1c2] sm:$0xff]
    %v353 = vld [vmem:[%s0 + $0x1ca] sm:$0xff]
    %v354 = vld [vmem:[%s0 + $0x1d2] sm:$0xff]
    %v355 = vld [vmem:[%s0 + $0x1da] sm:$0x3]
    %v356 = vld [vmem:[%s0 + $0x1e2] sm:$0xff]
    %v357 = vld [vmem:[%s0 + $0x1ea] sm:$0xff]
    %v358 = vld [vmem:[%s0 + $0x1f2] sm:$0xff]
    %v359 = vld [vmem:[%s0 + $0x1fa] sm:$0x3]
    %v360 = vld [vmem:[%s0 + $0x202] sm:$0xff]
    %v361 = vld [vmem:[%s0 + $0x20a] sm:$0xff]
    %v362 = vld [vmem:[%s0 + $0x212] sm:$0xff]
    %v363 = vld [vmem:[%s0 + $0x21a] sm:$0x3]
    %v364 = vld [vmem:[%s0 + $0x222] sm:$0xff]
    %v365 = vld [vmem:[%s0 + $0x22a] sm:$0xff]
    %v366 = vld [vmem:[%s0 + $0x232] sm:$0xff]
    %v367 = vld [vmem:[%s0 + $0x23a] sm:$0x3]
    %v368 = vld [vmem:[%s0 + $0x242] sm:$0xff]
    %v369 = vld [vmem:[%s0 + $0x24a] sm:$0xff]
    %v370 = vld [vmem:[%s0 + $0x252] sm:$0xff]
    %v371 = vld [vmem:[%s0 + $0x25a] sm:$0x3]
    %v372 = vld [vmem:[%s0 + $0x262] sm:$0xff]
    %v373 = vld [vmem:[%s0 + $0x26a] sm:$0xff]
    %v374 = vld [vmem:[%s0 + $0x272] sm:$0xff]
    %v375 = vld [vmem:[%s0 + $0x27a] sm:$0x3]
    %v376 = vld [vmem:[%s0 + $0x282] sm:$0xff]
    %v377 = vld [vmem:[%s0 + $0x28a] sm:$0xff]
    %v378 = vld [vmem:[%s0 + $0x292] sm:$0xff]
    %v379 = vld [vmem:[%s0 + $0x29a] sm:$0x3]
    %v380 = vld [vmem:[%s0 + $0x2a2] sm:$0xff]
    %v381 = vld [vmem:[%s0 + $0x2aa] sm:$0xff]
    %v382 = vld [vmem:[%s0 + $0x2b2] sm:$0xff]
    %v383 = vld [vmem:[%s0 + $0x2ba] sm:$0x3]
    %v384 = vld [vmem:[%s0 + $0x2c2] sm:$0xff]
    %v385 = vld [vmem:[%s0 + $0x2ca] sm:$0xff]
    %v386 = vld [vmem:[%s0 + $0x2d2] sm:$0xff]
    %v387 = vld [vmem:[%s0 + $0x2da] sm:$0x3]
    %v388 = vld [vmem:[%s0 + $0x2e2] sm:$0xff]
    %v389 = vld [vmem:[%s0 + $0x2ea] sm:$0xff]
    %v390 = vld [vmem:[%s0 + $0x2f2] sm:$0xff]
    %v391 = vld [vmem:[%s0 + $0x2fa] sm:$0x3]
    %v392 = vld [vmem:[%s0 + $0x302] sm:$0xff]
    %v393 = vld [vmem:[%s0 + $0x30a] sm:$0xff]
    %v394 = vld [vmem:[%s0 + $0x312] sm:$0xff]
    %v395 = vld [vmem:[%s0 + $0x31a] sm:$0x3]
    %v396 = vld [vmem:[%s0 + $0x322] sm:$0xff]
    %v397 = vld [vmem:[%s0 + $0x32a] sm:$0xff]
    %v398 = vld [vmem:[%s0 + $0x332] sm:$0xff]
    %v399 = vld [vmem:[%s0 + $0x33a] sm:$0x3]
    %s400 = scalar_lea.vmem %s0, 32
    %v401 = vld [vmem:[%s400] sm:$0xff]
    %v402 = vld [vmem:[%s400 + $0x8] sm:$0xff]
    %v403 = vld [vmem:[%s400 + $0x10] sm:$0xff]
    %v404 = vld [vmem:[%s400 + $0x18] sm:$0x3]
    %v405 = vld [vmem:[%s400 + $0x20] sm:$0xff]
    %v406 = vld [vmem:[%s400 + $0x28] sm:$0xff]
    %v407 = vld [vmem:[%s400 + $0x30] sm:$0xff]
    %v408 = vld [vmem:[%s400 + $0x38] sm:$0x3]
    %v409 = vld [vmem:[%s400 + $0x40] sm:$0xff]
    %v410 = vld [vmem:[%s400 + $0x48] sm:$0xff]
    %v411 = vld [vmem:[%s400 + $0x50] sm:$0xff]
    %v412 = vld [vmem:[%s400 + $0x58] sm:$0x3]
    %v413 = vld [vmem:[%s400 + $0x60] sm:$0xff]
    %v414 = vld [vmem:[%s400 + $0x68] sm:$0xff]
    %v415 = vld [vmem:[%s400 + $0x70] sm:$0xff]
    %v416 = vld [vmem:[%s400 + $0x78] sm:$0x3]
    %v417 = vld [vmem:[%s400 + $0x80] sm:$0xff]
    %v418 = vld [vmem:[%s400 + $0x88] sm:$0xff]
    %v419 = vld [vmem:[%s400 + $0x90] sm:$0xff]
    %v420 = vld [vmem:[%s400 + $0x98] sm:$0x3]
    %v421 = vld [vmem:[%s400 + $0xa0] sm:$0xff]
    %v422 = vld [vmem:[%s400 + $0xa8] sm:$0xff]
    %v423 = vld [vmem:[%s400 + $0xb0] sm:$0xff]
    %v424 = vld [vmem:[%s400 + $0xb8] sm:$0x3]
    %v425 = vld [vmem:[%s400 + $0xc0] sm:$0xff]
    %v426 = vld [vmem:[%s400 + $0xc8] sm:$0xff]
    %v427 = vld [vmem:[%s400 + $0xd0] sm:$0xff]
    %v428 = vld [vmem:[%s400 + $0xd8] sm:$0x3]
    %v429 = vld [vmem:[%s400 + $0xe0] sm:$0xff]
    %v430 = vld [vmem:[%s400 + $0xe8] sm:$0xff]
    %v431 = vld [vmem:[%s400 + $0xf0] sm:$0xff]
    %v432 = vld [vmem:[%s400 + $0xf8] sm:$0x3]
    %v433 = vld [vmem:[%s400 + $0x100] sm:$0xff]
    %v434 = vld [vmem:[%s400 + $0x108] sm:$0xff]
    %v435 = vld [vmem:[%s400 + $0x110] sm:$0xff]
    %v436 = vld [vmem:[%s400 + $0x118] sm:$0x3]
    %v437 = vld [vmem:[%s400 + $0x120] sm:$0xff]
    %v438 = vld [vmem:[%s400 + $0x128] sm:$0xff]
    %v439 = vld [vmem:[%s400 + $0x130] sm:$0xff]
    %v440 = vld [vmem:[%s400 + $0x138] sm:$0x3]
    %v441 = vld [vmem:[%s400 + $0x140] sm:$0xff]
    %v442 = vld [vmem:[%s400 + $0x148] sm:$0xff]
    %v443 = vld [vmem:[%s400 + $0x150] sm:$0xff]
    %v444 = vld [vmem:[%s400 + $0x158] sm:$0x3]
    %v445 = vld [vmem:[%s400 + $0x160] sm:$0xff]
    %v446 = vld [vmem:[%s400 + $0x168] sm:$0xff]
    %v447 = vld [vmem:[%s400 + $0x170] sm:$0xff]
    %v448 = vld [vmem:[%s400 + $0x178] sm:$0x3]
    %v449 = vld [vmem:[%s400 + $0x180] sm:$0xff]
    %v450 = vld [vmem:[%s400 + $0x188] sm:$0xff]
    %v451 = vld [vmem:[%s400 + $0x190] sm:$0xff]
    %v452 = vld [vmem:[%s400 + $0x198] sm:$0x3]
    %v453 = vld [vmem:[%s400 + $0x1a0] sm:$0xff]
    %v454 = vld [vmem:[%s400 + $0x1a8] sm:$0xff]
    %v455 = vld [vmem:[%s400 + $0x1b0] sm:$0xff]
    %v456 = vld [vmem:[%s400 + $0x1b8] sm:$0x3]
    %v457 = vld [vmem:[%s400 + $0x1c0] sm:$0xff]
    %v458 = vld [vmem:[%s400 + $0x1c8] sm:$0xff]
    %v459 = vld [vmem:[%s400 + $0x1d0] sm:$0xff]
    %v460 = vld [vmem:[%s400 + $0x1d8] sm:$0x3]
    %v461 = vld [vmem:[%s400 + $0x1e0] sm:$0xff]
    %v462 = vld [vmem:[%s400 + $0x1e8] sm:$0xff]
    %v463 = vld [vmem:[%s400 + $0x1f0] sm:$0xff]
    %v464 = vld [vmem:[%s400 + $0x1f8] sm:$0x3]
    %v465 = vld [vmem:[%s400 + $0x200] sm:$0xff]
    %v466 = vld [vmem:[%s400 + $0x208] sm:$0xff]
    %v467 = vld [vmem:[%s400 + $0x210] sm:$0xff]
    %v468 = vld [vmem:[%s400 + $0x218] sm:$0x3]
    %v469 = vld [vmem:[%s400 + $0x220] sm:$0xff]
    %v470 = vld [vmem:[%s400 + $0x228] sm:$0xff]
    %v471 = vld [vmem:[%s400 + $0x230] sm:$0xff]
    %v472 = vld [vmem:[%s400 + $0x238] sm:$0x3]
    %v473 = vld [vmem:[%s400 + $0x240] sm:$0xff]
    %v474 = vld [vmem:[%s400 + $0x248] sm:$0xff]
    %v475 = vld [vmem:[%s400 + $0x250] sm:$0xff]
    %v476 = vld [vmem:[%s400 + $0x258] sm:$0x3]
    %v477 = vld [vmem:[%s400 + $0x260] sm:$0xff]
    %v478 = vld [vmem:[%s400 + $0x268] sm:$0xff]
    %v479 = vld [vmem:[%s400 + $0x270] sm:$0xff]
    %v480 = vld [vmem:[%s400 + $0x278] sm:$0x3]
    %v481 = vld [vmem:[%s400 + $0x280] sm:$0xff]
    %v482 = vld [vmem:[%s400 + $0x288] sm:$0xff]
    %v483 = vld [vmem:[%s400 + $0x290] sm:$0xff]
    %v484 = vld [vmem:[%s400 + $0x298] sm:$0x3]
    %v485 = vld [vmem:[%s400 + $0x2a0] sm:$0xff]
    %v486 = vld [vmem:[%s400 + $0x2a8] sm:$0xff]
    %v487 = vld [vmem:[%s400 + $0x2b0] sm:$0xff]
    %v488 = vld [vmem:[%s400 + $0x2b8] sm:$0x3]
    %v489 = vld [vmem:[%s400 + $0x2c0] sm:$0xff]
    %v490 = vld [vmem:[%s400 + $0x2c8] sm:$0xff]
    %v491 = vld [vmem:[%s400 + $0x2d0] sm:$0xff]
    %v492 = vld [vmem:[%s400 + $0x2d8] sm:$0x3]
    %v493 = vld [vmem:[%s400 + $0x2e0] sm:$0xff]
    %v494 = vld [vmem:[%s400 + $0x2e8] sm:$0xff]
    %v495 = vld [vmem:[%s400 + $0x2f0] sm:$0xff]
    %v496 = vld [vmem:[%s400 + $0x2f8] sm:$0x3]
    %v497 = vld [vmem:[%s400 + $0x300] sm:$0xff]
    %v498 = vld [vmem:[%s400 + $0x308] sm:$0xff]
    %v499 = vld [vmem:[%s400 + $0x310] sm:$0xff]
    %v500 = vld [vmem:[%s400 + $0x318] sm:$0x3]
    %v501 = vld [vmem:[%s400 + $0x320] sm:$0xff]
    %v502 = vld [vmem:[%s400 + $0x328] sm:$0xff]
    %v503 = vld [vmem:[%s400 + $0x330] sm:$0xff]
    %v504 = vld [vmem:[%s400 + $0x338] sm:$0x3]
    %v505 = vld [vmem:[%s400 + $0x1] sm:$0xff]
    %v506 = vld [vmem:[%s400 + $0x9] sm:$0xff]
    %v507 = vld [vmem:[%s400 + $0x11] sm:$0xff]
    %v508 = vld [vmem:[%s400 + $0x19] sm:$0x3]
    %v509 = vld [vmem:[%s400 + $0x21] sm:$0xff]
    %v510 = vld [vmem:[%s400 + $0x29] sm:$0xff]
    %v511 = vld [vmem:[%s400 + $0x31] sm:$0xff]
    %v512 = vld [vmem:[%s400 + $0x39] sm:$0x3]
    %v513 = vld [vmem:[%s400 + $0x41] sm:$0xff]
    %v514 = vld [vmem:[%s400 + $0x49] sm:$0xff]
    %v515 = vld [vmem:[%s400 + $0x51] sm:$0xff]
    %v516 = vld [vmem:[%s400 + $0x59] sm:$0x3]
    %v517 = vld [vmem:[%s400 + $0x61] sm:$0xff]
    %v518 = vld [vmem:[%s400 + $0x69] sm:$0xff]
    %v519 = vld [vmem:[%s400 + $0x71] sm:$0xff]
    %v520 = vld [vmem:[%s400 + $0x79] sm:$0x3]
    %v521 = vld [vmem:[%s400 + $0x81] sm:$0xff]
    %v522 = vld [vmem:[%s400 + $0x89] sm:$0xff]
    %v523 = vld [vmem:[%s400 + $0x91] sm:$0xff]
    %v524 = vld [vmem:[%s400 + $0x99] sm:$0x3]
    %v525 = vld [vmem:[%s400 + $0xa1] sm:$0xff]
    %v526 = vld [vmem:[%s400 + $0xa9] sm:$0xff]
    %v527 = vld [vmem:[%s400 + $0xb1] sm:$0xff]
    %v528 = vld [vmem:[%s400 + $0xb9] sm:$0x3]
    %v529 = vld [vmem:[%s400 + $0xc1] sm:$0xff]
    %v530 = vld [vmem:[%s400 + $0xc9] sm:$0xff]
    %v531 = vld [vmem:[%s400 + $0xd1] sm:$0xff]
    %v532 = vld [vmem:[%s400 + $0xd9] sm:$0x3]
    %v533 = vld [vmem:[%s400 + $0xe1] sm:$0xff]
    %v534 = vld [vmem:[%s400 + $0xe9] sm:$0xff]
    %v535 = vld [vmem:[%s400 + $0xf1] sm:$0xff]
    %v536 = vld [vmem:[%s400 + $0xf9] sm:$0x3]
    %v537 = vld [vmem:[%s400 + $0x101] sm:$0xff]
    %v538 = vld [vmem:[%s400 + $0x109] sm:$0xff]
    %v539 = vld [vmem:[%s400 + $0x111] sm:$0xff]
    %v540 = vld [vmem:[%s400 + $0x119] sm:$0x3]
    %v541 = vld [vmem:[%s400 + $0x121] sm:$0xff]
    %v542 = vld [vmem:[%s400 + $0x129] sm:$0xff]
    %v543 = vld [vmem:[%s400 + $0x131] sm:$0xff]
    %v544 = vld [vmem:[%s400 + $0x139] sm:$0x3]
    %v545 = vld [vmem:[%s400 + $0x141] sm:$0xff]
    %v546 = vld [vmem:[%s400 + $0x149] sm:$0xff]
    %v547 = vld [vmem:[%s400 + $0x151] sm:$0xff]
    %v548 = vld [vmem:[%s400 + $0x159] sm:$0x3]
    %v549 = vld [vmem:[%s400 + $0x161] sm:$0xff]
    %v550 = vld [vmem:[%s400 + $0x169] sm:$0xff]
    %v551 = vld [vmem:[%s400 + $0x171] sm:$0xff]
    %v552 = vld [vmem:[%s400 + $0x179] sm:$0x3]
    %v553 = vld [vmem:[%s400 + $0x181] sm:$0xff]
    %v554 = vld [vmem:[%s400 + $0x189] sm:$0xff]
    %v555 = vld [vmem:[%s400 + $0x191] sm:$0xff]
    %v556 = vld [vmem:[%s400 + $0x199] sm:$0x3]
    %v557 = vld [vmem:[%s400 + $0x1a1] sm:$0xff]
    %v558 = vld [vmem:[%s400 + $0x1a9] sm:$0xff]
    %v559 = vld [vmem:[%s400 + $0x1b1] sm:$0xff]
    %v560 = vld [vmem:[%s400 + $0x1b9] sm:$0x3]
    %v561 = vld [vmem:[%s400 + $0x1c1] sm:$0xff]
    %v562 = vld [vmem:[%s400 + $0x1c9] sm:$0xff]
    %v563 = vld [vmem:[%s400 + $0x1d1] sm:$0xff]
    %v564 = vld [vmem:[%s400 + $0x1d9] sm:$0x3]
    %v565 = vld [vmem:[%s400 + $0x1e1] sm:$0xff]
    %v566 = vld [vmem:[%s400 + $0x1e9] sm:$0xff]
    %v567 = vld [vmem:[%s400 + $0x1f1] sm:$0xff]
    %v568 = vld [vmem:[%s400 + $0x1f9] sm:$0x3]
    %v569 = vld [vmem:[%s400 + $0x201] sm:$0xff]
    %v570 = vld [vmem:[%s400 + $0x209] sm:$0xff]
    %v571 = vld [vmem:[%s400 + $0x211] sm:$0xff]
    %v572 = vld [vmem:[%s400 + $0x219] sm:$0x3]
    %v573 = vld [vmem:[%s400 + $0x221] sm:$0xff]
    %v574 = vld [vmem:[%s400 + $0x229] sm:$0xff]
    %v575 = vld [vmem:[%s400 + $0x231] sm:$0xff]
    %v576 = vld [vmem:[%s400 + $0x239] sm:$0x3]
    %v577 = vld [vmem:[%s400 + $0x241] sm:$0xff]
    %v578 = vld [vmem:[%s400 + $0x249] sm:$0xff]
    %v579 = vld [vmem:[%s400 + $0x251] sm:$0xff]
    %v580 = vld [vmem:[%s400 + $0x259] sm:$0x3]
    %v581 = vld [vmem:[%s400 + $0x261] sm:$0xff]
    %v582 = vld [vmem:[%s400 + $0x269] sm:$0xff]
    %v583 = vld [vmem:[%s400 + $0x271] sm:$0xff]
    %v584 = vld [vmem:[%s400 + $0x279] sm:$0x3]
    %v585 = vld [vmem:[%s400 + $0x281] sm:$0xff]
    %v586 = vld [vmem:[%s400 + $0x289] sm:$0xff]
    %v587 = vld [vmem:[%s400 + $0x291] sm:$0xff]
    %v588 = vld [vmem:[%s400 + $0x299] sm:$0x3]
    %v589 = vld [vmem:[%s400 + $0x2a1] sm:$0xff]
    %v590 = vld [vmem:[%s400 + $0x2a9] sm:$0xff]
    %v591 = vld [vmem:[%s400 + $0x2b1] sm:$0xff]
    %v592 = vld [vmem:[%s400 + $0x2b9] sm:$0x3]
    %v593 = vld [vmem:[%s400 + $0x2c1] sm:$0xff]
    %v594 = vld [vmem:[%s400 + $0x2c9] sm:$0xff]
    %v595 = vld [vmem:[%s400 + $0x2d1] sm:$0xff]
    %v596 = vld [vmem:[%s400 + $0x2d9] sm:$0x3]
    %v597 = vld [vmem:[%s400 + $0x2e1] sm:$0xff]
    %v598 = vld [vmem:[%s400 + $0x2e9] sm:$0xff]
    %v599 = vld [vmem:[%s400 + $0x2f1] sm:$0xff]
    %v600 = vld [vmem:[%s400 + $0x2f9] sm:$0x3]
    %v601 = vld [vmem:[%s400 + $0x301] sm:$0xff]
    %v602 = vld [vmem:[%s400 + $0x309] sm:$0xff]
    %v603 = vld [vmem:[%s400 + $0x311] sm:$0xff]
    %v604 = vld [vmem:[%s400 + $0x319] sm:$0x3]
    %v605 = vld [vmem:[%s400 + $0x321] sm:$0xff]
    %v606 = vld [vmem:[%s400 + $0x329] sm:$0xff]
    %v607 = vld [vmem:[%s400 + $0x331] sm:$0xff]
    %v608 = vld [vmem:[%s400 + $0x339] sm:$0x3]
    %v609 = vld [vmem:[%s400 + $0x2] sm:$0xff]
    %v610 = vld [vmem:[%s400 + $0xa] sm:$0xff]
    %v611 = vld [vmem:[%s400 + $0x12] sm:$0xff]
    %v612 = vld [vmem:[%s400 + $0x1a] sm:$0x3]
    %v613 = vld [vmem:[%s400 + $0x22] sm:$0xff]
    %v614 = vld [vmem:[%s400 + $0x2a] sm:$0xff]
    %v615 = vld [vmem:[%s400 + $0x32] sm:$0xff]
    %v616 = vld [vmem:[%s400 + $0x3a] sm:$0x3]
    %v617 = vld [vmem:[%s400 + $0x42] sm:$0xff]
    %v618 = vld [vmem:[%s400 + $0x4a] sm:$0xff]
    %v619 = vld [vmem:[%s400 + $0x52] sm:$0xff]
    %v620 = vld [vmem:[%s400 + $0x5a] sm:$0x3]
    %v621 = vld [vmem:[%s400 + $0x62] sm:$0xff]
    %v622 = vld [vmem:[%s400 + $0x6a] sm:$0xff]
    %v623 = vld [vmem:[%s400 + $0x72] sm:$0xff]
    %v624 = vld [vmem:[%s400 + $0x7a] sm:$0x3]
    %v625 = vld [vmem:[%s400 + $0x82] sm:$0xff]
    %v626 = vld [vmem:[%s400 + $0x8a] sm:$0xff]
    %v627 = vld [vmem:[%s400 + $0x92] sm:$0xff]
    %v628 = vld [vmem:[%s400 + $0x9a] sm:$0x3]
    %v629 = vld [vmem:[%s400 + $0xa2] sm:$0xff]
    %v630 = vld [vmem:[%s400 + $0xaa] sm:$0xff]
    %v631 = vld [vmem:[%s400 + $0xb2] sm:$0xff]
    %v632 = vld [vmem:[%s400 + $0xba] sm:$0x3]
    %v633 = vld [vmem:[%s400 + $0xc2] sm:$0xff]
    %v634 = vld [vmem:[%s400 + $0xca] sm:$0xff]
    %v635 = vld [vmem:[%s400 + $0xd2] sm:$0xff]
    %v636 = vld [vmem:[%s400 + $0xda] sm:$0x3]
    %v637 = vld [vmem:[%s400 + $0xe2] sm:$0xff]
    %v638 = vld [vmem:[%s400 + $0xea] sm:$0xff]
    %v639 = vld [vmem:[%s400 + $0xf2] sm:$0xff]
    %v640 = vld [vmem:[%s400 + $0xfa] sm:$0x3]
    %v641 = vld [vmem:[%s400 + $0x102] sm:$0xff]
    %v642 = vld [vmem:[%s400 + $0x10a] sm:$0xff]
    %v643 = vld [vmem:[%s400 + $0x112] sm:$0xff]
    %v644 = vld [vmem:[%s400 + $0x11a] sm:$0x3]
    %v645 = vld [vmem:[%s400 + $0x122] sm:$0xff]
    %v646 = vld [vmem:[%s400 + $0x12a] sm:$0xff]
    %v647 = vld [vmem:[%s400 + $0x132] sm:$0xff]
    %v648 = vld [vmem:[%s400 + $0x13a] sm:$0x3]
    %v649 = vld [vmem:[%s400 + $0x142] sm:$0xff]
    %v650 = vld [vmem:[%s400 + $0x14a] sm:$0xff]
    %v651 = vld [vmem:[%s400 + $0x152] sm:$0xff]
    %v652 = vld [vmem:[%s400 + $0x15a] sm:$0x3]
    %v653 = vld [vmem:[%s400 + $0x162] sm:$0xff]
    %v654 = vld [vmem:[%s400 + $0x16a] sm:$0xff]
    %v655 = vld [vmem:[%s400 + $0x172] sm:$0xff]
    %v656 = vld [vmem:[%s400 + $0x17a] sm:$0x3]
    %v657 = vld [vmem:[%s400 + $0x182] sm:$0xff]
    %v658 = vld [vmem:[%s400 + $0x18a] sm:$0xff]
    %v659 = vld [vmem:[%s400 + $0x192] sm:$0xff]
    %v660 = vld [vmem:[%s400 + $0x19a] sm:$0x3]
    %v661 = vld [vmem:[%s400 + $0x1a2] sm:$0xff]
    %v662 = vld [vmem:[%s400 + $0x1aa] sm:$0xff]
    %v663 = vld [vmem:[%s400 + $0x1b2] sm:$0xff]
    %v664 = vld [vmem:[%s400 + $0x1ba] sm:$0x3]
    %v665 = vld [vmem:[%s400 + $0x1c2] sm:$0xff]
    %v666 = vld [vmem:[%s400 + $0x1ca] sm:$0xff]
    %v667 = vld [vmem:[%s400 + $0x1d2] sm:$0xff]
    %v668 = vld [vmem:[%s400 + $0x1da] sm:$0x3]
    %v669 = vld [vmem:[%s400 + $0x1e2] sm:$0xff]
    %v670 = vld [vmem:[%s400 + $0x1ea] sm:$0xff]
    %v671 = vld [vmem:[%s400 + $0x1f2] sm:$0xff]
    %v672 = vld [vmem:[%s400 + $0x1fa] sm:$0x3]
    %v673 = vld [vmem:[%s400 + $0x202] sm:$0xff]
    %v674 = vld [vmem:[%s400 + $0x20a] sm:$0xff]
    %v675 = vld [vmem:[%s400 + $0x212] sm:$0xff]
    %v676 = vld [vmem:[%s400 + $0x21a] sm:$0x3]
    %v677 = vld [vmem:[%s400 + $0x222] sm:$0xff]
    %v678 = vld [vmem:[%s400 + $0x22a] sm:$0xff]
    %v679 = vld [vmem:[%s400 + $0x232] sm:$0xff]
    %v680 = vld [vmem:[%s400 + $0x23a] sm:$0x3]
    %v681 = vld [vmem:[%s400 + $0x242] sm:$0xff]
    %v682 = vld [vmem:[%s400 + $0x24a] sm:$0xff]
    %v683 = vld [vmem:[%s400 + $0x252] sm:$0xff]
    %v684 = vld [vmem:[%s400 + $0x25a] sm:$0x3]
    %v685 = vld [vmem:[%s400 + $0x262] sm:$0xff]
    %v686 = vld [vmem:[%s400 + $0x26a] sm:$0xff]
    %v687 = vld [vmem:[%s400 + $0x272] sm:$0xff]
    %v688 = vld [vmem:[%s400 + $0x27a] sm:$0x3]
    %v689 = vld [vmem:[%s400 + $0x282] sm:$0xff]
    %v690 = vld [vmem:[%s400 + $0x28a] sm:$0xff]
    %v691 = vld [vmem:[%s400 + $0x292] sm:$0xff]
    %v692 = vld [vmem:[%s400 + $0x29a] sm:$0x3]
    %v693 = vld [vmem:[%s400 + $0x2a2] sm:$0xff]
    %v694 = vld [vmem:[%s400 + $0x2aa] sm:$0xff]
    %v695 = vld [vmem:[%s400 + $0x2b2] sm:$0xff]
    %v696 = vld [vmem:[%s400 + $0x2ba] sm:$0x3]
    %v697 = vld [vmem:[%s400 + $0x2c2] sm:$0xff]
    %v698 = vld [vmem:[%s400 + $0x2ca] sm:$0xff]
    %v699 = vld [vmem:[%s400 + $0x2d2] sm:$0xff]
    %v700 = vld [vmem:[%s400 + $0x2da] sm:$0x3]
    %v701 = vld [vmem:[%s400 + $0x2e2] sm:$0xff]
    %v702 = vld [vmem:[%s400 + $0x2ea] sm:$0xff]
    %v703 = vld [vmem:[%s400 + $0x2f2] sm:$0xff]
    %v704 = vld [vmem:[%s400 + $0x2fa] sm:$0x3]
    %v705 = vld [vmem:[%s400 + $0x302] sm:$0xff]
    %v706 = vld [vmem:[%s400 + $0x30a] sm:$0xff]
    %v707 = vld [vmem:[%s400 + $0x312] sm:$0xff]
    %v708 = vld [vmem:[%s400 + $0x31a] sm:$0x3]
    %v709 = vld [vmem:[%s400 + $0x322] sm:$0xff]
    %v710 = vld [vmem:[%s400 + $0x32a] sm:$0xff]
    %v711 = vld [vmem:[%s400 + $0x332] sm:$0xff]
    %v712 = vld [vmem:[%s400 + $0x33a] sm:$0x3]
    %s713 = scalar_lea.vmem %s0, 64
    %v714 = vld [vmem:[%s713] sm:$0xff]
    %v715 = vld [vmem:[%s713 + $0x8] sm:$0xff]
    %v716 = vld [vmem:[%s713 + $0x10] sm:$0xff]
    %v717 = vld [vmem:[%s713 + $0x18] sm:$0x3]
    %v718 = vld [vmem:[%s713 + $0x20] sm:$0xff]
    %v719 = vld [vmem:[%s713 + $0x28] sm:$0xff]
    %v720 = vld [vmem:[%s713 + $0x30] sm:$0xff]
    %v721 = vld [vmem:[%s713 + $0x38] sm:$0x3]
    %v722 = vld [vmem:[%s713 + $0x40] sm:$0xff]
    %v723 = vld [vmem:[%s713 + $0x48] sm:$0xff]
    %v724 = vld [vmem:[%s713 + $0x50] sm:$0xff]
    %v725 = vld [vmem:[%s713 + $0x58] sm:$0x3]
    %v726 = vld [vmem:[%s713 + $0x60] sm:$0xff]
    %v727 = vld [vmem:[%s713 + $0x68] sm:$0xff]
    %v728 = vld [vmem:[%s713 + $0x70] sm:$0xff]
    %v729 = vld [vmem:[%s713 + $0x78] sm:$0x3]
    %v730 = vld [vmem:[%s713 + $0x80] sm:$0xff]
    %v731 = vld [vmem:[%s713 + $0x88] sm:$0xff]
    %v732 = vld [vmem:[%s713 + $0x90] sm:$0xff]
    %v733 = vld [vmem:[%s713 + $0x98] sm:$0x3]
    %v734 = vld [vmem:[%s713 + $0xa0] sm:$0xff]
    %v735 = vld [vmem:[%s713 + $0xa8] sm:$0xff]
    %v736 = vld [vmem:[%s713 + $0xb0] sm:$0xff]
    %v737 = vld [vmem:[%s713 + $0xb8] sm:$0x3]
    %v738 = vld [vmem:[%s713 + $0xc0] sm:$0xff]
    %v739 = vld [vmem:[%s713 + $0xc8] sm:$0xff]
    %v740 = vld [vmem:[%s713 + $0xd0] sm:$0xff]
    %v741 = vld [vmem:[%s713 + $0xd8] sm:$0x3]
    %v742 = vld [vmem:[%s713 + $0xe0] sm:$0xff]
    %v743 = vld [vmem:[%s713 + $0xe8] sm:$0xff]
    %v744 = vld [vmem:[%s713 + $0xf0] sm:$0xff]
    %v745 = vld [vmem:[%s713 + $0xf8] sm:$0x3]
    %v746 = vld [vmem:[%s713 + $0x100] sm:$0xff]
    %v747 = vld [vmem:[%s713 + $0x108] sm:$0xff]
    %v748 = vld [vmem:[%s713 + $0x110] sm:$0xff]
    %v749 = vld [vmem:[%s713 + $0x118] sm:$0x3]
    %v750 = vld [vmem:[%s713 + $0x120] sm:$0xff]
    %v751 = vld [vmem:[%s713 + $0x128] sm:$0xff]
    %v752 = vld [vmem:[%s713 + $0x130] sm:$0xff]
    %v753 = vld [vmem:[%s713 + $0x138] sm:$0x3]
    %v754 = vld [vmem:[%s713 + $0x140] sm:$0xff]
    %v755 = vld [vmem:[%s713 + $0x148] sm:$0xff]
    %v756 = vld [vmem:[%s713 + $0x150] sm:$0xff]
    %v757 = vld [vmem:[%s713 + $0x158] sm:$0x3]
    %v758 = vld [vmem:[%s713 + $0x160] sm:$0xff]
    %v759 = vld [vmem:[%s713 + $0x168] sm:$0xff]
    %v760 = vld [vmem:[%s713 + $0x170] sm:$0xff]
    %v761 = vld [vmem:[%s713 + $0x178] sm:$0x3]
    %v762 = vld [vmem:[%s713 + $0x180] sm:$0xff]
    %v763 = vld [vmem:[%s713 + $0x188] sm:$0xff]
    %v764 = vld [vmem:[%s713 + $0x190] sm:$0xff]
    %v765 = vld [vmem:[%s713 + $0x198] sm:$0x3]
    %v766 = vld [vmem:[%s713 + $0x1a0] sm:$0xff]
    %v767 = vld [vmem:[%s713 + $0x1a8] sm:$0xff]
    %v768 = vld [vmem:[%s713 + $0x1b0] sm:$0xff]
    %v769 = vld [vmem:[%s713 + $0x1b8] sm:$0x3]
    %v770 = vld [vmem:[%s713 + $0x1c0] sm:$0xff]
    %v771 = vld [vmem:[%s713 + $0x1c8] sm:$0xff]
    %v772 = vld [vmem:[%s713 + $0x1d0] sm:$0xff]
    %v773 = vld [vmem:[%s713 + $0x1d8] sm:$0x3]
    %v774 = vld [vmem:[%s713 + $0x1e0] sm:$0xff]
    %v775 = vld [vmem:[%s713 + $0x1e8] sm:$0xff]
    %v776 = vld [vmem:[%s713 + $0x1f0] sm:$0xff]
    %v777 = vld [vmem:[%s713 + $0x1f8] sm:$0x3]
    %v778 = vld [vmem:[%s713 + $0x200] sm:$0xff]
    %v779 = vld [vmem:[%s713 + $0x208] sm:$0xff]
    %v780 = vld [vmem:[%s713 + $0x210] sm:$0xff]
    %v781 = vld [vmem:[%s713 + $0x218] sm:$0x3]
    %v782 = vld [vmem:[%s713 + $0x220] sm:$0xff]
    %v783 = vld [vmem:[%s713 + $0x228] sm:$0xff]
    %v784 = vld [vmem:[%s713 + $0x230] sm:$0xff]
    %v785 = vld [vmem:[%s713 + $0x238] sm:$0x3]
    %v786 = vld [vmem:[%s713 + $0x240] sm:$0xff]
    %v787 = vld [vmem:[%s713 + $0x248] sm:$0xff]
    %v788 = vld [vmem:[%s713 + $0x250] sm:$0xff]
    %v789 = vld [vmem:[%s713 + $0x258] sm:$0x3]
    %v790 = vld [vmem:[%s713 + $0x260] sm:$0xff]
    %v791 = vld [vmem:[%s713 + $0x268] sm:$0xff]
    %v792 = vld [vmem:[%s713 + $0x270] sm:$0xff]
    %v793 = vld [vmem:[%s713 + $0x278] sm:$0x3]
    %v794 = vld [vmem:[%s713 + $0x280] sm:$0xff]
    %v795 = vld [vmem:[%s713 + $0x288] sm:$0xff]
    %v796 = vld [vmem:[%s713 + $0x290] sm:$0xff]
    %v797 = vld [vmem:[%s713 + $0x298] sm:$0x3]
    %v798 = vld [vmem:[%s713 + $0x2a0] sm:$0xff]
    %v799 = vld [vmem:[%s713 + $0x2a8] sm:$0xff]
    %v800 = vld [vmem:[%s713 + $0x2b0] sm:$0xff]
    %v801 = vld [vmem:[%s713 + $0x2b8] sm:$0x3]
    %v802 = vld [vmem:[%s713 + $0x2c0] sm:$0xff]
    %v803 = vld [vmem:[%s713 + $0x2c8] sm:$0xff]
    %v804 = vld [vmem:[%s713 + $0x2d0] sm:$0xff]
    %v805 = vld [vmem:[%s713 + $0x2d8] sm:$0x3]
    %v806 = vld [vmem:[%s713 + $0x2e0] sm:$0xff]
    %v807 = vld [vmem:[%s713 + $0x2e8] sm:$0xff]
    %v808 = vld [vmem:[%s713 + $0x2f0] sm:$0xff]
    %v809 = vld [vmem:[%s713 + $0x2f8] sm:$0x3]
    %v810 = vld [vmem:[%s713 + $0x300] sm:$0xff]
    %v811 = vld [vmem:[%s713 + $0x308] sm:$0xff]
    %v812 = vld [vmem:[%s713 + $0x310] sm:$0xff]
    %v813 = vld [vmem:[%s713 + $0x318] sm:$0x3]
    %v814 = vld [vmem:[%s713 + $0x320] sm:$0xff]
    %v815 = vld [vmem:[%s713 + $0x328] sm:$0xff]
    %v816 = vld [vmem:[%s713 + $0x330] sm:$0xff]
    %v817 = vld [vmem:[%s713 + $0x338] sm:$0x3]
    %v818 = vld [vmem:[%s713 + $0x1] sm:$0xff]
    %v819 = vld [vmem:[%s713 + $0x9] sm:$0xff]
    %v820 = vld [vmem:[%s713 + $0x11] sm:$0xff]
    %v821 = vld [vmem:[%s713 + $0x19] sm:$0x3]
    %v822 = vld [vmem:[%s713 + $0x21] sm:$0xff]
    %v823 = vld [vmem:[%s713 + $0x29] sm:$0xff]
    %v824 = vld [vmem:[%s713 + $0x31] sm:$0xff]
    %v825 = vld [vmem:[%s713 + $0x39] sm:$0x3]
    %v826 = vld [vmem:[%s713 + $0x41] sm:$0xff]
    %v827 = vld [vmem:[%s713 + $0x49] sm:$0xff]
    %v828 = vld [vmem:[%s713 + $0x51] sm:$0xff]
    %v829 = vld [vmem:[%s713 + $0x59] sm:$0x3]
    %v830 = vld [vmem:[%s713 + $0x61] sm:$0xff]
    %v831 = vld [vmem:[%s713 + $0x69] sm:$0xff]
    %v832 = vld [vmem:[%s713 + $0x71] sm:$0xff]
    %v833 = vld [vmem:[%s713 + $0x79] sm:$0x3]
    %v834 = vld [vmem:[%s713 + $0x81] sm:$0xff]
    %v835 = vld [vmem:[%s713 + $0x89] sm:$0xff]
    %v836 = vld [vmem:[%s713 + $0x91] sm:$0xff]
    %v837 = vld [vmem:[%s713 + $0x99] sm:$0x3]
    %v838 = vld [vmem:[%s713 + $0xa1] sm:$0xff]
    %v839 = vld [vmem:[%s713 + $0xa9] sm:$0xff]
    %v840 = vld [vmem:[%s713 + $0xb1] sm:$0xff]
    %v841 = vld [vmem:[%s713 + $0xb9] sm:$0x3]
    %v842 = vld [vmem:[%s713 + $0xc1] sm:$0xff]
    %v843 = vld [vmem:[%s713 + $0xc9] sm:$0xff]
    %v844 = vld [vmem:[%s713 + $0xd1] sm:$0xff]
    %v845 = vld [vmem:[%s713 + $0xd9] sm:$0x3]
    %v846 = vld [vmem:[%s713 + $0xe1] sm:$0xff]
    %v847 = vld [vmem:[%s713 + $0xe9] sm:$0xff]
    %v848 = vld [vmem:[%s713 + $0xf1] sm:$0xff]
    %v849 = vld [vmem:[%s713 + $0xf9] sm:$0x3]
    %v850 = vld [vmem:[%s713 + $0x101] sm:$0xff]
    %v851 = vld [vmem:[%s713 + $0x109] sm:$0xff]
    %v852 = vld [vmem:[%s713 + $0x111] sm:$0xff]
    %v853 = vld [vmem:[%s713 + $0x119] sm:$0x3]
    %v854 = vld [vmem:[%s713 + $0x121] sm:$0xff]
    %v855 = vld [vmem:[%s713 + $0x129] sm:$0xff]
    %v856 = vld [vmem:[%s713 + $0x131] sm:$0xff]
    %v857 = vld [vmem:[%s713 + $0x139] sm:$0x3]
    %v858 = vld [vmem:[%s713 + $0x141] sm:$0xff]
    %v859 = vld [vmem:[%s713 + $0x149] sm:$0xff]
    %v860 = vld [vmem:[%s713 + $0x151] sm:$0xff]
    %v861 = vld [vmem:[%s713 + $0x159] sm:$0x3]
    %v862 = vld [vmem:[%s713 + $0x161] sm:$0xff]
    %v863 = vld [vmem:[%s713 + $0x169] sm:$0xff]
    %v864 = vld [vmem:[%s713 + $0x171] sm:$0xff]
    %v865 = vld [vmem:[%s713 + $0x179] sm:$0x3]
    %v866 = vld [vmem:[%s713 + $0x181] sm:$0xff]
    %v867 = vld [vmem:[%s713 + $0x189] sm:$0xff]
    %v868 = vld [vmem:[%s713 + $0x191] sm:$0xff]
    %v869 = vld [vmem:[%s713 + $0x199] sm:$0x3]
    %v870 = vld [vmem:[%s713 + $0x1a1] sm:$0xff]
    %v871 = vld [vmem:[%s713 + $0x1a9] sm:$0xff]
    %v872 = vld [vmem:[%s713 + $0x1b1] sm:$0xff]
    %v873 = vld [vmem:[%s713 + $0x1b9] sm:$0x3]
    %v874 = vld [vmem:[%s713 + $0x1c1] sm:$0xff]
    %v875 = vld [vmem:[%s713 + $0x1c9] sm:$0xff]
    %v876 = vld [vmem:[%s713 + $0x1d1] sm:$0xff]
    %v877 = vld [vmem:[%s713 + $0x1d9] sm:$0x3]
    %v878 = vld [vmem:[%s713 + $0x1e1] sm:$0xff]
    %v879 = vld [vmem:[%s713 + $0x1e9] sm:$0xff]
    %v880 = vld [vmem:[%s713 + $0x1f1] sm:$0xff]
    %v881 = vld [vmem:[%s713 + $0x1f9] sm:$0x3]
    %v882 = vld [vmem:[%s713 + $0x201] sm:$0xff]
    %v883 = vld [vmem:[%s713 + $0x209] sm:$0xff]
    %v884 = vld [vmem:[%s713 + $0x211] sm:$0xff]
    %v885 = vld [vmem:[%s713 + $0x219] sm:$0x3]
    %v886 = vld [vmem:[%s713 + $0x221] sm:$0xff]
    %v887 = vld [vmem:[%s713 + $0x229] sm:$0xff]
    %v888 = vld [vmem:[%s713 + $0x231] sm:$0xff]
    %v889 = vld [vmem:[%s713 + $0x239] sm:$0x3]
    %v890 = vld [vmem:[%s713 + $0x241] sm:$0xff]
    %v891 = vld [vmem:[%s713 + $0x249] sm:$0xff]
    %v892 = vld [vmem:[%s713 + $0x251] sm:$0xff]
    %v893 = vld [vmem:[%s713 + $0x259] sm:$0x3]
    %v894 = vld [vmem:[%s713 + $0x261] sm:$0xff]
    %v895 = vld [vmem:[%s713 + $0x269] sm:$0xff]
    %v896 = vld [vmem:[%s713 + $0x271] sm:$0xff]
    %v897 = vld [vmem:[%s713 + $0x279] sm:$0x3]
    %v898 = vld [vmem:[%s713 + $0x281] sm:$0xff]
    %v899 = vld [vmem:[%s713 + $0x289] sm:$0xff]
    %v900 = vld [vmem:[%s713 + $0x291] sm:$0xff]
    %v901 = vld [vmem:[%s713 + $0x299] sm:$0x3]
    %v902 = vld [vmem:[%s713 + $0x2a1] sm:$0xff]
    %v903 = vld [vmem:[%s713 + $0x2a9] sm:$0xff]
    %v904 = vld [vmem:[%s713 + $0x2b1] sm:$0xff]
    %v905 = vld [vmem:[%s713 + $0x2b9] sm:$0x3]
    %v906 = vld [vmem:[%s713 + $0x2c1] sm:$0xff]
    %v907 = vld [vmem:[%s713 + $0x2c9] sm:$0xff]
    %v908 = vld [vmem:[%s713 + $0x2d1] sm:$0xff]
    %v909 = vld [vmem:[%s713 + $0x2d9] sm:$0x3]
    %v910 = vld [vmem:[%s713 + $0x2e1] sm:$0xff]
    %v911 = vld [vmem:[%s713 + $0x2e9] sm:$0xff]
    %v912 = vld [vmem:[%s713 + $0x2f1] sm:$0xff]
    %v913 = vld [vmem:[%s713 + $0x2f9] sm:$0x3]
    %v914 = vld [vmem:[%s713 + $0x301] sm:$0xff]
    %v915 = vld [vmem:[%s713 + $0x309] sm:$0xff]
    %v916 = vld [vmem:[%s713 + $0x311] sm:$0xff]
    %v917 = vld [vmem:[%s713 + $0x319] sm:$0x3]
    %v918 = vld [vmem:[%s713 + $0x321] sm:$0xff]
    %v919 = vld [vmem:[%s713 + $0x329] sm:$0xff]
    %v920 = vld [vmem:[%s713 + $0x331] sm:$0xff]
    %v921 = vld [vmem:[%s713 + $0x339] sm:$0x3]
    %v922 = vld [vmem:[%s713 + $0x2] sm:$0xff]
    %v923 = vld [vmem:[%s713 + $0xa] sm:$0xff]
    %v924 = vld [vmem:[%s713 + $0x12] sm:$0xff]
    %v925 = vld [vmem:[%s713 + $0x1a] sm:$0x3]
    %v926 = vld [vmem:[%s713 + $0x22] sm:$0xff]
    %v927 = vld [vmem:[%s713 + $0x2a] sm:$0xff]
    %v928 = vld [vmem:[%s713 + $0x32] sm:$0xff]
    %v929 = vld [vmem:[%s713 + $0x3a] sm:$0x3]
    %v930 = vld [vmem:[%s713 + $0x42] sm:$0xff]
    %v931 = vld [vmem:[%s713 + $0x4a] sm:$0xff]
    %v932 = vld [vmem:[%s713 + $0x52] sm:$0xff]
    %v933 = vld [vmem:[%s713 + $0x5a] sm:$0x3]
    %v934 = vld [vmem:[%s713 + $0x62] sm:$0xff]
    %v935 = vld [vmem:[%s713 + $0x6a] sm:$0xff]
    %v936 = vld [vmem:[%s713 + $0x72] sm:$0xff]
    %v937 = vld [vmem:[%s713 + $0x7a] sm:$0x3]
    %v938 = vld [vmem:[%s713 + $0x82] sm:$0xff]
    %v939 = vld [vmem:[%s713 + $0x8a] sm:$0xff]
    %v940 = vld [vmem:[%s713 + $0x92] sm:$0xff]
    %v941 = vld [vmem:[%s713 + $0x9a] sm:$0x3]
    %v942 = vld [vmem:[%s713 + $0xa2] sm:$0xff]
    %v943 = vld [vmem:[%s713 + $0xaa] sm:$0xff]
    %v944 = vld [vmem:[%s713 + $0xb2] sm:$0xff]
    %v945 = vld [vmem:[%s713 + $0xba] sm:$0x3]
    %v946 = vld [vmem:[%s713 + $0xc2] sm:$0xff]
    %v947 = vld [vmem:[%s713 + $0xca] sm:$0xff]
    %v948 = vld [vmem:[%s713 + $0xd2] sm:$0xff]
    %v949 = vld [vmem:[%s713 + $0xda] sm:$0x3]
    %v950 = vld [vmem:[%s713 + $0xe2] sm:$0xff]
    %v951 = vld [vmem:[%s713 + $0xea] sm:$0xff]
    %v952 = vld [vmem:[%s713 + $0xf2] sm:$0xff]
    %v953 = vld [vmem:[%s713 + $0xfa] sm:$0x3]
    %v954 = vld [vmem:[%s713 + $0x102] sm:$0xff]
    %v955 = vld [vmem:[%s713 + $0x10a] sm:$0xff]
    %v956 = vld [vmem:[%s713 + $0x112] sm:$0xff]
    %v957 = vld [vmem:[%s713 + $0x11a] sm:$0x3]
    %v958 = vld [vmem:[%s713 + $0x122] sm:$0xff]
    %v959 = vld [vmem:[%s713 + $0x12a] sm:$0xff]
    %v960 = vld [vmem:[%s713 + $0x132] sm:$0xff]
    %v961 = vld [vmem:[%s713 + $0x13a] sm:$0x3]
    %v962 = vld [vmem:[%s713 + $0x142] sm:$0xff]
    %v963 = vld [vmem:[%s713 + $0x14a] sm:$0xff]
    %v964 = vld [vmem:[%s713 + $0x152] sm:$0xff]
    %v965 = vld [vmem:[%s713 + $0x15a] sm:$0x3]
    %v966 = vld [vmem:[%s713 + $0x162] sm:$0xff]
    %v967 = vld [vmem:[%s713 + $0x16a] sm:$0xff]
    %v968 = vld [vmem:[%s713 + $0x172] sm:$0xff]
    %v969 = vld [vmem:[%s713 + $0x17a] sm:$0x3]
    %v970 = vld [vmem:[%s713 + $0x182] sm:$0xff]
    %v971 = vld [vmem:[%s713 + $0x18a] sm:$0xff]
    %v972 = vld [vmem:[%s713 + $0x192] sm:$0xff]
    %v973 = vld [vmem:[%s713 + $0x19a] sm:$0x3]
    %v974 = vld [vmem:[%s713 + $0x1a2] sm:$0xff]
    %v975 = vld [vmem:[%s713 + $0x1aa] sm:$0xff]
    %v976 = vld [vmem:[%s713 + $0x1b2] sm:$0xff]
    %v977 = vld [vmem:[%s713 + $0x1ba] sm:$0x3]
    %v978 = vld [vmem:[%s713 + $0x1c2] sm:$0xff]
    %v979 = vld [vmem:[%s713 + $0x1ca] sm:$0xff]
    %v980 = vld [vmem:[%s713 + $0x1d2] sm:$0xff]
    %v981 = vld [vmem:[%s713 + $0x1da] sm:$0x3]
    %v982 = vld [vmem:[%s713 + $0x1e2] sm:$0xff]
    %v983 = vld [vmem:[%s713 + $0x1ea] sm:$0xff]
    %v984 = vld [vmem:[%s713 + $0x1f2] sm:$0xff]
    %v985 = vld [vmem:[%s713 + $0x1fa] sm:$0x3]
    %v986 = vld [vmem:[%s713 + $0x202] sm:$0xff]
    %v987 = vld [vmem:[%s713 + $0x20a] sm:$0xff]
    %v988 = vld [vmem:[%s713 + $0x212] sm:$0xff]
    %v989 = vld [vmem:[%s713 + $0x21a] sm:$0x3]
    %v990 = vld [vmem:[%s713 + $0x222] sm:$0xff]
    %v991 = vld [vmem:[%s713 + $0x22a] sm:$0xff]
    %v992 = vld [vmem:[%s713 + $0x232] sm:$0xff]
    %v993 = vld [vmem:[%s713 + $0x23a] sm:$0x3]
    %v994 = vld [vmem:[%s713 + $0x242] sm:$0xff]
    %v995 = vld [vmem:[%s713 + $0x24a] sm:$0xff]
    %v996 = vld [vmem:[%s713 + $0x252] sm:$0xff]
    %v997 = vld [vmem:[%s713 + $0x25a] sm:$0x3]
    %v998 = vld [vmem:[%s713 + $0x262] sm:$0xff]
    %v999 = vld [vmem:[%s713 + $0x26a] sm:$0xff]
    %v1000 = vld [vmem:[%s713 + $0x272] sm:$0xff]
    %v1001 = vld [vmem:[%s713 + $0x27a] sm:$0x3]
    %v1002 = vld [vmem:[%s713 + $0x282] sm:$0xff]
    %v1003 = vld [vmem:[%s713 + $0x28a] sm:$0xff]
    %v1004 = vld [vmem:[%s713 + $0x292] sm:$0xff]
    %v1005 = vld [vmem:[%s713 + $0x29a] sm:$0x3]
    %v1006 = vld [vmem:[%s713 + $0x2a2] sm:$0xff]
    %v1007 = vld [vmem:[%s713 + $0x2aa] sm:$0xff]
    %v1008 = vld [vmem:[%s713 + $0x2b2] sm:$0xff]
    %v1009 = vld [vmem:[%s713 + $0x2ba] sm:$0x3]
    %v1010 = vld [vmem:[%s713 + $0x2c2] sm:$0xff]
    %v1011 = vld [vmem:[%s713 + $0x2ca] sm:$0xff]
    %v1012 = vld [vmem:[%s713 + $0x2d2] sm:$0xff]
    %v1013 = vld [vmem:[%s713 + $0x2da] sm:$0x3]
    %v1014 = vld [vmem:[%s713 + $0x2e2] sm:$0xff]
    %v1015 = vld [vmem:[%s713 + $0x2ea] sm:$0xff]
    %v1016 = vld [vmem:[%s713 + $0x2f2] sm:$0xff]
    %v1017 = vld [vmem:[%s713 + $0x2fa] sm:$0x3]
    %v1018 = vld [vmem:[%s713 + $0x302] sm:$0xff]
    %v1019 = vld [vmem:[%s713 + $0x30a] sm:$0xff]
    %v1020 = vld [vmem:[%s713 + $0x312] sm:$0xff]
    %v1021 = vld [vmem:[%s713 + $0x31a] sm:$0x3]
    %v1022 = vld [vmem:[%s713 + $0x322] sm:$0xff]
    %v1023 = vld [vmem:[%s713 + $0x32a] sm:$0xff]
    %v1024 = vld [vmem:[%s713 + $0x332] sm:$0xff]
    %v1025 = vld [vmem:[%s713 + $0x33a] sm:$0x3]
    loop: start=0, step=1, limit=6
    $region62: #{forward.1} parent=1 // loop_pre_header
      _
    $region63: #{forward.1} parent=1 // loop_header
      %s1027 = sphi 0, %s1031
      %p1028 = scmp.ge.s32.totalorder %s1027, 6
    $region64: #{forward.1} parent=1 // loop_header_branch
      %1030 = sbr.rel (%p1028) target = $region68
    $region65: #{forward.1} parent=1 // loop_body
      %s1032 = smul.u32 %s1027, 128
      %s1033 = sld [smem:[#allocation4 + %s1032]]
      %v1034 = vstv %s1033
      %v1035 = vmul.f32 %v1034, %v88
      %v1036 = vmul.f32 %v1034, %v89
      %v1037 = vmul.f32 %v1034, %v90
      %v1038 = vmul.f32 %v1034, %v91
      %v1039 = vmul.f32 %v1034, %v92
      %v1040 = vmul.f32 %v1034, %v93
      %v1041 = vmul.f32 %v1034, %v94
      %v1042 = vmul.f32 %v1034, %v95
      %v1043 = vmul.f32 %v1034, %v96
      %v1044 = vmul.f32 %v1034, %v97
      %v1045 = vmul.f32 %v1034, %v98
      %v1046 = vmul.f32 %v1034, %v99
      %v1047 = vmul.f32 %v1034, %v100
      %v1048 = vmul.f32 %v1034, %v101
      %v1049 = vmul.f32 %v1034, %v102
      %v1050 = vmul.f32 %v1034, %v103
      %v1051 = vmul.f32 %v1034, %v104
      %v1052 = vmul.f32 %v1034, %v105
      %v1053 = vmul.f32 %v1034, %v106
      %v1054 = vmul.f32 %v1034, %v107
      %v1055 = vmul.f32 %v1034, %v108
      %v1056 = vmul.f32 %v1034, %v109
      %v1057 = vmul.f32 %v1034, %v110
      %v1058 = vmul.f32 %v1034, %v111
      %v1059 = vmul.f32 %v1034, %v112
      %v1060 = vmul.f32 %v1034, %v113
      %v1061 = vmul.f32 %v1034, %v114
      %v1062 = vmul.f32 %v1034, %v115
      %v1063 = vmul.f32 %v1034, %v116
      %v1064 = vmul.f32 %v1034, %v117
      %v1065 = vmul.f32 %v1034, %v118
      %v1066 = vmul.f32 %v1034, %v119
      %v1067 = vmul.f32 %v1034, %v120
      %v1068 = vmul.f32 %v1034, %v121
      %v1069 = vmul.f32 %v1034, %v122
      %v1070 = vmul.f32 %v1034, %v123
      %v1071 = vmul.f32 %v1034, %v124
      %v1072 = vmul.f32 %v1034, %v125
      %v1073 = vmul.f32 %v1034, %v126
      %v1074 = vmul.f32 %v1034, %v127
      %v1075 = vmul.f32 %v1034, %v128
      %v1076 = vmul.f32 %v1034, %v129
      %v1077 = vmul.f32 %v1034, %v130
      %v1078 = vmul.f32 %v1034, %v131
      %v1079 = vmul.f32 %v1034, %v132
      %v1080 = vmul.f32 %v1034, %v133
      %v1081 = vmul.f32 %v1034, %v134
      %v1082 = vmul.f32 %v1034, %v135
      %v1083 = vmul.f32 %v1034, %v136
      %v1084 = vmul.f32 %v1034, %v137
      %v1085 = vmul.f32 %v1034, %v138
      %v1086 = vmul.f32 %v1034, %v139
      %v1087 = vmul.f32 %v1034, %v140
      %v1088 = vmul.f32 %v1034, %v141
      %v1089 = vmul.f32 %v1034, %v142
      %v1090 = vmul.f32 %v1034, %v143
      %v1091 = vmul.f32 %v1034, %v144
      %v1092 = vmul.f32 %v1034, %v145
      %v1093 = vmul.f32 %v1034, %v146
      %v1094 = vmul.f32 %v1034, %v147
      %v1095 = vmul.f32 %v1034, %v148
      %v1096 = vmul.f32 %v1034, %v149
      %v1097 = vmul.f32 %v1034, %v150
      %v1098 = vmul.f32 %v1034, %v151
      %v1099 = vmul.f32 %v1034, %v152
      %v1100 = vmul.f32 %v1034, %v153
      %v1101 = vmul.f32 %v1034, %v154
      %v1102 = vmul.f32 %v1034, %v155
      %v1103 = vmul.f32 %v1034, %v156
      %v1104 = vmul.f32 %v1034, %v157
      %v1105 = vmul.f32 %v1034, %v158
      %v1106 = vmul.f32 %v1034, %v159
      %v1107 = vmul.f32 %v1034, %v160
      %v1108 = vmul.f32 %v1034, %v161
      %v1109 = vmul.f32 %v1034, %v162
      %v1110 = vmul.f32 %v1034, %v163
      %v1111 = vmul.f32 %v1034, %v164
      %v1112 = vmul.f32 %v1034, %v165
      %v1113 = vmul.f32 %v1034, %v166
      %v1114 = vmul.f32 %v1034, %v167
      %v1115 = vmul.f32 %v1034, %v168
      %v1116 = vmul.f32 %v1034, %v169
      %v1117 = vmul.f32 %v1034, %v170
      %v1118 = vmul.f32 %v1034, %v171
      %v1119 = vmul.f32 %v1034, %v172
      %v1120 = vmul.f32 %v1034, %v173
      %v1121 = vmul.f32 %v1034, %v174
      %v1122 = vmul.f32 %v1034, %v175
      %v1123 = vmul.f32 %v1034, %v176
      %v1124 = vmul.f32 %v1034, %v177
      %v1125 = vmul.f32 %v1034, %v178
      %v1126 = vmul.f32 %v1034, %v179
      %v1127 = vmul.f32 %v1034, %v180
      %v1128 = vmul.f32 %v1034, %v181
      %v1129 = vmul.f32 %v1034, %v182
      %v1130 = vmul.f32 %v1034, %v183
      %v1131 = vmul.f32 %v1034, %v184
      %v1132 = vmul.f32 %v1034, %v185
      %v1133 = vmul.f32 %v1034, %v186
      %v1134 = vmul.f32 %v1034, %v187
      %v1135 = vmul.f32 %v1034, %v188
      %v1136 = vmul.f32 %v1034, %v189
      %v1137 = vmul.f32 %v1034, %v190
      %v1138 = vmul.f32 %v1034, %v191
      %s1139 = sadd.s32 %s1032, 1
      %s1140 = sld [smem:[#allocation4 + %s1139]]
      %v1141 = vstv %s1140
      %v1142 = vmul.f32 %v1141, %v192
      %v1143 = vmul.f32 %v1141, %v193
      %v1144 = vmul.f32 %v1141, %v194
      %v1145 = vmul.f32 %v1141, %v195
      %v1146 = vmul.f32 %v1141, %v196
      %v1147 = vmul.f32 %v1141, %v197
      %v1148 = vmul.f32 %v1141, %v198
      %v1149 = vmul.f32 %v1141, %v199
      %v1150 = vmul.f32 %v1141, %v200
      %v1151 = vmul.f32 %v1141, %v201
      %v1152 = vmul.f32 %v1141, %v202
      %v1153 = vmul.f32 %v1141, %v203
      %v1154 = vmul.f32 %v1141, %v204
      %v1155 = vmul.f32 %v1141, %v205
      %v1156 = vmul.f32 %v1141, %v206
      %v1157 = vmul.f32 %v1141, %v207
      %v1158 = vmul.f32 %v1141, %v208
      %v1159 = vmul.f32 %v1141, %v209
      %v1160 = vmul.f32 %v1141, %v210
      %v1161 = vmul.f32 %v1141, %v211
      %v1162 = vmul.f32 %v1141, %v212
      %v1163 = vmul.f32 %v1141, %v213
      %v1164 = vmul.f32 %v1141, %v214
      %v1165 = vmul.f32 %v1141, %v215
      %v1166 = vmul.f32 %v1141, %v216
      %v1167 = vmul.f32 %v1141, %v217
      %v1168 = vmul.f32 %v1141, %v218
      %v1169 = vmul.f32 %v1141, %v219
      %v1170 = vmul.f32 %v1141, %v220
      %v1171 = vmul.f32 %v1141, %v221
      %v1172 = vmul.f32 %v1141, %v222
      %v1173 = vmul.f32 %v1141, %v223
      %v1174 = vmul.f32 %v1141, %v224
      %v1175 = vmul.f32 %v1141, %v225
      %v1176 = vmul.f32 %v1141, %v226
      %v1177 = vmul.f32 %v1141, %v227
      %v1178 = vmul.f32 %v1141, %v228
      %v1179 = vmul.f32 %v1141, %v229
      %v1180 = vmul.f32 %v1141, %v230
      %v1181 = vmul.f32 %v1141, %v231
      %v1182 = vmul.f32 %v1141, %v232
      %v1183 = vmul.f32 %v1141, %v233
      %v1184 = vmul.f32 %v1141, %v234
      %v1185 = vmul.f32 %v1141, %v235
      %v1186 = vmul.f32 %v1141, %v236
      %v1187 = vmul.f32 %v1141, %v237
      %v1188 = vmul.f32 %v1141, %v238
      %v1189 = vmul.f32 %v1141, %v239
      %v1190 = vmul.f32 %v1141, %v240
      %v1191 = vmul.f32 %v1141, %v241
      %v1192 = vmul.f32 %v1141, %v242
      %v1193 = vmul.f32 %v1141, %v243
      %v1194 = vmul.f32 %v1141, %v244
      %v1195 = vmul.f32 %v1141, %v245
      %v1196 = vmul.f32 %v1141, %v246
      %v1197 = vmul.f32 %v1141, %v247
      %v1198 = vmul.f32 %v1141, %v248
      %v1199 = vmul.f32 %v1141, %v249
      %v1200 = vmul.f32 %v1141, %v250
      %v1201 = vmul.f32 %v1141, %v251
      %v1202 = vmul.f32 %v1141, %v252
      %v1203 = vmul.f32 %v1141, %v253
      %v1204 = vmul.f32 %v1141, %v254
      %v1205 = vmul.f32 %v1141, %v255
      %v1206 = vmul.f32 %v1141, %v256
      %v1207 = vmul.f32 %v1141, %v257
      %v1208 = vmul.f32 %v1141, %v258
      %v1209 = vmul.f32 %v1141, %v259
      %v1210 = vmul.f32 %v1141, %v260
      %v1211 = vmul.f32 %v1141, %v261
      %v1212 = vmul.f32 %v1141, %v262
      %v1213 = vmul.f32 %v1141, %v263
      %v1214 = vmul.f32 %v1141, %v264
      %v1215 = vmul.f32 %v1141, %v265
      %v1216 = vmul.f32 %v1141, %v266
      %v1217 = vmul.f32 %v1141, %v267
      %v1218 = vmul.f32 %v1141, %v268
      %v1219 = vmul.f32 %v1141, %v269
      %v1220 = vmul.f32 %v1141, %v270
      %v1221 = vmul.f32 %v1141, %v271
      %v1222 = vmul.f32 %v1141, %v272
      %v1223 = vmul.f32 %v1141, %v273
      %v1224 = vmul.f32 %v1141, %v274
      %v1225 = vmul.f32 %v1141, %v275
      %v1226 = vmul.f32 %v1141, %v276
      %v1227 = vmul.f32 %v1141, %v277
      %v1228 = vmul.f32 %v1141, %v278
      %v1229 = vmul.f32 %v1141, %v279
      %v1230 = vmul.f32 %v1141, %v280
      %v1231 = vmul.f32 %v1141, %v281
      %v1232 = vmul.f32 %v1141, %v282
      %v1233 = vmul.f32 %v1141, %v283
      %v1234 = vmul.f32 %v1141, %v284
      %v1235 = vmul.f32 %v1141, %v285
      %v1236 = vmul.f32 %v1141, %v286
      %v1237 = vmul.f32 %v1141, %v287
      %v1238 = vmul.f32 %v1141, %v288
      %v1239 = vmul.f32 %v1141, %v289
      %v1240 = vmul.f32 %v1141, %v290
      %v1241 = vmul.f32 %v1141, %v291
      %v1242 = vmul.f32 %v1141, %v292
      %v1243 = vmul.f32 %v1141, %v293
      %v1244 = vmul.f32 %v1141, %v294
      %v1245 = vmul.f32 %v1141, %v295
      %v1246 = vadd.f32 %v1035, %v1142
      %v1247 = vadd.f32 %v1036, %v1143
      %v1248 = vadd.f32 %v1037, %v1144
      %v1249 = vadd.f32 %v1038, %v1145
      %v1250 = vadd.f32 %v1039, %v1146
      %v1251 = vadd.f32 %v1040, %v1147
      %v1252 = vadd.f32 %v1041, %v1148
      %v1253 = vadd.f32 %v1042, %v1149
      %v1254 = vadd.f32 %v1043, %v1150
      %v1255 = vadd.f32 %v1044, %v1151
      %v1256 = vadd.f32 %v1045, %v1152
      %v1257 = vadd.f32 %v1046, %v1153
      %v1258 = vadd.f32 %v1047, %v1154
      %v1259 = vadd.f32 %v1048, %v1155
      %v1260 = vadd.f32 %v1049, %v1156
      %v1261 = vadd.f32 %v1050, %v1157
      %v1262 = vadd.f32 %v1051, %v1158
      %v1263 = vadd.f32 %v1052, %v1159
      %v1264 = vadd.f32 %v1053, %v1160
      %v1265 = vadd.f32 %v1054, %v1161
      %v1266 = vadd.f32 %v1055, %v1162
      %v1267 = vadd.f32 %v1056, %v1163
      %v1268 = vadd.f32 %v1057, %v1164
      %v1269 = vadd.f32 %v1058, %v1165
      %v1270 = vadd.f32 %v1059, %v1166
      %v1271 = vadd.f32 %v1060, %v1167
      %v1272 = vadd.f32 %v1061, %v1168
      %v1273 = vadd.f32 %v1062, %v1169
      %v1274 = vadd.f32 %v1063, %v1170
      %v1275 = vadd.f32 %v1064, %v1171
      %v1276 = vadd.f32 %v1065, %v1172
      %v1277 = vadd.f32 %v1066, %v1173
      %v1278 = vadd.f32 %v1067, %v1174
      %v1279 = vadd.f32 %v1068, %v1175
      %v1280 = vadd.f32 %v1069, %v1176
      %v1281 = vadd.f32 %v1070, %v1177
      %v1282 = vadd.f32 %v1071, %v1178
      %v1283 = vadd.f32 %v1072, %v1179
      %v1284 = vadd.f32 %v1073, %v1180
      %v1285 = vadd.f32 %v1074, %v1181
      %v1286 = vadd.f32 %v1075, %v1182
      %v1287 = vadd.f32 %v1076, %v1183
      %v1288 = vadd.f32 %v1077, %v1184
      %v1289 = vadd.f32 %v1078, %v1185
      %v1290 = vadd.f32 %v1079, %v1186
      %v1291 = vadd.f32 %v1080, %v1187
      %v1292 = vadd.f32 %v1081, %v1188
      %v1293 = vadd.f32 %v1082, %v1189
      %v1294 = vadd.f32 %v1083, %v1190
      %v1295 = vadd.f32 %v1084, %v1191
      %v1296 = vadd.f32 %v1085, %v1192
      %v1297 = vadd.f32 %v1086, %v1193
      %v1298 = vadd.f32 %v1087, %v1194
      %v1299 = vadd.f32 %v1088, %v1195
      %v1300 = vadd.f32 %v1089, %v1196
      %v1301 = vadd.f32 %v1090, %v1197
      %v1302 = vadd.f32 %v1091, %v1198
      %v1303 = vadd.f32 %v1092, %v1199
      %v1304 = vadd.f32 %v1093, %v1200
      %v1305 = vadd.f32 %v1094, %v1201
      %v1306 = vadd.f32 %v1095, %v1202
      %v1307 = vadd.f32 %v1096, %v1203
      %v1308 = vadd.f32 %v1097, %v1204
      %v1309 = vadd.f32 %v1098, %v1205
      %v1310 = vadd.f32 %v1099, %v1206
      %v1311 = vadd.f32 %v1100, %v1207
      %v1312 = vadd.f32 %v1101, %v1208
      %v1313 = vadd.f32 %v1102, %v1209
      %v1314 = vadd.f32 %v1103, %v1210
      %v1315 = vadd.f32 %v1104, %v1211
      %v1316 = vadd.f32 %v1105, %v1212
      %v1317 = vadd.f32 %v1106, %v1213
      %v1318 = vadd.f32 %v1107, %v1214
      %v1319 = vadd.f32 %v1108, %v1215
      %v1320 = vadd.f32 %v1109, %v1216
      %v1321 = vadd.f32 %v1110, %v1217
      %v1322 = vadd.f32 %v1111, %v1218
      %v1323 = vadd.f32 %v1112, %v1219
      %v1324 = vadd.f32 %v1113, %v1220
      %v1325 = vadd.f32 %v1114, %v1221
      %v1326 = vadd.f32 %v1115, %v1222
      %v1327 = vadd.f32 %v1116, %v1223
      %v1328 = vadd.f32 %v1117, %v1224
      %v1329 = vadd.f32 %v1118, %v1225
      %v1330 = vadd.f32 %v1119, %v1226
      %v1331 = vadd.f32 %v1120, %v1227
      %v1332 = vadd.f32 %v1121, %v1228
      %v1333 = vadd.f32 %v1122, %v1229
      %v1334 = vadd.f32 %v1123, %v1230
      %v1335 = vadd.f32 %v1124, %v1231
      %v1336 = vadd.f32 %v1125, %v1232
      %v1337 = vadd.f32 %v1126, %v1233
      %v1338 = vadd.f32 %v1127, %v1234
      %v1339 = vadd.f32 %v1128, %v1235
      %v1340 = vadd.f32 %v1129, %v1236
      %v1341 = vadd.f32 %v1130, %v1237
      %v1342 = vadd.f32 %v1131, %v1238
      %v1343 = vadd.f32 %v1132, %v1239
      %v1344 = vadd.f32 %v1133, %v1240
      %v1345 = vadd.f32 %v1134, %v1241
      %v1346 = vadd.f32 %v1135, %v1242
      %v1347 = vadd.f32 %v1136, %v1243
      %v1348 = vadd.f32 %v1137, %v1244
      %v1349 = vadd.f32 %v1138, %v1245
      %s1350 = sadd.s32 %s1032, 2
      %s1351 = sld [smem:[#allocation4 + %s1350]]
      %v1352 = vstv %s1351
      %v1353 = vmul.f32 %v1352, %v296
      %v1354 = vmul.f32 %v1352, %v297
      %v1355 = vmul.f32 %v1352, %v298
      %v1356 = vmul.f32 %v1352, %v299
      %v1357 = vmul.f32 %v1352, %v300
      %v1358 = vmul.f32 %v1352, %v301
      %v1359 = vmul.f32 %v1352, %v302
      %v1360 = vmul.f32 %v1352, %v303
      %v1361 = vmul.f32 %v1352, %v304
      %v1362 = vmul.f32 %v1352, %v305
      %v1363 = vmul.f32 %v1352, %v306
      %v1364 = vmul.f32 %v1352, %v307
      %v1365 = vmul.f32 %v1352, %v308
      %v1366 = vmul.f32 %v1352, %v309
      %v1367 = vmul.f32 %v1352, %v310
      %v1368 = vmul.f32 %v1352, %v311
      %v1369 = vmul.f32 %v1352, %v312
      %v1370 = vmul.f32 %v1352, %v313
      %v1371 = vmul.f32 %v1352, %v314
      %v1372 = vmul.f32 %v1352, %v315
      %v1373 = vmul.f32 %v1352, %v316
      %v1374 = vmul.f32 %v1352, %v317
      %v1375 = vmul.f32 %v1352, %v318
      %v1376 = vmul.f32 %v1352, %v319
      %v1377 = vmul.f32 %v1352, %v320
      %v1378 = vmul.f32 %v1352, %v321
      %v1379 = vmul.f32 %v1352, %v322
      %v1380 = vmul.f32 %v1352, %v323
      %v1381 = vmul.f32 %v1352, %v324
      %v1382 = vmul.f32 %v1352, %v325
      %v1383 = vmul.f32 %v1352, %v326
      %v1384 = vmul.f32 %v1352, %v327
      %v1385 = vmul.f32 %v1352, %v328
      %v1386 = vmul.f32 %v1352, %v329
      %v1387 = vmul.f32 %v1352, %v330
      %v1388 = vmul.f32 %v1352, %v331
      %v1389 = vmul.f32 %v1352, %v332
      %v1390 = vmul.f32 %v1352, %v333
      %v1391 = vmul.f32 %v1352, %v334
      %v1392 = vmul.f32 %v1352, %v335
      %v1393 = vmul.f32 %v1352, %v336
      %v1394 = vmul.f32 %v1352, %v337
      %v1395 = vmul.f32 %v1352, %v338
      %v1396 = vmul.f32 %v1352, %v339
      %v1397 = vmul.f32 %v1352, %v340
      %v1398 = vmul.f32 %v1352, %v341
      %v1399 = vmul.f32 %v1352, %v342
      %v1400 = vmul.f32 %v1352, %v343
      %v1401 = vmul.f32 %v1352, %v344
      %v1402 = vmul.f32 %v1352, %v345
      %v1403 = vmul.f32 %v1352, %v346
      %v1404 = vmul.f32 %v1352, %v347
      %v1405 = vmul.f32 %v1352, %v348
      %v1406 = vmul.f32 %v1352, %v349
      %v1407 = vmul.f32 %v1352, %v350
      %v1408 = vmul.f32 %v1352, %v351
      %v1409 = vmul.f32 %v1352, %v352
      %v1410 = vmul.f32 %v1352, %v353
      %v1411 = vmul.f32 %v1352, %v354
      %v1412 = vmul.f32 %v1352, %v355
      %v1413 = vmul.f32 %v1352, %v356
      %v1414 = vmul.f32 %v1352, %v357
      %v1415 = vmul.f32 %v1352, %v358
      %v1416 = vmul.f32 %v1352, %v359
      %v1417 = vmul.f32 %v1352, %v360
      %v1418 = vmul.f32 %v1352, %v361
      %v1419 = vmul.f32 %v1352, %v362
      %v1420 = vmul.f32 %v1352, %v363
      %v1421 = vmul.f32 %v1352, %v364
      %v1422 = vmul.f32 %v1352, %v365
      %v1423 = vmul.f32 %v1352, %v366
      %v1424 = vmul.f32 %v1352, %v367
      %v1425 = vmul.f32 %v1352, %v368
      %v1426 = vmul.f32 %v1352, %v369
      %v1427 = vmul.f32 %v1352, %v370
      %v1428 = vmul.f32 %v1352, %v371
      %v1429 = vmul.f32 %v1352, %v372
      %v1430 = vmul.f32 %v1352, %v373
      %v1431 = vmul.f32 %v1352, %v374
      %v1432 = vmul.f32 %v1352, %v375
      %v1433 = vmul.f32 %v1352, %v376
      %v1434 = vmul.f32 %v1352, %v377
      %v1435 = vmul.f32 %v1352, %v378
      %v1436 = vmul.f32 %v1352, %v379
      %v1437 = vmul.f32 %v1352, %v380
      %v1438 = vmul.f32 %v1352, %v381
      %v1439 = vmul.f32 %v1352, %v382
      %v1440 = vmul.f32 %v1352, %v383
      %v1441 = vmul.f32 %v1352, %v384
      %v1442 = vmul.f32 %v1352, %v385
      %v1443 = vmul.f32 %v1352, %v386
      %v1444 = vmul.f32 %v1352, %v387
      %v1445 = vmul.f32 %v1352, %v388
      %v1446 = vmul.f32 %v1352, %v389
      %v1447 = vmul.f32 %v1352, %v390
      %v1448 = vmul.f32 %v1352, %v391
      %v1449 = vmul.f32 %v1352, %v392
      %v1450 = vmul.f32 %v1352, %v393
      %v1451 = vmul.f32 %v1352, %v394
      %v1452 = vmul.f32 %v1352, %v395
      %v1453 = vmul.f32 %v1352, %v396
      %v1454 = vmul.f32 %v1352, %v397
      %v1455 = vmul.f32 %v1352, %v398
      %v1456 = vmul.f32 %v1352, %v399
      %v1457 = vadd.f32 %v1246, %v1353
      %v1458 = vadd.f32 %v1247, %v1354
      %v1459 = vadd.f32 %v1248, %v1355
      %v1460 = vadd.f32 %v1249, %v1356
      %v1461 = vadd.f32 %v1250, %v1357
      %v1462 = vadd.f32 %v1251, %v1358
      %v1463 = vadd.f32 %v1252, %v1359
      %v1464 = vadd.f32 %v1253, %v1360
      %v1465 = vadd.f32 %v1254, %v1361
      %v1466 = vadd.f32 %v1255, %v1362
      %v1467 = vadd.f32 %v1256, %v1363
      %v1468 = vadd.f32 %v1257, %v1364
      %v1469 = vadd.f32 %v1258, %v1365
      %v1470 = vadd.f32 %v1259, %v1366
      %v1471 = vadd.f32 %v1260, %v1367
      %v1472 = vadd.f32 %v1261, %v1368
      %v1473 = vadd.f32 %v1262, %v1369
      %v1474 = vadd.f32 %v1263, %v1370
      %v1475 = vadd.f32 %v1264, %v1371
      %v1476 = vadd.f32 %v1265, %v1372
      %v1477 = vadd.f32 %v1266, %v1373
      %v1478 = vadd.f32 %v1267, %v1374
      %v1479 = vadd.f32 %v1268, %v1375
      %v1480 = vadd.f32 %v1269, %v1376
      %v1481 = vadd.f32 %v1270, %v1377
      %v1482 = vadd.f32 %v1271, %v1378
      %v1483 = vadd.f32 %v1272, %v1379
      %v1484 = vadd.f32 %v1273, %v1380
      %v1485 = vadd.f32 %v1274, %v1381
      %v1486 = vadd.f32 %v1275, %v1382
      %v1487 = vadd.f32 %v1276, %v1383
      %v1488 = vadd.f32 %v1277, %v1384
      %v1489 = vadd.f32 %v1278, %v1385
      %v1490 = vadd.f32 %v1279, %v1386
      %v1491 = vadd.f32 %v1280, %v1387
      %v1492 = vadd.f32 %v1281, %v1388
      %v1493 = vadd.f32 %v1282, %v1389
      %v1494 = vadd.f32 %v1283, %v1390
      %v1495 = vadd.f32 %v1284, %v1391
      %v1496 = vadd.f32 %v1285, %v1392
      %v1497 = vadd.f32 %v1286, %v1393
      %v1498 = vadd.f32 %v1287, %v1394
      %v1499 = vadd.f32 %v1288, %v1395
      %v1500 = vadd.f32 %v1289, %v1396
      %v1501 = vadd.f32 %v1290, %v1397
      %v1502 = vadd.f32 %v1291, %v1398
      %v1503 = vadd.f32 %v1292, %v1399
      %v1504 = vadd.f32 %v1293, %v1400
      %v1505 = vadd.f32 %v1294, %v1401
      %v1506 = vadd.f32 %v1295, %v1402
      %v1507 = vadd.f32 %v1296, %v1403
      %v1508 = vadd.f32 %v1297, %v1404
      %v1509 = vadd.f32 %v1298, %v1405
      %v1510 = vadd.f32 %v1299, %v1406
      %v1511 = vadd.f32 %v1300, %v1407
      %v1512 = vadd.f32 %v1301, %v1408
      %v1513 = vadd.f32 %v1302, %v1409
      %v1514 = vadd.f32 %v1303, %v1410
      %v1515 = vadd.f32 %v1304, %v1411
      %v1516 = vadd.f32 %v1305, %v1412
      %v1517 = vadd.f32 %v1306, %v1413
      %v1518 = vadd.f32 %v1307, %v1414
      %v1519 = vadd.f32 %v1308, %v1415
      %v1520 = vadd.f32 %v1309, %v1416
      %v1521 = vadd.f32 %v1310, %v1417
      %v1522 = vadd.f32 %v1311, %v1418
      %v1523 = vadd.f32 %v1312, %v1419
      %v1524 = vadd.f32 %v1313, %v1420
      %v1525 = vadd.f32 %v1314, %v1421
      %v1526 = vadd.f32 %v1315, %v1422
      %v1527 = vadd.f32 %v1316, %v1423
      %v1528 = vadd.f32 %v1317, %v1424
      %v1529 = vadd.f32 %v1318, %v1425
      %v1530 = vadd.f32 %v1319, %v1426
      %v1531 = vadd.f32 %v1320, %v1427
      %v1532 = vadd.f32 %v1321, %v1428
      %v1533 = vadd.f32 %v1322, %v1429
      %v1534 = vadd.f32 %v1323, %v1430
      %v1535 = vadd.f32 %v1324, %v1431
      %v1536 = vadd.f32 %v1325, %v1432
      %v1537 = vadd.f32 %v1326, %v1433
      %v1538 = vadd.f32 %v1327, %v1434
      %v1539 = vadd.f32 %v1328, %v1435
      %v1540 = vadd.f32 %v1329, %v1436
      %v1541 = vadd.f32 %v1330, %v1437
      %v1542 = vadd.f32 %v1331, %v1438
      %v1543 = vadd.f32 %v1332, %v1439
      %v1544 = vadd.f32 %v1333, %v1440
      %v1545 = vadd.f32 %v1334, %v1441
      %v1546 = vadd.f32 %v1335, %v1442
      %v1547 = vadd.f32 %v1336, %v1443
      %v1548 = vadd.f32 %v1337, %v1444
      %v1549 = vadd.f32 %v1338, %v1445
      %v1550 = vadd.f32 %v1339, %v1446
      %v1551 = vadd.f32 %v1340, %v1447
      %v1552 = vadd.f32 %v1341, %v1448
      %v1553 = vadd.f32 %v1342, %v1449
      %v1554 = vadd.f32 %v1343, %v1450
      %v1555 = vadd.f32 %v1344, %v1451
      %v1556 = vadd.f32 %v1345, %v1452
      %v1557 = vadd.f32 %v1346, %v1453
      %v1558 = vadd.f32 %v1347, %v1454
      %v1559 = vadd.f32 %v1348, %v1455
      %v1560 = vadd.f32 %v1349, %v1456
      %s1561 = sadd.s32 %s1032, 3
      %s1562 = sld [smem:[#allocation4 + %s1561]]
      %v1563 = vstv %s1562
      %v1564 = vmul.f32 %v1563, %v401
      %v1565 = vmul.f32 %v1563, %v402
      %v1566 = vmul.f32 %v1563, %v403
      %v1567 = vmul.f32 %v1563, %v404
      %v1568 = vmul.f32 %v1563, %v405
      %v1569 = vmul.f32 %v1563, %v406
      %v1570 = vmul.f32 %v1563, %v407
      %v1571 = vmul.f32 %v1563, %v408
      %v1572 = vmul.f32 %v1563, %v409
      %v1573 = vmul.f32 %v1563, %v410
      %v1574 = vmul.f32 %v1563, %v411
      %v1575 = vmul.f32 %v1563, %v412
      %v1576 = vmul.f32 %v1563, %v413
      %v1577 = vmul.f32 %v1563, %v414
      %v1578 = vmul.f32 %v1563, %v415
      %v1579 = vmul.f32 %v1563, %v416
      %v1580 = vmul.f32 %v1563, %v417
      %v1581 = vmul.f32 %v1563, %v418
      %v1582 = vmul.f32 %v1563, %v419
      %v1583 = vmul.f32 %v1563, %v420
      %v1584 = vmul.f32 %v1563, %v421
      %v1585 = vmul.f32 %v1563, %v422
      %v1586 = vmul.f32 %v1563, %v423
      %v1587 = vmul.f32 %v1563, %v424
      %v1588 = vmul.f32 %v1563, %v425
      %v1589 = vmul.f32 %v1563, %v426
      %v1590 = vmul.f32 %v1563, %v427
      %v1591 = vmul.f32 %v1563, %v428
      %v1592 = vmul.f32 %v1563, %v429
      %v1593 = vmul.f32 %v1563, %v430
      %v1594 = vmul.f32 %v1563, %v431
      %v1595 = vmul.f32 %v1563, %v432
      %v1596 = vmul.f32 %v1563, %v433
      %v1597 = vmul.f32 %v1563, %v434
      %v1598 = vmul.f32 %v1563, %v435
      %v1599 = vmul.f32 %v1563, %v436
      %v1600 = vmul.f32 %v1563, %v437
      %v1601 = vmul.f32 %v1563, %v438
      %v1602 = vmul.f32 %v1563, %v439
      %v1603 = vmul.f32 %v1563, %v440
      %v1604 = vmul.f32 %v1563, %v441
      %v1605 = vmul.f32 %v1563, %v442
      %v1606 = vmul.f32 %v1563, %v443
      %v1607 = vmul.f32 %v1563, %v444
      %v1608 = vmul.f32 %v1563, %v445
      %v1609 = vmul.f32 %v1563, %v446
      %v1610 = vmul.f32 %v1563, %v447
      %v1611 = vmul.f32 %v1563, %v448
      %v1612 = vmul.f32 %v1563, %v449
      %v1613 = vmul.f32 %v1563, %v450
      %v1614 = vmul.f32 %v1563, %v451
      %v1615 = vmul.f32 %v1563, %v452
      %v1616 = vmul.f32 %v1563, %v453
      %v1617 = vmul.f32 %v1563, %v454
      %v1618 = vmul.f32 %v1563, %v455
      %v1619 = vmul.f32 %v1563, %v456
      %v1620 = vmul.f32 %v1563, %v457
      %v1621 = vmul.f32 %v1563, %v458
      %v1622 = vmul.f32 %v1563, %v459
      %v1623 = vmul.f32 %v1563, %v460
      %v1624 = vmul.f32 %v1563, %v461
      %v1625 = vmul.f32 %v1563, %v462
      %v1626 = vmul.f32 %v1563, %v463
      %v1627 = vmul.f32 %v1563, %v464
      %v1628 = vmul.f32 %v1563, %v465
      %v1629 = vmul.f32 %v1563, %v466
      %v1630 = vmul.f32 %v1563, %v467
      %v1631 = vmul.f32 %v1563, %v468
      %v1632 = vmul.f32 %v1563, %v469
      %v1633 = vmul.f32 %v1563, %v470
      %v1634 = vmul.f32 %v1563, %v471
      %v1635 = vmul.f32 %v1563, %v472
      %v1636 = vmul.f32 %v1563, %v473
      %v1637 = vmul.f32 %v1563, %v474
      %v1638 = vmul.f32 %v1563, %v475
      %v1639 = vmul.f32 %v1563, %v476
      %v1640 = vmul.f32 %v1563, %v477
      %v1641 = vmul.f32 %v1563, %v478
      %v1642 = vmul.f32 %v1563, %v479
      %v1643 = vmul.f32 %v1563, %v480
      %v1644 = vmul.f32 %v1563, %v481
      %v1645 = vmul.f32 %v1563, %v482
      %v1646 = vmul.f32 %v1563, %v483
      %v1647 = vmul.f32 %v1563, %v484
      %v1648 = vmul.f32 %v1563, %v485
      %v1649 = vmul.f32 %v1563, %v486
      %v1650 = vmul.f32 %v1563, %v487
      %v1651 = vmul.f32 %v1563, %v488
      %v1652 = vmul.f32 %v1563, %v489
      %v1653 = vmul.f32 %v1563, %v490
      %v1654 = vmul.f32 %v1563, %v491
      %v1655 = vmul.f32 %v1563, %v492
      %v1656 = vmul.f32 %v1563, %v493
      %v1657 = vmul.f32 %v1563, %v494
      %v1658 = vmul.f32 %v1563, %v495
      %v1659 = vmul.f32 %v1563, %v496
      %v1660 = vmul.f32 %v1563, %v497
      %v1661 = vmul.f32 %v1563, %v498
      %v1662 = vmul.f32 %v1563, %v499
      %v1663 = vmul.f32 %v1563, %v500
      %v1664 = vmul.f32 %v1563, %v501
      %v1665 = vmul.f32 %v1563, %v502
      %v1666 = vmul.f32 %v1563, %v503
      %v1667 = vmul.f32 %v1563, %v504
      %v1668 = vadd.f32 %v1457, %v1564
      %v1669 = vadd.f32 %v1458, %v1565
      %v1670 = vadd.f32 %v1459, %v1566
      %v1671 = vadd.f32 %v1460, %v1567
      %v1672 = vadd.f32 %v1461, %v1568
      %v1673 = vadd.f32 %v1462, %v1569
      %v1674 = vadd.f32 %v1463, %v1570
      %v1675 = vadd.f32 %v1464, %v1571
      %v1676 = vadd.f32 %v1465, %v1572
      %v1677 = vadd.f32 %v1466, %v1573
      %v1678 = vadd.f32 %v1467, %v1574
      %v1679 = vadd.f32 %v1468, %v1575
      %v1680 = vadd.f32 %v1469, %v1576
      %v1681 = vadd.f32 %v1470, %v1577
      %v1682 = vadd.f32 %v1471, %v1578
      %v1683 = vadd.f32 %v1472, %v1579
      %v1684 = vadd.f32 %v1473, %v1580
      %v1685 = vadd.f32 %v1474, %v1581
      %v1686 = vadd.f32 %v1475, %v1582
      %v1687 = vadd.f32 %v1476, %v1583
      %v1688 = vadd.f32 %v1477, %v1584
      %v1689 = vadd.f32 %v1478, %v1585
      %v1690 = vadd.f32 %v1479, %v1586
      %v1691 = vadd.f32 %v1480, %v1587
      %v1692 = vadd.f32 %v1481, %v1588
      %v1693 = vadd.f32 %v1482, %v1589
      %v1694 = vadd.f32 %v1483, %v1590
      %v1695 = vadd.f32 %v1484, %v1591
      %v1696 = vadd.f32 %v1485, %v1592
      %v1697 = vadd.f32 %v1486, %v1593
      %v1698 = vadd.f32 %v1487, %v1594
      %v1699 = vadd.f32 %v1488, %v1595
      %v1700 = vadd.f32 %v1489, %v1596
      %v1701 = vadd.f32 %v1490, %v1597
      %v1702 = vadd.f32 %v1491, %v1598
      %v1703 = vadd.f32 %v1492, %v1599
      %v1704 = vadd.f32 %v1493, %v1600
      %v1705 = vadd.f32 %v1494, %v1601
      %v1706 = vadd.f32 %v1495, %v1602
      %v1707 = vadd.f32 %v1496, %v1603
      %v1708 = vadd.f32 %v1497, %v1604
      %v1709 = vadd.f32 %v1498, %v1605
      %v1710 = vadd.f32 %v1499, %v1606
      %v1711 = vadd.f32 %v1500, %v1607
      %v1712 = vadd.f32 %v1501, %v1608
      %v1713 = vadd.f32 %v1502, %v1609
      %v1714 = vadd.f32 %v1503, %v1610
      %v1715 = vadd.f32 %v1504, %v1611
      %v1716 = vadd.f32 %v1505, %v1612
      %v1717 = vadd.f32 %v1506, %v1613
      %v1718 = vadd.f32 %v1507, %v1614
      %v1719 = vadd.f32 %v1508, %v1615
      %v1720 = vadd.f32 %v1509, %v1616
      %v1721 = vadd.f32 %v1510, %v1617
      %v1722 = vadd.f32 %v1511, %v1618
      %v1723 = vadd.f32 %v1512, %v1619
      %v1724 = vadd.f32 %v1513, %v1620
      %v1725 = vadd.f32 %v1514, %v1621
      %v1726 = vadd.f32 %v1515, %v1622
      %v1727 = vadd.f32 %v1516, %v1623
      %v1728 = vadd.f32 %v1517, %v1624
      %v1729 = vadd.f32 %v1518, %v1625
      %v1730 = vadd.f32 %v1519, %v1626
      %v1731 = vadd.f32 %v1520, %v1627
      %v1732 = vadd.f32 %v1521, %v1628
      %v1733 = vadd.f32 %v1522, %v1629
      %v1734 = vadd.f32 %v1523, %v1630
      %v1735 = vadd.f32 %v1524, %v1631
      %v1736 = vadd.f32 %v1525, %v1632
      %v1737 = vadd.f32 %v1526, %v1633
      %v1738 = vadd.f32 %v1527, %v1634
      %v1739 = vadd.f32 %v1528, %v1635
      %v1740 = vadd.f32 %v1529, %v1636
      %v1741 = vadd.f32 %v1530, %v1637
      %v1742 = vadd.f32 %v1531, %v1638
      %v1743 = vadd.f32 %v1532, %v1639
      %v1744 = vadd.f32 %v1533, %v1640
      %v1745 = vadd.f32 %v1534, %v1641
      %v1746 = vadd.f32 %v1535, %v1642
      %v1747 = vadd.f32 %v1536, %v1643
      %v1748 = vadd.f32 %v1537, %v1644
      %v1749 = vadd.f32 %v1538, %v1645
      %v1750 = vadd.f32 %v1539, %v1646
      %v1751 = vadd.f32 %v1540, %v1647
      %v1752 = vadd.f32 %v1541, %v1648
      %v1753 = vadd.f32 %v1542, %v1649
      %v1754 = vadd.f32 %v1543, %v1650
      %v1755 = vadd.f32 %v1544, %v1651
      %v1756 = vadd.f32 %v1545, %v1652
      %v1757 = vadd.f32 %v1546, %v1653
      %v1758 = vadd.f32 %v1547, %v1654
      %v1759 = vadd.f32 %v1548, %v1655
      %v1760 = vadd.f32 %v1549, %v1656
      %v1761 = vadd.f32 %v1550, %v1657
      %v1762 = vadd.f32 %v1551, %v1658
      %v1763 = vadd.f32 %v1552, %v1659
      %v1764 = vadd.f32 %v1553, %v1660
      %v1765 = vadd.f32 %v1554, %v1661
      %v1766 = vadd.f32 %v1555, %v1662
      %v1767 = vadd.f32 %v1556, %v1663
      %v1768 = vadd.f32 %v1557, %v1664
      %v1769 = vadd.f32 %v1558, %v1665
      %v1770 = vadd.f32 %v1559, %v1666
      %v1771 = vadd.f32 %v1560, %v1667
      %s1772 = sadd.s32 %s1032, 4
      %s1773 = sld [smem:[#allocation4 + %s1772]]
      %v1774 = vstv %s1773
      %v1775 = vmul.f32 %v1774, %v505
      %v1776 = vmul.f32 %v1774, %v506
      %v1777 = vmul.f32 %v1774, %v507
      %v1778 = vmul.f32 %v1774, %v508
      %v1779 = vmul.f32 %v1774, %v509
      %v1780 = vmul.f32 %v1774, %v510
      %v1781 = vmul.f32 %v1774, %v511
      %v1782 = vmul.f32 %v1774, %v512
      %v1783 = vmul.f32 %v1774, %v513
      %v1784 = vmul.f32 %v1774, %v514
      %v1785 = vmul.f32 %v1774, %v515
      %v1786 = vmul.f32 %v1774, %v516
      %v1787 = vmul.f32 %v1774, %v517
      %v1788 = vmul.f32 %v1774, %v518
      %v1789 = vmul.f32 %v1774, %v519
      %v1790 = vmul.f32 %v1774, %v520
      %v1791 = vmul.f32 %v1774, %v521
      %v1792 = vmul.f32 %v1774, %v522
      %v1793 = vmul.f32 %v1774, %v523
      %v1794 = vmul.f32 %v1774, %v524
      %v1795 = vmul.f32 %v1774, %v525
      %v1796 = vmul.f32 %v1774, %v526
      %v1797 = vmul.f32 %v1774, %v527
      %v1798 = vmul.f32 %v1774, %v528
      %v1799 = vmul.f32 %v1774, %v529
      %v1800 = vmul.f32 %v1774, %v530
      %v1801 = vmul.f32 %v1774, %v531
      %v1802 = vmul.f32 %v1774, %v532
      %v1803 = vmul.f32 %v1774, %v533
      %v1804 = vmul.f32 %v1774, %v534
      %v1805 = vmul.f32 %v1774, %v535
      %v1806 = vmul.f32 %v1774, %v536
      %v1807 = vmul.f32 %v1774, %v537
      %v1808 = vmul.f32 %v1774, %v538
      %v1809 = vmul.f32 %v1774, %v539
      %v1810 = vmul.f32 %v1774, %v540
      %v1811 = vmul.f32 %v1774, %v541
      %v1812 = vmul.f32 %v1774, %v542
      %v1813 = vmul.f32 %v1774, %v543
      %v1814 = vmul.f32 %v1774, %v544
      %v1815 = vmul.f32 %v1774, %v545
      %v1816 = vmul.f32 %v1774, %v546
      %v1817 = vmul.f32 %v1774, %v547
      %v1818 = vmul.f32 %v1774, %v548
      %v1819 = vmul.f32 %v1774, %v549
      %v1820 = vmul.f32 %v1774, %v550
      %v1821 = vmul.f32 %v1774, %v551
      %v1822 = vmul.f32 %v1774, %v552
      %v1823 = vmul.f32 %v1774, %v553
      %v1824 = vmul.f32 %v1774, %v554
      %v1825 = vmul.f32 %v1774, %v555
      %v1826 = vmul.f32 %v1774, %v556
      %v1827 = vmul.f32 %v1774, %v557
      %v1828 = vmul.f32 %v1774, %v558
      %v1829 = vmul.f32 %v1774, %v559
      %v1830 = vmul.f32 %v1774, %v560
      %v1831 = vmul.f32 %v1774, %v561
      %v1832 = vmul.f32 %v1774, %v562
      %v1833 = vmul.f32 %v1774, %v563
      %v1834 = vmul.f32 %v1774, %v564
      %v1835 = vmul.f32 %v1774, %v565
      %v1836 = vmul.f32 %v1774, %v566
      %v1837 = vmul.f32 %v1774, %v567
      %v1838 = vmul.f32 %v1774, %v568
      %v1839 = vmul.f32 %v1774, %v569
      %v1840 = vmul.f32 %v1774, %v570
      %v1841 = vmul.f32 %v1774, %v571
      %v1842 = vmul.f32 %v1774, %v572
      %v1843 = vmul.f32 %v1774, %v573
      %v1844 = vmul.f32 %v1774, %v574
      %v1845 = vmul.f32 %v1774, %v575
      %v1846 = vmul.f32 %v1774, %v576
      %v1847 = vmul.f32 %v1774, %v577
      %v1848 = vmul.f32 %v1774, %v578
      %v1849 = vmul.f32 %v1774, %v579
      %v1850 = vmul.f32 %v1774, %v580
      %v1851 = vmul.f32 %v1774, %v581
      %v1852 = vmul.f32 %v1774, %v582
      %v1853 = vmul.f32 %v1774, %v583
      %v1854 = vmul.f32 %v1774, %v584
      %v1855 = vmul.f32 %v1774, %v585
      %v1856 = vmul.f32 %v1774, %v586
      %v1857 = vmul.f32 %v1774, %v587
      %v1858 = vmul.f32 %v1774, %v588
      %v1859 = vmul.f32 %v1774, %v589
      %v1860 = vmul.f32 %v1774, %v590
      %v1861 = vmul.f32 %v1774, %v591
      %v1862 = vmul.f32 %v1774, %v592
      %v1863 = vmul.f32 %v1774, %v593
      %v1864 = vmul.f32 %v1774, %v594
      %v1865 = vmul.f32 %v1774, %v595
      %v1866 = vmul.f32 %v1774, %v596
      %v1867 = vmul.f32 %v1774, %v597
      %v1868 = vmul.f32 %v1774, %v598
      %v1869 = vmul.f32 %v1774, %v599
      %v1870 = vmul.f32 %v1774, %v600
      %v1871 = vmul.f32 %v1774, %v601
      %v1872 = vmul.f32 %v1774, %v602
      %v1873 = vmul.f32 %v1774, %v603
      %v1874 = vmul.f32 %v1774, %v604
      %v1875 = vmul.f32 %v1774, %v605
      %v1876 = vmul.f32 %v1774, %v606
      %v1877 = vmul.f32 %v1774, %v607
      %v1878 = vmul.f32 %v1774, %v608
      %v1879 = vadd.f32 %v1668, %v1775
      %v1880 = vadd.f32 %v1669, %v1776
      %v1881 = vadd.f32 %v1670, %v1777
      %v1882 = vadd.f32 %v1671, %v1778
      %v1883 = vadd.f32 %v1672, %v1779
      %v1884 = vadd.f32 %v1673, %v1780
      %v1885 = vadd.f32 %v1674, %v1781
      %v1886 = vadd.f32 %v1675, %v1782
      %v1887 = vadd.f32 %v1676, %v1783
      %v1888 = vadd.f32 %v1677, %v1784
      %v1889 = vadd.f32 %v1678, %v1785
      %v1890 = vadd.f32 %v1679, %v1786
      %v1891 = vadd.f32 %v1680, %v1787
      %v1892 = vadd.f32 %v1681, %v1788
      %v1893 = vadd.f32 %v1682, %v1789
      %v1894 = vadd.f32 %v1683, %v1790
      %v1895 = vadd.f32 %v1684, %v1791
      %v1896 = vadd.f32 %v1685, %v1792
      %v1897 = vadd.f32 %v1686, %v1793
      %v1898 = vadd.f32 %v1687, %v1794
      %v1899 = vadd.f32 %v1688, %v1795
      %v1900 = vadd.f32 %v1689, %v1796
      %v1901 = vadd.f32 %v1690, %v1797
      %v1902 = vadd.f32 %v1691, %v1798
      %v1903 = vadd.f32 %v1692, %v1799
      %v1904 = vadd.f32 %v1693, %v1800
      %v1905 = vadd.f32 %v1694, %v1801
      %v1906 = vadd.f32 %v1695, %v1802
      %v1907 = vadd.f32 %v1696, %v1803
      %v1908 = vadd.f32 %v1697, %v1804
      %v1909 = vadd.f32 %v1698, %v1805
      %v1910 = vadd.f32 %v1699, %v1806
      %v1911 = vadd.f32 %v1700, %v1807
      %v1912 = vadd.f32 %v1701, %v1808
      %v1913 = vadd.f32 %v1702, %v1809
      %v1914 = vadd.f32 %v1703, %v1810
      %v1915 = vadd.f32 %v1704, %v1811
      %v1916 = vadd.f32 %v1705, %v1812
      %v1917 = vadd.f32 %v1706, %v1813
      %v1918 = vadd.f32 %v1707, %v1814
      %v1919 = vadd.f32 %v1708, %v1815
      %v1920 = vadd.f32 %v1709, %v1816
      %v1921 = vadd.f32 %v1710, %v1817
      %v1922 = vadd.f32 %v1711, %v1818
      %v1923 = vadd.f32 %v1712, %v1819
      %v1924 = vadd.f32 %v1713, %v1820
      %v1925 = vadd.f32 %v1714, %v1821
      %v1926 = vadd.f32 %v1715, %v1822
      %v1927 = vadd.f32 %v1716, %v1823
      %v1928 = vadd.f32 %v1717, %v1824
      %v1929 = vadd.f32 %v1718, %v1825
      %v1930 = vadd.f32 %v1719, %v1826
      %v1931 = vadd.f32 %v1720, %v1827
      %v1932 = vadd.f32 %v1721, %v1828
      %v1933 = vadd.f32 %v1722, %v1829
      %v1934 = vadd.f32 %v1723, %v1830
      %v1935 = vadd.f32 %v1724, %v1831
      %v1936 = vadd.f32 %v1725, %v1832
      %v1937 = vadd.f32 %v1726, %v1833
      %v1938 = vadd.f32 %v1727, %v1834
      %v1939 = vadd.f32 %v1728, %v1835
      %v1940 = vadd.f32 %v1729, %v1836
      %v1941 = vadd.f32 %v1730, %v1837
      %v1942 = vadd.f32 %v1731, %v1838
      %v1943 = vadd.f32 %v1732, %v1839
      %v1944 = vadd.f32 %v1733, %v1840
      %v1945 = vadd.f32 %v1734, %v1841
      %v1946 = vadd.f32 %v1735, %v1842
      %v1947 = vadd.f32 %v1736, %v1843
      %v1948 = vadd.f32 %v1737, %v1844
      %v1949 = vadd.f32 %v1738, %v1845
      %v1950 = vadd.f32 %v1739, %v1846
      %v1951 = vadd.f32 %v1740, %v1847
      %v1952 = vadd.f32 %v1741, %v1848
      %v1953 = vadd.f32 %v1742, %v1849
      %v1954 = vadd.f32 %v1743, %v1850
      %v1955 = vadd.f32 %v1744, %v1851
      %v1956 = vadd.f32 %v1745, %v1852
      %v1957 = vadd.f32 %v1746, %v1853
      %v1958 = vadd.f32 %v1747, %v1854
      %v1959 = vadd.f32 %v1748, %v1855
      %v1960 = vadd.f32 %v1749, %v1856
      %v1961 = vadd.f32 %v1750, %v1857
      %v1962 = vadd.f32 %v1751, %v1858
      %v1963 = vadd.f32 %v1752, %v1859
      %v1964 = vadd.f32 %v1753, %v1860
      %v1965 = vadd.f32 %v1754, %v1861
      %v1966 = vadd.f32 %v1755, %v1862
      %v1967 = vadd.f32 %v1756, %v1863
      %v1968 = vadd.f32 %v1757, %v1864
      %v1969 = vadd.f32 %v1758, %v1865
      %v1970 = vadd.f32 %v1759, %v1866
      %v1971 = vadd.f32 %v1760, %v1867
      %v1972 = vadd.f32 %v1761, %v1868
      %v1973 = vadd.f32 %v1762, %v1869
      %v1974 = vadd.f32 %v1763, %v1870
      %v1975 = vadd.f32 %v1764, %v1871
      %v1976 = vadd.f32 %v1765, %v1872
      %v1977 = vadd.f32 %v1766, %v1873
      %v1978 = vadd.f32 %v1767, %v1874
      %v1979 = vadd.f32 %v1768, %v1875
      %v1980 = vadd.f32 %v1769, %v1876
      %v1981 = vadd.f32 %v1770, %v1877
      %v1982 = vadd.f32 %v1771, %v1878
      %s1983 = sadd.s32 %s1032, 5
      %s1984 = sld [smem:[#allocation4 + %s1983]]
      %v1985 = vstv %s1984
      %v1986 = vmul.f32 %v1985, %v609
      %v1987 = vmul.f32 %v1985, %v610
      %v1988 = vmul.f32 %v1985, %v611
      %v1989 = vmul.f32 %v1985, %v612
      %v1990 = vmul.f32 %v1985, %v613
      %v1991 = vmul.f32 %v1985, %v614
      %v1992 = vmul.f32 %v1985, %v615
      %v1993 = vmul.f32 %v1985, %v616
      %v1994 = vmul.f32 %v1985, %v617
      %v1995 = vmul.f32 %v1985, %v618
      %v1996 = vmul.f32 %v1985, %v619
      %v1997 = vmul.f32 %v1985, %v620
      %v1998 = vmul.f32 %v1985, %v621
      %v1999 = vmul.f32 %v1985, %v622
      %v2000 = vmul.f32 %v1985, %v623
      %v2001 = vmul.f32 %v1985, %v624
      %v2002 = vmul.f32 %v1985, %v625
      %v2003 = vmul.f32 %v1985, %v626
      %v2004 = vmul.f32 %v1985, %v627
      %v2005 = vmul.f32 %v1985, %v628
      %v2006 = vmul.f32 %v1985, %v629
      %v2007 = vmul.f32 %v1985, %v630
      %v2008 = vmul.f32 %v1985, %v631
      %v2009 = vmul.f32 %v1985, %v632
      %v2010 = vmul.f32 %v1985, %v633
      %v2011 = vmul.f32 %v1985, %v634
      %v2012 = vmul.f32 %v1985, %v635
      %v2013 = vmul.f32 %v1985, %v636
      %v2014 = vmul.f32 %v1985, %v637
      %v2015 = vmul.f32 %v1985, %v638
      %v2016 = vmul.f32 %v1985, %v639
      %v2017 = vmul.f32 %v1985, %v640
      %v2018 = vmul.f32 %v1985, %v641
      %v2019 = vmul.f32 %v1985, %v642
      %v2020 = vmul.f32 %v1985, %v643
      %v2021 = vmul.f32 %v1985, %v644
      %v2022 = vmul.f32 %v1985, %v645
      %v2023 = vmul.f32 %v1985, %v646
      %v2024 = vmul.f32 %v1985, %v647
      %v2025 = vmul.f32 %v1985, %v648
      %v2026 = vmul.f32 %v1985, %v649
      %v2027 = vmul.f32 %v1985, %v650
      %v2028 = vmul.f32 %v1985, %v651
      %v2029 = vmul.f32 %v1985, %v652
      %v2030 = vmul.f32 %v1985, %v653
      %v2031 = vmul.f32 %v1985, %v654
      %v2032 = vmul.f32 %v1985, %v655
      %v2033 = vmul.f32 %v1985, %v656
      %v2034 = vmul.f32 %v1985, %v657
      %v2035 = vmul.f32 %v1985, %v658
      %v2036 = vmul.f32 %v1985, %v659
      %v2037 = vmul.f32 %v1985, %v660
      %v2038 = vmul.f32 %v1985, %v661
      %v2039 = vmul.f32 %v1985, %v662
      %v2040 = vmul.f32 %v1985, %v663
      %v2041 = vmul.f32 %v1985, %v664
      %v2042 = vmul.f32 %v1985, %v665
      %v2043 = vmul.f32 %v1985, %v666
      %v2044 = vmul.f32 %v1985, %v667
      %v2045 = vmul.f32 %v1985, %v668
      %v2046 = vmul.f32 %v1985, %v669
      %v2047 = vmul.f32 %v1985, %v670
      %v2048 = vmul.f32 %v1985, %v671
      %v2049 = vmul.f32 %v1985, %v672
      %v2050 = vmul.f32 %v1985, %v673
      %v2051 = vmul.f32 %v1985, %v674
      %v2052 = vmul.f32 %v1985, %v675
      %v2053 = vmul.f32 %v1985, %v676
      %v2054 = vmul.f32 %v1985, %v677
      %v2055 = vmul.f32 %v1985, %v678
      %v2056 = vmul.f32 %v1985, %v679
      %v2057 = vmul.f32 %v1985, %v680
      %v2058 = vmul.f32 %v1985, %v681
      %v2059 = vmul.f32 %v1985, %v682
      %v2060 = vmul.f32 %v1985, %v683
      %v2061 = vmul.f32 %v1985, %v684
      %v2062 = vmul.f32 %v1985, %v685
      %v2063 = vmul.f32 %v1985, %v686
      %v2064 = vmul.f32 %v1985, %v687
      %v2065 = vmul.f32 %v1985, %v688
      %v2066 = vmul.f32 %v1985, %v689
      %v2067 = vmul.f32 %v1985, %v690
      %v2068 = vmul.f32 %v1985, %v691
      %v2069 = vmul.f32 %v1985, %v692
      %v2070 = vmul.f32 %v1985, %v693
      %v2071 = vmul.f32 %v1985, %v694
      %v2072 = vmul.f32 %v1985, %v695
      %v2073 = vmul.f32 %v1985, %v696
      %v2074 = vmul.f32 %v1985, %v697
      %v2075 = vmul.f32 %v1985, %v698
      %v2076 = vmul.f32 %v1985, %v699
      %v2077 = vmul.f32 %v1985, %v700
      %v2078 = vmul.f32 %v1985, %v701
      %v2079 = vmul.f32 %v1985, %v702
      %v2080 = vmul.f32 %v1985, %v703
      %v2081 = vmul.f32 %v1985, %v704
      %v2082 = vmul.f32 %v1985, %v705
      %v2083 = vmul.f32 %v1985, %v706
      %v2084 = vmul.f32 %v1985, %v707
      %v2085 = vmul.f32 %v1985, %v708
      %v2086 = vmul.f32 %v1985, %v709
      %v2087 = vmul.f32 %v1985, %v710
      %v2088 = vmul.f32 %v1985, %v711
      %v2089 = vmul.f32 %v1985, %v712
      %v2090 = vadd.f32 %v1879, %v1986
      %v2091 = vadd.f32 %v1880, %v1987
      %v2092 = vadd.f32 %v1881, %v1988
      %v2093 = vadd.f32 %v1882, %v1989
      %v2094 = vadd.f32 %v1883, %v1990
      %v2095 = vadd.f32 %v1884, %v1991
      %v2096 = vadd.f32 %v1885, %v1992
      %v2097 = vadd.f32 %v1886, %v1993
      %v2098 = vadd.f32 %v1887, %v1994
      %v2099 = vadd.f32 %v1888, %v1995
      %v2100 = vadd.f32 %v1889, %v1996
      %v2101 = vadd.f32 %v1890, %v1997
      %v2102 = vadd.f32 %v1891, %v1998
      %v2103 = vadd.f32 %v1892, %v1999
      %v2104 = vadd.f32 %v1893, %v2000
      %v2105 = vadd.f32 %v1894, %v2001
      %v2106 = vadd.f32 %v1895, %v2002
      %v2107 = vadd.f32 %v1896, %v2003
      %v2108 = vadd.f32 %v1897, %v2004
      %v2109 = vadd.f32 %v1898, %v2005
      %v2110 = vadd.f32 %v1899, %v2006
      %v2111 = vadd.f32 %v1900, %v2007
      %v2112 = vadd.f32 %v1901, %v2008
      %v2113 = vadd.f32 %v1902, %v2009
      %v2114 = vadd.f32 %v1903, %v2010
      %v2115 = vadd.f32 %v1904, %v2011
      %v2116 = vadd.f32 %v1905, %v2012
      %v2117 = vadd.f32 %v1906, %v2013
      %v2118 = vadd.f32 %v1907, %v2014
      %v2119 = vadd.f32 %v1908, %v2015
      %v2120 = vadd.f32 %v1909, %v2016
      %v2121 = vadd.f32 %v1910, %v2017
      %v2122 = vadd.f32 %v1911, %v2018
      %v2123 = vadd.f32 %v1912, %v2019
      %v2124 = vadd.f32 %v1913, %v2020
      %v2125 = vadd.f32 %v1914, %v2021
      %v2126 = vadd.f32 %v1915, %v2022
      %v2127 = vadd.f32 %v1916, %v2023
      %v2128 = vadd.f32 %v1917, %v2024
      %v2129 = vadd.f32 %v1918, %v2025
      %v2130 = vadd.f32 %v1919, %v2026
      %v2131 = vadd.f32 %v1920, %v2027
      %v2132 = vadd.f32 %v1921, %v2028
      %v2133 = vadd.f32 %v1922, %v2029
      %v2134 = vadd.f32 %v1923, %v2030
      %v2135 = vadd.f32 %v1924, %v2031
      %v2136 = vadd.f32 %v1925, %v2032
      %v2137 = vadd.f32 %v1926, %v2033
      %v2138 = vadd.f32 %v1927, %v2034
      %v2139 = vadd.f32 %v1928, %v2035
      %v2140 = vadd.f32 %v1929, %v2036
      %v2141 = vadd.f32 %v1930, %v2037
      %v2142 = vadd.f32 %v1931, %v2038
      %v2143 = vadd.f32 %v1932, %v2039
      %v2144 = vadd.f32 %v1933, %v2040
      %v2145 = vadd.f32 %v1934, %v2041
      %v2146 = vadd.f32 %v1935, %v2042
      %v2147 = vadd.f32 %v1936, %v2043
      %v2148 = vadd.f32 %v1937, %v2044
      %v2149 = vadd.f32 %v1938, %v2045
      %v2150 = vadd.f32 %v1939, %v2046
      %v2151 = vadd.f32 %v1940, %v2047
      %v2152 = vadd.f32 %v1941, %v2048
      %v2153 = vadd.f32 %v1942, %v2049
      %v2154 = vadd.f32 %v1943, %v2050
      %v2155 = vadd.f32 %v1944, %v2051
      %v2156 = vadd.f32 %v1945, %v2052
      %v2157 = vadd.f32 %v1946, %v2053
      %v2158 = vadd.f32 %v1947, %v2054
      %v2159 = vadd.f32 %v1948, %v2055
      %v2160 = vadd.f32 %v1949, %v2056
      %v2161 = vadd.f32 %v1950, %v2057
      %v2162 = vadd.f32 %v1951, %v2058
      %v2163 = vadd.f32 %v1952, %v2059
      %v2164 = vadd.f32 %v1953, %v2060
      %v2165 = vadd.f32 %v1954, %v2061
      %v2166 = vadd.f32 %v1955, %v2062
      %v2167 = vadd.f32 %v1956, %v2063
      %v2168 = vadd.f32 %v1957, %v2064
      %v2169 = vadd.f32 %v1958, %v2065
      %v2170 = vadd.f32 %v1959, %v2066
      %v2171 = vadd.f32 %v1960, %v2067
      %v2172 = vadd.f32 %v1961, %v2068
      %v2173 = vadd.f32 %v1962, %v2069
      %v2174 = vadd.f32 %v1963, %v2070
      %v2175 = vadd.f32 %v1964, %v2071
      %v2176 = vadd.f32 %v1965, %v2072
      %v2177 = vadd.f32 %v1966, %v2073
      %v2178 = vadd.f32 %v1967, %v2074
      %v2179 = vadd.f32 %v1968, %v2075
      %v2180 = vadd.f32 %v1969, %v2076
      %v2181 = vadd.f32 %v1970, %v2077
      %v2182 = vadd.f32 %v1971, %v2078
      %v2183 = vadd.f32 %v1972, %v2079
      %v2184 = vadd.f32 %v1973, %v2080
      %v2185 = vadd.f32 %v1974, %v2081
      %v2186 = vadd.f32 %v1975, %v2082
      %v2187 = vadd.f32 %v1976, %v2083
      %v2188 = vadd.f32 %v1977, %v2084
      %v2189 = vadd.f32 %v1978, %v2085
      %v2190 = vadd.f32 %v1979, %v2086
      %v2191 = vadd.f32 %v1980, %v2087
      %v2192 = vadd.f32 %v1981, %v2088
      %v2193 = vadd.f32 %v1982, %v2089
      %s2194 = sadd.s32 %s1032, 6
      %s2195 = sld [smem:[#allocation4 + %s2194]]
      %v2196 = vstv %s2195
      %v2197 = vmul.f32 %v2196, %v714
      %v2198 = vmul.f32 %v2196, %v715
      %v2199 = vmul.f32 %v2196, %v716
      %v2200 = vmul.f32 %v2196, %v717
      %v2201 = vmul.f32 %v2196, %v718
      %v2202 = vmul.f32 %v2196, %v719
      %v2203 = vmul.f32 %v2196, %v720
      %v2204 = vmul.f32 %v2196, %v721
      %v2205 = vmul.f32 %v2196, %v722
      %v2206 = vmul.f32 %v2196, %v723
      %v2207 = vmul.f32 %v2196, %v724
      %v2208 = vmul.f32 %v2196, %v725
      %v2209 = vmul.f32 %v2196, %v726
      %v2210 = vmul.f32 %v2196, %v727
      %v2211 = vmul.f32 %v2196, %v728
      %v2212 = vmul.f32 %v2196, %v729
      %v2213 = vmul.f32 %v2196, %v730
      %v2214 = vmul.f32 %v2196, %v731
      %v2215 = vmul.f32 %v2196, %v732
      %v2216 = vmul.f32 %v2196, %v733
      %v2217 = vmul.f32 %v2196, %v734
      %v2218 = vmul.f32 %v2196, %v735
      %v2219 = vmul.f32 %v2196, %v736
      %v2220 = vmul.f32 %v2196, %v737
      %v2221 = vmul.f32 %v2196, %v738
      %v2222 = vmul.f32 %v2196, %v739
      %v2223 = vmul.f32 %v2196, %v740
      %v2224 = vmul.f32 %v2196, %v741
      %v2225 = vmul.f32 %v2196, %v742
      %v2226 = vmul.f32 %v2196, %v743
      %v2227 = vmul.f32 %v2196, %v744
      %v2228 = vmul.f32 %v2196, %v745
      %v2229 = vmul.f32 %v2196, %v746
      %v2230 = vmul.f32 %v2196, %v747
      %v2231 = vmul.f32 %v2196, %v748
      %v2232 = vmul.f32 %v2196, %v749
      %v2233 = vmul.f32 %v2196, %v750
      %v2234 = vmul.f32 %v2196, %v751
      %v2235 = vmul.f32 %v2196, %v752
      %v2236 = vmul.f32 %v2196, %v753
      %v2237 = vmul.f32 %v2196, %v754
      %v2238 = vmul.f32 %v2196, %v755
      %v2239 = vmul.f32 %v2196, %v756
      %v2240 = vmul.f32 %v2196, %v757
      %v2241 = vmul.f32 %v2196, %v758
      %v2242 = vmul.f32 %v2196, %v759
      %v2243 = vmul.f32 %v2196, %v760
      %v2244 = vmul.f32 %v2196, %v761
      %v2245 = vmul.f32 %v2196, %v762
      %v2246 = vmul.f32 %v2196, %v763
      %v2247 = vmul.f32 %v2196, %v764
      %v2248 = vmul.f32 %v2196, %v765
      %v2249 = vmul.f32 %v2196, %v766
      %v2250 = vmul.f32 %v2196, %v767
      %v2251 = vmul.f32 %v2196, %v768
      %v2252 = vmul.f32 %v2196, %v769
      %v2253 = vmul.f32 %v2196, %v770
      %v2254 = vmul.f32 %v2196, %v771
      %v2255 = vmul.f32 %v2196, %v772
      %v2256 = vmul.f32 %v2196, %v773
      %v2257 = vmul.f32 %v2196, %v774
      %v2258 = vmul.f32 %v2196, %v775
      %v2259 = vmul.f32 %v2196, %v776
      %v2260 = vmul.f32 %v2196, %v777
      %v2261 = vmul.f32 %v2196, %v778
      %v2262 = vmul.f32 %v2196, %v779
      %v2263 = vmul.f32 %v2196, %v780
      %v2264 = vmul.f32 %v2196, %v781
      %v2265 = vmul.f32 %v2196, %v782
      %v2266 = vmul.f32 %v2196, %v783
      %v2267 = vmul.f32 %v2196, %v784
      %v2268 = vmul.f32 %v2196, %v785
      %v2269 = vmul.f32 %v2196, %v786
      %v2270 = vmul.f32 %v2196, %v787
      %v2271 = vmul.f32 %v2196, %v788
      %v2272 = vmul.f32 %v2196, %v789
      %v2273 = vmul.f32 %v2196, %v790
      %v2274 = vmul.f32 %v2196, %v791
      %v2275 = vmul.f32 %v2196, %v792
      %v2276 = vmul.f32 %v2196, %v793
      %v2277 = vmul.f32 %v2196, %v794
      %v2278 = vmul.f32 %v2196, %v795
      %v2279 = vmul.f32 %v2196, %v796
      %v2280 = vmul.f32 %v2196, %v797
      %v2281 = vmul.f32 %v2196, %v798
      %v2282 = vmul.f32 %v2196, %v799
      %v2283 = vmul.f32 %v2196, %v800
      %v2284 = vmul.f32 %v2196, %v801
      %v2285 = vmul.f32 %v2196, %v802
      %v2286 = vmul.f32 %v2196, %v803
      %v2287 = vmul.f32 %v2196, %v804
      %v2288 = vmul.f32 %v2196, %v805
      %v2289 = vmul.f32 %v2196, %v806
      %v2290 = vmul.f32 %v2196, %v807
      %v2291 = vmul.f32 %v2196, %v808
      %v2292 = vmul.f32 %v2196, %v809
      %v2293 = vmul.f32 %v2196, %v810
      %v2294 = vmul.f32 %v2196, %v811
      %v2295 = vmul.f32 %v2196, %v812
      %v2296 = vmul.f32 %v2196, %v813
      %v2297 = vmul.f32 %v2196, %v814
      %v2298 = vmul.f32 %v2196, %v815
      %v2299 = vmul.f32 %v2196, %v816
      %v2300 = vmul.f32 %v2196, %v817
      %v2301 = vadd.f32 %v2090, %v2197
      %v2302 = vadd.f32 %v2091, %v2198
      %v2303 = vadd.f32 %v2092, %v2199
      %v2304 = vadd.f32 %v2093, %v2200
      %v2305 = vadd.f32 %v2094, %v2201
      %v2306 = vadd.f32 %v2095, %v2202
      %v2307 = vadd.f32 %v2096, %v2203
      %v2308 = vadd.f32 %v2097, %v2204
      %v2309 = vadd.f32 %v2098, %v2205
      %v2310 = vadd.f32 %v2099, %v2206
      %v2311 = vadd.f32 %v2100, %v2207
      %v2312 = vadd.f32 %v2101, %v2208
      %v2313 = vadd.f32 %v2102, %v2209
      %v2314 = vadd.f32 %v2103, %v2210
      %v2315 = vadd.f32 %v2104, %v2211
      %v2316 = vadd.f32 %v2105, %v2212
      %v2317 = vadd.f32 %v2106, %v2213
      %v2318 = vadd.f32 %v2107, %v2214
      %v2319 = vadd.f32 %v2108, %v2215
      %v2320 = vadd.f32 %v2109, %v2216
      %v2321 = vadd.f32 %v2110, %v2217
      %v2322 = vadd.f32 %v2111, %v2218
      %v2323 = vadd.f32 %v2112, %v2219
      %v2324 = vadd.f32 %v2113, %v2220
      %v2325 = vadd.f32 %v2114, %v2221
      %v2326 = vadd.f32 %v2115, %v2222
      %v2327 = vadd.f32 %v2116, %v2223
      %v2328 = vadd.f32 %v2117, %v2224
      %v2329 = vadd.f32 %v2118, %v2225
      %v2330 = vadd.f32 %v2119, %v2226
      %v2331 = vadd.f32 %v2120, %v2227
      %v2332 = vadd.f32 %v2121, %v2228
      %v2333 = vadd.f32 %v2122, %v2229
      %v2334 = vadd.f32 %v2123, %v2230
      %v2335 = vadd.f32 %v2124, %v2231
      %v2336 = vadd.f32 %v2125, %v2232
      %v2337 = vadd.f32 %v2126, %v2233
      %v2338 = vadd.f32 %v2127, %v2234
      %v2339 = vadd.f32 %v2128, %v2235
      %v2340 = vadd.f32 %v2129, %v2236
      %v2341 = vadd.f32 %v2130, %v2237
      %v2342 = vadd.f32 %v2131, %v2238
      %v2343 = vadd.f32 %v2132, %v2239
      %v2344 = vadd.f32 %v2133, %v2240
      %v2345 = vadd.f32 %v2134, %v2241
      %v2346 = vadd.f32 %v2135, %v2242
      %v2347 = vadd.f32 %v2136, %v2243
      %v2348 = vadd.f32 %v2137, %v2244
      %v2349 = vadd.f32 %v2138, %v2245
      %v2350 = vadd.f32 %v2139, %v2246
      %v2351 = vadd.f32 %v2140, %v2247
      %v2352 = vadd.f32 %v2141, %v2248
      %v2353 = vadd.f32 %v2142, %v2249
      %v2354 = vadd.f32 %v2143, %v2250
      %v2355 = vadd.f32 %v2144, %v2251
      %v2356 = vadd.f32 %v2145, %v2252
      %v2357 = vadd.f32 %v2146, %v2253
      %v2358 = vadd.f32 %v2147, %v2254
      %v2359 = vadd.f32 %v2148, %v2255
      %v2360 = vadd.f32 %v2149, %v2256
      %v2361 = vadd.f32 %v2150, %v2257
      %v2362 = vadd.f32 %v2151, %v2258
      %v2363 = vadd.f32 %v2152, %v2259
      %v2364 = vadd.f32 %v2153, %v2260
      %v2365 = vadd.f32 %v2154, %v2261
      %v2366 = vadd.f32 %v2155, %v2262
      %v2367 = vadd.f32 %v2156, %v2263
      %v2368 = vadd.f32 %v2157, %v2264
      %v2369 = vadd.f32 %v2158, %v2265
      %v2370 = vadd.f32 %v2159, %v2266
      %v2371 = vadd.f32 %v2160, %v2267
      %v2372 = vadd.f32 %v2161, %v2268
      %v2373 = vadd.f32 %v2162, %v2269
      %v2374 = vadd.f32 %v2163, %v2270
      %v2375 = vadd.f32 %v2164, %v2271
      %v2376 = vadd.f32 %v2165, %v2272
      %v2377 = vadd.f32 %v2166, %v2273
      %v2378 = vadd.f32 %v2167, %v2274
      %v2379 = vadd.f32 %v2168, %v2275
      %v2380 = vadd.f32 %v2169, %v2276
      %v2381 = vadd.f32 %v2170, %v2277
      %v2382 = vadd.f32 %v2171, %v2278
      %v2383 = vadd.f32 %v2172, %v2279
      %v2384 = vadd.f32 %v2173, %v2280
      %v2385 = vadd.f32 %v2174, %v2281
      %v2386 = vadd.f32 %v2175, %v2282
      %v2387 = vadd.f32 %v2176, %v2283
      %v2388 = vadd.f32 %v2177, %v2284
      %v2389 = vadd.f32 %v2178, %v2285
      %v2390 = vadd.f32 %v2179, %v2286
      %v2391 = vadd.f32 %v2180, %v2287
      %v2392 = vadd.f32 %v2181, %v2288
      %v2393 = vadd.f32 %v2182, %v2289
      %v2394 = vadd.f32 %v2183, %v2290
      %v2395 = vadd.f32 %v2184, %v2291
      %v2396 = vadd.f32 %v2185, %v2292
      %v2397 = vadd.f32 %v2186, %v2293
      %v2398 = vadd.f32 %v2187, %v2294
      %v2399 = vadd.f32 %v2188, %v2295
      %v2400 = vadd.f32 %v2189, %v2296
      %v2401 = vadd.f32 %v2190, %v2297
      %v2402 = vadd.f32 %v2191, %v2298
      %v2403 = vadd.f32 %v2192, %v2299
      %v2404 = vadd.f32 %v2193, %v2300
      %s2405 = sadd.s32 %s1032, 7
      %s2406 = sld [smem:[#allocation4 + %s2405]]
      %v2407 = vstv %s2406
      %v2408 = vmul.f32 %v2407, %v818
      %v2409 = vmul.f32 %v2407, %v819
      %v2410 = vmul.f32 %v2407, %v820
      %v2411 = vmul.f32 %v2407, %v821
      %v2412 = vmul.f32 %v2407, %v822
      %v2413 = vmul.f32 %v2407, %v823
      %v2414 = vmul.f32 %v2407, %v824
      %v2415 = vmul.f32 %v2407, %v825
      %v2416 = vmul.f32 %v2407, %v826
      %v2417 = vmul.f32 %v2407, %v827
      %v2418 = vmul.f32 %v2407, %v828
      %v2419 = vmul.f32 %v2407, %v829
      %v2420 = vmul.f32 %v2407, %v830
      %v2421 = vmul.f32 %v2407, %v831
      %v2422 = vmul.f32 %v2407, %v832
      %v2423 = vmul.f32 %v2407, %v833
      %v2424 = vmul.f32 %v2407, %v834
      %v2425 = vmul.f32 %v2407, %v835
      %v2426 = vmul.f32 %v2407, %v836
      %v2427 = vmul.f32 %v2407, %v837
      %v2428 = vmul.f32 %v2407, %v838
      %v2429 = vmul.f32 %v2407, %v839
      %v2430 = vmul.f32 %v2407, %v840
      %v2431 = vmul.f32 %v2407, %v841
      %v2432 = vmul.f32 %v2407, %v842
      %v2433 = vmul.f32 %v2407, %v843
      %v2434 = vmul.f32 %v2407, %v844
      %v2435 = vmul.f32 %v2407, %v845
      %v2436 = vmul.f32 %v2407, %v846
      %v2437 = vmul.f32 %v2407, %v847
      %v2438 = vmul.f32 %v2407, %v848
      %v2439 = vmul.f32 %v2407, %v849
      %v2440 = vmul.f32 %v2407, %v850
      %v2441 = vmul.f32 %v2407, %v851
      %v2442 = vmul.f32 %v2407, %v852
      %v2443 = vmul.f32 %v2407, %v853
      %v2444 = vmul.f32 %v2407, %v854
      %v2445 = vmul.f32 %v2407, %v855
      %v2446 = vmul.f32 %v2407, %v856
      %v2447 = vmul.f32 %v2407, %v857
      %v2448 = vmul.f32 %v2407, %v858
      %v2449 = vmul.f32 %v2407, %v859
      %v2450 = vmul.f32 %v2407, %v860
      %v2451 = vmul.f32 %v2407, %v861
      %v2452 = vmul.f32 %v2407, %v862
      %v2453 = vmul.f32 %v2407, %v863
      %v2454 = vmul.f32 %v2407, %v864
      %v2455 = vmul.f32 %v2407, %v865
      %v2456 = vmul.f32 %v2407, %v866
      %v2457 = vmul.f32 %v2407, %v867
      %v2458 = vmul.f32 %v2407, %v868
      %v2459 = vmul.f32 %v2407, %v869
      %v2460 = vmul.f32 %v2407, %v870
      %v2461 = vmul.f32 %v2407, %v871
      %v2462 = vmul.f32 %v2407, %v872
      %v2463 = vmul.f32 %v2407, %v873
      %v2464 = vmul.f32 %v2407, %v874
      %v2465 = vmul.f32 %v2407, %v875
      %v2466 = vmul.f32 %v2407, %v876
      %v2467 = vmul.f32 %v2407, %v877
      %v2468 = vmul.f32 %v2407, %v878
      %v2469 = vmul.f32 %v2407, %v879
      %v2470 = vmul.f32 %v2407, %v880
      %v2471 = vmul.f32 %v2407, %v881
      %v2472 = vmul.f32 %v2407, %v882
      %v2473 = vmul.f32 %v2407, %v883
      %v2474 = vmul.f32 %v2407, %v884
      %v2475 = vmul.f32 %v2407, %v885
      %v2476 = vmul.f32 %v2407, %v886
      %v2477 = vmul.f32 %v2407, %v887
      %v2478 = vmul.f32 %v2407, %v888
      %v2479 = vmul.f32 %v2407, %v889
      %v2480 = vmul.f32 %v2407, %v890
      %v2481 = vmul.f32 %v2407, %v891
      %v2482 = vmul.f32 %v2407, %v892
      %v2483 = vmul.f32 %v2407, %v893
      %v2484 = vmul.f32 %v2407, %v894
      %v2485 = vmul.f32 %v2407, %v895
      %v2486 = vmul.f32 %v2407, %v896
      %v2487 = vmul.f32 %v2407, %v897
      %v2488 = vmul.f32 %v2407, %v898
      %v2489 = vmul.f32 %v2407, %v899
      %v2490 = vmul.f32 %v2407, %v900
      %v2491 = vmul.f32 %v2407, %v901
      %v2492 = vmul.f32 %v2407, %v902
      %v2493 = vmul.f32 %v2407, %v903
      %v2494 = vmul.f32 %v2407, %v904
      %v2495 = vmul.f32 %v2407, %v905
      %v2496 = vmul.f32 %v2407, %v906
      %v2497 = vmul.f32 %v2407, %v907
      %v2498 = vmul.f32 %v2407, %v908
      %v2499 = vmul.f32 %v2407, %v909
      %v2500 = vmul.f32 %v2407, %v910
      %v2501 = vmul.f32 %v2407, %v911
      %v2502 = vmul.f32 %v2407, %v912
      %v2503 = vmul.f32 %v2407, %v913
      %v2504 = vmul.f32 %v2407, %v914
      %v2505 = vmul.f32 %v2407, %v915
      %v2506 = vmul.f32 %v2407, %v916
      %v2507 = vmul.f32 %v2407, %v917
      %v2508 = vmul.f32 %v2407, %v918
      %v2509 = vmul.f32 %v2407, %v919
      %v2510 = vmul.f32 %v2407, %v920
      %v2511 = vmul.f32 %v2407, %v921
      %v2512 = vadd.f32 %v2301, %v2408
      %v2513 = vadd.f32 %v2302, %v2409
      %v2514 = vadd.f32 %v2303, %v2410
      %v2515 = vadd.f32 %v2304, %v2411
      %v2516 = vadd.f32 %v2305, %v2412
      %v2517 = vadd.f32 %v2306, %v2413
      %v2518 = vadd.f32 %v2307, %v2414
      %v2519 = vadd.f32 %v2308, %v2415
      %v2520 = vadd.f32 %v2309, %v2416
      %v2521 = vadd.f32 %v2310, %v2417
      %v2522 = vadd.f32 %v2311, %v2418
      %v2523 = vadd.f32 %v2312, %v2419
      %v2524 = vadd.f32 %v2313, %v2420
      %v2525 = vadd.f32 %v2314, %v2421
      %v2526 = vadd.f32 %v2315, %v2422
      %v2527 = vadd.f32 %v2316, %v2423
      %v2528 = vadd.f32 %v2317, %v2424
      %v2529 = vadd.f32 %v2318, %v2425
      %v2530 = vadd.f32 %v2319, %v2426
      %v2531 = vadd.f32 %v2320, %v2427
      %v2532 = vadd.f32 %v2321, %v2428
      %v2533 = vadd.f32 %v2322, %v2429
      %v2534 = vadd.f32 %v2323, %v2430
      %v2535 = vadd.f32 %v2324, %v2431
      %v2536 = vadd.f32 %v2325, %v2432
      %v2537 = vadd.f32 %v2326, %v2433
      %v2538 = vadd.f32 %v2327, %v2434
      %v2539 = vadd.f32 %v2328, %v2435
      %v2540 = vadd.f32 %v2329, %v2436
      %v2541 = vadd.f32 %v2330, %v2437
      %v2542 = vadd.f32 %v2331, %v2438
      %v2543 = vadd.f32 %v2332, %v2439
      %v2544 = vadd.f32 %v2333, %v2440
      %v2545 = vadd.f32 %v2334, %v2441
      %v2546 = vadd.f32 %v2335, %v2442
      %v2547 = vadd.f32 %v2336, %v2443
      %v2548 = vadd.f32 %v2337, %v2444
      %v2549 = vadd.f32 %v2338, %v2445
      %v2550 = vadd.f32 %v2339, %v2446
      %v2551 = vadd.f32 %v2340, %v2447
      %v2552 = vadd.f32 %v2341, %v2448
      %v2553 = vadd.f32 %v2342, %v2449
      %v2554 = vadd.f32 %v2343, %v2450
      %v2555 = vadd.f32 %v2344, %v2451
      %v2556 = vadd.f32 %v2345, %v2452
      %v2557 = vadd.f32 %v2346, %v2453
      %v2558 = vadd.f32 %v2347, %v2454
      %v2559 = vadd.f32 %v2348, %v2455
      %v2560 = vadd.f32 %v2349, %v2456
      %v2561 = vadd.f32 %v2350, %v2457
      %v2562 = vadd.f32 %v2351, %v2458
      %v2563 = vadd.f32 %v2352, %v2459
      %v2564 = vadd.f32 %v2353, %v2460
      %v2565 = vadd.f32 %v2354, %v2461
      %v2566 = vadd.f32 %v2355, %v2462
      %v2567 = vadd.f32 %v2356, %v2463
      %v2568 = vadd.f32 %v2357, %v2464
      %v2569 = vadd.f32 %v2358, %v2465
      %v2570 = vadd.f32 %v2359, %v2466
      %v2571 = vadd.f32 %v2360, %v2467
      %v2572 = vadd.f32 %v2361, %v2468
      %v2573 = vadd.f32 %v2362, %v2469
      %v2574 = vadd.f32 %v2363, %v2470
      %v2575 = vadd.f32 %v2364, %v2471
      %v2576 = vadd.f32 %v2365, %v2472
      %v2577 = vadd.f32 %v2366, %v2473
      %v2578 = vadd.f32 %v2367, %v2474
      %v2579 = vadd.f32 %v2368, %v2475
      %v2580 = vadd.f32 %v2369, %v2476
      %v2581 = vadd.f32 %v2370, %v2477
      %v2582 = vadd.f32 %v2371, %v2478
      %v2583 = vadd.f32 %v2372, %v2479
      %v2584 = vadd.f32 %v2373, %v2480
      %v2585 = vadd.f32 %v2374, %v2481
      %v2586 = vadd.f32 %v2375, %v2482
      %v2587 = vadd.f32 %v2376, %v2483
      %v2588 = vadd.f32 %v2377, %v2484
      %v2589 = vadd.f32 %v2378, %v2485
      %v2590 = vadd.f32 %v2379, %v2486
      %v2591 = vadd.f32 %v2380, %v2487
      %v2592 = vadd.f32 %v2381, %v2488
      %v2593 = vadd.f32 %v2382, %v2489
      %v2594 = vadd.f32 %v2383, %v2490
      %v2595 = vadd.f32 %v2384, %v2491
      %v2596 = vadd.f32 %v2385, %v2492
      %v2597 = vadd.f32 %v2386, %v2493
      %v2598 = vadd.f32 %v2387, %v2494
      %v2599 = vadd.f32 %v2388, %v2495
      %v2600 = vadd.f32 %v2389, %v2496
      %v2601 = vadd.f32 %v2390, %v2497
      %v2602 = vadd.f32 %v2391, %v2498
      %v2603 = vadd.f32 %v2392, %v2499
      %v2604 = vadd.f32 %v2393, %v2500
      %v2605 = vadd.f32 %v2394, %v2501
      %v2606 = vadd.f32 %v2395, %v2502
      %v2607 = vadd.f32 %v2396, %v2503
      %v2608 = vadd.f32 %v2397, %v2504
      %v2609 = vadd.f32 %v2398, %v2505
      %v2610 = vadd.f32 %v2399, %v2506
      %v2611 = vadd.f32 %v2400, %v2507
      %v2612 = vadd.f32 %v2401, %v2508
      %v2613 = vadd.f32 %v2402, %v2509
      %v2614 = vadd.f32 %v2403, %v2510
      %v2615 = vadd.f32 %v2404, %v2511
      %s2616 = sadd.s32 %s1032, 8
      %s2617 = sld [smem:[#allocation4 + %s2616]]
      %v2618 = vstv %s2617
      %v2619 = vmul.f32 %v2618, %v922
      %v2620 = vmul.f32 %v2618, %v923
      %v2621 = vmul.f32 %v2618, %v924
      %v2622 = vmul.f32 %v2618, %v925
      %v2623 = vmul.f32 %v2618, %v926
      %v2624 = vmul.f32 %v2618, %v927
      %v2625 = vmul.f32 %v2618, %v928
      %v2626 = vmul.f32 %v2618, %v929
      %v2627 = vmul.f32 %v2618, %v930
      %v2628 = vmul.f32 %v2618, %v931
      %v2629 = vmul.f32 %v2618, %v932
      %v2630 = vmul.f32 %v2618, %v933
      %v2631 = vmul.f32 %v2618, %v934
      %v2632 = vmul.f32 %v2618, %v935
      %v2633 = vmul.f32 %v2618, %v936
      %v2634 = vmul.f32 %v2618, %v937
      %v2635 = vmul.f32 %v2618, %v938
      %v2636 = vmul.f32 %v2618, %v939
      %v2637 = vmul.f32 %v2618, %v940
      %v2638 = vmul.f32 %v2618, %v941
      %v2639 = vmul.f32 %v2618, %v942
      %v2640 = vmul.f32 %v2618, %v943
      %v2641 = vmul.f32 %v2618, %v944
      %v2642 = vmul.f32 %v2618, %v945
      %v2643 = vmul.f32 %v2618, %v946
      %v2644 = vmul.f32 %v2618, %v947
      %v2645 = vmul.f32 %v2618, %v948
      %v2646 = vmul.f32 %v2618, %v949
      %v2647 = vmul.f32 %v2618, %v950
      %v2648 = vmul.f32 %v2618, %v951
      %v2649 = vmul.f32 %v2618, %v952
      %v2650 = vmul.f32 %v2618, %v953
      %v2651 = vmul.f32 %v2618, %v954
      %v2652 = vmul.f32 %v2618, %v955
      %v2653 = vmul.f32 %v2618, %v956
      %v2654 = vmul.f32 %v2618, %v957
      %v2655 = vmul.f32 %v2618, %v958
      %v2656 = vmul.f32 %v2618, %v959
      %v2657 = vmul.f32 %v2618, %v960
      %v2658 = vmul.f32 %v2618, %v961
      %v2659 = vmul.f32 %v2618, %v962
      %v2660 = vmul.f32 %v2618, %v963
      %v2661 = vmul.f32 %v2618, %v964
      %v2662 = vmul.f32 %v2618, %v965
      %v2663 = vmul.f32 %v2618, %v966
      %v2664 = vmul.f32 %v2618, %v967
      %v2665 = vmul.f32 %v2618, %v968
      %v2666 = vmul.f32 %v2618, %v969
      %v2667 = vmul.f32 %v2618, %v970
      %v2668 = vmul.f32 %v2618, %v971
      %v2669 = vmul.f32 %v2618, %v972
      %v2670 = vmul.f32 %v2618, %v973
      %v2671 = vmul.f32 %v2618, %v974
      %v2672 = vmul.f32 %v2618, %v975
      %v2673 = vmul.f32 %v2618, %v976
      %v2674 = vmul.f32 %v2618, %v977
      %v2675 = vmul.f32 %v2618, %v978
      %v2676 = vmul.f32 %v2618, %v979
      %v2677 = vmul.f32 %v2618, %v980
      %v2678 = vmul.f32 %v2618, %v981
      %v2679 = vmul.f32 %v2618, %v982
      %v2680 = vmul.f32 %v2618, %v983
      %v2681 = vmul.f32 %v2618, %v984
      %v2682 = vmul.f32 %v2618, %v985
      %v2683 = vmul.f32 %v2618, %v986
      %v2684 = vmul.f32 %v2618, %v987
      %v2685 = vmul.f32 %v2618, %v988
      %v2686 = vmul.f32 %v2618, %v989
      %v2687 = vmul.f32 %v2618, %v990
      %v2688 = vmul.f32 %v2618, %v991
      %v2689 = vmul.f32 %v2618, %v992
      %v2690 = vmul.f32 %v2618, %v993
      %v2691 = vmul.f32 %v2618, %v994
      %v2692 = vmul.f32 %v2618, %v995
      %v2693 = vmul.f32 %v2618, %v996
      %v2694 = vmul.f32 %v2618, %v997
      %v2695 = vmul.f32 %v2618, %v998
      %v2696 = vmul.f32 %v2618, %v999
      %v2697 = vmul.f32 %v2618, %v1000
      %v2698 = vmul.f32 %v2618, %v1001
      %v2699 = vmul.f32 %v2618, %v1002
      %v2700 = vmul.f32 %v2618, %v1003
      %v2701 = vmul.f32 %v2618, %v1004
      %v2702 = vmul.f32 %v2618, %v1005
      %v2703 = vmul.f32 %v2618, %v1006
      %v2704 = vmul.f32 %v2618, %v1007
      %v2705 = vmul.f32 %v2618, %v1008
      %v2706 = vmul.f32 %v2618, %v1009
      %v2707 = vmul.f32 %v2618, %v1010
      %v2708 = vmul.f32 %v2618, %v1011
      %v2709 = vmul.f32 %v2618, %v1012
      %v2710 = vmul.f32 %v2618, %v1013
      %v2711 = vmul.f32 %v2618, %v1014
      %v2712 = vmul.f32 %v2618, %v1015
      %v2713 = vmul.f32 %v2618, %v1016
      %v2714 = vmul.f32 %v2618, %v1017
      %v2715 = vmul.f32 %v2618, %v1018
      %v2716 = vmul.f32 %v2618, %v1019
      %v2717 = vmul.f32 %v2618, %v1020
      %v2718 = vmul.f32 %v2618, %v1021
      %v2719 = vmul.f32 %v2618, %v1022
      %v2720 = vmul.f32 %v2618, %v1023
      %v2721 = vmul.f32 %v2618, %v1024
      %v2722 = vmul.f32 %v2618, %v1025
      %v2723 = vadd.f32 %v2512, %v2619
      %v2724 = vadd.f32 %v2513, %v2620
      %v2725 = vadd.f32 %v2514, %v2621
      %v2726 = vadd.f32 %v2515, %v2622
      %v2727 = vadd.f32 %v2516, %v2623
      %v2728 = vadd.f32 %v2517, %v2624
      %v2729 = vadd.f32 %v2518, %v2625
      %v2730 = vadd.f32 %v2519, %v2626
      %v2731 = vadd.f32 %v2520, %v2627
      %v2732 = vadd.f32 %v2521, %v2628
      %v2733 = vadd.f32 %v2522, %v2629
      %v2734 = vadd.f32 %v2523, %v2630
      %v2735 = vadd.f32 %v2524, %v2631
      %v2736 = vadd.f32 %v2525, %v2632
      %v2737 = vadd.f32 %v2526, %v2633
      %v2738 = vadd.f32 %v2527, %v2634
      %v2739 = vadd.f32 %v2528, %v2635
      %v2740 = vadd.f32 %v2529, %v2636
      %v2741 = vadd.f32 %v2530, %v2637
      %v2742 = vadd.f32 %v2531, %v2638
      %v2743 = vadd.f32 %v2532, %v2639
      %v2744 = vadd.f32 %v2533, %v2640
      %v2745 = vadd.f32 %v2534, %v2641
      %v2746 = vadd.f32 %v2535, %v2642
      %v2747 = vadd.f32 %v2536, %v2643
      %v2748 = vadd.f32 %v2537, %v2644
      %v2749 = vadd.f32 %v2538, %v2645
      %v2750 = vadd.f32 %v2539, %v2646
      %v2751 = vadd.f32 %v2540, %v2647
      %v2752 = vadd.f32 %v2541, %v2648
      %v2753 = vadd.f32 %v2542, %v2649
      %v2754 = vadd.f32 %v2543, %v2650
      %v2755 = vadd.f32 %v2544, %v2651
      %v2756 = vadd.f32 %v2545, %v2652
      %v2757 = vadd.f32 %v2546, %v2653
      %v2758 = vadd.f32 %v2547, %v2654
      %v2759 = vadd.f32 %v2548, %v2655
      %v2760 = vadd.f32 %v2549, %v2656
      %v2761 = vadd.f32 %v2550, %v2657
      %v2762 = vadd.f32 %v2551, %v2658
      %v2763 = vadd.f32 %v2552, %v2659
      %v2764 = vadd.f32 %v2553, %v2660
      %v2765 = vadd.f32 %v2554, %v2661
      %v2766 = vadd.f32 %v2555, %v2662
      %v2767 = vadd.f32 %v2556, %v2663
      %v2768 = vadd.f32 %v2557, %v2664
      %v2769 = vadd.f32 %v2558, %v2665
      %v2770 = vadd.f32 %v2559, %v2666
      %v2771 = vadd.f32 %v2560, %v2667
      %v2772 = vadd.f32 %v2561, %v2668
      %v2773 = vadd.f32 %v2562, %v2669
      %v2774 = vadd.f32 %v2563, %v2670
      %v2775 = vadd.f32 %v2564, %v2671
      %v2776 = vadd.f32 %v2565, %v2672
      %v2777 = vadd.f32 %v2566, %v2673
      %v2778 = vadd.f32 %v2567, %v2674
      %v2779 = vadd.f32 %v2568, %v2675
      %v2780 = vadd.f32 %v2569, %v2676
      %v2781 = vadd.f32 %v2570, %v2677
      %v2782 = vadd.f32 %v2571, %v2678
      %v2783 = vadd.f32 %v2572, %v2679
      %v2784 = vadd.f32 %v2573, %v2680
      %v2785 = vadd.f32 %v2574, %v2681
      %v2786 = vadd.f32 %v2575, %v2682
      %v2787 = vadd.f32 %v2576, %v2683
      %v2788 = vadd.f32 %v2577, %v2684
      %v2789 = vadd.f32 %v2578, %v2685
      %v2790 = vadd.f32 %v2579, %v2686
      %v2791 = vadd.f32 %v2580, %v2687
      %v2792 = vadd.f32 %v2581, %v2688
      %v2793 = vadd.f32 %v2582, %v2689
      %v2794 = vadd.f32 %v2583, %v2690
      %v2795 = vadd.f32 %v2584, %v2691
      %v2796 = vadd.f32 %v2585, %v2692
      %v2797 = vadd.f32 %v2586, %v2693
      %v2798 = vadd.f32 %v2587, %v2694
      %v2799 = vadd.f32 %v2588, %v2695
      %v2800 = vadd.f32 %v2589, %v2696
      %v2801 = vadd.f32 %v2590, %v2697
      %v2802 = vadd.f32 %v2591, %v2698
      %v2803 = vadd.f32 %v2592, %v2699
      %v2804 = vadd.f32 %v2593, %v2700
      %v2805 = vadd.f32 %v2594, %v2701
      %v2806 = vadd.f32 %v2595, %v2702
      %v2807 = vadd.f32 %v2596, %v2703
      %v2808 = vadd.f32 %v2597, %v2704
      %v2809 = vadd.f32 %v2598, %v2705
      %v2810 = vadd.f32 %v2599, %v2706
      %v2811 = vadd.f32 %v2600, %v2707
      %v2812 = vadd.f32 %v2601, %v2708
      %v2813 = vadd.f32 %v2602, %v2709
      %v2814 = vadd.f32 %v2603, %v2710
      %v2815 = vadd.f32 %v2604, %v2711
      %v2816 = vadd.f32 %v2605, %v2712
      %v2817 = vadd.f32 %v2606, %v2713
      %v2818 = vadd.f32 %v2607, %v2714
      %v2819 = vadd.f32 %v2608, %v2715
      %v2820 = vadd.f32 %v2609, %v2716
      %v2821 = vadd.f32 %v2610, %v2717
      %v2822 = vadd.f32 %v2611, %v2718
      %v2823 = vadd.f32 %v2612, %v2719
      %v2824 = vadd.f32 %v2613, %v2720
      %v2825 = vadd.f32 %v2614, %v2721
      %v2826 = vadd.f32 %v2615, %v2722
      %s2827 = sld [smem:[#allocation6 + %s1027]]
      %v2828 = vstv %s2827
      %v2829 = vadd.f32 %v2723, %v2828
      %v2830 = vadd.f32 %v2724, %v2828
      %v2831 = vadd.f32 %v2725, %v2828
      %v2832 = vadd.f32 %v2726, %v2828
      %v2833 = vadd.f32 %v2727, %v2828
      %v2834 = vadd.f32 %v2728, %v2828
      %v2835 = vadd.f32 %v2729, %v2828
      %v2836 = vadd.f32 %v2730, %v2828
      %v2837 = vadd.f32 %v2731, %v2828
      %v2838 = vadd.f32 %v2732, %v2828
      %v2839 = vadd.f32 %v2733, %v2828
      %v2840 = vadd.f32 %v2734, %v2828
      %v2841 = vadd.f32 %v2735, %v2828
      %v2842 = vadd.f32 %v2736, %v2828
      %v2843 = vadd.f32 %v2737, %v2828
      %v2844 = vadd.f32 %v2738, %v2828
      %v2845 = vadd.f32 %v2739, %v2828
      %v2846 = vadd.f32 %v2740, %v2828
      %v2847 = vadd.f32 %v2741, %v2828
      %v2848 = vadd.f32 %v2742, %v2828
      %v2849 = vadd.f32 %v2743, %v2828
      %v2850 = vadd.f32 %v2744, %v2828
      %v2851 = vadd.f32 %v2745, %v2828
      %v2852 = vadd.f32 %v2746, %v2828
      %v2853 = vadd.f32 %v2747, %v2828
      %v2854 = vadd.f32 %v2748, %v2828
      %v2855 = vadd.f32 %v2749, %v2828
      %v2856 = vadd.f32 %v2750, %v2828
      %v2857 = vadd.f32 %v2751, %v2828
      %v2858 = vadd.f32 %v2752, %v2828
      %v2859 = vadd.f32 %v2753, %v2828
      %v2860 = vadd.f32 %v2754, %v2828
      %v2861 = vadd.f32 %v2755, %v2828
      %v2862 = vadd.f32 %v2756, %v2828
      %v2863 = vadd.f32 %v2757, %v2828
      %v2864 = vadd.f32 %v2758, %v2828
      %v2865 = vadd.f32 %v2759, %v2828
      %v2866 = vadd.f32 %v2760, %v2828
      %v2867 = vadd.f32 %v2761, %v2828
      %v2868 = vadd.f32 %v2762, %v2828
      %v2869 = vadd.f32 %v2763, %v2828
      %v2870 = vadd.f32 %v2764, %v2828
      %v2871 = vadd.f32 %v2765, %v2828
      %v2872 = vadd.f32 %v2766, %v2828
      %v2873 = vadd.f32 %v2767, %v2828
      %v2874 = vadd.f32 %v2768, %v2828
      %v2875 = vadd.f32 %v2769, %v2828
      %v2876 = vadd.f32 %v2770, %v2828
      %v2877 = vadd.f32 %v2771, %v2828
      %v2878 = vadd.f32 %v2772, %v2828
      %v2879 = vadd.f32 %v2773, %v2828
      %v2880 = vadd.f32 %v2774, %v2828
      %v2881 = vadd.f32 %v2775, %v2828
      %v2882 = vadd.f32 %v2776, %v2828
      %v2883 = vadd.f32 %v2777, %v2828
      %v2884 = vadd.f32 %v2778, %v2828
      %v2885 = vadd.f32 %v2779, %v2828
      %v2886 = vadd.f32 %v2780, %v2828
      %v2887 = vadd.f32 %v2781, %v2828
      %v2888 = vadd.f32 %v2782, %v2828
      %v2889 = vadd.f32 %v2783, %v2828
      %v2890 = vadd.f32 %v2784, %v2828
      %v2891 = vadd.f32 %v2785, %v2828
      %v2892 = vadd.f32 %v2786, %v2828
      %v2893 = vadd.f32 %v2787, %v2828
      %v2894 = vadd.f32 %v2788, %v2828
      %v2895 = vadd.f32 %v2789, %v2828
      %v2896 = vadd.f32 %v2790, %v2828
      %v2897 = vadd.f32 %v2791, %v2828
      %v2898 = vadd.f32 %v2792, %v2828
      %v2899 = vadd.f32 %v2793, %v2828
      %v2900 = vadd.f32 %v2794, %v2828
      %v2901 = vadd.f32 %v2795, %v2828
      %v2902 = vadd.f32 %v2796, %v2828
      %v2903 = vadd.f32 %v2797, %v2828
      %v2904 = vadd.f32 %v2798, %v2828
      %v2905 = vadd.f32 %v2799, %v2828
      %v2906 = vadd.f32 %v2800, %v2828
      %v2907 = vadd.f32 %v2801, %v2828
      %v2908 = vadd.f32 %v2802, %v2828
      %v2909 = vadd.f32 %v2803, %v2828
      %v2910 = vadd.f32 %v2804, %v2828
      %v2911 = vadd.f32 %v2805, %v2828
      %v2912 = vadd.f32 %v2806, %v2828
      %v2913 = vadd.f32 %v2807, %v2828
      %v2914 = vadd.f32 %v2808, %v2828
      %v2915 = vadd.f32 %v2809, %v2828
      %v2916 = vadd.f32 %v2810, %v2828
      %v2917 = vadd.f32 %v2811, %v2828
      %v2918 = vadd.f32 %v2812, %v2828
      %v2919 = vadd.f32 %v2813, %v2828
      %v2920 = vadd.f32 %v2814, %v2828
      %v2921 = vadd.f32 %v2815, %v2828
      %v2922 = vadd.f32 %v2816, %v2828
      %v2923 = vadd.f32 %v2817, %v2828
      %v2924 = vadd.f32 %v2818, %v2828
      %v2925 = vadd.f32 %v2819, %v2828
      %v2926 = vadd.f32 %v2820, %v2828
      %v2927 = vadd.f32 %v2821, %v2828
      %v2928 = vadd.f32 %v2822, %v2828
      %v2929 = vadd.f32 %v2823, %v2828
      %v2930 = vadd.f32 %v2824, %v2828
      %v2931 = vadd.f32 %v2825, %v2828
      %v2932 = vadd.f32 %v2826, %v2828
      %v2933 = vmax.f32 %v2829, 0.0
      %v2934 = vmax.f32 %v2830, 0.0
      %v2935 = vmax.f32 %v2831, 0.0
      %v2936 = vmax.f32 %v2832, 0.0
      %v2937 = vmax.f32 %v2833, 0.0
      %v2938 = vmax.f32 %v2834, 0.0
      %v2939 = vmax.f32 %v2835, 0.0
      %v2940 = vmax.f32 %v2836, 0.0
      %v2941 = vmax.f32 %v2837, 0.0
      %v2942 = vmax.f32 %v2838, 0.0
      %v2943 = vmax.f32 %v2839, 0.0
      %v2944 = vmax.f32 %v2840, 0.0
      %v2945 = vmax.f32 %v2841, 0.0
      %v2946 = vmax.f32 %v2842, 0.0
      %v2947 = vmax.f32 %v2843, 0.0
      %v2948 = vmax.f32 %v2844, 0.0
      %v2949 = vmax.f32 %v2845, 0.0
      %v2950 = vmax.f32 %v2846, 0.0
      %v2951 = vmax.f32 %v2847, 0.0
      %v2952 = vmax.f32 %v2848, 0.0
      %v2953 = vmax.f32 %v2849, 0.0
      %v2954 = vmax.f32 %v2850, 0.0
      %v2955 = vmax.f32 %v2851, 0.0
      %v2956 = vmax.f32 %v2852, 0.0
      %v2957 = vmax.f32 %v2853, 0.0
      %v2958 = vmax.f32 %v2854, 0.0
      %v2959 = vmax.f32 %v2855, 0.0
      %v2960 = vmax.f32 %v2856, 0.0
      %v2961 = vmax.f32 %v2857, 0.0
      %v2962 = vmax.f32 %v2858, 0.0
      %v2963 = vmax.f32 %v2859, 0.0
      %v2964 = vmax.f32 %v2860, 0.0
      %v2965 = vmax.f32 %v2861, 0.0
      %v2966 = vmax.f32 %v2862, 0.0
      %v2967 = vmax.f32 %v2863, 0.0
      %v2968 = vmax.f32 %v2864, 0.0
      %v2969 = vmax.f32 %v2865, 0.0
      %v2970 = vmax.f32 %v2866, 0.0
      %v2971 = vmax.f32 %v2867, 0.0
      %v2972 = vmax.f32 %v2868, 0.0
      %v2973 = vmax.f32 %v2869, 0.0
      %v2974 = vmax.f32 %v2870, 0.0
      %v2975 = vmax.f32 %v2871, 0.0
      %v2976 = vmax.f32 %v2872, 0.0
      %v2977 = vmax.f32 %v2873, 0.0
      %v2978 = vmax.f32 %v2874, 0.0
      %v2979 = vmax.f32 %v2875, 0.0
      %v2980 = vmax.f32 %v2876, 0.0
      %v2981 = vmax.f32 %v2877, 0.0
      %v2982 = vmax.f32 %v2878, 0.0
      %v2983 = vmax.f32 %v2879, 0.0
      %v2984 = vmax.f32 %v2880, 0.0
      %v2985 = vmax.f32 %v2881, 0.0
      %v2986 = vmax.f32 %v2882, 0.0
      %v2987 = vmax.f32 %v2883, 0.0
      %v2988 = vmax.f32 %v2884, 0.0
      %v2989 = vmax.f32 %v2885, 0.0
      %v2990 = vmax.f32 %v2886, 0.0
      %v2991 = vmax.f32 %v2887, 0.0
      %v2992 = vmax.f32 %v2888, 0.0
      %v2993 = vmax.f32 %v2889, 0.0
      %v2994 = vmax.f32 %v2890, 0.0
      %v2995 = vmax.f32 %v2891, 0.0
      %v2996 = vmax.f32 %v2892, 0.0
      %v2997 = vmax.f32 %v2893, 0.0
      %v2998 = vmax.f32 %v2894, 0.0
      %v2999 = vmax.f32 %v2895, 0.0
      %v3000 = vmax.f32 %v2896, 0.0
      %v3001 = vmax.f32 %v2897, 0.0
      %v3002 = vmax.f32 %v2898, 0.0
      %v3003 = vmax.f32 %v2899, 0.0
      %v3004 = vmax.f32 %v2900, 0.0
      %v3005 = vmax.f32 %v2901, 0.0
      %v3006 = vmax.f32 %v2902, 0.0
      %v3007 = vmax.f32 %v2903, 0.0
      %v3008 = vmax.f32 %v2904, 0.0
      %v3009 = vmax.f32 %v2905, 0.0
      %v3010 = vmax.f32 %v2906, 0.0
      %v3011 = vmax.f32 %v2907, 0.0
      %v3012 = vmax.f32 %v2908, 0.0
      %v3013 = vmax.f32 %v2909, 0.0
      %v3014 = vmax.f32 %v2910, 0.0
      %v3015 = vmax.f32 %v2911, 0.0
      %v3016 = vmax.f32 %v2912, 0.0
      %v3017 = vmax.f32 %v2913, 0.0
      %v3018 = vmax.f32 %v2914, 0.0
      %v3019 = vmax.f32 %v2915, 0.0
      %v3020 = vmax.f32 %v2916, 0.0
      %v3021 = vmax.f32 %v2917, 0.0
      %v3022 = vmax.f32 %v2918, 0.0
      %v3023 = vmax.f32 %v2919, 0.0
      %v3024 = vmax.f32 %v2920, 0.0
      %v3025 = vmax.f32 %v2921, 0.0
      %v3026 = vmax.f32 %v2922, 0.0
      %v3027 = vmax.f32 %v2923, 0.0
      %v3028 = vmax.f32 %v2924, 0.0
      %v3029 = vmax.f32 %v2925, 0.0
      %v3030 = vmax.f32 %v2926, 0.0
      %v3031 = vmax.f32 %v2927, 0.0
      %v3032 = vmax.f32 %v2928, 0.0
      %v3033 = vmax.f32 %v2929, 0.0
      %v3034 = vmax.f32 %v2930, 0.0
      %v3035 = vmax.f32 %v2931, 0.0
      %v3036 = vmax.f32 %v2932, 0.0
      %v3037 = vmax.f32 %v2933, %v2937
      %v3038 = vmax.f32 %v2934, %v2938
      %v3039 = vmax.f32 %v2935, %v2939
      %vm3040 = vcmask 1041408
      %v3041 = vsel %vm3040, %v2936, -inf
      %v3042 = vsel %vm3040, %v2940, -inf
      %v3043 = vmax.f32 %v3041, %v3042
      %v3044 = vmax.f32 %v2941, %v2945
      %v3045 = vmax.f32 %v2942, %v2946
      %v3046 = vmax.f32 %v2943, %v2947
      %v3047 = vsel %vm3040, %v2944, -inf
      %v3048 = vsel %vm3040, %v2948, -inf
      %v3049 = vmax.f32 %v3047, %v3048
      %v3050 = vmax.f32 %v2949, %v2953
      %v3051 = vmax.f32 %v2950, %v2954
      %v3052 = vmax.f32 %v2951, %v2955
      %v3053 = vsel %vm3040, %v2952, -inf
      %v3054 = vsel %vm3040, %v2956, -inf
      %v3055 = vmax.f32 %v3053, %v3054
      %v3056 = vmax.f32 %v2957, %v2961
      %v3057 = vmax.f32 %v2958, %v2962
      %v3058 = vmax.f32 %v2959, %v2963
      %v3059 = vsel %vm3040, %v2960, -inf
      %v3060 = vsel %vm3040, %v2964, -inf
      %v3061 = vmax.f32 %v3059, %v3060
      %v3062 = vmax.f32 %v2965, %v2969
      %v3063 = vmax.f32 %v2966, %v2970
      %v3064 = vmax.f32 %v2967, %v2971
      %v3065 = vsel %vm3040, %v2968, -inf
      %v3066 = vsel %vm3040, %v2972, -inf
      %v3067 = vmax.f32 %v3065, %v3066
      %v3068 = vmax.f32 %v2973, %v2977
      %v3069 = vmax.f32 %v2974, %v2978
      %v3070 = vmax.f32 %v2975, %v2979
      %v3071 = vsel %vm3040, %v2976, -inf
      %v3072 = vsel %vm3040, %v2980, -inf
      %v3073 = vmax.f32 %v3071, %v3072
      %v3074 = vmax.f32 %v2981, %v2985
      %v3075 = vmax.f32 %v2982, %v2986
      %v3076 = vmax.f32 %v2983, %v2987
      %v3077 = vsel %vm3040, %v2984, -inf
      %v3078 = vsel %vm3040, %v2988, -inf
      %v3079 = vmax.f32 %v3077, %v3078
      %v3080 = vmax.f32 %v2989, %v2993
      %v3081 = vmax.f32 %v2990, %v2994
      %v3082 = vmax.f32 %v2991, %v2995
      %v3083 = vsel %vm3040, %v2992, -inf
      %v3084 = vsel %vm3040, %v2996, -inf
      %v3085 = vmax.f32 %v3083, %v3084
      %v3086 = vmax.f32 %v2997, %v3001
      %v3087 = vmax.f32 %v2998, %v3002
      %v3088 = vmax.f32 %v2999, %v3003
      %v3089 = vsel %vm3040, %v3000, -inf
      %v3090 = vsel %vm3040, %v3004, -inf
      %v3091 = vmax.f32 %v3089, %v3090
      %v3092 = vmax.f32 %v3005, %v3009
      %v3093 = vmax.f32 %v3006, %v3010
      %v3094 = vmax.f32 %v3007, %v3011
      %v3095 = vsel %vm3040, %v3008, -inf
      %v3096 = vsel %vm3040, %v3012, -inf
      %v3097 = vmax.f32 %v3095, %v3096
      %v3098 = vmax.f32 %v3013, %v3017
      %v3099 = vmax.f32 %v3014, %v3018
      %v3100 = vmax.f32 %v3015, %v3019
      %v3101 = vsel %vm3040, %v3016, -inf
      %v3102 = vsel %vm3040, %v3020, -inf
      %v3103 = vmax.f32 %v3101, %v3102
      %v3104 = vmax.f32 %v3021, %v3025
      %v3105 = vmax.f32 %v3022, %v3026
      %v3106 = vmax.f32 %v3023, %v3027
      %v3107 = vsel %vm3040, %v3024, -inf
      %v3108 = vsel %vm3040, %v3028, -inf
      %v3109 = vmax.f32 %v3107, %v3108
      %v3110 = vmax.f32 %v3029, %v3033
      %v3111 = vmax.f32 %v3030, %v3034
      %v3112 = vmax.f32 %v3031, %v3035
      %v3113 = vsel %vm3040, %v3032, -inf
      %v3114 = vsel %vm3040, %v3036, -inf
      %v3115 = vmax.f32 %v3113, %v3114
      %vm3168 = vcmask 1046528
      %v3169 = vrot.slane %v3037, 1
      %v3170 = vrot.slane %v3038, 1
      %v3171 = vsel %vm3168, %v3169, %v3170
      %v3172 = vrot.slane %v3039, 1
      %v3173 = vsel %vm3168, %v3170, %v3172
      %v3174 = vrot.slane %v3043, 1
      %v3175 = vsel %vm3168, %v3172, %v3174
      %v3176 = vrot.slane %v3044, 1
      %v3177 = vrot.slane %v3045, 1
      %v3178 = vsel %vm3168, %v3176, %v3177
      %v3179 = vrot.slane %v3046, 1
      %v3180 = vsel %vm3168, %v3177, %v3179
      %v3181 = vrot.slane %v3049, 1
      %v3182 = vsel %vm3168, %v3179, %v3181
      %v3183 = vrot.slane %v3050, 1
      %v3184 = vrot.slane %v3051, 1
      %v3185 = vsel %vm3168, %v3183, %v3184
      %v3186 = vrot.slane %v3052, 1
      %v3187 = vsel %vm3168, %v3184, %v3186
      %v3188 = vrot.slane %v3055, 1
      %v3189 = vsel %vm3168, %v3186, %v3188
      %v3190 = vrot.slane %v3056, 1
      %v3191 = vrot.slane %v3057, 1
      %v3192 = vsel %vm3168, %v3190, %v3191
      %v3193 = vrot.slane %v3058, 1
      %v3194 = vsel %vm3168, %v3191, %v3193
      %v3195 = vrot.slane %v3061, 1
      %v3196 = vsel %vm3168, %v3193, %v3195
      %v3197 = vrot.slane %v3062, 1
      %v3198 = vrot.slane %v3063, 1
      %v3199 = vsel %vm3168, %v3197, %v3198
      %v3200 = vrot.slane %v3064, 1
      %v3201 = vsel %vm3168, %v3198, %v3200
      %v3202 = vrot.slane %v3067, 1
      %v3203 = vsel %vm3168, %v3200, %v3202
      %v3204 = vrot.slane %v3068, 1
      %v3205 = vrot.slane %v3069, 1
      %v3206 = vsel %vm3168, %v3204, %v3205
      %v3207 = vrot.slane %v3070, 1
      %v3208 = vsel %vm3168, %v3205, %v3207
      %v3209 = vrot.slane %v3073, 1
      %v3210 = vsel %vm3168, %v3207, %v3209
      %v3211 = vrot.slane %v3074, 1
      %v3212 = vrot.slane %v3075, 1
      %v3213 = vsel %vm3168, %v3211, %v3212
      %v3214 = vrot.slane %v3076, 1
      %v3215 = vsel %vm3168, %v3212, %v3214
      %v3216 = vrot.slane %v3079, 1
      %v3217 = vsel %vm3168, %v3214, %v3216
      %v3218 = vrot.slane %v3080, 1
      %v3219 = vrot.slane %v3081, 1
      %v3220 = vsel %vm3168, %v3218, %v3219
      %v3221 = vrot.slane %v3082, 1
      %v3222 = vsel %vm3168, %v3219, %v3221
      %v3223 = vrot.slane %v3085, 1
      %v3224 = vsel %vm3168, %v3221, %v3223
      %v3225 = vrot.slane %v3086, 1
      %v3226 = vrot.slane %v3087, 1
      %v3227 = vsel %vm3168, %v3225, %v3226
      %v3228 = vrot.slane %v3088, 1
      %v3229 = vsel %vm3168, %v3226, %v3228
      %v3230 = vrot.slane %v3091, 1
      %v3231 = vsel %vm3168, %v3228, %v3230
      %v3232 = vrot.slane %v3092, 1
      %v3233 = vrot.slane %v3093, 1
      %v3234 = vsel %vm3168, %v3232, %v3233
      %v3235 = vrot.slane %v3094, 1
      %v3236 = vsel %vm3168, %v3233, %v3235
      %v3237 = vrot.slane %v3097, 1
      %v3238 = vsel %vm3168, %v3235, %v3237
      %v3239 = vrot.slane %v3098, 1
      %v3240 = vrot.slane %v3099, 1
      %v3241 = vsel %vm3168, %v3239, %v3240
      %v3242 = vrot.slane %v3100, 1
      %v3243 = vsel %vm3168, %v3240, %v3242
      %v3244 = vrot.slane %v3103, 1
      %v3245 = vsel %vm3168, %v3242, %v3244
      %v3246 = vrot.slane %v3104, 1
      %v3247 = vrot.slane %v3105, 1
      %v3248 = vsel %vm3168, %v3246, %v3247
      %v3249 = vrot.slane %v3106, 1
      %v3250 = vsel %vm3168, %v3247, %v3249
      %v3251 = vrot.slane %v3109, 1
      %v3252 = vsel %vm3168, %v3249, %v3251
      %v3253 = vrot.slane %v3110, 1
      %v3254 = vrot.slane %v3111, 1
      %v3255 = vsel %vm3168, %v3253, %v3254
      %v3256 = vrot.slane %v3112, 1
      %v3257 = vsel %vm3168, %v3254, %v3256
      %v3258 = vrot.slane %v3115, 1
      %v3259 = vsel %vm3168, %v3256, %v3258
      %v3312 = vmax.f32 %v3037, %v3171
      %v3313 = vmax.f32 %v3038, %v3173
      %v3314 = vmax.f32 %v3039, %v3175
      %v3315 = vmax.f32 %v3043, %v3174
      %v3316 = vmax.f32 %v3044, %v3178
      %v3317 = vmax.f32 %v3045, %v3180
      %v3318 = vmax.f32 %v3046, %v3182
      %v3319 = vmax.f32 %v3049, %v3181
      %v3320 = vmax.f32 %v3050, %v3185
      %v3321 = vmax.f32 %v3051, %v3187
      %v3322 = vmax.f32 %v3052, %v3189
      %v3323 = vmax.f32 %v3055, %v3188
      %v3324 = vmax.f32 %v3056, %v3192
      %v3325 = vmax.f32 %v3057, %v3194
      %v3326 = vmax.f32 %v3058, %v3196
      %v3327 = vmax.f32 %v3061, %v3195
      %v3328 = vmax.f32 %v3062, %v3199
      %v3329 = vmax.f32 %v3063, %v3201
      %v3330 = vmax.f32 %v3064, %v3203
      %v3331 = vmax.f32 %v3067, %v3202
      %v3332 = vmax.f32 %v3068, %v3206
      %v3333 = vmax.f32 %v3069, %v3208
      %v3334 = vmax.f32 %v3070, %v3210
      %v3335 = vmax.f32 %v3073, %v3209
      %v3336 = vmax.f32 %v3074, %v3213
      %v3337 = vmax.f32 %v3075, %v3215
      %v3338 = vmax.f32 %v3076, %v3217
      %v3339 = vmax.f32 %v3079, %v3216
      %v3340 = vmax.f32 %v3080, %v3220
      %v3341 = vmax.f32 %v3081, %v3222
      %v3342 = vmax.f32 %v3082, %v3224
      %v3343 = vmax.f32 %v3085, %v3223
      %v3344 = vmax.f32 %v3086, %v3227
      %v3345 = vmax.f32 %v3087, %v3229
      %v3346 = vmax.f32 %v3088, %v3231
      %v3347 = vmax.f32 %v3091, %v3230
      %v3348 = vmax.f32 %v3092, %v3234
      %v3349 = vmax.f32 %v3093, %v3236
      %v3350 = vmax.f32 %v3094, %v3238
      %v3351 = vmax.f32 %v3097, %v3237
      %v3352 = vmax.f32 %v3098, %v3241
      %v3353 = vmax.f32 %v3099, %v3243
      %v3354 = vmax.f32 %v3100, %v3245
      %v3355 = vmax.f32 %v3103, %v3244
      %v3356 = vmax.f32 %v3104, %v3248
      %v3357 = vmax.f32 %v3105, %v3250
      %v3358 = vmax.f32 %v3106, %v3252
      %v3359 = vmax.f32 %v3109, %v3251
      %v3360 = vmax.f32 %v3110, %v3255
      %v3361 = vmax.f32 %v3111, %v3257
      %v3362 = vmax.f32 %v3112, %v3259
      %v3363 = vmax.f32 %v3115, %v3258
      %v3377 = vrot.slane %v3312, 1
      %v3378 = vrot.slane %v3316, 1
      %v3379 = vrot.slane %v3320, 1
      %v3380 = vrot.slane %v3324, 1
      %v3381 = vrot.slane %v3328, 1
      %v3382 = vrot.slane %v3332, 1
      %v3383 = vrot.slane %v3336, 1
      %v3384 = vrot.slane %v3340, 1
      %v3385 = vrot.slane %v3344, 1
      %v3386 = vrot.slane %v3348, 1
      %v3387 = vrot.slane %v3352, 1
      %v3388 = vrot.slane %v3356, 1
      %v3389 = vrot.slane %v3360, 1
      %v3403 = vrot.slane %v3312, 2
      %v3404 = vrot.slane %v3316, 2
      %v3405 = vrot.slane %v3320, 2
      %v3406 = vrot.slane %v3324, 2
      %v3407 = vrot.slane %v3328, 2
      %v3408 = vrot.slane %v3332, 2
      %v3409 = vrot.slane %v3336, 2
      %v3410 = vrot.slane %v3340, 2
      %v3411 = vrot.slane %v3344, 2
      %v3412 = vrot.slane %v3348, 2
      %v3413 = vrot.slane %v3352, 2
      %v3414 = vrot.slane %v3356, 2
      %v3415 = vrot.slane %v3360, 2
      %v3429 = vrot.slane %v3312, 3
      %v3430 = vrot.slane %v3316, 3
      %v3431 = vrot.slane %v3320, 3
      %v3432 = vrot.slane %v3324, 3
      %v3433 = vrot.slane %v3328, 3
      %v3434 = vrot.slane %v3332, 3
      %v3435 = vrot.slane %v3336, 3
      %v3436 = vrot.slane %v3340, 3
      %v3437 = vrot.slane %v3344, 3
      %v3438 = vrot.slane %v3348, 3
      %v3439 = vrot.slane %v3352, 3
      %v3440 = vrot.slane %v3356, 3
      %v3441 = vrot.slane %v3360, 3
      %v3468 = vrot.slane %v3313, 4
      %v3469 = vrot.slane %v3317, 4
      %v3470 = vrot.slane %v3321, 4
      %v3471 = vrot.slane %v3325, 4
      %v3472 = vrot.slane %v3329, 4
      %v3473 = vrot.slane %v3333, 4
      %v3474 = vrot.slane %v3337, 4
      %v3475 = vrot.slane %v3341, 4
      %v3476 = vrot.slane %v3345, 4
      %v3477 = vrot.slane %v3349, 4
      %v3478 = vrot.slane %v3353, 4
      %v3479 = vrot.slane %v3357, 4
      %v3480 = vrot.slane %v3361, 4
      %v3494 = vrot.slane %v3313, 5
      %v3495 = vrot.slane %v3317, 5
      %v3496 = vrot.slane %v3321, 5
      %v3497 = vrot.slane %v3325, 5
      %v3498 = vrot.slane %v3329, 5
      %v3499 = vrot.slane %v3333, 5
      %v3500 = vrot.slane %v3337, 5
      %v3501 = vrot.slane %v3341, 5
      %v3502 = vrot.slane %v3345, 5
      %v3503 = vrot.slane %v3349, 5
      %v3504 = vrot.slane %v3353, 5
      %v3505 = vrot.slane %v3357, 5
      %v3506 = vrot.slane %v3361, 5
      %v3520 = vrot.slane %v3313, 6
      %v3521 = vrot.slane %v3317, 6
      %v3522 = vrot.slane %v3321, 6
      %v3523 = vrot.slane %v3325, 6
      %v3524 = vrot.slane %v3329, 6
      %v3525 = vrot.slane %v3333, 6
      %v3526 = vrot.slane %v3337, 6
      %v3527 = vrot.slane %v3341, 6
      %v3528 = vrot.slane %v3345, 6
      %v3529 = vrot.slane %v3349, 6
      %v3530 = vrot.slane %v3353, 6
      %v3531 = vrot.slane %v3357, 6
      %v3532 = vrot.slane %v3361, 6
      %v3546 = vrot.slane %v3313, 7
      %v3547 = vrot.slane %v3317, 7
      %v3548 = vrot.slane %v3321, 7
      %v3549 = vrot.slane %v3325, 7
      %v3550 = vrot.slane %v3329, 7
      %v3551 = vrot.slane %v3333, 7
      %v3552 = vrot.slane %v3337, 7
      %v3553 = vrot.slane %v3341, 7
      %v3554 = vrot.slane %v3345, 7
      %v3555 = vrot.slane %v3349, 7
      %v3556 = vrot.slane %v3353, 7
      %v3557 = vrot.slane %v3357, 7
      %v3558 = vrot.slane %v3361, 7
      %v3585 = vrot.slane %v3314, 1
      %v3586 = vrot.slane %v3318, 1
      %v3587 = vrot.slane %v3322, 1
      %v3588 = vrot.slane %v3326, 1
      %v3589 = vrot.slane %v3330, 1
      %v3590 = vrot.slane %v3334, 1
      %v3591 = vrot.slane %v3338, 1
      %v3592 = vrot.slane %v3342, 1
      %v3593 = vrot.slane %v3346, 1
      %v3594 = vrot.slane %v3350, 1
      %v3595 = vrot.slane %v3354, 1
      %v3596 = vrot.slane %v3358, 1
      %v3597 = vrot.slane %v3362, 1
      %v3611 = vrot.slane %v3314, 2
      %v3612 = vrot.slane %v3318, 2
      %v3613 = vrot.slane %v3322, 2
      %v3614 = vrot.slane %v3326, 2
      %v3615 = vrot.slane %v3330, 2
      %v3616 = vrot.slane %v3334, 2
      %v3617 = vrot.slane %v3338, 2
      %v3618 = vrot.slane %v3342, 2
      %v3619 = vrot.slane %v3346, 2
      %v3620 = vrot.slane %v3350, 2
      %v3621 = vrot.slane %v3354, 2
      %v3622 = vrot.slane %v3358, 2
      %v3623 = vrot.slane %v3362, 2
      %v3637 = vrot.slane %v3314, 3
      %v3638 = vrot.slane %v3318, 3
      %v3639 = vrot.slane %v3322, 3
      %v3640 = vrot.slane %v3326, 3
      %v3641 = vrot.slane %v3330, 3
      %v3642 = vrot.slane %v3334, 3
      %v3643 = vrot.slane %v3338, 3
      %v3644 = vrot.slane %v3342, 3
      %v3645 = vrot.slane %v3346, 3
      %v3646 = vrot.slane %v3350, 3
      %v3647 = vrot.slane %v3354, 3
      %v3648 = vrot.slane %v3358, 3
      %v3649 = vrot.slane %v3362, 3
      %v3676 = vrot.slane %v3315, 4
      %v3677 = vrot.slane %v3319, 4
      %v3678 = vrot.slane %v3323, 4
      %v3679 = vrot.slane %v3327, 4
      %v3680 = vrot.slane %v3331, 4
      %v3681 = vrot.slane %v3335, 4
      %v3682 = vrot.slane %v3339, 4
      %v3683 = vrot.slane %v3343, 4
      %v3684 = vrot.slane %v3347, 4
      %v3685 = vrot.slane %v3351, 4
      %v3686 = vrot.slane %v3355, 4
      %v3687 = vrot.slane %v3359, 4
      %v3688 = vrot.slane %v3363, 4
      %vm3702 = vcmask 1040384
      %v3703 = vsel %vm3702, %v3312, %v3377
      %v3704 = vsel %vm3702, %v3316, %v3378
      %v3705 = vsel %vm3702, %v3320, %v3379
      %v3706 = vsel %vm3702, %v3324, %v3380
      %v3707 = vsel %vm3702, %v3328, %v3381
      %v3708 = vsel %vm3702, %v3332, %v3382
      %v3709 = vsel %vm3702, %v3336, %v3383
      %v3710 = vsel %vm3702, %v3340, %v3384
      %v3711 = vsel %vm3702, %v3344, %v3385
      %v3712 = vsel %vm3702, %v3348, %v3386
      %v3713 = vsel %vm3702, %v3352, %v3387
      %v3714 = vsel %vm3702, %v3356, %v3388
      %v3715 = vsel %vm3702, %v3360, %v3389
      %v3716 = vsel %vm3040, %v3703, %v3403
      %v3717 = vsel %vm3040, %v3704, %v3404
      %v3718 = vsel %vm3040, %v3705, %v3405
      %v3719 = vsel %vm3040, %v3706, %v3406
      %v3720 = vsel %vm3040, %v3707, %v3407
      %v3721 = vsel %vm3040, %v3708, %v3408
      %v3722 = vsel %vm3040, %v3709, %v3409
      %v3723 = vsel %vm3040, %v3710, %v3410
      %v3724 = vsel %vm3040, %v3711, %v3411
      %v3725 = vsel %vm3040, %v3712, %v3412
      %v3726 = vsel %vm3040, %v3713, %v3413
      %v3727 = vsel %vm3040, %v3714, %v3414
      %v3728 = vsel %vm3040, %v3715, %v3415
      %vm3729 = vcmask 1042432
      %v3730 = vsel %vm3729, %v3716, %v3429
      %v3731 = vsel %vm3729, %v3717, %v3430
      %v3732 = vsel %vm3729, %v3718, %v3431
      %v3733 = vsel %vm3729, %v3719, %v3432
      %v3734 = vsel %vm3729, %v3720, %v3433
      %v3735 = vsel %vm3729, %v3721, %v3434
      %v3736 = vsel %vm3729, %v3722, %v3435
      %v3737 = vsel %vm3729, %v3723, %v3436
      %v3738 = vsel %vm3729, %v3724, %v3437
      %v3739 = vsel %vm3729, %v3725, %v3438
      %v3740 = vsel %vm3729, %v3726, %v3439
      %v3741 = vsel %vm3729, %v3727, %v3440
      %v3742 = vsel %vm3729, %v3728, %v3441
      %vm3743 = vcmask 1043456
      %v3744 = vsel %vm3743, %v3730, %v3468
      %v3745 = vsel %vm3743, %v3731, %v3469
      %v3746 = vsel %vm3743, %v3732, %v3470
      %v3747 = vsel %vm3743, %v3733, %v3471
      %v3748 = vsel %vm3743, %v3734, %v3472
      %v3749 = vsel %vm3743, %v3735, %v3473
      %v3750 = vsel %vm3743, %v3736, %v3474
      %v3751 = vsel %vm3743, %v3737, %v3475
      %v3752 = vsel %vm3743, %v3738, %v3476
      %v3753 = vsel %vm3743, %v3739, %v3477
      %v3754 = vsel %vm3743, %v3740, %v3478
      %v3755 = vsel %vm3743, %v3741, %v3479
      %v3756 = vsel %vm3743, %v3742, %v3480
      %vm3757 = vcmask 1044480
      %v3758 = vsel %vm3757, %v3744, %v3494
      %v3759 = vsel %vm3757, %v3745, %v3495
      %v3760 = vsel %vm3757, %v3746, %v3496
      %v3761 = vsel %vm3757, %v3747, %v3497
      %v3762 = vsel %vm3757, %v3748, %v3498
      %v3763 = vsel %vm3757, %v3749, %v3499
      %v3764 = vsel %vm3757, %v3750, %v3500
      %v3765 = vsel %vm3757, %v3751, %v3501
      %v3766 = vsel %vm3757, %v3752, %v3502
      %v3767 = vsel %vm3757, %v3753, %v3503
      %v3768 = vsel %vm3757, %v3754, %v3504
      %v3769 = vsel %vm3757, %v3755, %v3505
      %v3770 = vsel %vm3757, %v3756, %v3506
      %vm3771 = vcmask 1045504
      %v3772 = vsel %vm3771, %v3758, %v3520
      %v3773 = vsel %vm3771, %v3759, %v3521
      %v3774 = vsel %vm3771, %v3760, %v3522
      %v3775 = vsel %vm3771, %v3761, %v3523
      %v3776 = vsel %vm3771, %v3762, %v3524
      %v3777 = vsel %vm3771, %v3763, %v3525
      %v3778 = vsel %vm3771, %v3764, %v3526
      %v3779 = vsel %vm3771, %v3765, %v3527
      %v3780 = vsel %vm3771, %v3766, %v3528
      %v3781 = vsel %vm3771, %v3767, %v3529
      %v3782 = vsel %vm3771, %v3768, %v3530
      %v3783 = vsel %vm3771, %v3769, %v3531
      %v3784 = vsel %vm3771, %v3770, %v3532
      %v3785 = vsel %vm3168, %v3772, %v3546
      %v3786 = vsel %vm3168, %v3773, %v3547
      %v3787 = vsel %vm3168, %v3774, %v3548
      %v3788 = vsel %vm3168, %v3775, %v3549
      %v3789 = vsel %vm3168, %v3776, %v3550
      %v3790 = vsel %vm3168, %v3777, %v3551
      %v3791 = vsel %vm3168, %v3778, %v3552
      %v3792 = vsel %vm3168, %v3779, %v3553
      %v3793 = vsel %vm3168, %v3780, %v3554
      %v3794 = vsel %vm3168, %v3781, %v3555
      %v3795 = vsel %vm3168, %v3782, %v3556
      %v3796 = vsel %vm3168, %v3783, %v3557
      %v3797 = vsel %vm3168, %v3784, %v3558
      %v3798 = vsel %vm3702, %v3314, %v3585
      %v3799 = vsel %vm3702, %v3318, %v3586
      %v3800 = vsel %vm3702, %v3322, %v3587
      %v3801 = vsel %vm3702, %v3326, %v3588
      %v3802 = vsel %vm3702, %v3330, %v3589
      %v3803 = vsel %vm3702, %v3334, %v3590
      %v3804 = vsel %vm3702, %v3338, %v3591
      %v3805 = vsel %vm3702, %v3342, %v3592
      %v3806 = vsel %vm3702, %v3346, %v3593
      %v3807 = vsel %vm3702, %v3350, %v3594
      %v3808 = vsel %vm3702, %v3354, %v3595
      %v3809 = vsel %vm3702, %v3358, %v3596
      %v3810 = vsel %vm3702, %v3362, %v3597
      %v3811 = vsel %vm3040, %v3798, %v3611
      %v3812 = vsel %vm3040, %v3799, %v3612
      %v3813 = vsel %vm3040, %v3800, %v3613
      %v3814 = vsel %vm3040, %v3801, %v3614
      %v3815 = vsel %vm3040, %v3802, %v3615
      %v3816 = vsel %vm3040, %v3803, %v3616
      %v3817 = vsel %vm3040, %v3804, %v3617
      %v3818 = vsel %vm3040, %v3805, %v3618
      %v3819 = vsel %vm3040, %v3806, %v3619
      %v3820 = vsel %vm3040, %v3807, %v3620
      %v3821 = vsel %vm3040, %v3808, %v3621
      %v3822 = vsel %vm3040, %v3809, %v3622
      %v3823 = vsel %vm3040, %v3810, %v3623
      %v3824 = vsel %vm3729, %v3811, %v3637
      %v3825 = vsel %vm3729, %v3812, %v3638
      %v3826 = vsel %vm3729, %v3813, %v3639
      %v3827 = vsel %vm3729, %v3814, %v3640
      %v3828 = vsel %vm3729, %v3815, %v3641
      %v3829 = vsel %vm3729, %v3816, %v3642
      %v3830 = vsel %vm3729, %v3817, %v3643
      %v3831 = vsel %vm3729, %v3818, %v3644
      %v3832 = vsel %vm3729, %v3819, %v3645
      %v3833 = vsel %vm3729, %v3820, %v3646
      %v3834 = vsel %vm3729, %v3821, %v3647
      %v3835 = vsel %vm3729, %v3822, %v3648
      %v3836 = vsel %vm3729, %v3823, %v3649
      %v3837 = vsel %vm3743, %v3824, %v3676
      %v3838 = vsel %vm3743, %v3825, %v3677
      %v3839 = vsel %vm3743, %v3826, %v3678
      %v3840 = vsel %vm3743, %v3827, %v3679
      %v3841 = vsel %vm3743, %v3828, %v3680
      %v3842 = vsel %vm3743, %v3829, %v3681
      %v3843 = vsel %vm3743, %v3830, %v3682
      %v3844 = vsel %vm3743, %v3831, %v3683
      %v3845 = vsel %vm3743, %v3832, %v3684
      %v3846 = vsel %vm3743, %v3833, %v3685
      %v3847 = vsel %vm3743, %v3834, %v3686
      %v3848 = vsel %vm3743, %v3835, %v3687
      %v3849 = vsel %vm3743, %v3836, %v3688
      %s3850 = smul.u32 %s1027, 208
      %s3851 = scalar_lea.vmem [#allocation2], %s3850
      %3852 = vst [vmem:[%s3851] sm:$0xff] %v3785
      %3853 = vst [vmem:[%s3851 + $0x8] sm:$0x1f] %v3837
      %3854 = vst [vmem:[%s3851 + $0x10] sm:$0xff] %v3786
      %3855 = vst [vmem:[%s3851 + $0x18] sm:$0x1f] %v3838
      %3856 = vst [vmem:[%s3851 + $0x20] sm:$0xff] %v3787
      %3857 = vst [vmem:[%s3851 + $0x28] sm:$0x1f] %v3839
      %3858 = vst [vmem:[%s3851 + $0x30] sm:$0xff] %v3788
      %3859 = vst [vmem:[%s3851 + $0x38] sm:$0x1f] %v3840
      %3860 = vst [vmem:[%s3851 + $0x40] sm:$0xff] %v3789
      %3861 = vst [vmem:[%s3851 + $0x48] sm:$0x1f] %v3841
      %3862 = vst [vmem:[%s3851 + $0x50] sm:$0xff] %v3790
      %3863 = vst [vmem:[%s3851 + $0x58] sm:$0x1f] %v3842
      %3864 = vst [vmem:[%s3851 + $0x60] sm:$0xff] %v3791
      %3865 = vst [vmem:[%s3851 + $0x68] sm:$0x1f] %v3843
      %3866 = vst [vmem:[%s3851 + $0x70] sm:$0xff] %v3792
      %3867 = vst [vmem:[%s3851 + $0x78] sm:$0x1f] %v3844
      %3868 = vst [vmem:[%s3851 + $0x80] sm:$0xff] %v3793
      %3869 = vst [vmem:[%s3851 + $0x88] sm:$0x1f] %v3845
      %3870 = vst [vmem:[%s3851 + $0x90] sm:$0xff] %v3794
      %3871 = vst [vmem:[%s3851 + $0x98] sm:$0x1f] %v3846
      %3872 = vst [vmem:[%s3851 + $0xa0] sm:$0xff] %v3795
      %3873 = vst [vmem:[%s3851 + $0xa8] sm:$0x1f] %v3847
      %3874 = vst [vmem:[%s3851 + $0xb0] sm:$0xff] %v3796
      %3875 = vst [vmem:[%s3851 + $0xb8] sm:$0x1f] %v3848
      %3876 = vst [vmem:[%s3851 + $0xc0] sm:$0xff] %v3797
      %3877 = vst [vmem:[%s3851 + $0xc8] sm:$0x1f] %v3849
    $region66: #{forward.1} parent=1 // loop_footer
      %s1031 = sadd.s32 1, %s1027
    $region67: #{forward.1} parent=1 // loop_footer_branch
      %1026 = sbr.rel target = $region63
    $region68: #{forward.1} parent=1 // loop_exit
      _
    %v3878 = vld [vmem:[#allocation2] sm:$0xff]
    %v3879 = vld [vmem:[#allocation2 + $0x8] sm:$0x7]
    %v3880 = vld [vmem:[#allocation2 + $0x10] sm:$0xff]
    %v3881 = vld [vmem:[#allocation2 + $0x18] sm:$0x7]
    %v3882 = vld [vmem:[#allocation2 + $0x20] sm:$0xff]
    %v3883 = vld [vmem:[#allocation2 + $0x28] sm:$0x7]
    %v3884 = vld [vmem:[#allocation2 + $0x30] sm:$0xff]
    %v3885 = vld [vmem:[#allocation2 + $0x38] sm:$0x7]
    %v3886 = vld [vmem:[#allocation2 + $0x40] sm:$0xff]
    %v3887 = vld [vmem:[#allocation2 + $0x48] sm:$0x7]
    %v3888 = vld [vmem:[#allocation2 + $0x50] sm:$0xff]
    %v3889 = vld [vmem:[#allocation2 + $0x58] sm:$0x7]
    %v3890 = vld [vmem:[#allocation2 + $0x60] sm:$0xff]
    %v3891 = vld [vmem:[#allocation2 + $0x68] sm:$0x7]
    %v3892 = vld [vmem:[#allocation2 + $0x70] sm:$0xff]
    %v3893 = vld [vmem:[#allocation2 + $0x78] sm:$0x7]
    %v3894 = vld [vmem:[#allocation2 + $0x80] sm:$0xff]
    %v3895 = vld [vmem:[#allocation2 + $0x88] sm:$0x7]
    %v3896 = vld [vmem:[#allocation2 + $0x90] sm:$0xff]
    %v3897 = vld [vmem:[#allocation2 + $0x98] sm:$0x7]
    %v3898 = vld [vmem:[#allocation2 + $0x1] sm:$0xff]
    %v3899 = vld [vmem:[#allocation2 + $0x9] sm:$0x7]
    %v3900 = vld [vmem:[#allocation2 + $0x11] sm:$0xff]
    %v3901 = vld [vmem:[#allocation2 + $0x19] sm:$0x7]
    %v3902 = vld [vmem:[#allocation2 + $0x21] sm:$0xff]
    %v3903 = vld [vmem:[#allocation2 + $0x29] sm:$0x7]
    %v3904 = vld [vmem:[#allocation2 + $0x31] sm:$0xff]
    %v3905 = vld [vmem:[#allocation2 + $0x39] sm:$0x7]
    %v3906 = vld [vmem:[#allocation2 + $0x41] sm:$0xff]
    %v3907 = vld [vmem:[#allocation2 + $0x49] sm:$0x7]
    %v3908 = vld [vmem:[#allocation2 + $0x51] sm:$0xff]
    %v3909 = vld [vmem:[#allocation2 + $0x59] sm:$0x7]
    %v3910 = vld [vmem:[#allocation2 + $0x61] sm:$0xff]
    %v3911 = vld [vmem:[#allocation2 + $0x69] sm:$0x7]
    %v3912 = vld [vmem:[#allocation2 + $0x71] sm:$0xff]
    %v3913 = vld [vmem:[#allocation2 + $0x79] sm:$0x7]
    %v3914 = vld [vmem:[#allocation2 + $0x81] sm:$0xff]
    %v3915 = vld [vmem:[#allocation2 + $0x89] sm:$0x7]
    %v3916 = vld [vmem:[#allocation2 + $0x91] sm:$0xff]
    %v3917 = vld [vmem:[#allocation2 + $0x99] sm:$0x7]
    %v3918 = vld [vmem:[#allocation2 + $0x2] sm:$0xff]
    %v3919 = vld [vmem:[#allocation2 + $0xa] sm:$0x7]
    %v3920 = vld [vmem:[#allocation2 + $0x12] sm:$0xff]
    %v3921 = vld [vmem:[#allocation2 + $0x1a] sm:$0x7]
    %v3922 = vld [vmem:[#allocation2 + $0x22] sm:$0xff]
    %v3923 = vld [vmem:[#allocation2 + $0x2a] sm:$0x7]
    %v3924 = vld [vmem:[#allocation2 + $0x32] sm:$0xff]
    %v3925 = vld [vmem:[#allocation2 + $0x3a] sm:$0x7]
    %v3926 = vld [vmem:[#allocation2 + $0x42] sm:$0xff]
    %v3927 = vld [vmem:[#allocation2 + $0x4a] sm:$0x7]
    %v3928 = vld [vmem:[#allocation2 + $0x52] sm:$0xff]
    %v3929 = vld [vmem:[#allocation2 + $0x5a] sm:$0x7]
    %v3930 = vld [vmem:[#allocation2 + $0x62] sm:$0xff]
    %v3931 = vld [vmem:[#allocation2 + $0x6a] sm:$0x7]
    %v3932 = vld [vmem:[#allocation2 + $0x72] sm:$0xff]
    %v3933 = vld [vmem:[#allocation2 + $0x7a] sm:$0x7]
    %v3934 = vld [vmem:[#allocation2 + $0x82] sm:$0xff]
    %v3935 = vld [vmem:[#allocation2 + $0x8a] sm:$0x7]
    %v3936 = vld [vmem:[#allocation2 + $0x92] sm:$0xff]
    %v3937 = vld [vmem:[#allocation2 + $0x9a] sm:$0x7]
    %s3938 = scalar_lea.vmem [#allocation2], 16
    %v3939 = vld [vmem:[%s3938] sm:$0xff]
    %v3940 = vld [vmem:[%s3938 + $0x8] sm:$0x7]
    %v3941 = vld [vmem:[%s3938 + $0x10] sm:$0xff]
    %v3942 = vld [vmem:[%s3938 + $0x18] sm:$0x7]
    %v3943 = vld [vmem:[%s3938 + $0x20] sm:$0xff]
    %v3944 = vld [vmem:[%s3938 + $0x28] sm:$0x7]
    %v3945 = vld [vmem:[%s3938 + $0x30] sm:$0xff]
    %v3946 = vld [vmem:[%s3938 + $0x38] sm:$0x7]
    %v3947 = vld [vmem:[%s3938 + $0x40] sm:$0xff]
    %v3948 = vld [vmem:[%s3938 + $0x48] sm:$0x7]
    %v3949 = vld [vmem:[%s3938 + $0x50] sm:$0xff]
    %v3950 = vld [vmem:[%s3938 + $0x58] sm:$0x7]
    %v3951 = vld [vmem:[%s3938 + $0x60] sm:$0xff]
    %v3952 = vld [vmem:[%s3938 + $0x68] sm:$0x7]
    %v3953 = vld [vmem:[%s3938 + $0x70] sm:$0xff]
    %v3954 = vld [vmem:[%s3938 + $0x78] sm:$0x7]
    %v3955 = vld [vmem:[%s3938 + $0x80] sm:$0xff]
    %v3956 = vld [vmem:[%s3938 + $0x88] sm:$0x7]
    %v3957 = vld [vmem:[%s3938 + $0x90] sm:$0xff]
    %v3958 = vld [vmem:[%s3938 + $0x98] sm:$0x7]
    %v3959 = vld [vmem:[%s3938 + $0x1] sm:$0xff]
    %v3960 = vld [vmem:[%s3938 + $0x9] sm:$0x7]
    %v3961 = vld [vmem:[%s3938 + $0x11] sm:$0xff]
    %v3962 = vld [vmem:[%s3938 + $0x19] sm:$0x7]
    %v3963 = vld [vmem:[%s3938 + $0x21] sm:$0xff]
    %v3964 = vld [vmem:[%s3938 + $0x29] sm:$0x7]
    %v3965 = vld [vmem:[%s3938 + $0x31] sm:$0xff]
    %v3966 = vld [vmem:[%s3938 + $0x39] sm:$0x7]
    %v3967 = vld [vmem:[%s3938 + $0x41] sm:$0xff]
    %v3968 = vld [vmem:[%s3938 + $0x49] sm:$0x7]
    %v3969 = vld [vmem:[%s3938 + $0x51] sm:$0xff]
    %v3970 = vld [vmem:[%s3938 + $0x59] sm:$0x7]
    %v3971 = vld [vmem:[%s3938 + $0x61] sm:$0xff]
    %v3972 = vld [vmem:[%s3938 + $0x69] sm:$0x7]
    %v3973 = vld [vmem:[%s3938 + $0x71] sm:$0xff]
    %v3974 = vld [vmem:[%s3938 + $0x79] sm:$0x7]
    %v3975 = vld [vmem:[%s3938 + $0x81] sm:$0xff]
    %v3976 = vld [vmem:[%s3938 + $0x89] sm:$0x7]
    %v3977 = vld [vmem:[%s3938 + $0x91] sm:$0xff]
    %v3978 = vld [vmem:[%s3938 + $0x99] sm:$0x7]
    %v3979 = vld [vmem:[%s3938 + $0x2] sm:$0xff]
    %v3980 = vld [vmem:[%s3938 + $0xa] sm:$0x7]
    %v3981 = vld [vmem:[%s3938 + $0x12] sm:$0xff]
    %v3982 = vld [vmem:[%s3938 + $0x1a] sm:$0x7]
    %v3983 = vld [vmem:[%s3938 + $0x22] sm:$0xff]
    %v3984 = vld [vmem:[%s3938 + $0x2a] sm:$0x7]
    %v3985 = vld [vmem:[%s3938 + $0x32] sm:$0xff]
    %v3986 = vld [vmem:[%s3938 + $0x3a] sm:$0x7]
    %v3987 = vld [vmem:[%s3938 + $0x42] sm:$0xff]
    %v3988 = vld [vmem:[%s3938 + $0x4a] sm:$0x7]
    %v3989 = vld [vmem:[%s3938 + $0x52] sm:$0xff]
    %v3990 = vld [vmem:[%s3938 + $0x5a] sm:$0x7]
    %v3991 = vld [vmem:[%s3938 + $0x62] sm:$0xff]
    %v3992 = vld [vmem:[%s3938 + $0x6a] sm:$0x7]
    %v3993 = vld [vmem:[%s3938 + $0x72] sm:$0xff]
    %v3994 = vld [vmem:[%s3938 + $0x7a] sm:$0x7]
    %v3995 = vld [vmem:[%s3938 + $0x82] sm:$0xff]
    %v3996 = vld [vmem:[%s3938 + $0x8a] sm:$0x7]
    %v3997 = vld [vmem:[%s3938 + $0x92] sm:$0xff]
    %v3998 = vld [vmem:[%s3938 + $0x9a] sm:$0x7]
    %s3999 = scalar_lea.vmem [#allocation2], 32
    %v4000 = vld [vmem:[%s3999] sm:$0xff]
    %v4001 = vld [vmem:[%s3999 + $0x8] sm:$0x7]
    %v4002 = vld [vmem:[%s3999 + $0x10] sm:$0xff]
    %v4003 = vld [vmem:[%s3999 + $0x18] sm:$0x7]
    %v4004 = vld [vmem:[%s3999 + $0x20] sm:$0xff]
    %v4005 = vld [vmem:[%s3999 + $0x28] sm:$0x7]
    %v4006 = vld [vmem:[%s3999 + $0x30] sm:$0xff]
    %v4007 = vld [vmem:[%s3999 + $0x38] sm:$0x7]
    %v4008 = vld [vmem:[%s3999 + $0x40] sm:$0xff]
    %v4009 = vld [vmem:[%s3999 + $0x48] sm:$0x7]
    %v4010 = vld [vmem:[%s3999 + $0x50] sm:$0xff]
    %v4011 = vld [vmem:[%s3999 + $0x58] sm:$0x7]
    %v4012 = vld [vmem:[%s3999 + $0x60] sm:$0xff]
    %v4013 = vld [vmem:[%s3999 + $0x68] sm:$0x7]
    %v4014 = vld [vmem:[%s3999 + $0x70] sm:$0xff]
    %v4015 = vld [vmem:[%s3999 + $0x78] sm:$0x7]
    %v4016 = vld [vmem:[%s3999 + $0x80] sm:$0xff]
    %v4017 = vld [vmem:[%s3999 + $0x88] sm:$0x7]
    %v4018 = vld [vmem:[%s3999 + $0x90] sm:$0xff]
    %v4019 = vld [vmem:[%s3999 + $0x98] sm:$0x7]
    %v4020 = vld [vmem:[%s3999 + $0x1] sm:$0xff]
    %v4021 = vld [vmem:[%s3999 + $0x9] sm:$0x7]
    %v4022 = vld [vmem:[%s3999 + $0x11] sm:$0xff]
    %v4023 = vld [vmem:[%s3999 + $0x19] sm:$0x7]
    %v4024 = vld [vmem:[%s3999 + $0x21] sm:$0xff]
    %v4025 = vld [vmem:[%s3999 + $0x29] sm:$0x7]
    %v4026 = vld [vmem:[%s3999 + $0x31] sm:$0xff]
    %v4027 = vld [vmem:[%s3999 + $0x39] sm:$0x7]
    %v4028 = vld [vmem:[%s3999 + $0x41] sm:$0xff]
    %v4029 = vld [vmem:[%s3999 + $0x49] sm:$0x7]
    %v4030 = vld [vmem:[%s3999 + $0x51] sm:$0xff]
    %v4031 = vld [vmem:[%s3999 + $0x59] sm:$0x7]
    %v4032 = vld [vmem:[%s3999 + $0x61] sm:$0xff]
    %v4033 = vld [vmem:[%s3999 + $0x69] sm:$0x7]
    %v4034 = vld [vmem:[%s3999 + $0x71] sm:$0xff]
    %v4035 = vld [vmem:[%s3999 + $0x79] sm:$0x7]
    %v4036 = vld [vmem:[%s3999 + $0x81] sm:$0xff]
    %v4037 = vld [vmem:[%s3999 + $0x89] sm:$0x7]
    %v4038 = vld [vmem:[%s3999 + $0x91] sm:$0xff]
    %v4039 = vld [vmem:[%s3999 + $0x99] sm:$0x7]
    %v4040 = vld [vmem:[%s3999 + $0x2] sm:$0xff]
    %v4041 = vld [vmem:[%s3999 + $0xa] sm:$0x7]
    %v4042 = vld [vmem:[%s3999 + $0x12] sm:$0xff]
    %v4043 = vld [vmem:[%s3999 + $0x1a] sm:$0x7]
    %v4044 = vld [vmem:[%s3999 + $0x22] sm:$0xff]
    %v4045 = vld [vmem:[%s3999 + $0x2a] sm:$0x7]
    %v4046 = vld [vmem:[%s3999 + $0x32] sm:$0xff]
    %v4047 = vld [vmem:[%s3999 + $0x3a] sm:$0x7]
    %v4048 = vld [vmem:[%s3999 + $0x42] sm:$0xff]
    %v4049 = vld [vmem:[%s3999 + $0x4a] sm:$0x7]
    %v4050 = vld [vmem:[%s3999 + $0x52] sm:$0xff]
    %v4051 = vld [vmem:[%s3999 + $0x5a] sm:$0x7]
    %v4052 = vld [vmem:[%s3999 + $0x62] sm:$0xff]
    %v4053 = vld [vmem:[%s3999 + $0x6a] sm:$0x7]
    %v4054 = vld [vmem:[%s3999 + $0x72] sm:$0xff]
    %v4055 = vld [vmem:[%s3999 + $0x7a] sm:$0x7]
    %v4056 = vld [vmem:[%s3999 + $0x82] sm:$0xff]
    %v4057 = vld [vmem:[%s3999 + $0x8a] sm:$0x7]
    %v4058 = vld [vmem:[%s3999 + $0x92] sm:$0xff]
    %v4059 = vld [vmem:[%s3999 + $0x9a] sm:$0x7]
    %s4060 = scalar_lea.vmem [#allocation2], 208
    %v4061 = vld [vmem:[%s4060] sm:$0xff]
    %v4062 = vld [vmem:[%s4060 + $0x8] sm:$0x7]
    %v4063 = vld [vmem:[%s4060 + $0x10] sm:$0xff]
    %v4064 = vld [vmem:[%s4060 + $0x18] sm:$0x7]
    %v4065 = vld [vmem:[%s4060 + $0x20] sm:$0xff]
    %v4066 = vld [vmem:[%s4060 + $0x28] sm:$0x7]
    %v4067 = vld [vmem:[%s4060 + $0x30] sm:$0xff]
    %v4068 = vld [vmem:[%s4060 + $0x38] sm:$0x7]
    %v4069 = vld [vmem:[%s4060 + $0x40] sm:$0xff]
    %v4070 = vld [vmem:[%s4060 + $0x48] sm:$0x7]
    %v4071 = vld [vmem:[%s4060 + $0x50] sm:$0xff]
    %v4072 = vld [vmem:[%s4060 + $0x58] sm:$0x7]
    %v4073 = vld [vmem:[%s4060 + $0x60] sm:$0xff]
    %v4074 = vld [vmem:[%s4060 + $0x68] sm:$0x7]
    %v4075 = vld [vmem:[%s4060 + $0x70] sm:$0xff]
    %v4076 = vld [vmem:[%s4060 + $0x78] sm:$0x7]
    %v4077 = vld [vmem:[%s4060 + $0x80] sm:$0xff]
    %v4078 = vld [vmem:[%s4060 + $0x88] sm:$0x7]
    %v4079 = vld [vmem:[%s4060 + $0x90] sm:$0xff]
    %v4080 = vld [vmem:[%s4060 + $0x98] sm:$0x7]
    %v4081 = vld [vmem:[%s4060 + $0x1] sm:$0xff]
    %v4082 = vld [vmem:[%s4060 + $0x9] sm:$0x7]
    %v4083 = vld [vmem:[%s4060 + $0x11] sm:$0xff]
    %v4084 = vld [vmem:[%s4060 + $0x19] sm:$0x7]
    %v4085 = vld [vmem:[%s4060 + $0x21] sm:$0xff]
    %v4086 = vld [vmem:[%s4060 + $0x29] sm:$0x7]
    %v4087 = vld [vmem:[%s4060 + $0x31] sm:$0xff]
    %v4088 = vld [vmem:[%s4060 + $0x39] sm:$0x7]
    %v4089 = vld [vmem:[%s4060 + $0x41] sm:$0xff]
    %v4090 = vld [vmem:[%s4060 + $0x49] sm:$0x7]
    %v4091 = vld [vmem:[%s4060 + $0x51] sm:$0xff]
    %v4092 = vld [vmem:[%s4060 + $0x59] sm:$0x7]
    %v4093 = vld [vmem:[%s4060 + $0x61] sm:$0xff]
    %v4094 = vld [vmem:[%s4060 + $0x69] sm:$0x7]
    %v4095 = vld [vmem:[%s4060 + $0x71] sm:$0xff]
    %v4096 = vld [vmem:[%s4060 + $0x79] sm:$0x7]
    %v4097 = vld [vmem:[%s4060 + $0x81] sm:$0xff]
    %v4098 = vld [vmem:[%s4060 + $0x89] sm:$0x7]
    %v4099 = vld [vmem:[%s4060 + $0x91] sm:$0xff]
    %v4100 = vld [vmem:[%s4060 + $0x99] sm:$0x7]
    %v4101 = vld [vmem:[%s4060 + $0x2] sm:$0xff]
    %v4102 = vld [vmem:[%s4060 + $0xa] sm:$0x7]
    %v4103 = vld [vmem:[%s4060 + $0x12] sm:$0xff]
    %v4104 = vld [vmem:[%s4060 + $0x1a] sm:$0x7]
    %v4105 = vld [vmem:[%s4060 + $0x22] sm:$0xff]
    %v4106 = vld [vmem:[%s4060 + $0x2a] sm:$0x7]
    %v4107 = vld [vmem:[%s4060 + $0x32] sm:$0xff]
    %v4108 = vld [vmem:[%s4060 + $0x3a] sm:$0x7]
    %v4109 = vld [vmem:[%s4060 + $0x42] sm:$0xff]
    %v4110 = vld [vmem:[%s4060 + $0x4a] sm:$0x7]
    %v4111 = vld [vmem:[%s4060 + $0x52] sm:$0xff]
    %v4112 = vld [vmem:[%s4060 + $0x5a] sm:$0x7]
    %v4113 = vld [vmem:[%s4060 + $0x62] sm:$0xff]
    %v4114 = vld [vmem:[%s4060 + $0x6a] sm:$0x7]
    %v4115 = vld [vmem:[%s4060 + $0x72] sm:$0xff]
    %v4116 = vld [vmem:[%s4060 + $0x7a] sm:$0x7]
    %v4117 = vld [vmem:[%s4060 + $0x82] sm:$0xff]
    %v4118 = vld [vmem:[%s4060 + $0x8a] sm:$0x7]
    %v4119 = vld [vmem:[%s4060 + $0x92] sm:$0xff]
    %v4120 = vld [vmem:[%s4060 + $0x9a] sm:$0x7]
    %s4121 = scalar_lea.vmem [#allocation2], 224
    %v4122 = vld [vmem:[%s4121] sm:$0xff]
    %v4123 = vld [vmem:[%s4121 + $0x8] sm:$0x7]
    %v4124 = vld [vmem:[%s4121 + $0x10] sm:$0xff]
    %v4125 = vld [vmem:[%s4121 + $0x18] sm:$0x7]
    %v4126 = vld [vmem:[%s4121 + $0x20] sm:$0xff]
    %v4127 = vld [vmem:[%s4121 + $0x28] sm:$0x7]
    %v4128 = vld [vmem:[%s4121 + $0x30] sm:$0xff]
    %v4129 = vld [vmem:[%s4121 + $0x38] sm:$0x7]
    %v4130 = vld [vmem:[%s4121 + $0x40] sm:$0xff]
    %v4131 = vld [vmem:[%s4121 + $0x48] sm:$0x7]
    %v4132 = vld [vmem:[%s4121 + $0x50] sm:$0xff]
    %v4133 = vld [vmem:[%s4121 + $0x58] sm:$0x7]
    %v4134 = vld [vmem:[%s4121 + $0x60] sm:$0xff]
    %v4135 = vld [vmem:[%s4121 + $0x68] sm:$0x7]
    %v4136 = vld [vmem:[%s4121 + $0x70] sm:$0xff]
    %v4137 = vld [vmem:[%s4121 + $0x78] sm:$0x7]
    %v4138 = vld [vmem:[%s4121 + $0x80] sm:$0xff]
    %v4139 = vld [vmem:[%s4121 + $0x88] sm:$0x7]
    %v4140 = vld [vmem:[%s4121 + $0x90] sm:$0xff]
    %v4141 = vld [vmem:[%s4121 + $0x98] sm:$0x7]
    %v4142 = vld [vmem:[%s4121 + $0x1] sm:$0xff]
    %v4143 = vld [vmem:[%s4121 + $0x9] sm:$0x7]
    %v4144 = vld [vmem:[%s4121 + $0x11] sm:$0xff]
    %v4145 = vld [vmem:[%s4121 + $0x19] sm:$0x7]
    %v4146 = vld [vmem:[%s4121 + $0x21] sm:$0xff]
    %v4147 = vld [vmem:[%s4121 + $0x29] sm:$0x7]
    %v4148 = vld [vmem:[%s4121 + $0x31] sm:$0xff]
    %v4149 = vld [vmem:[%s4121 + $0x39] sm:$0x7]
    %v4150 = vld [vmem:[%s4121 + $0x41] sm:$0xff]
    %v4151 = vld [vmem:[%s4121 + $0x49] sm:$0x7]
    %v4152 = vld [vmem:[%s4121 + $0x51] sm:$0xff]
    %v4153 = vld [vmem:[%s4121 + $0x59] sm:$0x7]
    %v4154 = vld [vmem:[%s4121 + $0x61] sm:$0xff]
    %v4155 = vld [vmem:[%s4121 + $0x69] sm:$0x7]
    %v4156 = vld [vmem:[%s4121 + $0x71] sm:$0xff]
    %v4157 = vld [vmem:[%s4121 + $0x79] sm:$0x7]
    %v4158 = vld [vmem:[%s4121 + $0x81] sm:$0xff]
    %v4159 = vld [vmem:[%s4121 + $0x89] sm:$0x7]
    %v4160 = vld [vmem:[%s4121 + $0x91] sm:$0xff]
    %v4161 = vld [vmem:[%s4121 + $0x99] sm:$0x7]
    %v4162 = vld [vmem:[%s4121 + $0x2] sm:$0xff]
    %v4163 = vld [vmem:[%s4121 + $0xa] sm:$0x7]
    %v4164 = vld [vmem:[%s4121 + $0x12] sm:$0xff]
    %v4165 = vld [vmem:[%s4121 + $0x1a] sm:$0x7]
    %v4166 = vld [vmem:[%s4121 + $0x22] sm:$0xff]
    %v4167 = vld [vmem:[%s4121 + $0x2a] sm:$0x7]
    %v4168 = vld [vmem:[%s4121 + $0x32] sm:$0xff]
    %v4169 = vld [vmem:[%s4121 + $0x3a] sm:$0x7]
    %v4170 = vld [vmem:[%s4121 + $0x42] sm:$0xff]
    %v4171 = vld [vmem:[%s4121 + $0x4a] sm:$0x7]
    %v4172 = vld [vmem:[%s4121 + $0x52] sm:$0xff]
    %v4173 = vld [vmem:[%s4121 + $0x5a] sm:$0x7]
    %v4174 = vld [vmem:[%s4121 + $0x62] sm:$0xff]
    %v4175 = vld [vmem:[%s4121 + $0x6a] sm:$0x7]
    %v4176 = vld [vmem:[%s4121 + $0x72] sm:$0xff]
    %v4177 = vld [vmem:[%s4121 + $0x7a] sm:$0x7]
    %v4178 = vld [vmem:[%s4121 + $0x82] sm:$0xff]
    %v4179 = vld [vmem:[%s4121 + $0x8a] sm:$0x7]
    %v4180 = vld [vmem:[%s4121 + $0x92] sm:$0xff]
    %v4181 = vld [vmem:[%s4121 + $0x9a] sm:$0x7]
    %s4182 = scalar_lea.vmem [#allocation2], 240
    %v4183 = vld [vmem:[%s4182] sm:$0xff]
    %v4184 = vld [vmem:[%s4182 + $0x8] sm:$0x7]
    %v4185 = vld [vmem:[%s4182 + $0x10] sm:$0xff]
    %v4186 = vld [vmem:[%s4182 + $0x18] sm:$0x7]
    %v4187 = vld [vmem:[%s4182 + $0x20] sm:$0xff]
    %v4188 = vld [vmem:[%s4182 + $0x28] sm:$0x7]
    %v4189 = vld [vmem:[%s4182 + $0x30] sm:$0xff]
    %v4190 = vld [vmem:[%s4182 + $0x38] sm:$0x7]
    %v4191 = vld [vmem:[%s4182 + $0x40] sm:$0xff]
    %v4192 = vld [vmem:[%s4182 + $0x48] sm:$0x7]
    %v4193 = vld [vmem:[%s4182 + $0x50] sm:$0xff]
    %v4194 = vld [vmem:[%s4182 + $0x58] sm:$0x7]
    %v4195 = vld [vmem:[%s4182 + $0x60] sm:$0xff]
    %v4196 = vld [vmem:[%s4182 + $0x68] sm:$0x7]
    %v4197 = vld [vmem:[%s4182 + $0x70] sm:$0xff]
    %v4198 = vld [vmem:[%s4182 + $0x78] sm:$0x7]
    %v4199 = vld [vmem:[%s4182 + $0x80] sm:$0xff]
    %v4200 = vld [vmem:[%s4182 + $0x88] sm:$0x7]
    %v4201 = vld [vmem:[%s4182 + $0x90] sm:$0xff]
    %v4202 = vld [vmem:[%s4182 + $0x98] sm:$0x7]
    %v4203 = vld [vmem:[%s4182 + $0x1] sm:$0xff]
    %v4204 = vld [vmem:[%s4182 + $0x9] sm:$0x7]
    %v4205 = vld [vmem:[%s4182 + $0x11] sm:$0xff]
    %v4206 = vld [vmem:[%s4182 + $0x19] sm:$0x7]
    %v4207 = vld [vmem:[%s4182 + $0x21] sm:$0xff]
    %v4208 = vld [vmem:[%s4182 + $0x29] sm:$0x7]
    %v4209 = vld [vmem:[%s4182 + $0x31] sm:$0xff]
    %v4210 = vld [vmem:[%s4182 + $0x39] sm:$0x7]
    %v4211 = vld [vmem:[%s4182 + $0x41] sm:$0xff]
    %v4212 = vld [vmem:[%s4182 + $0x49] sm:$0x7]
    %v4213 = vld [vmem:[%s4182 + $0x51] sm:$0xff]
    %v4214 = vld [vmem:[%s4182 + $0x59] sm:$0x7]
    %v4215 = vld [vmem:[%s4182 + $0x61] sm:$0xff]
    %v4216 = vld [vmem:[%s4182 + $0x69] sm:$0x7]
    %v4217 = vld [vmem:[%s4182 + $0x71] sm:$0xff]
    %v4218 = vld [vmem:[%s4182 + $0x79] sm:$0x7]
    %v4219 = vld [vmem:[%s4182 + $0x81] sm:$0xff]
    %v4220 = vld [vmem:[%s4182 + $0x89] sm:$0x7]
    %v4221 = vld [vmem:[%s4182 + $0x91] sm:$0xff]
    %v4222 = vld [vmem:[%s4182 + $0x99] sm:$0x7]
    %v4223 = vld [vmem:[%s4182 + $0x2] sm:$0xff]
    %v4224 = vld [vmem:[%s4182 + $0xa] sm:$0x7]
    %v4225 = vld [vmem:[%s4182 + $0x12] sm:$0xff]
    %v4226 = vld [vmem:[%s4182 + $0x1a] sm:$0x7]
    %v4227 = vld [vmem:[%s4182 + $0x22] sm:$0xff]
    %v4228 = vld [vmem:[%s4182 + $0x2a] sm:$0x7]
    %v4229 = vld [vmem:[%s4182 + $0x32] sm:$0xff]
    %v4230 = vld [vmem:[%s4182 + $0x3a] sm:$0x7]
    %v4231 = vld [vmem:[%s4182 + $0x42] sm:$0xff]
    %v4232 = vld [vmem:[%s4182 + $0x4a] sm:$0x7]
    %v4233 = vld [vmem:[%s4182 + $0x52] sm:$0xff]
    %v4234 = vld [vmem:[%s4182 + $0x5a] sm:$0x7]
    %v4235 = vld [vmem:[%s4182 + $0x62] sm:$0xff]
    %v4236 = vld [vmem:[%s4182 + $0x6a] sm:$0x7]
    %v4237 = vld [vmem:[%s4182 + $0x72] sm:$0xff]
    %v4238 = vld [vmem:[%s4182 + $0x7a] sm:$0x7]
    %v4239 = vld [vmem:[%s4182 + $0x82] sm:$0xff]
    %v4240 = vld [vmem:[%s4182 + $0x8a] sm:$0x7]
    %v4241 = vld [vmem:[%s4182 + $0x92] sm:$0xff]
    %v4242 = vld [vmem:[%s4182 + $0x9a] sm:$0x7]
    %s4243 = scalar_lea.vmem [#allocation2], 416
    %v4244 = vld [vmem:[%s4243] sm:$0xff]
    %v4245 = vld [vmem:[%s4243 + $0x8] sm:$0x7]
    %v4246 = vld [vmem:[%s4243 + $0x10] sm:$0xff]
    %v4247 = vld [vmem:[%s4243 + $0x18] sm:$0x7]
    %v4248 = vld [vmem:[%s4243 + $0x20] sm:$0xff]
    %v4249 = vld [vmem:[%s4243 + $0x28] sm:$0x7]
    %v4250 = vld [vmem:[%s4243 + $0x30] sm:$0xff]
    %v4251 = vld [vmem:[%s4243 + $0x38] sm:$0x7]
    %v4252 = vld [vmem:[%s4243 + $0x40] sm:$0xff]
    %v4253 = vld [vmem:[%s4243 + $0x48] sm:$0x7]
    %v4254 = vld [vmem:[%s4243 + $0x50] sm:$0xff]
    %v4255 = vld [vmem:[%s4243 + $0x58] sm:$0x7]
    %v4256 = vld [vmem:[%s4243 + $0x60] sm:$0xff]
    %v4257 = vld [vmem:[%s4243 + $0x68] sm:$0x7]
    %v4258 = vld [vmem:[%s4243 + $0x70] sm:$0xff]
    %v4259 = vld [vmem:[%s4243 + $0x78] sm:$0x7]
    %v4260 = vld [vmem:[%s4243 + $0x80] sm:$0xff]
    %v4261 = vld [vmem:[%s4243 + $0x88] sm:$0x7]
    %v4262 = vld [vmem:[%s4243 + $0x90] sm:$0xff]
    %v4263 = vld [vmem:[%s4243 + $0x98] sm:$0x7]
    %v4264 = vld [vmem:[%s4243 + $0x1] sm:$0xff]
    %v4265 = vld [vmem:[%s4243 + $0x9] sm:$0x7]
    %v4266 = vld [vmem:[%s4243 + $0x11] sm:$0xff]
    %v4267 = vld [vmem:[%s4243 + $0x19] sm:$0x7]
    %v4268 = vld [vmem:[%s4243 + $0x21] sm:$0xff]
    %v4269 = vld [vmem:[%s4243 + $0x29] sm:$0x7]
    %v4270 = vld [vmem:[%s4243 + $0x31] sm:$0xff]
    %v4271 = vld [vmem:[%s4243 + $0x39] sm:$0x7]
    %v4272 = vld [vmem:[%s4243 + $0x41] sm:$0xff]
    %v4273 = vld [vmem:[%s4243 + $0x49] sm:$0x7]
    %v4274 = vld [vmem:[%s4243 + $0x51] sm:$0xff]
    %v4275 = vld [vmem:[%s4243 + $0x59] sm:$0x7]
    %v4276 = vld [vmem:[%s4243 + $0x61] sm:$0xff]
    %v4277 = vld [vmem:[%s4243 + $0x69] sm:$0x7]
    %v4278 = vld [vmem:[%s4243 + $0x71] sm:$0xff]
    %v4279 = vld [vmem:[%s4243 + $0x79] sm:$0x7]
    %v4280 = vld [vmem:[%s4243 + $0x81] sm:$0xff]
    %v4281 = vld [vmem:[%s4243 + $0x89] sm:$0x7]
    %v4282 = vld [vmem:[%s4243 + $0x91] sm:$0xff]
    %v4283 = vld [vmem:[%s4243 + $0x99] sm:$0x7]
    %v4284 = vld [vmem:[%s4243 + $0x2] sm:$0xff]
    %v4285 = vld [vmem:[%s4243 + $0xa] sm:$0x7]
    %v4286 = vld [vmem:[%s4243 + $0x12] sm:$0xff]
    %v4287 = vld [vmem:[%s4243 + $0x1a] sm:$0x7]
    %v4288 = vld [vmem:[%s4243 + $0x22] sm:$0xff]
    %v4289 = vld [vmem:[%s4243 + $0x2a] sm:$0x7]
    %v4290 = vld [vmem:[%s4243 + $0x32] sm:$0xff]
    %v4291 = vld [vmem:[%s4243 + $0x3a] sm:$0x7]
    %v4292 = vld [vmem:[%s4243 + $0x42] sm:$0xff]
    %v4293 = vld [vmem:[%s4243 + $0x4a] sm:$0x7]
    %v4294 = vld [vmem:[%s4243 + $0x52] sm:$0xff]
    %v4295 = vld [vmem:[%s4243 + $0x5a] sm:$0x7]
    %v4296 = vld [vmem:[%s4243 + $0x62] sm:$0xff]
    %v4297 = vld [vmem:[%s4243 + $0x6a] sm:$0x7]
    %v4298 = vld [vmem:[%s4243 + $0x72] sm:$0xff]
    %v4299 = vld [vmem:[%s4243 + $0x7a] sm:$0x7]
    %v4300 = vld [vmem:[%s4243 + $0x82] sm:$0xff]
    %v4301 = vld [vmem:[%s4243 + $0x8a] sm:$0x7]
    %v4302 = vld [vmem:[%s4243 + $0x92] sm:$0xff]
    %v4303 = vld [vmem:[%s4243 + $0x9a] sm:$0x7]
    %s4304 = scalar_lea.vmem [#allocation2], 432
    %v4305 = vld [vmem:[%s4304] sm:$0xff]
    %v4306 = vld [vmem:[%s4304 + $0x8] sm:$0x7]
    %v4307 = vld [vmem:[%s4304 + $0x10] sm:$0xff]
    %v4308 = vld [vmem:[%s4304 + $0x18] sm:$0x7]
    %v4309 = vld [vmem:[%s4304 + $0x20] sm:$0xff]
    %v4310 = vld [vmem:[%s4304 + $0x28] sm:$0x7]
    %v4311 = vld [vmem:[%s4304 + $0x30] sm:$0xff]
    %v4312 = vld [vmem:[%s4304 + $0x38] sm:$0x7]
    %v4313 = vld [vmem:[%s4304 + $0x40] sm:$0xff]
    %v4314 = vld [vmem:[%s4304 + $0x48] sm:$0x7]
    %v4315 = vld [vmem:[%s4304 + $0x50] sm:$0xff]
    %v4316 = vld [vmem:[%s4304 + $0x58] sm:$0x7]
    %v4317 = vld [vmem:[%s4304 + $0x60] sm:$0xff]
    %v4318 = vld [vmem:[%s4304 + $0x68] sm:$0x7]
    %v4319 = vld [vmem:[%s4304 + $0x70] sm:$0xff]
    %v4320 = vld [vmem:[%s4304 + $0x78] sm:$0x7]
    %v4321 = vld [vmem:[%s4304 + $0x80] sm:$0xff]
    %v4322 = vld [vmem:[%s4304 + $0x88] sm:$0x7]
    %v4323 = vld [vmem:[%s4304 + $0x90] sm:$0xff]
    %v4324 = vld [vmem:[%s4304 + $0x98] sm:$0x7]
    %v4325 = vld [vmem:[%s4304 + $0x1] sm:$0xff]
    %v4326 = vld [vmem:[%s4304 + $0x9] sm:$0x7]
    %v4327 = vld [vmem:[%s4304 + $0x11] sm:$0xff]
    %v4328 = vld [vmem:[%s4304 + $0x19] sm:$0x7]
    %v4329 = vld [vmem:[%s4304 + $0x21] sm:$0xff]
    %v4330 = vld [vmem:[%s4304 + $0x29] sm:$0x7]
    %v4331 = vld [vmem:[%s4304 + $0x31] sm:$0xff]
    %v4332 = vld [vmem:[%s4304 + $0x39] sm:$0x7]
    %v4333 = vld [vmem:[%s4304 + $0x41] sm:$0xff]
    %v4334 = vld [vmem:[%s4304 + $0x49] sm:$0x7]
    %v4335 = vld [vmem:[%s4304 + $0x51] sm:$0xff]
    %v4336 = vld [vmem:[%s4304 + $0x59] sm:$0x7]
    %v4337 = vld [vmem:[%s4304 + $0x61] sm:$0xff]
    %v4338 = vld [vmem:[%s4304 + $0x69] sm:$0x7]
    %v4339 = vld [vmem:[%s4304 + $0x71] sm:$0xff]
    %v4340 = vld [vmem:[%s4304 + $0x79] sm:$0x7]
    %v4341 = vld [vmem:[%s4304 + $0x81] sm:$0xff]
    %v4342 = vld [vmem:[%s4304 + $0x89] sm:$0x7]
    %v4343 = vld [vmem:[%s4304 + $0x91] sm:$0xff]
    %v4344 = vld [vmem:[%s4304 + $0x99] sm:$0x7]
    %v4345 = vld [vmem:[%s4304 + $0x2] sm:$0xff]
    %v4346 = vld [vmem:[%s4304 + $0xa] sm:$0x7]
    %v4347 = vld [vmem:[%s4304 + $0x12] sm:$0xff]
    %v4348 = vld [vmem:[%s4304 + $0x1a] sm:$0x7]
    %v4349 = vld [vmem:[%s4304 + $0x22] sm:$0xff]
    %v4350 = vld [vmem:[%s4304 + $0x2a] sm:$0x7]
    %v4351 = vld [vmem:[%s4304 + $0x32] sm:$0xff]
    %v4352 = vld [vmem:[%s4304 + $0x3a] sm:$0x7]
    %v4353 = vld [vmem:[%s4304 + $0x42] sm:$0xff]
    %v4354 = vld [vmem:[%s4304 + $0x4a] sm:$0x7]
    %v4355 = vld [vmem:[%s4304 + $0x52] sm:$0xff]
    %v4356 = vld [vmem:[%s4304 + $0x5a] sm:$0x7]
    %v4357 = vld [vmem:[%s4304 + $0x62] sm:$0xff]
    %v4358 = vld [vmem:[%s4304 + $0x6a] sm:$0x7]
    %v4359 = vld [vmem:[%s4304 + $0x72] sm:$0xff]
    %v4360 = vld [vmem:[%s4304 + $0x7a] sm:$0x7]
    %v4361 = vld [vmem:[%s4304 + $0x82] sm:$0xff]
    %v4362 = vld [vmem:[%s4304 + $0x8a] sm:$0x7]
    %v4363 = vld [vmem:[%s4304 + $0x92] sm:$0xff]
    %v4364 = vld [vmem:[%s4304 + $0x9a] sm:$0x7]
    %s4365 = scalar_lea.vmem [#allocation2], 448
    %v4366 = vld [vmem:[%s4365] sm:$0xff]
    %v4367 = vld [vmem:[%s4365 + $0x8] sm:$0x7]
    %v4368 = vld [vmem:[%s4365 + $0x10] sm:$0xff]
    %v4369 = vld [vmem:[%s4365 + $0x18] sm:$0x7]
    %v4370 = vld [vmem:[%s4365 + $0x20] sm:$0xff]
    %v4371 = vld [vmem:[%s4365 + $0x28] sm:$0x7]
    %v4372 = vld [vmem:[%s4365 + $0x30] sm:$0xff]
    %v4373 = vld [vmem:[%s4365 + $0x38] sm:$0x7]
    %v4374 = vld [vmem:[%s4365 + $0x40] sm:$0xff]
    %v4375 = vld [vmem:[%s4365 + $0x48] sm:$0x7]
    %v4376 = vld [vmem:[%s4365 + $0x50] sm:$0xff]
    %v4377 = vld [vmem:[%s4365 + $0x58] sm:$0x7]
    %v4378 = vld [vmem:[%s4365 + $0x60] sm:$0xff]
    %v4379 = vld [vmem:[%s4365 + $0x68] sm:$0x7]
    %v4380 = vld [vmem:[%s4365 + $0x70] sm:$0xff]
    %v4381 = vld [vmem:[%s4365 + $0x78] sm:$0x7]
    %v4382 = vld [vmem:[%s4365 + $0x80] sm:$0xff]
    %v4383 = vld [vmem:[%s4365 + $0x88] sm:$0x7]
    %v4384 = vld [vmem:[%s4365 + $0x90] sm:$0xff]
    %v4385 = vld [vmem:[%s4365 + $0x98] sm:$0x7]
    %v4386 = vld [vmem:[%s4365 + $0x1] sm:$0xff]
    %v4387 = vld [vmem:[%s4365 + $0x9] sm:$0x7]
    %v4388 = vld [vmem:[%s4365 + $0x11] sm:$0xff]
    %v4389 = vld [vmem:[%s4365 + $0x19] sm:$0x7]
    %v4390 = vld [vmem:[%s4365 + $0x21] sm:$0xff]
    %v4391 = vld [vmem:[%s4365 + $0x29] sm:$0x7]
    %v4392 = vld [vmem:[%s4365 + $0x31] sm:$0xff]
    %v4393 = vld [vmem:[%s4365 + $0x39] sm:$0x7]
    %v4394 = vld [vmem:[%s4365 + $0x41] sm:$0xff]
    %v4395 = vld [vmem:[%s4365 + $0x49] sm:$0x7]
    %v4396 = vld [vmem:[%s4365 + $0x51] sm:$0xff]
    %v4397 = vld [vmem:[%s4365 + $0x59] sm:$0x7]
    %v4398 = vld [vmem:[%s4365 + $0x61] sm:$0xff]
    %v4399 = vld [vmem:[%s4365 + $0x69] sm:$0x7]
    %v4400 = vld [vmem:[%s4365 + $0x71] sm:$0xff]
    %v4401 = vld [vmem:[%s4365 + $0x79] sm:$0x7]
    %v4402 = vld [vmem:[%s4365 + $0x81] sm:$0xff]
    %v4403 = vld [vmem:[%s4365 + $0x89] sm:$0x7]
    %v4404 = vld [vmem:[%s4365 + $0x91] sm:$0xff]
    %v4405 = vld [vmem:[%s4365 + $0x99] sm:$0x7]
    %v4406 = vld [vmem:[%s4365 + $0x2] sm:$0xff]
    %v4407 = vld [vmem:[%s4365 + $0xa] sm:$0x7]
    %v4408 = vld [vmem:[%s4365 + $0x12] sm:$0xff]
    %v4409 = vld [vmem:[%s4365 + $0x1a] sm:$0x7]
    %v4410 = vld [vmem:[%s4365 + $0x22] sm:$0xff]
    %v4411 = vld [vmem:[%s4365 + $0x2a] sm:$0x7]
    %v4412 = vld [vmem:[%s4365 + $0x32] sm:$0xff]
    %v4413 = vld [vmem:[%s4365 + $0x3a] sm:$0x7]
    %v4414 = vld [vmem:[%s4365 + $0x42] sm:$0xff]
    %v4415 = vld [vmem:[%s4365 + $0x4a] sm:$0x7]
    %v4416 = vld [vmem:[%s4365 + $0x52] sm:$0xff]
    %v4417 = vld [vmem:[%s4365 + $0x5a] sm:$0x7]
    %v4418 = vld [vmem:[%s4365 + $0x62] sm:$0xff]
    %v4419 = vld [vmem:[%s4365 + $0x6a] sm:$0x7]
    %v4420 = vld [vmem:[%s4365 + $0x72] sm:$0xff]
    %v4421 = vld [vmem:[%s4365 + $0x7a] sm:$0x7]
    %v4422 = vld [vmem:[%s4365 + $0x82] sm:$0xff]
    %v4423 = vld [vmem:[%s4365 + $0x8a] sm:$0x7]
    %v4424 = vld [vmem:[%s4365 + $0x92] sm:$0xff]
    %v4425 = vld [vmem:[%s4365 + $0x9a] sm:$0x7]
    %s4426 = scalar_lea.vmem [#allocation2], 624
    %v4427 = vld [vmem:[%s4426] sm:$0xff]
    %v4428 = vld [vmem:[%s4426 + $0x8] sm:$0x7]
    %v4429 = vld [vmem:[%s4426 + $0x10] sm:$0xff]
    %v4430 = vld [vmem:[%s4426 + $0x18] sm:$0x7]
    %v4431 = vld [vmem:[%s4426 + $0x20] sm:$0xff]
    %v4432 = vld [vmem:[%s4426 + $0x28] sm:$0x7]
    %v4433 = vld [vmem:[%s4426 + $0x30] sm:$0xff]
    %v4434 = vld [vmem:[%s4426 + $0x38] sm:$0x7]
    %v4435 = vld [vmem:[%s4426 + $0x40] sm:$0xff]
    %v4436 = vld [vmem:[%s4426 + $0x48] sm:$0x7]
    %v4437 = vld [vmem:[%s4426 + $0x50] sm:$0xff]
    %v4438 = vld [vmem:[%s4426 + $0x58] sm:$0x7]
    %v4439 = vld [vmem:[%s4426 + $0x60] sm:$0xff]
    %v4440 = vld [vmem:[%s4426 + $0x68] sm:$0x7]
    %v4441 = vld [vmem:[%s4426 + $0x70] sm:$0xff]
    %v4442 = vld [vmem:[%s4426 + $0x78] sm:$0x7]
    %v4443 = vld [vmem:[%s4426 + $0x80] sm:$0xff]
    %v4444 = vld [vmem:[%s4426 + $0x88] sm:$0x7]
    %v4445 = vld [vmem:[%s4426 + $0x90] sm:$0xff]
    %v4446 = vld [vmem:[%s4426 + $0x98] sm:$0x7]
    %v4447 = vld [vmem:[%s4426 + $0x1] sm:$0xff]
    %v4448 = vld [vmem:[%s4426 + $0x9] sm:$0x7]
    %v4449 = vld [vmem:[%s4426 + $0x11] sm:$0xff]
    %v4450 = vld [vmem:[%s4426 + $0x19] sm:$0x7]
    %v4451 = vld [vmem:[%s4426 + $0x21] sm:$0xff]
    %v4452 = vld [vmem:[%s4426 + $0x29] sm:$0x7]
    %v4453 = vld [vmem:[%s4426 + $0x31] sm:$0xff]
    %v4454 = vld [vmem:[%s4426 + $0x39] sm:$0x7]
    %v4455 = vld [vmem:[%s4426 + $0x41] sm:$0xff]
    %v4456 = vld [vmem:[%s4426 + $0x49] sm:$0x7]
    %v4457 = vld [vmem:[%s4426 + $0x51] sm:$0xff]
    %v4458 = vld [vmem:[%s4426 + $0x59] sm:$0x7]
    %v4459 = vld [vmem:[%s4426 + $0x61] sm:$0xff]
    %v4460 = vld [vmem:[%s4426 + $0x69] sm:$0x7]
    %v4461 = vld [vmem:[%s4426 + $0x71] sm:$0xff]
    %v4462 = vld [vmem:[%s4426 + $0x79] sm:$0x7]
    %v4463 = vld [vmem:[%s4426 + $0x81] sm:$0xff]
    %v4464 = vld [vmem:[%s4426 + $0x89] sm:$0x7]
    %v4465 = vld [vmem:[%s4426 + $0x91] sm:$0xff]
    %v4466 = vld [vmem:[%s4426 + $0x99] sm:$0x7]
    %v4467 = vld [vmem:[%s4426 + $0x2] sm:$0xff]
    %v4468 = vld [vmem:[%s4426 + $0xa] sm:$0x7]
    %v4469 = vld [vmem:[%s4426 + $0x12] sm:$0xff]
    %v4470 = vld [vmem:[%s4426 + $0x1a] sm:$0x7]
    %v4471 = vld [vmem:[%s4426 + $0x22] sm:$0xff]
    %v4472 = vld [vmem:[%s4426 + $0x2a] sm:$0x7]
    %v4473 = vld [vmem:[%s4426 + $0x32] sm:$0xff]
    %v4474 = vld [vmem:[%s4426 + $0x3a] sm:$0x7]
    %v4475 = vld [vmem:[%s4426 + $0x42] sm:$0xff]
    %v4476 = vld [vmem:[%s4426 + $0x4a] sm:$0x7]
    %v4477 = vld [vmem:[%s4426 + $0x52] sm:$0xff]
    %v4478 = vld [vmem:[%s4426 + $0x5a] sm:$0x7]
    %v4479 = vld [vmem:[%s4426 + $0x62] sm:$0xff]
    %v4480 = vld [vmem:[%s4426 + $0x6a] sm:$0x7]
    %v4481 = vld [vmem:[%s4426 + $0x72] sm:$0xff]
    %v4482 = vld [vmem:[%s4426 + $0x7a] sm:$0x7]
    %v4483 = vld [vmem:[%s4426 + $0x82] sm:$0xff]
    %v4484 = vld [vmem:[%s4426 + $0x8a] sm:$0x7]
    %v4485 = vld [vmem:[%s4426 + $0x92] sm:$0xff]
    %v4486 = vld [vmem:[%s4426 + $0x9a] sm:$0x7]
    %s4487 = scalar_lea.vmem [#allocation2], 640
    %v4488 = vld [vmem:[%s4487] sm:$0xff]
    %v4489 = vld [vmem:[%s4487 + $0x8] sm:$0x7]
    %v4490 = vld [vmem:[%s4487 + $0x10] sm:$0xff]
    %v4491 = vld [vmem:[%s4487 + $0x18] sm:$0x7]
    %v4492 = vld [vmem:[%s4487 + $0x20] sm:$0xff]
    %v4493 = vld [vmem:[%s4487 + $0x28] sm:$0x7]
    %v4494 = vld [vmem:[%s4487 + $0x30] sm:$0xff]
    %v4495 = vld [vmem:[%s4487 + $0x38] sm:$0x7]
    %v4496 = vld [vmem:[%s4487 + $0x40] sm:$0xff]
    %v4497 = vld [vmem:[%s4487 + $0x48] sm:$0x7]
    %v4498 = vld [vmem:[%s4487 + $0x50] sm:$0xff]
    %v4499 = vld [vmem:[%s4487 + $0x58] sm:$0x7]
    %v4500 = vld [vmem:[%s4487 + $0x60] sm:$0xff]
    %v4501 = vld [vmem:[%s4487 + $0x68] sm:$0x7]
    %v4502 = vld [vmem:[%s4487 + $0x70] sm:$0xff]
    %v4503 = vld [vmem:[%s4487 + $0x78] sm:$0x7]
    %v4504 = vld [vmem:[%s4487 + $0x80] sm:$0xff]
    %v4505 = vld [vmem:[%s4487 + $0x88] sm:$0x7]
    %v4506 = vld [vmem:[%s4487 + $0x90] sm:$0xff]
    %v4507 = vld [vmem:[%s4487 + $0x98] sm:$0x7]
    %v4508 = vld [vmem:[%s4487 + $0x1] sm:$0xff]
    %v4509 = vld [vmem:[%s4487 + $0x9] sm:$0x7]
    %v4510 = vld [vmem:[%s4487 + $0x11] sm:$0xff]
    %v4511 = vld [vmem:[%s4487 + $0x19] sm:$0x7]
    %v4512 = vld [vmem:[%s4487 + $0x21] sm:$0xff]
    %v4513 = vld [vmem:[%s4487 + $0x29] sm:$0x7]
    %v4514 = vld [vmem:[%s4487 + $0x31] sm:$0xff]
    %v4515 = vld [vmem:[%s4487 + $0x39] sm:$0x7]
    %v4516 = vld [vmem:[%s4487 + $0x41] sm:$0xff]
    %v4517 = vld [vmem:[%s4487 + $0x49] sm:$0x7]
    %v4518 = vld [vmem:[%s4487 + $0x51] sm:$0xff]
    %v4519 = vld [vmem:[%s4487 + $0x59] sm:$0x7]
    %v4520 = vld [vmem:[%s4487 + $0x61] sm:$0xff]
    %v4521 = vld [vmem:[%s4487 + $0x69] sm:$0x7]
    %v4522 = vld [vmem:[%s4487 + $0x71] sm:$0xff]
    %v4523 = vld [vmem:[%s4487 + $0x79] sm:$0x7]
    %v4524 = vld [vmem:[%s4487 + $0x81] sm:$0xff]
    %v4525 = vld [vmem:[%s4487 + $0x89] sm:$0x7]
    %v4526 = vld [vmem:[%s4487 + $0x91] sm:$0xff]
    %v4527 = vld [vmem:[%s4487 + $0x99] sm:$0x7]
    %v4528 = vld [vmem:[%s4487 + $0x2] sm:$0xff]
    %v4529 = vld [vmem:[%s4487 + $0xa] sm:$0x7]
    %v4530 = vld [vmem:[%s4487 + $0x12] sm:$0xff]
    %v4531 = vld [vmem:[%s4487 + $0x1a] sm:$0x7]
    %v4532 = vld [vmem:[%s4487 + $0x22] sm:$0xff]
    %v4533 = vld [vmem:[%s4487 + $0x2a] sm:$0x7]
    %v4534 = vld [vmem:[%s4487 + $0x32] sm:$0xff]
    %v4535 = vld [vmem:[%s4487 + $0x3a] sm:$0x7]
    %v4536 = vld [vmem:[%s4487 + $0x42] sm:$0xff]
    %v4537 = vld [vmem:[%s4487 + $0x4a] sm:$0x7]
    %v4538 = vld [vmem:[%s4487 + $0x52] sm:$0xff]
    %v4539 = vld [vmem:[%s4487 + $0x5a] sm:$0x7]
    %v4540 = vld [vmem:[%s4487 + $0x62] sm:$0xff]
    %v4541 = vld [vmem:[%s4487 + $0x6a] sm:$0x7]
    %v4542 = vld [vmem:[%s4487 + $0x72] sm:$0xff]
    %v4543 = vld [vmem:[%s4487 + $0x7a] sm:$0x7]
    %v4544 = vld [vmem:[%s4487 + $0x82] sm:$0xff]
    %v4545 = vld [vmem:[%s4487 + $0x8a] sm:$0x7]
    %v4546 = vld [vmem:[%s4487 + $0x92] sm:$0xff]
    %v4547 = vld [vmem:[%s4487 + $0x9a] sm:$0x7]
    %s4548 = scalar_lea.vmem [#allocation2], 656
    %v4549 = vld [vmem:[%s4548] sm:$0xff]
    %v4550 = vld [vmem:[%s4548 + $0x8] sm:$0x7]
    %v4551 = vld [vmem:[%s4548 + $0x10] sm:$0xff]
    %v4552 = vld [vmem:[%s4548 + $0x18] sm:$0x7]
    %v4553 = vld [vmem:[%s4548 + $0x20] sm:$0xff]
    %v4554 = vld [vmem:[%s4548 + $0x28] sm:$0x7]
    %v4555 = vld [vmem:[%s4548 + $0x30] sm:$0xff]
    %v4556 = vld [vmem:[%s4548 + $0x38] sm:$0x7]
    %v4557 = vld [vmem:[%s4548 + $0x40] sm:$0xff]
    %v4558 = vld [vmem:[%s4548 + $0x48] sm:$0x7]
    %v4559 = vld [vmem:[%s4548 + $0x50] sm:$0xff]
    %v4560 = vld [vmem:[%s4548 + $0x58] sm:$0x7]
    %v4561 = vld [vmem:[%s4548 + $0x60] sm:$0xff]
    %v4562 = vld [vmem:[%s4548 + $0x68] sm:$0x7]
    %v4563 = vld [vmem:[%s4548 + $0x70] sm:$0xff]
    %v4564 = vld [vmem:[%s4548 + $0x78] sm:$0x7]
    %v4565 = vld [vmem:[%s4548 + $0x80] sm:$0xff]
    %v4566 = vld [vmem:[%s4548 + $0x88] sm:$0x7]
    %v4567 = vld [vmem:[%s4548 + $0x90] sm:$0xff]
    %v4568 = vld [vmem:[%s4548 + $0x98] sm:$0x7]
    %v4569 = vld [vmem:[%s4548 + $0x1] sm:$0xff]
    %v4570 = vld [vmem:[%s4548 + $0x9] sm:$0x7]
    %v4571 = vld [vmem:[%s4548 + $0x11] sm:$0xff]
    %v4572 = vld [vmem:[%s4548 + $0x19] sm:$0x7]
    %v4573 = vld [vmem:[%s4548 + $0x21] sm:$0xff]
    %v4574 = vld [vmem:[%s4548 + $0x29] sm:$0x7]
    %v4575 = vld [vmem:[%s4548 + $0x31] sm:$0xff]
    %v4576 = vld [vmem:[%s4548 + $0x39] sm:$0x7]
    %v4577 = vld [vmem:[%s4548 + $0x41] sm:$0xff]
    %v4578 = vld [vmem:[%s4548 + $0x49] sm:$0x7]
    %v4579 = vld [vmem:[%s4548 + $0x51] sm:$0xff]
    %v4580 = vld [vmem:[%s4548 + $0x59] sm:$0x7]
    %v4581 = vld [vmem:[%s4548 + $0x61] sm:$0xff]
    %v4582 = vld [vmem:[%s4548 + $0x69] sm:$0x7]
    %v4583 = vld [vmem:[%s4548 + $0x71] sm:$0xff]
    %v4584 = vld [vmem:[%s4548 + $0x79] sm:$0x7]
    %v4585 = vld [vmem:[%s4548 + $0x81] sm:$0xff]
    %v4586 = vld [vmem:[%s4548 + $0x89] sm:$0x7]
    %v4587 = vld [vmem:[%s4548 + $0x91] sm:$0xff]
    %v4588 = vld [vmem:[%s4548 + $0x99] sm:$0x7]
    %v4589 = vld [vmem:[%s4548 + $0x2] sm:$0xff]
    %v4590 = vld [vmem:[%s4548 + $0xa] sm:$0x7]
    %v4591 = vld [vmem:[%s4548 + $0x12] sm:$0xff]
    %v4592 = vld [vmem:[%s4548 + $0x1a] sm:$0x7]
    %v4593 = vld [vmem:[%s4548 + $0x22] sm:$0xff]
    %v4594 = vld [vmem:[%s4548 + $0x2a] sm:$0x7]
    %v4595 = vld [vmem:[%s4548 + $0x32] sm:$0xff]
    %v4596 = vld [vmem:[%s4548 + $0x3a] sm:$0x7]
    %v4597 = vld [vmem:[%s4548 + $0x42] sm:$0xff]
    %v4598 = vld [vmem:[%s4548 + $0x4a] sm:$0x7]
    %v4599 = vld [vmem:[%s4548 + $0x52] sm:$0xff]
    %v4600 = vld [vmem:[%s4548 + $0x5a] sm:$0x7]
    %v4601 = vld [vmem:[%s4548 + $0x62] sm:$0xff]
    %v4602 = vld [vmem:[%s4548 + $0x6a] sm:$0x7]
    %v4603 = vld [vmem:[%s4548 + $0x72] sm:$0xff]
    %v4604 = vld [vmem:[%s4548 + $0x7a] sm:$0x7]
    %v4605 = vld [vmem:[%s4548 + $0x82] sm:$0xff]
    %v4606 = vld [vmem:[%s4548 + $0x8a] sm:$0x7]
    %v4607 = vld [vmem:[%s4548 + $0x92] sm:$0xff]
    %v4608 = vld [vmem:[%s4548 + $0x9a] sm:$0x7]
    %s4609 = scalar_lea.vmem [#allocation2], 832
    %v4610 = vld [vmem:[%s4609] sm:$0xff]
    %v4611 = vld [vmem:[%s4609 + $0x8] sm:$0x7]
    %v4612 = vld [vmem:[%s4609 + $0x10] sm:$0xff]
    %v4613 = vld [vmem:[%s4609 + $0x18] sm:$0x7]
    %v4614 = vld [vmem:[%s4609 + $0x20] sm:$0xff]
    %v4615 = vld [vmem:[%s4609 + $0x28] sm:$0x7]
    %v4616 = vld [vmem:[%s4609 + $0x30] sm:$0xff]
    %v4617 = vld [vmem:[%s4609 + $0x38] sm:$0x7]
    %v4618 = vld [vmem:[%s4609 + $0x40] sm:$0xff]
    %v4619 = vld [vmem:[%s4609 + $0x48] sm:$0x7]
    %v4620 = vld [vmem:[%s4609 + $0x50] sm:$0xff]
    %v4621 = vld [vmem:[%s4609 + $0x58] sm:$0x7]
    %v4622 = vld [vmem:[%s4609 + $0x60] sm:$0xff]
    %v4623 = vld [vmem:[%s4609 + $0x68] sm:$0x7]
    %v4624 = vld [vmem:[%s4609 + $0x70] sm:$0xff]
    %v4625 = vld [vmem:[%s4609 + $0x78] sm:$0x7]
    %v4626 = vld [vmem:[%s4609 + $0x80] sm:$0xff]
    %v4627 = vld [vmem:[%s4609 + $0x88] sm:$0x7]
    %v4628 = vld [vmem:[%s4609 + $0x90] sm:$0xff]
    %v4629 = vld [vmem:[%s4609 + $0x98] sm:$0x7]
    %v4630 = vld [vmem:[%s4609 + $0x1] sm:$0xff]
    %v4631 = vld [vmem:[%s4609 + $0x9] sm:$0x7]
    %v4632 = vld [vmem:[%s4609 + $0x11] sm:$0xff]
    %v4633 = vld [vmem:[%s4609 + $0x19] sm:$0x7]
    %v4634 = vld [vmem:[%s4609 + $0x21] sm:$0xff]
    %v4635 = vld [vmem:[%s4609 + $0x29] sm:$0x7]
    %v4636 = vld [vmem:[%s4609 + $0x31] sm:$0xff]
    %v4637 = vld [vmem:[%s4609 + $0x39] sm:$0x7]
    %v4638 = vld [vmem:[%s4609 + $0x41] sm:$0xff]
    %v4639 = vld [vmem:[%s4609 + $0x49] sm:$0x7]
    %v4640 = vld [vmem:[%s4609 + $0x51] sm:$0xff]
    %v4641 = vld [vmem:[%s4609 + $0x59] sm:$0x7]
    %v4642 = vld [vmem:[%s4609 + $0x61] sm:$0xff]
    %v4643 = vld [vmem:[%s4609 + $0x69] sm:$0x7]
    %v4644 = vld [vmem:[%s4609 + $0x71] sm:$0xff]
    %v4645 = vld [vmem:[%s4609 + $0x79] sm:$0x7]
    %v4646 = vld [vmem:[%s4609 + $0x81] sm:$0xff]
    %v4647 = vld [vmem:[%s4609 + $0x89] sm:$0x7]
    %v4648 = vld [vmem:[%s4609 + $0x91] sm:$0xff]
    %v4649 = vld [vmem:[%s4609 + $0x99] sm:$0x7]
    %v4650 = vld [vmem:[%s4609 + $0x2] sm:$0xff]
    %v4651 = vld [vmem:[%s4609 + $0xa] sm:$0x7]
    %v4652 = vld [vmem:[%s4609 + $0x12] sm:$0xff]
    %v4653 = vld [vmem:[%s4609 + $0x1a] sm:$0x7]
    %v4654 = vld [vmem:[%s4609 + $0x22] sm:$0xff]
    %v4655 = vld [vmem:[%s4609 + $0x2a] sm:$0x7]
    %v4656 = vld [vmem:[%s4609 + $0x32] sm:$0xff]
    %v4657 = vld [vmem:[%s4609 + $0x3a] sm:$0x7]
    %v4658 = vld [vmem:[%s4609 + $0x42] sm:$0xff]
    %v4659 = vld [vmem:[%s4609 + $0x4a] sm:$0x7]
    %v4660 = vld [vmem:[%s4609 + $0x52] sm:$0xff]
    %v4661 = vld [vmem:[%s4609 + $0x5a] sm:$0x7]
    %v4662 = vld [vmem:[%s4609 + $0x62] sm:$0xff]
    %v4663 = vld [vmem:[%s4609 + $0x6a] sm:$0x7]
    %v4664 = vld [vmem:[%s4609 + $0x72] sm:$0xff]
    %v4665 = vld [vmem:[%s4609 + $0x7a] sm:$0x7]
    %v4666 = vld [vmem:[%s4609 + $0x82] sm:$0xff]
    %v4667 = vld [vmem:[%s4609 + $0x8a] sm:$0x7]
    %v4668 = vld [vmem:[%s4609 + $0x92] sm:$0xff]
    %v4669 = vld [vmem:[%s4609 + $0x9a] sm:$0x7]
    %s4670 = scalar_lea.vmem [#allocation2], 848
    %v4671 = vld [vmem:[%s4670] sm:$0xff]
    %v4672 = vld [vmem:[%s4670 + $0x8] sm:$0x7]
    %v4673 = vld [vmem:[%s4670 + $0x10] sm:$0xff]
    %v4674 = vld [vmem:[%s4670 + $0x18] sm:$0x7]
    %v4675 = vld [vmem:[%s4670 + $0x20] sm:$0xff]
    %v4676 = vld [vmem:[%s4670 + $0x28] sm:$0x7]
    %v4677 = vld [vmem:[%s4670 + $0x30] sm:$0xff]
    %v4678 = vld [vmem:[%s4670 + $0x38] sm:$0x7]
    %v4679 = vld [vmem:[%s4670 + $0x40] sm:$0xff]
    %v4680 = vld [vmem:[%s4670 + $0x48] sm:$0x7]
    %v4681 = vld [vmem:[%s4670 + $0x50] sm:$0xff]
    %v4682 = vld [vmem:[%s4670 + $0x58] sm:$0x7]
    %v4683 = vld [vmem:[%s4670 + $0x60] sm:$0xff]
    %v4684 = vld [vmem:[%s4670 + $0x68] sm:$0x7]
    %v4685 = vld [vmem:[%s4670 + $0x70] sm:$0xff]
    %v4686 = vld [vmem:[%s4670 + $0x78] sm:$0x7]
    %v4687 = vld [vmem:[%s4670 + $0x80] sm:$0xff]
    %v4688 = vld [vmem:[%s4670 + $0x88] sm:$0x7]
    %v4689 = vld [vmem:[%s4670 + $0x90] sm:$0xff]
    %v4690 = vld [vmem:[%s4670 + $0x98] sm:$0x7]
    %v4691 = vld [vmem:[%s4670 + $0x1] sm:$0xff]
    %v4692 = vld [vmem:[%s4670 + $0x9] sm:$0x7]
    %v4693 = vld [vmem:[%s4670 + $0x11] sm:$0xff]
    %v4694 = vld [vmem:[%s4670 + $0x19] sm:$0x7]
    %v4695 = vld [vmem:[%s4670 + $0x21] sm:$0xff]
    %v4696 = vld [vmem:[%s4670 + $0x29] sm:$0x7]
    %v4697 = vld [vmem:[%s4670 + $0x31] sm:$0xff]
    %v4698 = vld [vmem:[%s4670 + $0x39] sm:$0x7]
    %v4699 = vld [vmem:[%s4670 + $0x41] sm:$0xff]
    %v4700 = vld [vmem:[%s4670 + $0x49] sm:$0x7]
    %v4701 = vld [vmem:[%s4670 + $0x51] sm:$0xff]
    %v4702 = vld [vmem:[%s4670 + $0x59] sm:$0x7]
    %v4703 = vld [vmem:[%s4670 + $0x61] sm:$0xff]
    %v4704 = vld [vmem:[%s4670 + $0x69] sm:$0x7]
    %v4705 = vld [vmem:[%s4670 + $0x71] sm:$0xff]
    %v4706 = vld [vmem:[%s4670 + $0x79] sm:$0x7]
    %v4707 = vld [vmem:[%s4670 + $0x81] sm:$0xff]
    %v4708 = vld [vmem:[%s4670 + $0x89] sm:$0x7]
    %v4709 = vld [vmem:[%s4670 + $0x91] sm:$0xff]
    %v4710 = vld [vmem:[%s4670 + $0x99] sm:$0x7]
    %v4711 = vld [vmem:[%s4670 + $0x2] sm:$0xff]
    %v4712 = vld [vmem:[%s4670 + $0xa] sm:$0x7]
    %v4713 = vld [vmem:[%s4670 + $0x12] sm:$0xff]
    %v4714 = vld [vmem:[%s4670 + $0x1a] sm:$0x7]
    %v4715 = vld [vmem:[%s4670 + $0x22] sm:$0xff]
    %v4716 = vld [vmem:[%s4670 + $0x2a] sm:$0x7]
    %v4717 = vld [vmem:[%s4670 + $0x32] sm:$0xff]
    %v4718 = vld [vmem:[%s4670 + $0x3a] sm:$0x7]
    %v4719 = vld [vmem:[%s4670 + $0x42] sm:$0xff]
    %v4720 = vld [vmem:[%s4670 + $0x4a] sm:$0x7]
    %v4721 = vld [vmem:[%s4670 + $0x52] sm:$0xff]
    %v4722 = vld [vmem:[%s4670 + $0x5a] sm:$0x7]
    %v4723 = vld [vmem:[%s4670 + $0x62] sm:$0xff]
    %v4724 = vld [vmem:[%s4670 + $0x6a] sm:$0x7]
    %v4725 = vld [vmem:[%s4670 + $0x72] sm:$0xff]
    %v4726 = vld [vmem:[%s4670 + $0x7a] sm:$0x7]
    %v4727 = vld [vmem:[%s4670 + $0x82] sm:$0xff]
    %v4728 = vld [vmem:[%s4670 + $0x8a] sm:$0x7]
    %v4729 = vld [vmem:[%s4670 + $0x92] sm:$0xff]
    %v4730 = vld [vmem:[%s4670 + $0x9a] sm:$0x7]
    %s4731 = scalar_lea.vmem [#allocation2], 864
    %v4732 = vld [vmem:[%s4731] sm:$0xff]
    %v4733 = vld [vmem:[%s4731 + $0x8] sm:$0x7]
    %v4734 = vld [vmem:[%s4731 + $0x10] sm:$0xff]
    %v4735 = vld [vmem:[%s4731 + $0x18] sm:$0x7]
    %v4736 = vld [vmem:[%s4731 + $0x20] sm:$0xff]
    %v4737 = vld [vmem:[%s4731 + $0x28] sm:$0x7]
    %v4738 = vld [vmem:[%s4731 + $0x30] sm:$0xff]
    %v4739 = vld [vmem:[%s4731 + $0x38] sm:$0x7]
    %v4740 = vld [vmem:[%s4731 + $0x40] sm:$0xff]
    %v4741 = vld [vmem:[%s4731 + $0x48] sm:$0x7]
    %v4742 = vld [vmem:[%s4731 + $0x50] sm:$0xff]
    %v4743 = vld [vmem:[%s4731 + $0x58] sm:$0x7]
    %v4744 = vld [vmem:[%s4731 + $0x60] sm:$0xff]
    %v4745 = vld [vmem:[%s4731 + $0x68] sm:$0x7]
    %v4746 = vld [vmem:[%s4731 + $0x70] sm:$0xff]
    %v4747 = vld [vmem:[%s4731 + $0x78] sm:$0x7]
    %v4748 = vld [vmem:[%s4731 + $0x80] sm:$0xff]
    %v4749 = vld [vmem:[%s4731 + $0x88] sm:$0x7]
    %v4750 = vld [vmem:[%s4731 + $0x90] sm:$0xff]
    %v4751 = vld [vmem:[%s4731 + $0x98] sm:$0x7]
    %v4752 = vld [vmem:[%s4731 + $0x1] sm:$0xff]
    %v4753 = vld [vmem:[%s4731 + $0x9] sm:$0x7]
    %v4754 = vld [vmem:[%s4731 + $0x11] sm:$0xff]
    %v4755 = vld [vmem:[%s4731 + $0x19] sm:$0x7]
    %v4756 = vld [vmem:[%s4731 + $0x21] sm:$0xff]
    %v4757 = vld [vmem:[%s4731 + $0x29] sm:$0x7]
    %v4758 = vld [vmem:[%s4731 + $0x31] sm:$0xff]
    %v4759 = vld [vmem:[%s4731 + $0x39] sm:$0x7]
    %v4760 = vld [vmem:[%s4731 + $0x41] sm:$0xff]
    %v4761 = vld [vmem:[%s4731 + $0x49] sm:$0x7]
    %v4762 = vld [vmem:[%s4731 + $0x51] sm:$0xff]
    %v4763 = vld [vmem:[%s4731 + $0x59] sm:$0x7]
    %v4764 = vld [vmem:[%s4731 + $0x61] sm:$0xff]
    %v4765 = vld [vmem:[%s4731 + $0x69] sm:$0x7]
    %v4766 = vld [vmem:[%s4731 + $0x71] sm:$0xff]
    %v4767 = vld [vmem:[%s4731 + $0x79] sm:$0x7]
    %v4768 = vld [vmem:[%s4731 + $0x81] sm:$0xff]
    %v4769 = vld [vmem:[%s4731 + $0x89] sm:$0x7]
    %v4770 = vld [vmem:[%s4731 + $0x91] sm:$0xff]
    %v4771 = vld [vmem:[%s4731 + $0x99] sm:$0x7]
    %v4772 = vld [vmem:[%s4731 + $0x2] sm:$0xff]
    %v4773 = vld [vmem:[%s4731 + $0xa] sm:$0x7]
    %v4774 = vld [vmem:[%s4731 + $0x12] sm:$0xff]
    %v4775 = vld [vmem:[%s4731 + $0x1a] sm:$0x7]
    %v4776 = vld [vmem:[%s4731 + $0x22] sm:$0xff]
    %v4777 = vld [vmem:[%s4731 + $0x2a] sm:$0x7]
    %v4778 = vld [vmem:[%s4731 + $0x32] sm:$0xff]
    %v4779 = vld [vmem:[%s4731 + $0x3a] sm:$0x7]
    %v4780 = vld [vmem:[%s4731 + $0x42] sm:$0xff]
    %v4781 = vld [vmem:[%s4731 + $0x4a] sm:$0x7]
    %v4782 = vld [vmem:[%s4731 + $0x52] sm:$0xff]
    %v4783 = vld [vmem:[%s4731 + $0x5a] sm:$0x7]
    %v4784 = vld [vmem:[%s4731 + $0x62] sm:$0xff]
    %v4785 = vld [vmem:[%s4731 + $0x6a] sm:$0x7]
    %v4786 = vld [vmem:[%s4731 + $0x72] sm:$0xff]
    %v4787 = vld [vmem:[%s4731 + $0x7a] sm:$0x7]
    %v4788 = vld [vmem:[%s4731 + $0x82] sm:$0xff]
    %v4789 = vld [vmem:[%s4731 + $0x8a] sm:$0x7]
    %v4790 = vld [vmem:[%s4731 + $0x92] sm:$0xff]
    %v4791 = vld [vmem:[%s4731 + $0x9a] sm:$0x7]
    %s4792 = scalar_lea.vmem [#allocation2], 1040
    %v4793 = vld [vmem:[%s4792] sm:$0xff]
    %v4794 = vld [vmem:[%s4792 + $0x8] sm:$0x7]
    %v4795 = vld [vmem:[%s4792 + $0x10] sm:$0xff]
    %v4796 = vld [vmem:[%s4792 + $0x18] sm:$0x7]
    %v4797 = vld [vmem:[%s4792 + $0x20] sm:$0xff]
    %v4798 = vld [vmem:[%s4792 + $0x28] sm:$0x7]
    %v4799 = vld [vmem:[%s4792 + $0x30] sm:$0xff]
    %v4800 = vld [vmem:[%s4792 + $0x38] sm:$0x7]
    %v4801 = vld [vmem:[%s4792 + $0x40] sm:$0xff]
    %v4802 = vld [vmem:[%s4792 + $0x48] sm:$0x7]
    %v4803 = vld [vmem:[%s4792 + $0x50] sm:$0xff]
    %v4804 = vld [vmem:[%s4792 + $0x58] sm:$0x7]
    %v4805 = vld [vmem:[%s4792 + $0x60] sm:$0xff]
    %v4806 = vld [vmem:[%s4792 + $0x68] sm:$0x7]
    %v4807 = vld [vmem:[%s4792 + $0x70] sm:$0xff]
    %v4808 = vld [vmem:[%s4792 + $0x78] sm:$0x7]
    %v4809 = vld [vmem:[%s4792 + $0x80] sm:$0xff]
    %v4810 = vld [vmem:[%s4792 + $0x88] sm:$0x7]
    %v4811 = vld [vmem:[%s4792 + $0x90] sm:$0xff]
    %v4812 = vld [vmem:[%s4792 + $0x98] sm:$0x7]
    %v4813 = vld [vmem:[%s4792 + $0x1] sm:$0xff]
    %v4814 = vld [vmem:[%s4792 + $0x9] sm:$0x7]
    %v4815 = vld [vmem:[%s4792 + $0x11] sm:$0xff]
    %v4816 = vld [vmem:[%s4792 + $0x19] sm:$0x7]
    %v4817 = vld [vmem:[%s4792 + $0x21] sm:$0xff]
    %v4818 = vld [vmem:[%s4792 + $0x29] sm:$0x7]
    %v4819 = vld [vmem:[%s4792 + $0x31] sm:$0xff]
    %v4820 = vld [vmem:[%s4792 + $0x39] sm:$0x7]
    %v4821 = vld [vmem:[%s4792 + $0x41] sm:$0xff]
    %v4822 = vld [vmem:[%s4792 + $0x49] sm:$0x7]
    %v4823 = vld [vmem:[%s4792 + $0x51] sm:$0xff]
    %v4824 = vld [vmem:[%s4792 + $0x59] sm:$0x7]
    %v4825 = vld [vmem:[%s4792 + $0x61] sm:$0xff]
    %v4826 = vld [vmem:[%s4792 + $0x69] sm:$0x7]
    %v4827 = vld [vmem:[%s4792 + $0x71] sm:$0xff]
    %v4828 = vld [vmem:[%s4792 + $0x79] sm:$0x7]
    %v4829 = vld [vmem:[%s4792 + $0x81] sm:$0xff]
    %v4830 = vld [vmem:[%s4792 + $0x89] sm:$0x7]
    %v4831 = vld [vmem:[%s4792 + $0x91] sm:$0xff]
    %v4832 = vld [vmem:[%s4792 + $0x99] sm:$0x7]
    %v4833 = vld [vmem:[%s4792 + $0x2] sm:$0xff]
    %v4834 = vld [vmem:[%s4792 + $0xa] sm:$0x7]
    %v4835 = vld [vmem:[%s4792 + $0x12] sm:$0xff]
    %v4836 = vld [vmem:[%s4792 + $0x1a] sm:$0x7]
    %v4837 = vld [vmem:[%s4792 + $0x22] sm:$0xff]
    %v4838 = vld [vmem:[%s4792 + $0x2a] sm:$0x7]
    %v4839 = vld [vmem:[%s4792 + $0x32] sm:$0xff]
    %v4840 = vld [vmem:[%s4792 + $0x3a] sm:$0x7]
    %v4841 = vld [vmem:[%s4792 + $0x42] sm:$0xff]
    %v4842 = vld [vmem:[%s4792 + $0x4a] sm:$0x7]
    %v4843 = vld [vmem:[%s4792 + $0x52] sm:$0xff]
    %v4844 = vld [vmem:[%s4792 + $0x5a] sm:$0x7]
    %v4845 = vld [vmem:[%s4792 + $0x62] sm:$0xff]
    %v4846 = vld [vmem:[%s4792 + $0x6a] sm:$0x7]
    %v4847 = vld [vmem:[%s4792 + $0x72] sm:$0xff]
    %v4848 = vld [vmem:[%s4792 + $0x7a] sm:$0x7]
    %v4849 = vld [vmem:[%s4792 + $0x82] sm:$0xff]
    %v4850 = vld [vmem:[%s4792 + $0x8a] sm:$0x7]
    %v4851 = vld [vmem:[%s4792 + $0x92] sm:$0xff]
    %v4852 = vld [vmem:[%s4792 + $0x9a] sm:$0x7]
    %s4853 = scalar_lea.vmem [#allocation2], 1056
    %v4854 = vld [vmem:[%s4853] sm:$0xff]
    %v4855 = vld [vmem:[%s4853 + $0x8] sm:$0x7]
    %v4856 = vld [vmem:[%s4853 + $0x10] sm:$0xff]
    %v4857 = vld [vmem:[%s4853 + $0x18] sm:$0x7]
    %v4858 = vld [vmem:[%s4853 + $0x20] sm:$0xff]
    %v4859 = vld [vmem:[%s4853 + $0x28] sm:$0x7]
    %v4860 = vld [vmem:[%s4853 + $0x30] sm:$0xff]
    %v4861 = vld [vmem:[%s4853 + $0x38] sm:$0x7]
    %v4862 = vld [vmem:[%s4853 + $0x40] sm:$0xff]
    %v4863 = vld [vmem:[%s4853 + $0x48] sm:$0x7]
    %v4864 = vld [vmem:[%s4853 + $0x50] sm:$0xff]
    %v4865 = vld [vmem:[%s4853 + $0x58] sm:$0x7]
    %v4866 = vld [vmem:[%s4853 + $0x60] sm:$0xff]
    %v4867 = vld [vmem:[%s4853 + $0x68] sm:$0x7]
    %v4868 = vld [vmem:[%s4853 + $0x70] sm:$0xff]
    %v4869 = vld [vmem:[%s4853 + $0x78] sm:$0x7]
    %v4870 = vld [vmem:[%s4853 + $0x80] sm:$0xff]
    %v4871 = vld [vmem:[%s4853 + $0x88] sm:$0x7]
    %v4872 = vld [vmem:[%s4853 + $0x90] sm:$0xff]
    %v4873 = vld [vmem:[%s4853 + $0x98] sm:$0x7]
    %v4874 = vld [vmem:[%s4853 + $0x1] sm:$0xff]
    %v4875 = vld [vmem:[%s4853 + $0x9] sm:$0x7]
    %v4876 = vld [vmem:[%s4853 + $0x11] sm:$0xff]
    %v4877 = vld [vmem:[%s4853 + $0x19] sm:$0x7]
    %v4878 = vld [vmem:[%s4853 + $0x21] sm:$0xff]
    %v4879 = vld [vmem:[%s4853 + $0x29] sm:$0x7]
    %v4880 = vld [vmem:[%s4853 + $0x31] sm:$0xff]
    %v4881 = vld [vmem:[%s4853 + $0x39] sm:$0x7]
    %v4882 = vld [vmem:[%s4853 + $0x41] sm:$0xff]
    %v4883 = vld [vmem:[%s4853 + $0x49] sm:$0x7]
    %v4884 = vld [vmem:[%s4853 + $0x51] sm:$0xff]
    %v4885 = vld [vmem:[%s4853 + $0x59] sm:$0x7]
    %v4886 = vld [vmem:[%s4853 + $0x61] sm:$0xff]
    %v4887 = vld [vmem:[%s4853 + $0x69] sm:$0x7]
    %v4888 = vld [vmem:[%s4853 + $0x71] sm:$0xff]
    %v4889 = vld [vmem:[%s4853 + $0x79] sm:$0x7]
    %v4890 = vld [vmem:[%s4853 + $0x81] sm:$0xff]
    %v4891 = vld [vmem:[%s4853 + $0x89] sm:$0x7]
    %v4892 = vld [vmem:[%s4853 + $0x91] sm:$0xff]
    %v4893 = vld [vmem:[%s4853 + $0x99] sm:$0x7]
    %v4894 = vld [vmem:[%s4853 + $0x2] sm:$0xff]
    %v4895 = vld [vmem:[%s4853 + $0xa] sm:$0x7]
    %v4896 = vld [vmem:[%s4853 + $0x12] sm:$0xff]
    %v4897 = vld [vmem:[%s4853 + $0x1a] sm:$0x7]
    %v4898 = vld [vmem:[%s4853 + $0x22] sm:$0xff]
    %v4899 = vld [vmem:[%s4853 + $0x2a] sm:$0x7]
    %v4900 = vld [vmem:[%s4853 + $0x32] sm:$0xff]
    %v4901 = vld [vmem:[%s4853 + $0x3a] sm:$0x7]
    %v4902 = vld [vmem:[%s4853 + $0x42] sm:$0xff]
    %v4903 = vld [vmem:[%s4853 + $0x4a] sm:$0x7]
    %v4904 = vld [vmem:[%s4853 + $0x52] sm:$0xff]
    %v4905 = vld [vmem:[%s4853 + $0x5a] sm:$0x7]
    %v4906 = vld [vmem:[%s4853 + $0x62] sm:$0xff]
    %v4907 = vld [vmem:[%s4853 + $0x6a] sm:$0x7]
    %v4908 = vld [vmem:[%s4853 + $0x72] sm:$0xff]
    %v4909 = vld [vmem:[%s4853 + $0x7a] sm:$0x7]
    %v4910 = vld [vmem:[%s4853 + $0x82] sm:$0xff]
    %v4911 = vld [vmem:[%s4853 + $0x8a] sm:$0x7]
    %v4912 = vld [vmem:[%s4853 + $0x92] sm:$0xff]
    %v4913 = vld [vmem:[%s4853 + $0x9a] sm:$0x7]
    %s4914 = scalar_lea.vmem [#allocation2], 1072
    %v4915 = vld [vmem:[%s4914] sm:$0xff]
    %v4916 = vld [vmem:[%s4914 + $0x8] sm:$0x7]
    %v4917 = vld [vmem:[%s4914 + $0x10] sm:$0xff]
    %v4918 = vld [vmem:[%s4914 + $0x18] sm:$0x7]
    %v4919 = vld [vmem:[%s4914 + $0x20] sm:$0xff]
    %v4920 = vld [vmem:[%s4914 + $0x28] sm:$0x7]
    %v4921 = vld [vmem:[%s4914 + $0x30] sm:$0xff]
    %v4922 = vld [vmem:[%s4914 + $0x38] sm:$0x7]
    %v4923 = vld [vmem:[%s4914 + $0x40] sm:$0xff]
    %v4924 = vld [vmem:[%s4914 + $0x48] sm:$0x7]
    %v4925 = vld [vmem:[%s4914 + $0x50] sm:$0xff]
    %v4926 = vld [vmem:[%s4914 + $0x58] sm:$0x7]
    %v4927 = vld [vmem:[%s4914 + $0x60] sm:$0xff]
    %v4928 = vld [vmem:[%s4914 + $0x68] sm:$0x7]
    %v4929 = vld [vmem:[%s4914 + $0x70] sm:$0xff]
    %v4930 = vld [vmem:[%s4914 + $0x78] sm:$0x7]
    %v4931 = vld [vmem:[%s4914 + $0x80] sm:$0xff]
    %v4932 = vld [vmem:[%s4914 + $0x88] sm:$0x7]
    %v4933 = vld [vmem:[%s4914 + $0x90] sm:$0xff]
    %v4934 = vld [vmem:[%s4914 + $0x98] sm:$0x7]
    %v4935 = vld [vmem:[%s4914 + $0x1] sm:$0xff]
    %v4936 = vld [vmem:[%s4914 + $0x9] sm:$0x7]
    %v4937 = vld [vmem:[%s4914 + $0x11] sm:$0xff]
    %v4938 = vld [vmem:[%s4914 + $0x19] sm:$0x7]
    %v4939 = vld [vmem:[%s4914 + $0x21] sm:$0xff]
    %v4940 = vld [vmem:[%s4914 + $0x29] sm:$0x7]
    %v4941 = vld [vmem:[%s4914 + $0x31] sm:$0xff]
    %v4942 = vld [vmem:[%s4914 + $0x39] sm:$0x7]
    %v4943 = vld [vmem:[%s4914 + $0x41] sm:$0xff]
    %v4944 = vld [vmem:[%s4914 + $0x49] sm:$0x7]
    %v4945 = vld [vmem:[%s4914 + $0x51] sm:$0xff]
    %v4946 = vld [vmem:[%s4914 + $0x59] sm:$0x7]
    %v4947 = vld [vmem:[%s4914 + $0x61] sm:$0xff]
    %v4948 = vld [vmem:[%s4914 + $0x69] sm:$0x7]
    %v4949 = vld [vmem:[%s4914 + $0x71] sm:$0xff]
    %v4950 = vld [vmem:[%s4914 + $0x79] sm:$0x7]
    %v4951 = vld [vmem:[%s4914 + $0x81] sm:$0xff]
    %v4952 = vld [vmem:[%s4914 + $0x89] sm:$0x7]
    %v4953 = vld [vmem:[%s4914 + $0x91] sm:$0xff]
    %v4954 = vld [vmem:[%s4914 + $0x99] sm:$0x7]
    %v4955 = vld [vmem:[%s4914 + $0x2] sm:$0xff]
    %v4956 = vld [vmem:[%s4914 + $0xa] sm:$0x7]
    %v4957 = vld [vmem:[%s4914 + $0x12] sm:$0xff]
    %v4958 = vld [vmem:[%s4914 + $0x1a] sm:$0x7]
    %v4959 = vld [vmem:[%s4914 + $0x22] sm:$0xff]
    %v4960 = vld [vmem:[%s4914 + $0x2a] sm:$0x7]
    %v4961 = vld [vmem:[%s4914 + $0x32] sm:$0xff]
    %v4962 = vld [vmem:[%s4914 + $0x3a] sm:$0x7]
    %v4963 = vld [vmem:[%s4914 + $0x42] sm:$0xff]
    %v4964 = vld [vmem:[%s4914 + $0x4a] sm:$0x7]
    %v4965 = vld [vmem:[%s4914 + $0x52] sm:$0xff]
    %v4966 = vld [vmem:[%s4914 + $0x5a] sm:$0x7]
    %v4967 = vld [vmem:[%s4914 + $0x62] sm:$0xff]
    %v4968 = vld [vmem:[%s4914 + $0x6a] sm:$0x7]
    %v4969 = vld [vmem:[%s4914 + $0x72] sm:$0xff]
    %v4970 = vld [vmem:[%s4914 + $0x7a] sm:$0x7]
    %v4971 = vld [vmem:[%s4914 + $0x82] sm:$0xff]
    %v4972 = vld [vmem:[%s4914 + $0x8a] sm:$0x7]
    %v4973 = vld [vmem:[%s4914 + $0x92] sm:$0xff]
    %v4974 = vld [vmem:[%s4914 + $0x9a] sm:$0x7]
    loop: start=0, step=1, limit=16
    $region69: #{forward.1} parent=1 // loop_pre_header
      _
    $region70: #{forward.1} parent=1 // loop_header
      %s4976 = sphi 0, %s4980
      %p4977 = scmp.ge.s32.totalorder %s4976, 16
    $region71: #{forward.1} parent=1 // loop_header_branch
      %4979 = sbr.rel (%p4977) target = $region75
    $region72: #{forward.1} parent=1 // loop_body
      %s4981 = smul.u32 %s4976, 128
      %s4982 = sld [smem:[#allocation8 + %s4981]]
      %v4983 = vstv %s4982
      %v4984 = vmul.f32 %v4983, %v3878
      %v4985 = vmul.f32 %v4983, %v3879
      %v4986 = vmul.f32 %v4983, %v3880
      %v4987 = vmul.f32 %v4983, %v3881
      %v4988 = vmul.f32 %v4983, %v3882
      %v4989 = vmul.f32 %v4983, %v3883
      %v4990 = vmul.f32 %v4983, %v3884
      %v4991 = vmul.f32 %v4983, %v3885
      %v4992 = vmul.f32 %v4983, %v3886
      %v4993 = vmul.f32 %v4983, %v3887
      %v4994 = vmul.f32 %v4983, %v3888
      %v4995 = vmul.f32 %v4983, %v3889
      %v4996 = vmul.f32 %v4983, %v3890
      %v4997 = vmul.f32 %v4983, %v3891
      %v4998 = vmul.f32 %v4983, %v3892
      %v4999 = vmul.f32 %v4983, %v3893
      %v5000 = vmul.f32 %v4983, %v3894
      %v5001 = vmul.f32 %v4983, %v3895
      %v5002 = vmul.f32 %v4983, %v3896
      %v5003 = vmul.f32 %v4983, %v3897
      %s5004 = sadd.s32 %s4981, 1
      %s5005 = sld [smem:[#allocation8 + %s5004]]
      %v5006 = vstv %s5005
      %v5007 = vmul.f32 %v5006, %v3898
      %v5008 = vmul.f32 %v5006, %v3899
      %v5009 = vmul.f32 %v5006, %v3900
      %v5010 = vmul.f32 %v5006, %v3901
      %v5011 = vmul.f32 %v5006, %v3902
      %v5012 = vmul.f32 %v5006, %v3903
      %v5013 = vmul.f32 %v5006, %v3904
      %v5014 = vmul.f32 %v5006, %v3905
      %v5015 = vmul.f32 %v5006, %v3906
      %v5016 = vmul.f32 %v5006, %v3907
      %v5017 = vmul.f32 %v5006, %v3908
      %v5018 = vmul.f32 %v5006, %v3909
      %v5019 = vmul.f32 %v5006, %v3910
      %v5020 = vmul.f32 %v5006, %v3911
      %v5021 = vmul.f32 %v5006, %v3912
      %v5022 = vmul.f32 %v5006, %v3913
      %v5023 = vmul.f32 %v5006, %v3914
      %v5024 = vmul.f32 %v5006, %v3915
      %v5025 = vmul.f32 %v5006, %v3916
      %v5026 = vmul.f32 %v5006, %v3917
      %v5027 = vadd.f32 %v4984, %v5007
      %v5028 = vadd.f32 %v4985, %v5008
      %v5029 = vadd.f32 %v4986, %v5009
      %v5030 = vadd.f32 %v4987, %v5010
      %v5031 = vadd.f32 %v4988, %v5011
      %v5032 = vadd.f32 %v4989, %v5012
      %v5033 = vadd.f32 %v4990, %v5013
      %v5034 = vadd.f32 %v4991, %v5014
      %v5035 = vadd.f32 %v4992, %v5015
      %v5036 = vadd.f32 %v4993, %v5016
      %v5037 = vadd.f32 %v4994, %v5017
      %v5038 = vadd.f32 %v4995, %v5018
      %v5039 = vadd.f32 %v4996, %v5019
      %v5040 = vadd.f32 %v4997, %v5020
      %v5041 = vadd.f32 %v4998, %v5021
      %v5042 = vadd.f32 %v4999, %v5022
      %v5043 = vadd.f32 %v5000, %v5023
      %v5044 = vadd.f32 %v5001, %v5024
      %v5045 = vadd.f32 %v5002, %v5025
      %v5046 = vadd.f32 %v5003, %v5026
      %s5047 = sadd.s32 %s4981, 2
      %s5048 = sld [smem:[#allocation8 + %s5047]]
      %v5049 = vstv %s5048
      %v5050 = vmul.f32 %v5049, %v3918
      %v5051 = vmul.f32 %v5049, %v3919
      %v5052 = vmul.f32 %v5049, %v3920
      %v5053 = vmul.f32 %v5049, %v3921
      %v5054 = vmul.f32 %v5049, %v3922
      %v5055 = vmul.f32 %v5049, %v3923
      %v5056 = vmul.f32 %v5049, %v3924
      %v5057 = vmul.f32 %v5049, %v3925
      %v5058 = vmul.f32 %v5049, %v3926
      %v5059 = vmul.f32 %v5049, %v3927
      %v5060 = vmul.f32 %v5049, %v3928
      %v5061 = vmul.f32 %v5049, %v3929
      %v5062 = vmul.f32 %v5049, %v3930
      %v5063 = vmul.f32 %v5049, %v3931
      %v5064 = vmul.f32 %v5049, %v3932
      %v5065 = vmul.f32 %v5049, %v3933
      %v5066 = vmul.f32 %v5049, %v3934
      %v5067 = vmul.f32 %v5049, %v3935
      %v5068 = vmul.f32 %v5049, %v3936
      %v5069 = vmul.f32 %v5049, %v3937
      %v5070 = vadd.f32 %v5027, %v5050
      %v5071 = vadd.f32 %v5028, %v5051
      %v5072 = vadd.f32 %v5029, %v5052
      %v5073 = vadd.f32 %v5030, %v5053
      %v5074 = vadd.f32 %v5031, %v5054
      %v5075 = vadd.f32 %v5032, %v5055
      %v5076 = vadd.f32 %v5033, %v5056
      %v5077 = vadd.f32 %v5034, %v5057
      %v5078 = vadd.f32 %v5035, %v5058
      %v5079 = vadd.f32 %v5036, %v5059
      %v5080 = vadd.f32 %v5037, %v5060
      %v5081 = vadd.f32 %v5038, %v5061
      %v5082 = vadd.f32 %v5039, %v5062
      %v5083 = vadd.f32 %v5040, %v5063
      %v5084 = vadd.f32 %v5041, %v5064
      %v5085 = vadd.f32 %v5042, %v5065
      %v5086 = vadd.f32 %v5043, %v5066
      %v5087 = vadd.f32 %v5044, %v5067
      %v5088 = vadd.f32 %v5045, %v5068
      %v5089 = vadd.f32 %v5046, %v5069
      %s5090 = sadd.s32 %s4981, 3
      %s5091 = sld [smem:[#allocation8 + %s5090]]
      %v5092 = vstv %s5091
      %v5093 = vmul.f32 %v5092, %v3939
      %v5094 = vmul.f32 %v5092, %v3940
      %v5095 = vmul.f32 %v5092, %v3941
      %v5096 = vmul.f32 %v5092, %v3942
      %v5097 = vmul.f32 %v5092, %v3943
      %v5098 = vmul.f32 %v5092, %v3944
      %v5099 = vmul.f32 %v5092, %v3945
      %v5100 = vmul.f32 %v5092, %v3946
      %v5101 = vmul.f32 %v5092, %v3947
      %v5102 = vmul.f32 %v5092, %v3948
      %v5103 = vmul.f32 %v5092, %v3949
      %v5104 = vmul.f32 %v5092, %v3950
      %v5105 = vmul.f32 %v5092, %v3951
      %v5106 = vmul.f32 %v5092, %v3952
      %v5107 = vmul.f32 %v5092, %v3953
      %v5108 = vmul.f32 %v5092, %v3954
      %v5109 = vmul.f32 %v5092, %v3955
      %v5110 = vmul.f32 %v5092, %v3956
      %v5111 = vmul.f32 %v5092, %v3957
      %v5112 = vmul.f32 %v5092, %v3958
      %v5113 = vadd.f32 %v5070, %v5093
      %v5114 = vadd.f32 %v5071, %v5094
      %v5115 = vadd.f32 %v5072, %v5095
      %v5116 = vadd.f32 %v5073, %v5096
      %v5117 = vadd.f32 %v5074, %v5097
      %v5118 = vadd.f32 %v5075, %v5098
      %v5119 = vadd.f32 %v5076, %v5099
      %v5120 = vadd.f32 %v5077, %v5100
      %v5121 = vadd.f32 %v5078, %v5101
      %v5122 = vadd.f32 %v5079, %v5102
      %v5123 = vadd.f32 %v5080, %v5103
      %v5124 = vadd.f32 %v5081, %v5104
      %v5125 = vadd.f32 %v5082, %v5105
      %v5126 = vadd.f32 %v5083, %v5106
      %v5127 = vadd.f32 %v5084, %v5107
      %v5128 = vadd.f32 %v5085, %v5108
      %v5129 = vadd.f32 %v5086, %v5109
      %v5130 = vadd.f32 %v5087, %v5110
      %v5131 = vadd.f32 %v5088, %v5111
      %v5132 = vadd.f32 %v5089, %v5112
      %s5133 = sadd.s32 %s4981, 4
      %s5134 = sld [smem:[#allocation8 + %s5133]]
      %v5135 = vstv %s5134
      %v5136 = vmul.f32 %v5135, %v3959
      %v5137 = vmul.f32 %v5135, %v3960
      %v5138 = vmul.f32 %v5135, %v3961
      %v5139 = vmul.f32 %v5135, %v3962
      %v5140 = vmul.f32 %v5135, %v3963
      %v5141 = vmul.f32 %v5135, %v3964
      %v5142 = vmul.f32 %v5135, %v3965
      %v5143 = vmul.f32 %v5135, %v3966
      %v5144 = vmul.f32 %v5135, %v3967
      %v5145 = vmul.f32 %v5135, %v3968
      %v5146 = vmul.f32 %v5135, %v3969
      %v5147 = vmul.f32 %v5135, %v3970
      %v5148 = vmul.f32 %v5135, %v3971
      %v5149 = vmul.f32 %v5135, %v3972
      %v5150 = vmul.f32 %v5135, %v3973
      %v5151 = vmul.f32 %v5135, %v3974
      %v5152 = vmul.f32 %v5135, %v3975
      %v5153 = vmul.f32 %v5135, %v3976
      %v5154 = vmul.f32 %v5135, %v3977
      %v5155 = vmul.f32 %v5135, %v3978
      %v5156 = vadd.f32 %v5113, %v5136
      %v5157 = vadd.f32 %v5114, %v5137
      %v5158 = vadd.f32 %v5115, %v5138
      %v5159 = vadd.f32 %v5116, %v5139
      %v5160 = vadd.f32 %v5117, %v5140
      %v5161 = vadd.f32 %v5118, %v5141
      %v5162 = vadd.f32 %v5119, %v5142
      %v5163 = vadd.f32 %v5120, %v5143
      %v5164 = vadd.f32 %v5121, %v5144
      %v5165 = vadd.f32 %v5122, %v5145
      %v5166 = vadd.f32 %v5123, %v5146
      %v5167 = vadd.f32 %v5124, %v5147
      %v5168 = vadd.f32 %v5125, %v5148
      %v5169 = vadd.f32 %v5126, %v5149
      %v5170 = vadd.f32 %v5127, %v5150
      %v5171 = vadd.f32 %v5128, %v5151
      %v5172 = vadd.f32 %v5129, %v5152
      %v5173 = vadd.f32 %v5130, %v5153
      %v5174 = vadd.f32 %v5131, %v5154
      %v5175 = vadd.f32 %v5132, %v5155
      %s5176 = sadd.s32 %s4981, 5
      %s5177 = sld [smem:[#allocation8 + %s5176]]
      %v5178 = vstv %s5177
      %v5179 = vmul.f32 %v5178, %v3979
      %v5180 = vmul.f32 %v5178, %v3980
      %v5181 = vmul.f32 %v5178, %v3981
      %v5182 = vmul.f32 %v5178, %v3982
      %v5183 = vmul.f32 %v5178, %v3983
      %v5184 = vmul.f32 %v5178, %v3984
      %v5185 = vmul.f32 %v5178, %v3985
      %v5186 = vmul.f32 %v5178, %v3986
      %v5187 = vmul.f32 %v5178, %v3987
      %v5188 = vmul.f32 %v5178, %v3988
      %v5189 = vmul.f32 %v5178, %v3989
      %v5190 = vmul.f32 %v5178, %v3990
      %v5191 = vmul.f32 %v5178, %v3991
      %v5192 = vmul.f32 %v5178, %v3992
      %v5193 = vmul.f32 %v5178, %v3993
      %v5194 = vmul.f32 %v5178, %v3994
      %v5195 = vmul.f32 %v5178, %v3995
      %v5196 = vmul.f32 %v5178, %v3996
      %v5197 = vmul.f32 %v5178, %v3997
      %v5198 = vmul.f32 %v5178, %v3998
      %v5199 = vadd.f32 %v5156, %v5179
      %v5200 = vadd.f32 %v5157, %v5180
      %v5201 = vadd.f32 %v5158, %v5181
      %v5202 = vadd.f32 %v5159, %v5182
      %v5203 = vadd.f32 %v5160, %v5183
      %v5204 = vadd.f32 %v5161, %v5184
      %v5205 = vadd.f32 %v5162, %v5185
      %v5206 = vadd.f32 %v5163, %v5186
      %v5207 = vadd.f32 %v5164, %v5187
      %v5208 = vadd.f32 %v5165, %v5188
      %v5209 = vadd.f32 %v5166, %v5189
      %v5210 = vadd.f32 %v5167, %v5190
      %v5211 = vadd.f32 %v5168, %v5191
      %v5212 = vadd.f32 %v5169, %v5192
      %v5213 = vadd.f32 %v5170, %v5193
      %v5214 = vadd.f32 %v5171, %v5194
      %v5215 = vadd.f32 %v5172, %v5195
      %v5216 = vadd.f32 %v5173, %v5196
      %v5217 = vadd.f32 %v5174, %v5197
      %v5218 = vadd.f32 %v5175, %v5198
      %s5219 = sadd.s32 %s4981, 6
      %s5220 = sld [smem:[#allocation8 + %s5219]]
      %v5221 = vstv %s5220
      %v5222 = vmul.f32 %v5221, %v4000
      %v5223 = vmul.f32 %v5221, %v4001
      %v5224 = vmul.f32 %v5221, %v4002
      %v5225 = vmul.f32 %v5221, %v4003
      %v5226 = vmul.f32 %v5221, %v4004
      %v5227 = vmul.f32 %v5221, %v4005
      %v5228 = vmul.f32 %v5221, %v4006
      %v5229 = vmul.f32 %v5221, %v4007
      %v5230 = vmul.f32 %v5221, %v4008
      %v5231 = vmul.f32 %v5221, %v4009
      %v5232 = vmul.f32 %v5221, %v4010
      %v5233 = vmul.f32 %v5221, %v4011
      %v5234 = vmul.f32 %v5221, %v4012
      %v5235 = vmul.f32 %v5221, %v4013
      %v5236 = vmul.f32 %v5221, %v4014
      %v5237 = vmul.f32 %v5221, %v4015
      %v5238 = vmul.f32 %v5221, %v4016
      %v5239 = vmul.f32 %v5221, %v4017
      %v5240 = vmul.f32 %v5221, %v4018
      %v5241 = vmul.f32 %v5221, %v4019
      %v5242 = vadd.f32 %v5199, %v5222
      %v5243 = vadd.f32 %v5200, %v5223
      %v5244 = vadd.f32 %v5201, %v5224
      %v5245 = vadd.f32 %v5202, %v5225
      %v5246 = vadd.f32 %v5203, %v5226
      %v5247 = vadd.f32 %v5204, %v5227
      %v5248 = vadd.f32 %v5205, %v5228
      %v5249 = vadd.f32 %v5206, %v5229
      %v5250 = vadd.f32 %v5207, %v5230
      %v5251 = vadd.f32 %v5208, %v5231
      %v5252 = vadd.f32 %v5209, %v5232
      %v5253 = vadd.f32 %v5210, %v5233
      %v5254 = vadd.f32 %v5211, %v5234
      %v5255 = vadd.f32 %v5212, %v5235
      %v5256 = vadd.f32 %v5213, %v5236
      %v5257 = vadd.f32 %v5214, %v5237
      %v5258 = vadd.f32 %v5215, %v5238
      %v5259 = vadd.f32 %v5216, %v5239
      %v5260 = vadd.f32 %v5217, %v5240
      %v5261 = vadd.f32 %v5218, %v5241
      %s5262 = sadd.s32 %s4981, 7
      %s5263 = sld [smem:[#allocation8 + %s5262]]
      %v5264 = vstv %s5263
      %v5265 = vmul.f32 %v5264, %v4020
      %v5266 = vmul.f32 %v5264, %v4021
      %v5267 = vmul.f32 %v5264, %v4022
      %v5268 = vmul.f32 %v5264, %v4023
      %v5269 = vmul.f32 %v5264, %v4024
      %v5270 = vmul.f32 %v5264, %v4025
      %v5271 = vmul.f32 %v5264, %v4026
      %v5272 = vmul.f32 %v5264, %v4027
      %v5273 = vmul.f32 %v5264, %v4028
      %v5274 = vmul.f32 %v5264, %v4029
      %v5275 = vmul.f32 %v5264, %v4030
      %v5276 = vmul.f32 %v5264, %v4031
      %v5277 = vmul.f32 %v5264, %v4032
      %v5278 = vmul.f32 %v5264, %v4033
      %v5279 = vmul.f32 %v5264, %v4034
      %v5280 = vmul.f32 %v5264, %v4035
      %v5281 = vmul.f32 %v5264, %v4036
      %v5282 = vmul.f32 %v5264, %v4037
      %v5283 = vmul.f32 %v5264, %v4038
      %v5284 = vmul.f32 %v5264, %v4039
      %v5285 = vadd.f32 %v5242, %v5265
      %v5286 = vadd.f32 %v5243, %v5266
      %v5287 = vadd.f32 %v5244, %v5267
      %v5288 = vadd.f32 %v5245, %v5268
      %v5289 = vadd.f32 %v5246, %v5269
      %v5290 = vadd.f32 %v5247, %v5270
      %v5291 = vadd.f32 %v5248, %v5271
      %v5292 = vadd.f32 %v5249, %v5272
      %v5293 = vadd.f32 %v5250, %v5273
      %v5294 = vadd.f32 %v5251, %v5274
      %v5295 = vadd.f32 %v5252, %v5275
      %v5296 = vadd.f32 %v5253, %v5276
      %v5297 = vadd.f32 %v5254, %v5277
      %v5298 = vadd.f32 %v5255, %v5278
      %v5299 = vadd.f32 %v5256, %v5279
      %v5300 = vadd.f32 %v5257, %v5280
      %v5301 = vadd.f32 %v5258, %v5281
      %v5302 = vadd.f32 %v5259, %v5282
      %v5303 = vadd.f32 %v5260, %v5283
      %v5304 = vadd.f32 %v5261, %v5284
      %s5305 = sadd.s32 %s4981, 8
      %s5306 = sld [smem:[#allocation8 + %s5305]]
      %v5307 = vstv %s5306
      %v5308 = vmul.f32 %v5307, %v4040
      %v5309 = vmul.f32 %v5307, %v4041
      %v5310 = vmul.f32 %v5307, %v4042
      %v5311 = vmul.f32 %v5307, %v4043
      %v5312 = vmul.f32 %v5307, %v4044
      %v5313 = vmul.f32 %v5307, %v4045
      %v5314 = vmul.f32 %v5307, %v4046
      %v5315 = vmul.f32 %v5307, %v4047
      %v5316 = vmul.f32 %v5307, %v4048
      %v5317 = vmul.f32 %v5307, %v4049
      %v5318 = vmul.f32 %v5307, %v4050
      %v5319 = vmul.f32 %v5307, %v4051
      %v5320 = vmul.f32 %v5307, %v4052
      %v5321 = vmul.f32 %v5307, %v4053
      %v5322 = vmul.f32 %v5307, %v4054
      %v5323 = vmul.f32 %v5307, %v4055
      %v5324 = vmul.f32 %v5307, %v4056
      %v5325 = vmul.f32 %v5307, %v4057
      %v5326 = vmul.f32 %v5307, %v4058
      %v5327 = vmul.f32 %v5307, %v4059
      %v5328 = vadd.f32 %v5285, %v5308
      %v5329 = vadd.f32 %v5286, %v5309
      %v5330 = vadd.f32 %v5287, %v5310
      %v5331 = vadd.f32 %v5288, %v5311
      %v5332 = vadd.f32 %v5289, %v5312
      %v5333 = vadd.f32 %v5290, %v5313
      %v5334 = vadd.f32 %v5291, %v5314
      %v5335 = vadd.f32 %v5292, %v5315
      %v5336 = vadd.f32 %v5293, %v5316
      %v5337 = vadd.f32 %v5294, %v5317
      %v5338 = vadd.f32 %v5295, %v5318
      %v5339 = vadd.f32 %v5296, %v5319
      %v5340 = vadd.f32 %v5297, %v5320
      %v5341 = vadd.f32 %v5298, %v5321
      %v5342 = vadd.f32 %v5299, %v5322
      %v5343 = vadd.f32 %v5300, %v5323
      %v5344 = vadd.f32 %v5301, %v5324
      %v5345 = vadd.f32 %v5302, %v5325
      %v5346 = vadd.f32 %v5303, %v5326
      %v5347 = vadd.f32 %v5304, %v5327
      %s5348 = sadd.s32 %s4981, 9
      %s5349 = sld [smem:[#allocation8 + %s5348]]
      %v5350 = vstv %s5349
      %v5351 = vmul.f32 %v5350, %v4061
      %v5352 = vmul.f32 %v5350, %v4062
      %v5353 = vmul.f32 %v5350, %v4063
      %v5354 = vmul.f32 %v5350, %v4064
      %v5355 = vmul.f32 %v5350, %v4065
      %v5356 = vmul.f32 %v5350, %v4066
      %v5357 = vmul.f32 %v5350, %v4067
      %v5358 = vmul.f32 %v5350, %v4068
      %v5359 = vmul.f32 %v5350, %v4069
      %v5360 = vmul.f32 %v5350, %v4070
      %v5361 = vmul.f32 %v5350, %v4071
      %v5362 = vmul.f32 %v5350, %v4072
      %v5363 = vmul.f32 %v5350, %v4073
      %v5364 = vmul.f32 %v5350, %v4074
      %v5365 = vmul.f32 %v5350, %v4075
      %v5366 = vmul.f32 %v5350, %v4076
      %v5367 = vmul.f32 %v5350, %v4077
      %v5368 = vmul.f32 %v5350, %v4078
      %v5369 = vmul.f32 %v5350, %v4079
      %v5370 = vmul.f32 %v5350, %v4080
      %v5371 = vadd.f32 %v5328, %v5351
      %v5372 = vadd.f32 %v5329, %v5352
      %v5373 = vadd.f32 %v5330, %v5353
      %v5374 = vadd.f32 %v5331, %v5354
      %v5375 = vadd.f32 %v5332, %v5355
      %v5376 = vadd.f32 %v5333, %v5356
      %v5377 = vadd.f32 %v5334, %v5357
      %v5378 = vadd.f32 %v5335, %v5358
      %v5379 = vadd.f32 %v5336, %v5359
      %v5380 = vadd.f32 %v5337, %v5360
      %v5381 = vadd.f32 %v5338, %v5361
      %v5382 = vadd.f32 %v5339, %v5362
      %v5383 = vadd.f32 %v5340, %v5363
      %v5384 = vadd.f32 %v5341, %v5364
      %v5385 = vadd.f32 %v5342, %v5365
      %v5386 = vadd.f32 %v5343, %v5366
      %v5387 = vadd.f32 %v5344, %v5367
      %v5388 = vadd.f32 %v5345, %v5368
      %v5389 = vadd.f32 %v5346, %v5369
      %v5390 = vadd.f32 %v5347, %v5370
      %s5391 = sadd.s32 %s4981, 10
      %s5392 = sld [smem:[#allocation8 + %s5391]]
      %v5393 = vstv %s5392
      %v5394 = vmul.f32 %v5393, %v4081
      %v5395 = vmul.f32 %v5393, %v4082
      %v5396 = vmul.f32 %v5393, %v4083
      %v5397 = vmul.f32 %v5393, %v4084
      %v5398 = vmul.f32 %v5393, %v4085
      %v5399 = vmul.f32 %v5393, %v4086
      %v5400 = vmul.f32 %v5393, %v4087
      %v5401 = vmul.f32 %v5393, %v4088
      %v5402 = vmul.f32 %v5393, %v4089
      %v5403 = vmul.f32 %v5393, %v4090
      %v5404 = vmul.f32 %v5393, %v4091
      %v5405 = vmul.f32 %v5393, %v4092
      %v5406 = vmul.f32 %v5393, %v4093
      %v5407 = vmul.f32 %v5393, %v4094
      %v5408 = vmul.f32 %v5393, %v4095
      %v5409 = vmul.f32 %v5393, %v4096
      %v5410 = vmul.f32 %v5393, %v4097
      %v5411 = vmul.f32 %v5393, %v4098
      %v5412 = vmul.f32 %v5393, %v4099
      %v5413 = vmul.f32 %v5393, %v4100
      %v5414 = vadd.f32 %v5371, %v5394
      %v5415 = vadd.f32 %v5372, %v5395
      %v5416 = vadd.f32 %v5373, %v5396
      %v5417 = vadd.f32 %v5374, %v5397
      %v5418 = vadd.f32 %v5375, %v5398
      %v5419 = vadd.f32 %v5376, %v5399
      %v5420 = vadd.f32 %v5377, %v5400
      %v5421 = vadd.f32 %v5378, %v5401
      %v5422 = vadd.f32 %v5379, %v5402
      %v5423 = vadd.f32 %v5380, %v5403
      %v5424 = vadd.f32 %v5381, %v5404
      %v5425 = vadd.f32 %v5382, %v5405
      %v5426 = vadd.f32 %v5383, %v5406
      %v5427 = vadd.f32 %v5384, %v5407
      %v5428 = vadd.f32 %v5385, %v5408
      %v5429 = vadd.f32 %v5386, %v5409
      %v5430 = vadd.f32 %v5387, %v5410
      %v5431 = vadd.f32 %v5388, %v5411
      %v5432 = vadd.f32 %v5389, %v5412
      %v5433 = vadd.f32 %v5390, %v5413
      %s5434 = sadd.s32 %s4981, 11
      %s5435 = sld [smem:[#allocation8 + %s5434]]
      %v5436 = vstv %s5435
      %v5437 = vmul.f32 %v5436, %v4101
      %v5438 = vmul.f32 %v5436, %v4102
      %v5439 = vmul.f32 %v5436, %v4103
      %v5440 = vmul.f32 %v5436, %v4104
      %v5441 = vmul.f32 %v5436, %v4105
      %v5442 = vmul.f32 %v5436, %v4106
      %v5443 = vmul.f32 %v5436, %v4107
      %v5444 = vmul.f32 %v5436, %v4108
      %v5445 = vmul.f32 %v5436, %v4109
      %v5446 = vmul.f32 %v5436, %v4110
      %v5447 = vmul.f32 %v5436, %v4111
      %v5448 = vmul.f32 %v5436, %v4112
      %v5449 = vmul.f32 %v5436, %v4113
      %v5450 = vmul.f32 %v5436, %v4114
      %v5451 = vmul.f32 %v5436, %v4115
      %v5452 = vmul.f32 %v5436, %v4116
      %v5453 = vmul.f32 %v5436, %v4117
      %v5454 = vmul.f32 %v5436, %v4118
      %v5455 = vmul.f32 %v5436, %v4119
      %v5456 = vmul.f32 %v5436, %v4120
      %v5457 = vadd.f32 %v5414, %v5437
      %v5458 = vadd.f32 %v5415, %v5438
      %v5459 = vadd.f32 %v5416, %v5439
      %v5460 = vadd.f32 %v5417, %v5440
      %v5461 = vadd.f32 %v5418, %v5441
      %v5462 = vadd.f32 %v5419, %v5442
      %v5463 = vadd.f32 %v5420, %v5443
      %v5464 = vadd.f32 %v5421, %v5444
      %v5465 = vadd.f32 %v5422, %v5445
      %v5466 = vadd.f32 %v5423, %v5446
      %v5467 = vadd.f32 %v5424, %v5447
      %v5468 = vadd.f32 %v5425, %v5448
      %v5469 = vadd.f32 %v5426, %v5449
      %v5470 = vadd.f32 %v5427, %v5450
      %v5471 = vadd.f32 %v5428, %v5451
      %v5472 = vadd.f32 %v5429, %v5452
      %v5473 = vadd.f32 %v5430, %v5453
      %v5474 = vadd.f32 %v5431, %v5454
      %v5475 = vadd.f32 %v5432, %v5455
      %v5476 = vadd.f32 %v5433, %v5456
      %s5477 = sadd.s32 %s4981, 12
      %s5478 = sld [smem:[#allocation8 + %s5477]]
      %v5479 = vstv %s5478
      %v5480 = vmul.f32 %v5479, %v4122
      %v5481 = vmul.f32 %v5479, %v4123
      %v5482 = vmul.f32 %v5479, %v4124
      %v5483 = vmul.f32 %v5479, %v4125
      %v5484 = vmul.f32 %v5479, %v4126
      %v5485 = vmul.f32 %v5479, %v4127
      %v5486 = vmul.f32 %v5479, %v4128
      %v5487 = vmul.f32 %v5479, %v4129
      %v5488 = vmul.f32 %v5479, %v4130
      %v5489 = vmul.f32 %v5479, %v4131
      %v5490 = vmul.f32 %v5479, %v4132
      %v5491 = vmul.f32 %v5479, %v4133
      %v5492 = vmul.f32 %v5479, %v4134
      %v5493 = vmul.f32 %v5479, %v4135
      %v5494 = vmul.f32 %v5479, %v4136
      %v5495 = vmul.f32 %v5479, %v4137
      %v5496 = vmul.f32 %v5479, %v4138
      %v5497 = vmul.f32 %v5479, %v4139
      %v5498 = vmul.f32 %v5479, %v4140
      %v5499 = vmul.f32 %v5479, %v4141
      %v5500 = vadd.f32 %v5457, %v5480
      %v5501 = vadd.f32 %v5458, %v5481
      %v5502 = vadd.f32 %v5459, %v5482
      %v5503 = vadd.f32 %v5460, %v5483
      %v5504 = vadd.f32 %v5461, %v5484
      %v5505 = vadd.f32 %v5462, %v5485
      %v5506 = vadd.f32 %v5463, %v5486
      %v5507 = vadd.f32 %v5464, %v5487
      %v5508 = vadd.f32 %v5465, %v5488
      %v5509 = vadd.f32 %v5466, %v5489
      %v5510 = vadd.f32 %v5467, %v5490
      %v5511 = vadd.f32 %v5468, %v5491
      %v5512 = vadd.f32 %v5469, %v5492
      %v5513 = vadd.f32 %v5470, %v5493
      %v5514 = vadd.f32 %v5471, %v5494
      %v5515 = vadd.f32 %v5472, %v5495
      %v5516 = vadd.f32 %v5473, %v5496
      %v5517 = vadd.f32 %v5474, %v5497
      %v5518 = vadd.f32 %v5475, %v5498
      %v5519 = vadd.f32 %v5476, %v5499
      %s5520 = sadd.s32 %s4981, 13
      %s5521 = sld [smem:[#allocation8 + %s5520]]
      %v5522 = vstv %s5521
      %v5523 = vmul.f32 %v5522, %v4142
      %v5524 = vmul.f32 %v5522, %v4143
      %v5525 = vmul.f32 %v5522, %v4144
      %v5526 = vmul.f32 %v5522, %v4145
      %v5527 = vmul.f32 %v5522, %v4146
      %v5528 = vmul.f32 %v5522, %v4147
      %v5529 = vmul.f32 %v5522, %v4148
      %v5530 = vmul.f32 %v5522, %v4149
      %v5531 = vmul.f32 %v5522, %v4150
      %v5532 = vmul.f32 %v5522, %v4151
      %v5533 = vmul.f32 %v5522, %v4152
      %v5534 = vmul.f32 %v5522, %v4153
      %v5535 = vmul.f32 %v5522, %v4154
      %v5536 = vmul.f32 %v5522, %v4155
      %v5537 = vmul.f32 %v5522, %v4156
      %v5538 = vmul.f32 %v5522, %v4157
      %v5539 = vmul.f32 %v5522, %v4158
      %v5540 = vmul.f32 %v5522, %v4159
      %v5541 = vmul.f32 %v5522, %v4160
      %v5542 = vmul.f32 %v5522, %v4161
      %v5543 = vadd.f32 %v5500, %v5523
      %v5544 = vadd.f32 %v5501, %v5524
      %v5545 = vadd.f32 %v5502, %v5525
      %v5546 = vadd.f32 %v5503, %v5526
      %v5547 = vadd.f32 %v5504, %v5527
      %v5548 = vadd.f32 %v5505, %v5528
      %v5549 = vadd.f32 %v5506, %v5529
      %v5550 = vadd.f32 %v5507, %v5530
      %v5551 = vadd.f32 %v5508, %v5531
      %v5552 = vadd.f32 %v5509, %v5532
      %v5553 = vadd.f32 %v5510, %v5533
      %v5554 = vadd.f32 %v5511, %v5534
      %v5555 = vadd.f32 %v5512, %v5535
      %v5556 = vadd.f32 %v5513, %v5536
      %v5557 = vadd.f32 %v5514, %v5537
      %v5558 = vadd.f32 %v5515, %v5538
      %v5559 = vadd.f32 %v5516, %v5539
      %v5560 = vadd.f32 %v5517, %v5540
      %v5561 = vadd.f32 %v5518, %v5541
      %v5562 = vadd.f32 %v5519, %v5542
      %s5563 = sadd.s32 %s4981, 14
      %s5564 = sld [smem:[#allocation8 + %s5563]]
      %v5565 = vstv %s5564
      %v5566 = vmul.f32 %v5565, %v4162
      %v5567 = vmul.f32 %v5565, %v4163
      %v5568 = vmul.f32 %v5565, %v4164
      %v5569 = vmul.f32 %v5565, %v4165
      %v5570 = vmul.f32 %v5565, %v4166
      %v5571 = vmul.f32 %v5565, %v4167
      %v5572 = vmul.f32 %v5565, %v4168
      %v5573 = vmul.f32 %v5565, %v4169
      %v5574 = vmul.f32 %v5565, %v4170
      %v5575 = vmul.f32 %v5565, %v4171
      %v5576 = vmul.f32 %v5565, %v4172
      %v5577 = vmul.f32 %v5565, %v4173
      %v5578 = vmul.f32 %v5565, %v4174
      %v5579 = vmul.f32 %v5565, %v4175
      %v5580 = vmul.f32 %v5565, %v4176
      %v5581 = vmul.f32 %v5565, %v4177
      %v5582 = vmul.f32 %v5565, %v4178
      %v5583 = vmul.f32 %v5565, %v4179
      %v5584 = vmul.f32 %v5565, %v4180
      %v5585 = vmul.f32 %v5565, %v4181
      %v5586 = vadd.f32 %v5543, %v5566
      %v5587 = vadd.f32 %v5544, %v5567
      %v5588 = vadd.f32 %v5545, %v5568
      %v5589 = vadd.f32 %v5546, %v5569
      %v5590 = vadd.f32 %v5547, %v5570
      %v5591 = vadd.f32 %v5548, %v5571
      %v5592 = vadd.f32 %v5549, %v5572
      %v5593 = vadd.f32 %v5550, %v5573
      %v5594 = vadd.f32 %v5551, %v5574
      %v5595 = vadd.f32 %v5552, %v5575
      %v5596 = vadd.f32 %v5553, %v5576
      %v5597 = vadd.f32 %v5554, %v5577
      %v5598 = vadd.f32 %v5555, %v5578
      %v5599 = vadd.f32 %v5556, %v5579
      %v5600 = vadd.f32 %v5557, %v5580
      %v5601 = vadd.f32 %v5558, %v5581
      %v5602 = vadd.f32 %v5559, %v5582
      %v5603 = vadd.f32 %v5560, %v5583
      %v5604 = vadd.f32 %v5561, %v5584
      %v5605 = vadd.f32 %v5562, %v5585
      %s5606 = sadd.s32 %s4981, 15
      %s5607 = sld [smem:[#allocation8 + %s5606]]
      %v5608 = vstv %s5607
      %v5609 = vmul.f32 %v5608, %v4183
      %v5610 = vmul.f32 %v5608, %v4184
      %v5611 = vmul.f32 %v5608, %v4185
      %v5612 = vmul.f32 %v5608, %v4186
      %v5613 = vmul.f32 %v5608, %v4187
      %v5614 = vmul.f32 %v5608, %v4188
      %v5615 = vmul.f32 %v5608, %v4189
      %v5616 = vmul.f32 %v5608, %v4190
      %v5617 = vmul.f32 %v5608, %v4191
      %v5618 = vmul.f32 %v5608, %v4192
      %v5619 = vmul.f32 %v5608, %v4193
      %v5620 = vmul.f32 %v5608, %v4194
      %v5621 = vmul.f32 %v5608, %v4195
      %v5622 = vmul.f32 %v5608, %v4196
      %v5623 = vmul.f32 %v5608, %v4197
      %v5624 = vmul.f32 %v5608, %v4198
      %v5625 = vmul.f32 %v5608, %v4199
      %v5626 = vmul.f32 %v5608, %v4200
      %v5627 = vmul.f32 %v5608, %v4201
      %v5628 = vmul.f32 %v5608, %v4202
      %v5629 = vadd.f32 %v5586, %v5609
      %v5630 = vadd.f32 %v5587, %v5610
      %v5631 = vadd.f32 %v5588, %v5611
      %v5632 = vadd.f32 %v5589, %v5612
      %v5633 = vadd.f32 %v5590, %v5613
      %v5634 = vadd.f32 %v5591, %v5614
      %v5635 = vadd.f32 %v5592, %v5615
      %v5636 = vadd.f32 %v5593, %v5616
      %v5637 = vadd.f32 %v5594, %v5617
      %v5638 = vadd.f32 %v5595, %v5618
      %v5639 = vadd.f32 %v5596, %v5619
      %v5640 = vadd.f32 %v5597, %v5620
      %v5641 = vadd.f32 %v5598, %v5621
      %v5642 = vadd.f32 %v5599, %v5622
      %v5643 = vadd.f32 %v5600, %v5623
      %v5644 = vadd.f32 %v5601, %v5624
      %v5645 = vadd.f32 %v5602, %v5625
      %v5646 = vadd.f32 %v5603, %v5626
      %v5647 = vadd.f32 %v5604, %v5627
      %v5648 = vadd.f32 %v5605, %v5628
      %s5649 = sadd.s32 %s4981, 16
      %s5650 = sld [smem:[#allocation8 + %s5649]]
      %v5651 = vstv %s5650
      %v5652 = vmul.f32 %v5651, %v4203
      %v5653 = vmul.f32 %v5651, %v4204
      %v5654 = vmul.f32 %v5651, %v4205
      %v5655 = vmul.f32 %v5651, %v4206
      %v5656 = vmul.f32 %v5651, %v4207
      %v5657 = vmul.f32 %v5651, %v4208
      %v5658 = vmul.f32 %v5651, %v4209
      %v5659 = vmul.f32 %v5651, %v4210
      %v5660 = vmul.f32 %v5651, %v4211
      %v5661 = vmul.f32 %v5651, %v4212
      %v5662 = vmul.f32 %v5651, %v4213
      %v5663 = vmul.f32 %v5651, %v4214
      %v5664 = vmul.f32 %v5651, %v4215
      %v5665 = vmul.f32 %v5651, %v4216
      %v5666 = vmul.f32 %v5651, %v4217
      %v5667 = vmul.f32 %v5651, %v4218
      %v5668 = vmul.f32 %v5651, %v4219
      %v5669 = vmul.f32 %v5651, %v4220
      %v5670 = vmul.f32 %v5651, %v4221
      %v5671 = vmul.f32 %v5651, %v4222
      %v5672 = vadd.f32 %v5629, %v5652
      %v5673 = vadd.f32 %v5630, %v5653
      %v5674 = vadd.f32 %v5631, %v5654
      %v5675 = vadd.f32 %v5632, %v5655
      %v5676 = vadd.f32 %v5633, %v5656
      %v5677 = vadd.f32 %v5634, %v5657
      %v5678 = vadd.f32 %v5635, %v5658
      %v5679 = vadd.f32 %v5636, %v5659
      %v5680 = vadd.f32 %v5637, %v5660
      %v5681 = vadd.f32 %v5638, %v5661
      %v5682 = vadd.f32 %v5639, %v5662
      %v5683 = vadd.f32 %v5640, %v5663
      %v5684 = vadd.f32 %v5641, %v5664
      %v5685 = vadd.f32 %v5642, %v5665
      %v5686 = vadd.f32 %v5643, %v5666
      %v5687 = vadd.f32 %v5644, %v5667
      %v5688 = vadd.f32 %v5645, %v5668
      %v5689 = vadd.f32 %v5646, %v5669
      %v5690 = vadd.f32 %v5647, %v5670
      %v5691 = vadd.f32 %v5648, %v5671
      %s5692 = sadd.s32 %s4981, 17
      %s5693 = sld [smem:[#allocation8 + %s5692]]
      %v5694 = vstv %s5693
      %v5695 = vmul.f32 %v5694, %v4223
      %v5696 = vmul.f32 %v5694, %v4224
      %v5697 = vmul.f32 %v5694, %v4225
      %v5698 = vmul.f32 %v5694, %v4226
      %v5699 = vmul.f32 %v5694, %v4227
      %v5700 = vmul.f32 %v5694, %v4228
      %v5701 = vmul.f32 %v5694, %v4229
      %v5702 = vmul.f32 %v5694, %v4230
      %v5703 = vmul.f32 %v5694, %v4231
      %v5704 = vmul.f32 %v5694, %v4232
      %v5705 = vmul.f32 %v5694, %v4233
      %v5706 = vmul.f32 %v5694, %v4234
      %v5707 = vmul.f32 %v5694, %v4235
      %v5708 = vmul.f32 %v5694, %v4236
      %v5709 = vmul.f32 %v5694, %v4237
      %v5710 = vmul.f32 %v5694, %v4238
      %v5711 = vmul.f32 %v5694, %v4239
      %v5712 = vmul.f32 %v5694, %v4240
      %v5713 = vmul.f32 %v5694, %v4241
      %v5714 = vmul.f32 %v5694, %v4242
      %v5715 = vadd.f32 %v5672, %v5695
      %v5716 = vadd.f32 %v5673, %v5696
      %v5717 = vadd.f32 %v5674, %v5697
      %v5718 = vadd.f32 %v5675, %v5698
      %v5719 = vadd.f32 %v5676, %v5699
      %v5720 = vadd.f32 %v5677, %v5700
      %v5721 = vadd.f32 %v5678, %v5701
      %v5722 = vadd.f32 %v5679, %v5702
      %v5723 = vadd.f32 %v5680, %v5703
      %v5724 = vadd.f32 %v5681, %v5704
      %v5725 = vadd.f32 %v5682, %v5705
      %v5726 = vadd.f32 %v5683, %v5706
      %v5727 = vadd.f32 %v5684, %v5707
      %v5728 = vadd.f32 %v5685, %v5708
      %v5729 = vadd.f32 %v5686, %v5709
      %v5730 = vadd.f32 %v5687, %v5710
      %v5731 = vadd.f32 %v5688, %v5711
      %v5732 = vadd.f32 %v5689, %v5712
      %v5733 = vadd.f32 %v5690, %v5713
      %v5734 = vadd.f32 %v5691, %v5714
      %s5735 = sadd.s32 %s4981, 18
      %s5736 = sld [smem:[#allocation8 + %s5735]]
      %v5737 = vstv %s5736
      %v5738 = vmul.f32 %v5737, %v4244
      %v5739 = vmul.f32 %v5737, %v4245
      %v5740 = vmul.f32 %v5737, %v4246
      %v5741 = vmul.f32 %v5737, %v4247
      %v5742 = vmul.f32 %v5737, %v4248
      %v5743 = vmul.f32 %v5737, %v4249
      %v5744 = vmul.f32 %v5737, %v4250
      %v5745 = vmul.f32 %v5737, %v4251
      %v5746 = vmul.f32 %v5737, %v4252
      %v5747 = vmul.f32 %v5737, %v4253
      %v5748 = vmul.f32 %v5737, %v4254
      %v5749 = vmul.f32 %v5737, %v4255
      %v5750 = vmul.f32 %v5737, %v4256
      %v5751 = vmul.f32 %v5737, %v4257
      %v5752 = vmul.f32 %v5737, %v4258
      %v5753 = vmul.f32 %v5737, %v4259
      %v5754 = vmul.f32 %v5737, %v4260
      %v5755 = vmul.f32 %v5737, %v4261
      %v5756 = vmul.f32 %v5737, %v4262
      %v5757 = vmul.f32 %v5737, %v4263
      %v5758 = vadd.f32 %v5715, %v5738
      %v5759 = vadd.f32 %v5716, %v5739
      %v5760 = vadd.f32 %v5717, %v5740
      %v5761 = vadd.f32 %v5718, %v5741
      %v5762 = vadd.f32 %v5719, %v5742
      %v5763 = vadd.f32 %v5720, %v5743
      %v5764 = vadd.f32 %v5721, %v5744
      %v5765 = vadd.f32 %v5722, %v5745
      %v5766 = vadd.f32 %v5723, %v5746
      %v5767 = vadd.f32 %v5724, %v5747
      %v5768 = vadd.f32 %v5725, %v5748
      %v5769 = vadd.f32 %v5726, %v5749
      %v5770 = vadd.f32 %v5727, %v5750
      %v5771 = vadd.f32 %v5728, %v5751
      %v5772 = vadd.f32 %v5729, %v5752
      %v5773 = vadd.f32 %v5730, %v5753
      %v5774 = vadd.f32 %v5731, %v5754
      %v5775 = vadd.f32 %v5732, %v5755
      %v5776 = vadd.f32 %v5733, %v5756
      %v5777 = vadd.f32 %v5734, %v5757
      %s5778 = sadd.s32 %s4981, 19
      %s5779 = sld [smem:[#allocation8 + %s5778]]
      %v5780 = vstv %s5779
      %v5781 = vmul.f32 %v5780, %v4264
      %v5782 = vmul.f32 %v5780, %v4265
      %v5783 = vmul.f32 %v5780, %v4266
      %v5784 = vmul.f32 %v5780, %v4267
      %v5785 = vmul.f32 %v5780, %v4268
      %v5786 = vmul.f32 %v5780, %v4269
      %v5787 = vmul.f32 %v5780, %v4270
      %v5788 = vmul.f32 %v5780, %v4271
      %v5789 = vmul.f32 %v5780, %v4272
      %v5790 = vmul.f32 %v5780, %v4273
      %v5791 = vmul.f32 %v5780, %v4274
      %v5792 = vmul.f32 %v5780, %v4275
      %v5793 = vmul.f32 %v5780, %v4276
      %v5794 = vmul.f32 %v5780, %v4277
      %v5795 = vmul.f32 %v5780, %v4278
      %v5796 = vmul.f32 %v5780, %v4279
      %v5797 = vmul.f32 %v5780, %v4280
      %v5798 = vmul.f32 %v5780, %v4281
      %v5799 = vmul.f32 %v5780, %v4282
      %v5800 = vmul.f32 %v5780, %v4283
      %v5801 = vadd.f32 %v5758, %v5781
      %v5802 = vadd.f32 %v5759, %v5782
      %v5803 = vadd.f32 %v5760, %v5783
      %v5804 = vadd.f32 %v5761, %v5784
      %v5805 = vadd.f32 %v5762, %v5785
      %v5806 = vadd.f32 %v5763, %v5786
      %v5807 = vadd.f32 %v5764, %v5787
      %v5808 = vadd.f32 %v5765, %v5788
      %v5809 = vadd.f32 %v5766, %v5789
      %v5810 = vadd.f32 %v5767, %v5790
      %v5811 = vadd.f32 %v5768, %v5791
      %v5812 = vadd.f32 %v5769, %v5792
      %v5813 = vadd.f32 %v5770, %v5793
      %v5814 = vadd.f32 %v5771, %v5794
      %v5815 = vadd.f32 %v5772, %v5795
      %v5816 = vadd.f32 %v5773, %v5796
      %v5817 = vadd.f32 %v5774, %v5797
      %v5818 = vadd.f32 %v5775, %v5798
      %v5819 = vadd.f32 %v5776, %v5799
      %v5820 = vadd.f32 %v5777, %v5800
      %s5821 = sadd.s32 %s4981, 20
      %s5822 = sld [smem:[#allocation8 + %s5821]]
      %v5823 = vstv %s5822
      %v5824 = vmul.f32 %v5823, %v4284
      %v5825 = vmul.f32 %v5823, %v4285
      %v5826 = vmul.f32 %v5823, %v4286
      %v5827 = vmul.f32 %v5823, %v4287
      %v5828 = vmul.f32 %v5823, %v4288
      %v5829 = vmul.f32 %v5823, %v4289
      %v5830 = vmul.f32 %v5823, %v4290
      %v5831 = vmul.f32 %v5823, %v4291
      %v5832 = vmul.f32 %v5823, %v4292
      %v5833 = vmul.f32 %v5823, %v4293
      %v5834 = vmul.f32 %v5823, %v4294
      %v5835 = vmul.f32 %v5823, %v4295
      %v5836 = vmul.f32 %v5823, %v4296
      %v5837 = vmul.f32 %v5823, %v4297
      %v5838 = vmul.f32 %v5823, %v4298
      %v5839 = vmul.f32 %v5823, %v4299
      %v5840 = vmul.f32 %v5823, %v4300
      %v5841 = vmul.f32 %v5823, %v4301
      %v5842 = vmul.f32 %v5823, %v4302
      %v5843 = vmul.f32 %v5823, %v4303
      %v5844 = vadd.f32 %v5801, %v5824
      %v5845 = vadd.f32 %v5802, %v5825
      %v5846 = vadd.f32 %v5803, %v5826
      %v5847 = vadd.f32 %v5804, %v5827
      %v5848 = vadd.f32 %v5805, %v5828
      %v5849 = vadd.f32 %v5806, %v5829
      %v5850 = vadd.f32 %v5807, %v5830
      %v5851 = vadd.f32 %v5808, %v5831
      %v5852 = vadd.f32 %v5809, %v5832
      %v5853 = vadd.f32 %v5810, %v5833
      %v5854 = vadd.f32 %v5811, %v5834
      %v5855 = vadd.f32 %v5812, %v5835
      %v5856 = vadd.f32 %v5813, %v5836
      %v5857 = vadd.f32 %v5814, %v5837
      %v5858 = vadd.f32 %v5815, %v5838
      %v5859 = vadd.f32 %v5816, %v5839
      %v5860 = vadd.f32 %v5817, %v5840
      %v5861 = vadd.f32 %v5818, %v5841
      %v5862 = vadd.f32 %v5819, %v5842
      %v5863 = vadd.f32 %v5820, %v5843
      %s5864 = sadd.s32 %s4981, 21
      %s5865 = sld [smem:[#allocation8 + %s5864]]
      %v5866 = vstv %s5865
      %v5867 = vmul.f32 %v5866, %v4305
      %v5868 = vmul.f32 %v5866, %v4306
      %v5869 = vmul.f32 %v5866, %v4307
      %v5870 = vmul.f32 %v5866, %v4308
      %v5871 = vmul.f32 %v5866, %v4309
      %v5872 = vmul.f32 %v5866, %v4310
      %v5873 = vmul.f32 %v5866, %v4311
      %v5874 = vmul.f32 %v5866, %v4312
      %v5875 = vmul.f32 %v5866, %v4313
      %v5876 = vmul.f32 %v5866, %v4314
      %v5877 = vmul.f32 %v5866, %v4315
      %v5878 = vmul.f32 %v5866, %v4316
      %v5879 = vmul.f32 %v5866, %v4317
      %v5880 = vmul.f32 %v5866, %v4318
      %v5881 = vmul.f32 %v5866, %v4319
      %v5882 = vmul.f32 %v5866, %v4320
      %v5883 = vmul.f32 %v5866, %v4321
      %v5884 = vmul.f32 %v5866, %v4322
      %v5885 = vmul.f32 %v5866, %v4323
      %v5886 = vmul.f32 %v5866, %v4324
      %v5887 = vadd.f32 %v5844, %v5867
      %v5888 = vadd.f32 %v5845, %v5868
      %v5889 = vadd.f32 %v5846, %v5869
      %v5890 = vadd.f32 %v5847, %v5870
      %v5891 = vadd.f32 %v5848, %v5871
      %v5892 = vadd.f32 %v5849, %v5872
      %v5893 = vadd.f32 %v5850, %v5873
      %v5894 = vadd.f32 %v5851, %v5874
      %v5895 = vadd.f32 %v5852, %v5875
      %v5896 = vadd.f32 %v5853, %v5876
      %v5897 = vadd.f32 %v5854, %v5877
      %v5898 = vadd.f32 %v5855, %v5878
      %v5899 = vadd.f32 %v5856, %v5879
      %v5900 = vadd.f32 %v5857, %v5880
      %v5901 = vadd.f32 %v5858, %v5881
      %v5902 = vadd.f32 %v5859, %v5882
      %v5903 = vadd.f32 %v5860, %v5883
      %v5904 = vadd.f32 %v5861, %v5884
      %v5905 = vadd.f32 %v5862, %v5885
      %v5906 = vadd.f32 %v5863, %v5886
      %s5907 = sadd.s32 %s4981, 22
      %s5908 = sld [smem:[#allocation8 + %s5907]]
      %v5909 = vstv %s5908
      %v5910 = vmul.f32 %v5909, %v4325
      %v5911 = vmul.f32 %v5909, %v4326
      %v5912 = vmul.f32 %v5909, %v4327
      %v5913 = vmul.f32 %v5909, %v4328
      %v5914 = vmul.f32 %v5909, %v4329
      %v5915 = vmul.f32 %v5909, %v4330
      %v5916 = vmul.f32 %v5909, %v4331
      %v5917 = vmul.f32 %v5909, %v4332
      %v5918 = vmul.f32 %v5909, %v4333
      %v5919 = vmul.f32 %v5909, %v4334
      %v5920 = vmul.f32 %v5909, %v4335
      %v5921 = vmul.f32 %v5909, %v4336
      %v5922 = vmul.f32 %v5909, %v4337
      %v5923 = vmul.f32 %v5909, %v4338
      %v5924 = vmul.f32 %v5909, %v4339
      %v5925 = vmul.f32 %v5909, %v4340
      %v5926 = vmul.f32 %v5909, %v4341
      %v5927 = vmul.f32 %v5909, %v4342
      %v5928 = vmul.f32 %v5909, %v4343
      %v5929 = vmul.f32 %v5909, %v4344
      %v5930 = vadd.f32 %v5887, %v5910
      %v5931 = vadd.f32 %v5888, %v5911
      %v5932 = vadd.f32 %v5889, %v5912
      %v5933 = vadd.f32 %v5890, %v5913
      %v5934 = vadd.f32 %v5891, %v5914
      %v5935 = vadd.f32 %v5892, %v5915
      %v5936 = vadd.f32 %v5893, %v5916
      %v5937 = vadd.f32 %v5894, %v5917
      %v5938 = vadd.f32 %v5895, %v5918
      %v5939 = vadd.f32 %v5896, %v5919
      %v5940 = vadd.f32 %v5897, %v5920
      %v5941 = vadd.f32 %v5898, %v5921
      %v5942 = vadd.f32 %v5899, %v5922
      %v5943 = vadd.f32 %v5900, %v5923
      %v5944 = vadd.f32 %v5901, %v5924
      %v5945 = vadd.f32 %v5902, %v5925
      %v5946 = vadd.f32 %v5903, %v5926
      %v5947 = vadd.f32 %v5904, %v5927
      %v5948 = vadd.f32 %v5905, %v5928
      %v5949 = vadd.f32 %v5906, %v5929
      %s5950 = sadd.s32 %s4981, 23
      %s5951 = sld [smem:[#allocation8 + %s5950]]
      %v5952 = vstv %s5951
      %v5953 = vmul.f32 %v5952, %v4345
      %v5954 = vmul.f32 %v5952, %v4346
      %v5955 = vmul.f32 %v5952, %v4347
      %v5956 = vmul.f32 %v5952, %v4348
      %v5957 = vmul.f32 %v5952, %v4349
      %v5958 = vmul.f32 %v5952, %v4350
      %v5959 = vmul.f32 %v5952, %v4351
      %v5960 = vmul.f32 %v5952, %v4352
      %v5961 = vmul.f32 %v5952, %v4353
      %v5962 = vmul.f32 %v5952, %v4354
      %v5963 = vmul.f32 %v5952, %v4355
      %v5964 = vmul.f32 %v5952, %v4356
      %v5965 = vmul.f32 %v5952, %v4357
      %v5966 = vmul.f32 %v5952, %v4358
      %v5967 = vmul.f32 %v5952, %v4359
      %v5968 = vmul.f32 %v5952, %v4360
      %v5969 = vmul.f32 %v5952, %v4361
      %v5970 = vmul.f32 %v5952, %v4362
      %v5971 = vmul.f32 %v5952, %v4363
      %v5972 = vmul.f32 %v5952, %v4364
      %v5973 = vadd.f32 %v5930, %v5953
      %v5974 = vadd.f32 %v5931, %v5954
      %v5975 = vadd.f32 %v5932, %v5955
      %v5976 = vadd.f32 %v5933, %v5956
      %v5977 = vadd.f32 %v5934, %v5957
      %v5978 = vadd.f32 %v5935, %v5958
      %v5979 = vadd.f32 %v5936, %v5959
      %v5980 = vadd.f32 %v5937, %v5960
      %v5981 = vadd.f32 %v5938, %v5961
      %v5982 = vadd.f32 %v5939, %v5962
      %v5983 = vadd.f32 %v5940, %v5963
      %v5984 = vadd.f32 %v5941, %v5964
      %v5985 = vadd.f32 %v5942, %v5965
      %v5986 = vadd.f32 %v5943, %v5966
      %v5987 = vadd.f32 %v5944, %v5967
      %v5988 = vadd.f32 %v5945, %v5968
      %v5989 = vadd.f32 %v5946, %v5969
      %v5990 = vadd.f32 %v5947, %v5970
      %v5991 = vadd.f32 %v5948, %v5971
      %v5992 = vadd.f32 %v5949, %v5972
      %s5993 = sadd.s32 %s4981, 24
      %s5994 = sld [smem:[#allocation8 + %s5993]]
      %v5995 = vstv %s5994
      %v5996 = vmul.f32 %v5995, %v4366
      %v5997 = vmul.f32 %v5995, %v4367
      %v5998 = vmul.f32 %v5995, %v4368
      %v5999 = vmul.f32 %v5995, %v4369
      %v6000 = vmul.f32 %v5995, %v4370
      %v6001 = vmul.f32 %v5995, %v4371
      %v6002 = vmul.f32 %v5995, %v4372
      %v6003 = vmul.f32 %v5995, %v4373
      %v6004 = vmul.f32 %v5995, %v4374
      %v6005 = vmul.f32 %v5995, %v4375
      %v6006 = vmul.f32 %v5995, %v4376
      %v6007 = vmul.f32 %v5995, %v4377
      %v6008 = vmul.f32 %v5995, %v4378
      %v6009 = vmul.f32 %v5995, %v4379
      %v6010 = vmul.f32 %v5995, %v4380
      %v6011 = vmul.f32 %v5995, %v4381
      %v6012 = vmul.f32 %v5995, %v4382
      %v6013 = vmul.f32 %v5995, %v4383
      %v6014 = vmul.f32 %v5995, %v4384
      %v6015 = vmul.f32 %v5995, %v4385
      %v6016 = vadd.f32 %v5973, %v5996
      %v6017 = vadd.f32 %v5974, %v5997
      %v6018 = vadd.f32 %v5975, %v5998
      %v6019 = vadd.f32 %v5976, %v5999
      %v6020 = vadd.f32 %v5977, %v6000
      %v6021 = vadd.f32 %v5978, %v6001
      %v6022 = vadd.f32 %v5979, %v6002
      %v6023 = vadd.f32 %v5980, %v6003
      %v6024 = vadd.f32 %v5981, %v6004
      %v6025 = vadd.f32 %v5982, %v6005
      %v6026 = vadd.f32 %v5983, %v6006
      %v6027 = vadd.f32 %v5984, %v6007
      %v6028 = vadd.f32 %v5985, %v6008
      %v6029 = vadd.f32 %v5986, %v6009
      %v6030 = vadd.f32 %v5987, %v6010
      %v6031 = vadd.f32 %v5988, %v6011
      %v6032 = vadd.f32 %v5989, %v6012
      %v6033 = vadd.f32 %v5990, %v6013
      %v6034 = vadd.f32 %v5991, %v6014
      %v6035 = vadd.f32 %v5992, %v6015
      %s6036 = sadd.s32 %s4981, 25
      %s6037 = sld [smem:[#allocation8 + %s6036]]
      %v6038 = vstv %s6037
      %v6039 = vmul.f32 %v6038, %v4386
      %v6040 = vmul.f32 %v6038, %v4387
      %v6041 = vmul.f32 %v6038, %v4388
      %v6042 = vmul.f32 %v6038, %v4389
      %v6043 = vmul.f32 %v6038, %v4390
      %v6044 = vmul.f32 %v6038, %v4391
      %v6045 = vmul.f32 %v6038, %v4392
      %v6046 = vmul.f32 %v6038, %v4393
      %v6047 = vmul.f32 %v6038, %v4394
      %v6048 = vmul.f32 %v6038, %v4395
      %v6049 = vmul.f32 %v6038, %v4396
      %v6050 = vmul.f32 %v6038, %v4397
      %v6051 = vmul.f32 %v6038, %v4398
      %v6052 = vmul.f32 %v6038, %v4399
      %v6053 = vmul.f32 %v6038, %v4400
      %v6054 = vmul.f32 %v6038, %v4401
      %v6055 = vmul.f32 %v6038, %v4402
      %v6056 = vmul.f32 %v6038, %v4403
      %v6057 = vmul.f32 %v6038, %v4404
      %v6058 = vmul.f32 %v6038, %v4405
      %v6059 = vadd.f32 %v6016, %v6039
      %v6060 = vadd.f32 %v6017, %v6040
      %v6061 = vadd.f32 %v6018, %v6041
      %v6062 = vadd.f32 %v6019, %v6042
      %v6063 = vadd.f32 %v6020, %v6043
      %v6064 = vadd.f32 %v6021, %v6044
      %v6065 = vadd.f32 %v6022, %v6045
      %v6066 = vadd.f32 %v6023, %v6046
      %v6067 = vadd.f32 %v6024, %v6047
      %v6068 = vadd.f32 %v6025, %v6048
      %v6069 = vadd.f32 %v6026, %v6049
      %v6070 = vadd.f32 %v6027, %v6050
      %v6071 = vadd.f32 %v6028, %v6051
      %v6072 = vadd.f32 %v6029, %v6052
      %v6073 = vadd.f32 %v6030, %v6053
      %v6074 = vadd.f32 %v6031, %v6054
      %v6075 = vadd.f32 %v6032, %v6055
      %v6076 = vadd.f32 %v6033, %v6056
      %v6077 = vadd.f32 %v6034, %v6057
      %v6078 = vadd.f32 %v6035, %v6058
      %s6079 = sadd.s32 %s4981, 26
      %s6080 = sld [smem:[#allocation8 + %s6079]]
      %v6081 = vstv %s6080
      %v6082 = vmul.f32 %v6081, %v4406
      %v6083 = vmul.f32 %v6081, %v4407
      %v6084 = vmul.f32 %v6081, %v4408
      %v6085 = vmul.f32 %v6081, %v4409
      %v6086 = vmul.f32 %v6081, %v4410
      %v6087 = vmul.f32 %v6081, %v4411
      %v6088 = vmul.f32 %v6081, %v4412
      %v6089 = vmul.f32 %v6081, %v4413
      %v6090 = vmul.f32 %v6081, %v4414
      %v6091 = vmul.f32 %v6081, %v4415
      %v6092 = vmul.f32 %v6081, %v4416
      %v6093 = vmul.f32 %v6081, %v4417
      %v6094 = vmul.f32 %v6081, %v4418
      %v6095 = vmul.f32 %v6081, %v4419
      %v6096 = vmul.f32 %v6081, %v4420
      %v6097 = vmul.f32 %v6081, %v4421
      %v6098 = vmul.f32 %v6081, %v4422
      %v6099 = vmul.f32 %v6081, %v4423
      %v6100 = vmul.f32 %v6081, %v4424
      %v6101 = vmul.f32 %v6081, %v4425
      %v6102 = vadd.f32 %v6059, %v6082
      %v6103 = vadd.f32 %v6060, %v6083
      %v6104 = vadd.f32 %v6061, %v6084
      %v6105 = vadd.f32 %v6062, %v6085
      %v6106 = vadd.f32 %v6063, %v6086
      %v6107 = vadd.f32 %v6064, %v6087
      %v6108 = vadd.f32 %v6065, %v6088
      %v6109 = vadd.f32 %v6066, %v6089
      %v6110 = vadd.f32 %v6067, %v6090
      %v6111 = vadd.f32 %v6068, %v6091
      %v6112 = vadd.f32 %v6069, %v6092
      %v6113 = vadd.f32 %v6070, %v6093
      %v6114 = vadd.f32 %v6071, %v6094
      %v6115 = vadd.f32 %v6072, %v6095
      %v6116 = vadd.f32 %v6073, %v6096
      %v6117 = vadd.f32 %v6074, %v6097
      %v6118 = vadd.f32 %v6075, %v6098
      %v6119 = vadd.f32 %v6076, %v6099
      %v6120 = vadd.f32 %v6077, %v6100
      %v6121 = vadd.f32 %v6078, %v6101
      %s6122 = sadd.s32 %s4981, 27
      %s6123 = sld [smem:[#allocation8 + %s6122]]
      %v6124 = vstv %s6123
      %v6125 = vmul.f32 %v6124, %v4427
      %v6126 = vmul.f32 %v6124, %v4428
      %v6127 = vmul.f32 %v6124, %v4429
      %v6128 = vmul.f32 %v6124, %v4430
      %v6129 = vmul.f32 %v6124, %v4431
      %v6130 = vmul.f32 %v6124, %v4432
      %v6131 = vmul.f32 %v6124, %v4433
      %v6132 = vmul.f32 %v6124, %v4434
      %v6133 = vmul.f32 %v6124, %v4435
      %v6134 = vmul.f32 %v6124, %v4436
      %v6135 = vmul.f32 %v6124, %v4437
      %v6136 = vmul.f32 %v6124, %v4438
      %v6137 = vmul.f32 %v6124, %v4439
      %v6138 = vmul.f32 %v6124, %v4440
      %v6139 = vmul.f32 %v6124, %v4441
      %v6140 = vmul.f32 %v6124, %v4442
      %v6141 = vmul.f32 %v6124, %v4443
      %v6142 = vmul.f32 %v6124, %v4444
      %v6143 = vmul.f32 %v6124, %v4445
      %v6144 = vmul.f32 %v6124, %v4446
      %v6145 = vadd.f32 %v6102, %v6125
      %v6146 = vadd.f32 %v6103, %v6126
      %v6147 = vadd.f32 %v6104, %v6127
      %v6148 = vadd.f32 %v6105, %v6128
      %v6149 = vadd.f32 %v6106, %v6129
      %v6150 = vadd.f32 %v6107, %v6130
      %v6151 = vadd.f32 %v6108, %v6131
      %v6152 = vadd.f32 %v6109, %v6132
      %v6153 = vadd.f32 %v6110, %v6133
      %v6154 = vadd.f32 %v6111, %v6134
      %v6155 = vadd.f32 %v6112, %v6135
      %v6156 = vadd.f32 %v6113, %v6136
      %v6157 = vadd.f32 %v6114, %v6137
      %v6158 = vadd.f32 %v6115, %v6138
      %v6159 = vadd.f32 %v6116, %v6139
      %v6160 = vadd.f32 %v6117, %v6140
      %v6161 = vadd.f32 %v6118, %v6141
      %v6162 = vadd.f32 %v6119, %v6142
      %v6163 = vadd.f32 %v6120, %v6143
      %v6164 = vadd.f32 %v6121, %v6144
      %s6165 = sadd.s32 %s4981, 28
      %s6166 = sld [smem:[#allocation8 + %s6165]]
      %v6167 = vstv %s6166
      %v6168 = vmul.f32 %v6167, %v4447
      %v6169 = vmul.f32 %v6167, %v4448
      %v6170 = vmul.f32 %v6167, %v4449
      %v6171 = vmul.f32 %v6167, %v4450
      %v6172 = vmul.f32 %v6167, %v4451
      %v6173 = vmul.f32 %v6167, %v4452
      %v6174 = vmul.f32 %v6167, %v4453
      %v6175 = vmul.f32 %v6167, %v4454
      %v6176 = vmul.f32 %v6167, %v4455
      %v6177 = vmul.f32 %v6167, %v4456
      %v6178 = vmul.f32 %v6167, %v4457
      %v6179 = vmul.f32 %v6167, %v4458
      %v6180 = vmul.f32 %v6167, %v4459
      %v6181 = vmul.f32 %v6167, %v4460
      %v6182 = vmul.f32 %v6167, %v4461
      %v6183 = vmul.f32 %v6167, %v4462
      %v6184 = vmul.f32 %v6167, %v4463
      %v6185 = vmul.f32 %v6167, %v4464
      %v6186 = vmul.f32 %v6167, %v4465
      %v6187 = vmul.f32 %v6167, %v4466
      %v6188 = vadd.f32 %v6145, %v6168
      %v6189 = vadd.f32 %v6146, %v6169
      %v6190 = vadd.f32 %v6147, %v6170
      %v6191 = vadd.f32 %v6148, %v6171
      %v6192 = vadd.f32 %v6149, %v6172
      %v6193 = vadd.f32 %v6150, %v6173
      %v6194 = vadd.f32 %v6151, %v6174
      %v6195 = vadd.f32 %v6152, %v6175
      %v6196 = vadd.f32 %v6153, %v6176
      %v6197 = vadd.f32 %v6154, %v6177
      %v6198 = vadd.f32 %v6155, %v6178
      %v6199 = vadd.f32 %v6156, %v6179
      %v6200 = vadd.f32 %v6157, %v6180
      %v6201 = vadd.f32 %v6158, %v6181
      %v6202 = vadd.f32 %v6159, %v6182
      %v6203 = vadd.f32 %v6160, %v6183
      %v6204 = vadd.f32 %v6161, %v6184
      %v6205 = vadd.f32 %v6162, %v6185
      %v6206 = vadd.f32 %v6163, %v6186
      %v6207 = vadd.f32 %v6164, %v6187
      %s6208 = sadd.s32 %s4981, 29
      %s6209 = sld [smem:[#allocation8 + %s6208]]
      %v6210 = vstv %s6209
      %v6211 = vmul.f32 %v6210, %v4467
      %v6212 = vmul.f32 %v6210, %v4468
      %v6213 = vmul.f32 %v6210, %v4469
      %v6214 = vmul.f32 %v6210, %v4470
      %v6215 = vmul.f32 %v6210, %v4471
      %v6216 = vmul.f32 %v6210, %v4472
      %v6217 = vmul.f32 %v6210, %v4473
      %v6218 = vmul.f32 %v6210, %v4474
      %v6219 = vmul.f32 %v6210, %v4475
      %v6220 = vmul.f32 %v6210, %v4476
      %v6221 = vmul.f32 %v6210, %v4477
      %v6222 = vmul.f32 %v6210, %v4478
      %v6223 = vmul.f32 %v6210, %v4479
      %v6224 = vmul.f32 %v6210, %v4480
      %v6225 = vmul.f32 %v6210, %v4481
      %v6226 = vmul.f32 %v6210, %v4482
      %v6227 = vmul.f32 %v6210, %v4483
      %v6228 = vmul.f32 %v6210, %v4484
      %v6229 = vmul.f32 %v6210, %v4485
      %v6230 = vmul.f32 %v6210, %v4486
      %v6231 = vadd.f32 %v6188, %v6211
      %v6232 = vadd.f32 %v6189, %v6212
      %v6233 = vadd.f32 %v6190, %v6213
      %v6234 = vadd.f32 %v6191, %v6214
      %v6235 = vadd.f32 %v6192, %v6215
      %v6236 = vadd.f32 %v6193, %v6216
      %v6237 = vadd.f32 %v6194, %v6217
      %v6238 = vadd.f32 %v6195, %v6218
      %v6239 = vadd.f32 %v6196, %v6219
      %v6240 = vadd.f32 %v6197, %v6220
      %v6241 = vadd.f32 %v6198, %v6221
      %v6242 = vadd.f32 %v6199, %v6222
      %v6243 = vadd.f32 %v6200, %v6223
      %v6244 = vadd.f32 %v6201, %v6224
      %v6245 = vadd.f32 %v6202, %v6225
      %v6246 = vadd.f32 %v6203, %v6226
      %v6247 = vadd.f32 %v6204, %v6227
      %v6248 = vadd.f32 %v6205, %v6228
      %v6249 = vadd.f32 %v6206, %v6229
      %v6250 = vadd.f32 %v6207, %v6230
      %s6251 = sadd.s32 %s4981, 30
      %s6252 = sld [smem:[#allocation8 + %s6251]]
      %v6253 = vstv %s6252
      %v6254 = vmul.f32 %v6253, %v4488
      %v6255 = vmul.f32 %v6253, %v4489
      %v6256 = vmul.f32 %v6253, %v4490
      %v6257 = vmul.f32 %v6253, %v4491
      %v6258 = vmul.f32 %v6253, %v4492
      %v6259 = vmul.f32 %v6253, %v4493
      %v6260 = vmul.f32 %v6253, %v4494
      %v6261 = vmul.f32 %v6253, %v4495
      %v6262 = vmul.f32 %v6253, %v4496
      %v6263 = vmul.f32 %v6253, %v4497
      %v6264 = vmul.f32 %v6253, %v4498
      %v6265 = vmul.f32 %v6253, %v4499
      %v6266 = vmul.f32 %v6253, %v4500
      %v6267 = vmul.f32 %v6253, %v4501
      %v6268 = vmul.f32 %v6253, %v4502
      %v6269 = vmul.f32 %v6253, %v4503
      %v6270 = vmul.f32 %v6253, %v4504
      %v6271 = vmul.f32 %v6253, %v4505
      %v6272 = vmul.f32 %v6253, %v4506
      %v6273 = vmul.f32 %v6253, %v4507
      %v6274 = vadd.f32 %v6231, %v6254
      %v6275 = vadd.f32 %v6232, %v6255
      %v6276 = vadd.f32 %v6233, %v6256
      %v6277 = vadd.f32 %v6234, %v6257
      %v6278 = vadd.f32 %v6235, %v6258
      %v6279 = vadd.f32 %v6236, %v6259
      %v6280 = vadd.f32 %v6237, %v6260
      %v6281 = vadd.f32 %v6238, %v6261
      %v6282 = vadd.f32 %v6239, %v6262
      %v6283 = vadd.f32 %v6240, %v6263
      %v6284 = vadd.f32 %v6241, %v6264
      %v6285 = vadd.f32 %v6242, %v6265
      %v6286 = vadd.f32 %v6243, %v6266
      %v6287 = vadd.f32 %v6244, %v6267
      %v6288 = vadd.f32 %v6245, %v6268
      %v6289 = vadd.f32 %v6246, %v6269
      %v6290 = vadd.f32 %v6247, %v6270
      %v6291 = vadd.f32 %v6248, %v6271
      %v6292 = vadd.f32 %v6249, %v6272
      %v6293 = vadd.f32 %v6250, %v6273
      %s6294 = sadd.s32 %s4981, 31
      %s6295 = sld [smem:[#allocation8 + %s6294]]
      %v6296 = vstv %s6295
      %v6297 = vmul.f32 %v6296, %v4508
      %v6298 = vmul.f32 %v6296, %v4509
      %v6299 = vmul.f32 %v6296, %v4510
      %v6300 = vmul.f32 %v6296, %v4511
      %v6301 = vmul.f32 %v6296, %v4512
      %v6302 = vmul.f32 %v6296, %v4513
      %v6303 = vmul.f32 %v6296, %v4514
      %v6304 = vmul.f32 %v6296, %v4515
      %v6305 = vmul.f32 %v6296, %v4516
      %v6306 = vmul.f32 %v6296, %v4517
      %v6307 = vmul.f32 %v6296, %v4518
      %v6308 = vmul.f32 %v6296, %v4519
      %v6309 = vmul.f32 %v6296, %v4520
      %v6310 = vmul.f32 %v6296, %v4521
      %v6311 = vmul.f32 %v6296, %v4522
      %v6312 = vmul.f32 %v6296, %v4523
      %v6313 = vmul.f32 %v6296, %v4524
      %v6314 = vmul.f32 %v6296, %v4525
      %v6315 = vmul.f32 %v6296, %v4526
      %v6316 = vmul.f32 %v6296, %v4527
      %v6317 = vadd.f32 %v6274, %v6297
      %v6318 = vadd.f32 %v6275, %v6298
      %v6319 = vadd.f32 %v6276, %v6299
      %v6320 = vadd.f32 %v6277, %v6300
      %v6321 = vadd.f32 %v6278, %v6301
      %v6322 = vadd.f32 %v6279, %v6302
      %v6323 = vadd.f32 %v6280, %v6303
      %v6324 = vadd.f32 %v6281, %v6304
      %v6325 = vadd.f32 %v6282, %v6305
      %v6326 = vadd.f32 %v6283, %v6306
      %v6327 = vadd.f32 %v6284, %v6307
      %v6328 = vadd.f32 %v6285, %v6308
      %v6329 = vadd.f32 %v6286, %v6309
      %v6330 = vadd.f32 %v6287, %v6310
      %v6331 = vadd.f32 %v6288, %v6311
      %v6332 = vadd.f32 %v6289, %v6312
      %v6333 = vadd.f32 %v6290, %v6313
      %v6334 = vadd.f32 %v6291, %v6314
      %v6335 = vadd.f32 %v6292, %v6315
      %v6336 = vadd.f32 %v6293, %v6316
      %s6337 = sadd.s32 %s4981, 32
      %s6338 = sld [smem:[#allocation8 + %s6337]]
      %v6339 = vstv %s6338
      %v6340 = vmul.f32 %v6339, %v4528
      %v6341 = vmul.f32 %v6339, %v4529
      %v6342 = vmul.f32 %v6339, %v4530
      %v6343 = vmul.f32 %v6339, %v4531
      %v6344 = vmul.f32 %v6339, %v4532
      %v6345 = vmul.f32 %v6339, %v4533
      %v6346 = vmul.f32 %v6339, %v4534
      %v6347 = vmul.f32 %v6339, %v4535
      %v6348 = vmul.f32 %v6339, %v4536
      %v6349 = vmul.f32 %v6339, %v4537
      %v6350 = vmul.f32 %v6339, %v4538
      %v6351 = vmul.f32 %v6339, %v4539
      %v6352 = vmul.f32 %v6339, %v4540
      %v6353 = vmul.f32 %v6339, %v4541
      %v6354 = vmul.f32 %v6339, %v4542
      %v6355 = vmul.f32 %v6339, %v4543
      %v6356 = vmul.f32 %v6339, %v4544
      %v6357 = vmul.f32 %v6339, %v4545
      %v6358 = vmul.f32 %v6339, %v4546
      %v6359 = vmul.f32 %v6339, %v4547
      %v6360 = vadd.f32 %v6317, %v6340
      %v6361 = vadd.f32 %v6318, %v6341
      %v6362 = vadd.f32 %v6319, %v6342
      %v6363 = vadd.f32 %v6320, %v6343
      %v6364 = vadd.f32 %v6321, %v6344
      %v6365 = vadd.f32 %v6322, %v6345
      %v6366 = vadd.f32 %v6323, %v6346
      %v6367 = vadd.f32 %v6324, %v6347
      %v6368 = vadd.f32 %v6325, %v6348
      %v6369 = vadd.f32 %v6326, %v6349
      %v6370 = vadd.f32 %v6327, %v6350
      %v6371 = vadd.f32 %v6328, %v6351
      %v6372 = vadd.f32 %v6329, %v6352
      %v6373 = vadd.f32 %v6330, %v6353
      %v6374 = vadd.f32 %v6331, %v6354
      %v6375 = vadd.f32 %v6332, %v6355
      %v6376 = vadd.f32 %v6333, %v6356
      %v6377 = vadd.f32 %v6334, %v6357
      %v6378 = vadd.f32 %v6335, %v6358
      %v6379 = vadd.f32 %v6336, %v6359
      %s6380 = sadd.s32 %s4981, 33
      %s6381 = sld [smem:[#allocation8 + %s6380]]
      %v6382 = vstv %s6381
      %v6383 = vmul.f32 %v6382, %v4549
      %v6384 = vmul.f32 %v6382, %v4550
      %v6385 = vmul.f32 %v6382, %v4551
      %v6386 = vmul.f32 %v6382, %v4552
      %v6387 = vmul.f32 %v6382, %v4553
      %v6388 = vmul.f32 %v6382, %v4554
      %v6389 = vmul.f32 %v6382, %v4555
      %v6390 = vmul.f32 %v6382, %v4556
      %v6391 = vmul.f32 %v6382, %v4557
      %v6392 = vmul.f32 %v6382, %v4558
      %v6393 = vmul.f32 %v6382, %v4559
      %v6394 = vmul.f32 %v6382, %v4560
      %v6395 = vmul.f32 %v6382, %v4561
      %v6396 = vmul.f32 %v6382, %v4562
      %v6397 = vmul.f32 %v6382, %v4563
      %v6398 = vmul.f32 %v6382, %v4564
      %v6399 = vmul.f32 %v6382, %v4565
      %v6400 = vmul.f32 %v6382, %v4566
      %v6401 = vmul.f32 %v6382, %v4567
      %v6402 = vmul.f32 %v6382, %v4568
      %v6403 = vadd.f32 %v6360, %v6383
      %v6404 = vadd.f32 %v6361, %v6384
      %v6405 = vadd.f32 %v6362, %v6385
      %v6406 = vadd.f32 %v6363, %v6386
      %v6407 = vadd.f32 %v6364, %v6387
      %v6408 = vadd.f32 %v6365, %v6388
      %v6409 = vadd.f32 %v6366, %v6389
      %v6410 = vadd.f32 %v6367, %v6390
      %v6411 = vadd.f32 %v6368, %v6391
      %v6412 = vadd.f32 %v6369, %v6392
      %v6413 = vadd.f32 %v6370, %v6393
      %v6414 = vadd.f32 %v6371, %v6394
      %v6415 = vadd.f32 %v6372, %v6395
      %v6416 = vadd.f32 %v6373, %v6396
      %v6417 = vadd.f32 %v6374, %v6397
      %v6418 = vadd.f32 %v6375, %v6398
      %v6419 = vadd.f32 %v6376, %v6399
      %v6420 = vadd.f32 %v6377, %v6400
      %v6421 = vadd.f32 %v6378, %v6401
      %v6422 = vadd.f32 %v6379, %v6402
      %s6423 = sadd.s32 %s4981, 34
      %s6424 = sld [smem:[#allocation8 + %s6423]]
      %v6425 = vstv %s6424
      %v6426 = vmul.f32 %v6425, %v4569
      %v6427 = vmul.f32 %v6425, %v4570
      %v6428 = vmul.f32 %v6425, %v4571
      %v6429 = vmul.f32 %v6425, %v4572
      %v6430 = vmul.f32 %v6425, %v4573
      %v6431 = vmul.f32 %v6425, %v4574
      %v6432 = vmul.f32 %v6425, %v4575
      %v6433 = vmul.f32 %v6425, %v4576
      %v6434 = vmul.f32 %v6425, %v4577
      %v6435 = vmul.f32 %v6425, %v4578
      %v6436 = vmul.f32 %v6425, %v4579
      %v6437 = vmul.f32 %v6425, %v4580
      %v6438 = vmul.f32 %v6425, %v4581
      %v6439 = vmul.f32 %v6425, %v4582
      %v6440 = vmul.f32 %v6425, %v4583
      %v6441 = vmul.f32 %v6425, %v4584
      %v6442 = vmul.f32 %v6425, %v4585
      %v6443 = vmul.f32 %v6425, %v4586
      %v6444 = vmul.f32 %v6425, %v4587
      %v6445 = vmul.f32 %v6425, %v4588
      %v6446 = vadd.f32 %v6403, %v6426
      %v6447 = vadd.f32 %v6404, %v6427
      %v6448 = vadd.f32 %v6405, %v6428
      %v6449 = vadd.f32 %v6406, %v6429
      %v6450 = vadd.f32 %v6407, %v6430
      %v6451 = vadd.f32 %v6408, %v6431
      %v6452 = vadd.f32 %v6409, %v6432
      %v6453 = vadd.f32 %v6410, %v6433
      %v6454 = vadd.f32 %v6411, %v6434
      %v6455 = vadd.f32 %v6412, %v6435
      %v6456 = vadd.f32 %v6413, %v6436
      %v6457 = vadd.f32 %v6414, %v6437
      %v6458 = vadd.f32 %v6415, %v6438
      %v6459 = vadd.f32 %v6416, %v6439
      %v6460 = vadd.f32 %v6417, %v6440
      %v6461 = vadd.f32 %v6418, %v6441
      %v6462 = vadd.f32 %v6419, %v6442
      %v6463 = vadd.f32 %v6420, %v6443
      %v6464 = vadd.f32 %v6421, %v6444
      %v6465 = vadd.f32 %v6422, %v6445
      %s6466 = sadd.s32 %s4981, 35
      %s6467 = sld [smem:[#allocation8 + %s6466]]
      %v6468 = vstv %s6467
      %v6469 = vmul.f32 %v6468, %v4589
      %v6470 = vmul.f32 %v6468, %v4590
      %v6471 = vmul.f32 %v6468, %v4591
      %v6472 = vmul.f32 %v6468, %v4592
      %v6473 = vmul.f32 %v6468, %v4593
      %v6474 = vmul.f32 %v6468, %v4594
      %v6475 = vmul.f32 %v6468, %v4595
      %v6476 = vmul.f32 %v6468, %v4596
      %v6477 = vmul.f32 %v6468, %v4597
      %v6478 = vmul.f32 %v6468, %v4598
      %v6479 = vmul.f32 %v6468, %v4599
      %v6480 = vmul.f32 %v6468, %v4600
      %v6481 = vmul.f32 %v6468, %v4601
      %v6482 = vmul.f32 %v6468, %v4602
      %v6483 = vmul.f32 %v6468, %v4603
      %v6484 = vmul.f32 %v6468, %v4604
      %v6485 = vmul.f32 %v6468, %v4605
      %v6486 = vmul.f32 %v6468, %v4606
      %v6487 = vmul.f32 %v6468, %v4607
      %v6488 = vmul.f32 %v6468, %v4608
      %v6489 = vadd.f32 %v6446, %v6469
      %v6490 = vadd.f32 %v6447, %v6470
      %v6491 = vadd.f32 %v6448, %v6471
      %v6492 = vadd.f32 %v6449, %v6472
      %v6493 = vadd.f32 %v6450, %v6473
      %v6494 = vadd.f32 %v6451, %v6474
      %v6495 = vadd.f32 %v6452, %v6475
      %v6496 = vadd.f32 %v6453, %v6476
      %v6497 = vadd.f32 %v6454, %v6477
      %v6498 = vadd.f32 %v6455, %v6478
      %v6499 = vadd.f32 %v6456, %v6479
      %v6500 = vadd.f32 %v6457, %v6480
      %v6501 = vadd.f32 %v6458, %v6481
      %v6502 = vadd.f32 %v6459, %v6482
      %v6503 = vadd.f32 %v6460, %v6483
      %v6504 = vadd.f32 %v6461, %v6484
      %v6505 = vadd.f32 %v6462, %v6485
      %v6506 = vadd.f32 %v6463, %v6486
      %v6507 = vadd.f32 %v6464, %v6487
      %v6508 = vadd.f32 %v6465, %v6488
      %s6509 = sadd.s32 %s4981, 36
      %s6510 = sld [smem:[#allocation8 + %s6509]]
      %v6511 = vstv %s6510
      %v6512 = vmul.f32 %v6511, %v4610
      %v6513 = vmul.f32 %v6511, %v4611
      %v6514 = vmul.f32 %v6511, %v4612
      %v6515 = vmul.f32 %v6511, %v4613
      %v6516 = vmul.f32 %v6511, %v4614
      %v6517 = vmul.f32 %v6511, %v4615
      %v6518 = vmul.f32 %v6511, %v4616
      %v6519 = vmul.f32 %v6511, %v4617
      %v6520 = vmul.f32 %v6511, %v4618
      %v6521 = vmul.f32 %v6511, %v4619
      %v6522 = vmul.f32 %v6511, %v4620
      %v6523 = vmul.f32 %v6511, %v4621
      %v6524 = vmul.f32 %v6511, %v4622
      %v6525 = vmul.f32 %v6511, %v4623
      %v6526 = vmul.f32 %v6511, %v4624
      %v6527 = vmul.f32 %v6511, %v4625
      %v6528 = vmul.f32 %v6511, %v4626
      %v6529 = vmul.f32 %v6511, %v4627
      %v6530 = vmul.f32 %v6511, %v4628
      %v6531 = vmul.f32 %v6511, %v4629
      %v6532 = vadd.f32 %v6489, %v6512
      %v6533 = vadd.f32 %v6490, %v6513
      %v6534 = vadd.f32 %v6491, %v6514
      %v6535 = vadd.f32 %v6492, %v6515
      %v6536 = vadd.f32 %v6493, %v6516
      %v6537 = vadd.f32 %v6494, %v6517
      %v6538 = vadd.f32 %v6495, %v6518
      %v6539 = vadd.f32 %v6496, %v6519
      %v6540 = vadd.f32 %v6497, %v6520
      %v6541 = vadd.f32 %v6498, %v6521
      %v6542 = vadd.f32 %v6499, %v6522
      %v6543 = vadd.f32 %v6500, %v6523
      %v6544 = vadd.f32 %v6501, %v6524
      %v6545 = vadd.f32 %v6502, %v6525
      %v6546 = vadd.f32 %v6503, %v6526
      %v6547 = vadd.f32 %v6504, %v6527
      %v6548 = vadd.f32 %v6505, %v6528
      %v6549 = vadd.f32 %v6506, %v6529
      %v6550 = vadd.f32 %v6507, %v6530
      %v6551 = vadd.f32 %v6508, %v6531
      %s6552 = sadd.s32 %s4981, 37
      %s6553 = sld [smem:[#allocation8 + %s6552]]
      %v6554 = vstv %s6553
      %v6555 = vmul.f32 %v6554, %v4630
      %v6556 = vmul.f32 %v6554, %v4631
      %v6557 = vmul.f32 %v6554, %v4632
      %v6558 = vmul.f32 %v6554, %v4633
      %v6559 = vmul.f32 %v6554, %v4634
      %v6560 = vmul.f32 %v6554, %v4635
      %v6561 = vmul.f32 %v6554, %v4636
      %v6562 = vmul.f32 %v6554, %v4637
      %v6563 = vmul.f32 %v6554, %v4638
      %v6564 = vmul.f32 %v6554, %v4639
      %v6565 = vmul.f32 %v6554, %v4640
      %v6566 = vmul.f32 %v6554, %v4641
      %v6567 = vmul.f32 %v6554, %v4642
      %v6568 = vmul.f32 %v6554, %v4643
      %v6569 = vmul.f32 %v6554, %v4644
      %v6570 = vmul.f32 %v6554, %v4645
      %v6571 = vmul.f32 %v6554, %v4646
      %v6572 = vmul.f32 %v6554, %v4647
      %v6573 = vmul.f32 %v6554, %v4648
      %v6574 = vmul.f32 %v6554, %v4649
      %v6575 = vadd.f32 %v6532, %v6555
      %v6576 = vadd.f32 %v6533, %v6556
      %v6577 = vadd.f32 %v6534, %v6557
      %v6578 = vadd.f32 %v6535, %v6558
      %v6579 = vadd.f32 %v6536, %v6559
      %v6580 = vadd.f32 %v6537, %v6560
      %v6581 = vadd.f32 %v6538, %v6561
      %v6582 = vadd.f32 %v6539, %v6562
      %v6583 = vadd.f32 %v6540, %v6563
      %v6584 = vadd.f32 %v6541, %v6564
      %v6585 = vadd.f32 %v6542, %v6565
      %v6586 = vadd.f32 %v6543, %v6566
      %v6587 = vadd.f32 %v6544, %v6567
      %v6588 = vadd.f32 %v6545, %v6568
      %v6589 = vadd.f32 %v6546, %v6569
      %v6590 = vadd.f32 %v6547, %v6570
      %v6591 = vadd.f32 %v6548, %v6571
      %v6592 = vadd.f32 %v6549, %v6572
      %v6593 = vadd.f32 %v6550, %v6573
      %v6594 = vadd.f32 %v6551, %v6574
      %s6595 = sadd.s32 %s4981, 38
      %s6596 = sld [smem:[#allocation8 + %s6595]]
      %v6597 = vstv %s6596
      %v6598 = vmul.f32 %v6597, %v4650
      %v6599 = vmul.f32 %v6597, %v4651
      %v6600 = vmul.f32 %v6597, %v4652
      %v6601 = vmul.f32 %v6597, %v4653
      %v6602 = vmul.f32 %v6597, %v4654
      %v6603 = vmul.f32 %v6597, %v4655
      %v6604 = vmul.f32 %v6597, %v4656
      %v6605 = vmul.f32 %v6597, %v4657
      %v6606 = vmul.f32 %v6597, %v4658
      %v6607 = vmul.f32 %v6597, %v4659
      %v6608 = vmul.f32 %v6597, %v4660
      %v6609 = vmul.f32 %v6597, %v4661
      %v6610 = vmul.f32 %v6597, %v4662
      %v6611 = vmul.f32 %v6597, %v4663
      %v6612 = vmul.f32 %v6597, %v4664
      %v6613 = vmul.f32 %v6597, %v4665
      %v6614 = vmul.f32 %v6597, %v4666
      %v6615 = vmul.f32 %v6597, %v4667
      %v6616 = vmul.f32 %v6597, %v4668
      %v6617 = vmul.f32 %v6597, %v4669
      %v6618 = vadd.f32 %v6575, %v6598
      %v6619 = vadd.f32 %v6576, %v6599
      %v6620 = vadd.f32 %v6577, %v6600
      %v6621 = vadd.f32 %v6578, %v6601
      %v6622 = vadd.f32 %v6579, %v6602
      %v6623 = vadd.f32 %v6580, %v6603
      %v6624 = vadd.f32 %v6581, %v6604
      %v6625 = vadd.f32 %v6582, %v6605
      %v6626 = vadd.f32 %v6583, %v6606
      %v6627 = vadd.f32 %v6584, %v6607
      %v6628 = vadd.f32 %v6585, %v6608
      %v6629 = vadd.f32 %v6586, %v6609
      %v6630 = vadd.f32 %v6587, %v6610
      %v6631 = vadd.f32 %v6588, %v6611
      %v6632 = vadd.f32 %v6589, %v6612
      %v6633 = vadd.f32 %v6590, %v6613
      %v6634 = vadd.f32 %v6591, %v6614
      %v6635 = vadd.f32 %v6592, %v6615
      %v6636 = vadd.f32 %v6593, %v6616
      %v6637 = vadd.f32 %v6594, %v6617
      %s6638 = sadd.s32 %s4981, 39
      %s6639 = sld [smem:[#allocation8 + %s6638]]
      %v6640 = vstv %s6639
      %v6641 = vmul.f32 %v6640, %v4671
      %v6642 = vmul.f32 %v6640, %v4672
      %v6643 = vmul.f32 %v6640, %v4673
      %v6644 = vmul.f32 %v6640, %v4674
      %v6645 = vmul.f32 %v6640, %v4675
      %v6646 = vmul.f32 %v6640, %v4676
      %v6647 = vmul.f32 %v6640, %v4677
      %v6648 = vmul.f32 %v6640, %v4678
      %v6649 = vmul.f32 %v6640, %v4679
      %v6650 = vmul.f32 %v6640, %v4680
      %v6651 = vmul.f32 %v6640, %v4681
      %v6652 = vmul.f32 %v6640, %v4682
      %v6653 = vmul.f32 %v6640, %v4683
      %v6654 = vmul.f32 %v6640, %v4684
      %v6655 = vmul.f32 %v6640, %v4685
      %v6656 = vmul.f32 %v6640, %v4686
      %v6657 = vmul.f32 %v6640, %v4687
      %v6658 = vmul.f32 %v6640, %v4688
      %v6659 = vmul.f32 %v6640, %v4689
      %v6660 = vmul.f32 %v6640, %v4690
      %v6661 = vadd.f32 %v6618, %v6641
      %v6662 = vadd.f32 %v6619, %v6642
      %v6663 = vadd.f32 %v6620, %v6643
      %v6664 = vadd.f32 %v6621, %v6644
      %v6665 = vadd.f32 %v6622, %v6645
      %v6666 = vadd.f32 %v6623, %v6646
      %v6667 = vadd.f32 %v6624, %v6647
      %v6668 = vadd.f32 %v6625, %v6648
      %v6669 = vadd.f32 %v6626, %v6649
      %v6670 = vadd.f32 %v6627, %v6650
      %v6671 = vadd.f32 %v6628, %v6651
      %v6672 = vadd.f32 %v6629, %v6652
      %v6673 = vadd.f32 %v6630, %v6653
      %v6674 = vadd.f32 %v6631, %v6654
      %v6675 = vadd.f32 %v6632, %v6655
      %v6676 = vadd.f32 %v6633, %v6656
      %v6677 = vadd.f32 %v6634, %v6657
      %v6678 = vadd.f32 %v6635, %v6658
      %v6679 = vadd.f32 %v6636, %v6659
      %v6680 = vadd.f32 %v6637, %v6660
      %s6681 = sadd.s32 %s4981, 40
      %s6682 = sld [smem:[#allocation8 + %s6681]]
      %v6683 = vstv %s6682
      %v6684 = vmul.f32 %v6683, %v4691
      %v6685 = vmul.f32 %v6683, %v4692
      %v6686 = vmul.f32 %v6683, %v4693
      %v6687 = vmul.f32 %v6683, %v4694
      %v6688 = vmul.f32 %v6683, %v4695
      %v6689 = vmul.f32 %v6683, %v4696
      %v6690 = vmul.f32 %v6683, %v4697
      %v6691 = vmul.f32 %v6683, %v4698
      %v6692 = vmul.f32 %v6683, %v4699
      %v6693 = vmul.f32 %v6683, %v4700
      %v6694 = vmul.f32 %v6683, %v4701
      %v6695 = vmul.f32 %v6683, %v4702
      %v6696 = vmul.f32 %v6683, %v4703
      %v6697 = vmul.f32 %v6683, %v4704
      %v6698 = vmul.f32 %v6683, %v4705
      %v6699 = vmul.f32 %v6683, %v4706
      %v6700 = vmul.f32 %v6683, %v4707
      %v6701 = vmul.f32 %v6683, %v4708
      %v6702 = vmul.f32 %v6683, %v4709
      %v6703 = vmul.f32 %v6683, %v4710
      %v6704 = vadd.f32 %v6661, %v6684
      %v6705 = vadd.f32 %v6662, %v6685
      %v6706 = vadd.f32 %v6663, %v6686
      %v6707 = vadd.f32 %v6664, %v6687
      %v6708 = vadd.f32 %v6665, %v6688
      %v6709 = vadd.f32 %v6666, %v6689
      %v6710 = vadd.f32 %v6667, %v6690
      %v6711 = vadd.f32 %v6668, %v6691
      %v6712 = vadd.f32 %v6669, %v6692
      %v6713 = vadd.f32 %v6670, %v6693
      %v6714 = vadd.f32 %v6671, %v6694
      %v6715 = vadd.f32 %v6672, %v6695
      %v6716 = vadd.f32 %v6673, %v6696
      %v6717 = vadd.f32 %v6674, %v6697
      %v6718 = vadd.f32 %v6675, %v6698
      %v6719 = vadd.f32 %v6676, %v6699
      %v6720 = vadd.f32 %v6677, %v6700
      %v6721 = vadd.f32 %v6678, %v6701
      %v6722 = vadd.f32 %v6679, %v6702
      %v6723 = vadd.f32 %v6680, %v6703
      %s6724 = sadd.s32 %s4981, 41
      %s6725 = sld [smem:[#allocation8 + %s6724]]
      %v6726 = vstv %s6725
      %v6727 = vmul.f32 %v6726, %v4711
      %v6728 = vmul.f32 %v6726, %v4712
      %v6729 = vmul.f32 %v6726, %v4713
      %v6730 = vmul.f32 %v6726, %v4714
      %v6731 = vmul.f32 %v6726, %v4715
      %v6732 = vmul.f32 %v6726, %v4716
      %v6733 = vmul.f32 %v6726, %v4717
      %v6734 = vmul.f32 %v6726, %v4718
      %v6735 = vmul.f32 %v6726, %v4719
      %v6736 = vmul.f32 %v6726, %v4720
      %v6737 = vmul.f32 %v6726, %v4721
      %v6738 = vmul.f32 %v6726, %v4722
      %v6739 = vmul.f32 %v6726, %v4723
      %v6740 = vmul.f32 %v6726, %v4724
      %v6741 = vmul.f32 %v6726, %v4725
      %v6742 = vmul.f32 %v6726, %v4726
      %v6743 = vmul.f32 %v6726, %v4727
      %v6744 = vmul.f32 %v6726, %v4728
      %v6745 = vmul.f32 %v6726, %v4729
      %v6746 = vmul.f32 %v6726, %v4730
      %v6747 = vadd.f32 %v6704, %v6727
      %v6748 = vadd.f32 %v6705, %v6728
      %v6749 = vadd.f32 %v6706, %v6729
      %v6750 = vadd.f32 %v6707, %v6730
      %v6751 = vadd.f32 %v6708, %v6731
      %v6752 = vadd.f32 %v6709, %v6732
      %v6753 = vadd.f32 %v6710, %v6733
      %v6754 = vadd.f32 %v6711, %v6734
      %v6755 = vadd.f32 %v6712, %v6735
      %v6756 = vadd.f32 %v6713, %v6736
      %v6757 = vadd.f32 %v6714, %v6737
      %v6758 = vadd.f32 %v6715, %v6738
      %v6759 = vadd.f32 %v6716, %v6739
      %v6760 = vadd.f32 %v6717, %v6740
      %v6761 = vadd.f32 %v6718, %v6741
      %v6762 = vadd.f32 %v6719, %v6742
      %v6763 = vadd.f32 %v6720, %v6743
      %v6764 = vadd.f32 %v6721, %v6744
      %v6765 = vadd.f32 %v6722, %v6745
      %v6766 = vadd.f32 %v6723, %v6746
      %s6767 = sadd.s32 %s4981, 42
      %s6768 = sld [smem:[#allocation8 + %s6767]]
      %v6769 = vstv %s6768
      %v6770 = vmul.f32 %v6769, %v4732
      %v6771 = vmul.f32 %v6769, %v4733
      %v6772 = vmul.f32 %v6769, %v4734
      %v6773 = vmul.f32 %v6769, %v4735
      %v6774 = vmul.f32 %v6769, %v4736
      %v6775 = vmul.f32 %v6769, %v4737
      %v6776 = vmul.f32 %v6769, %v4738
      %v6777 = vmul.f32 %v6769, %v4739
      %v6778 = vmul.f32 %v6769, %v4740
      %v6779 = vmul.f32 %v6769, %v4741
      %v6780 = vmul.f32 %v6769, %v4742
      %v6781 = vmul.f32 %v6769, %v4743
      %v6782 = vmul.f32 %v6769, %v4744
      %v6783 = vmul.f32 %v6769, %v4745
      %v6784 = vmul.f32 %v6769, %v4746
      %v6785 = vmul.f32 %v6769, %v4747
      %v6786 = vmul.f32 %v6769, %v4748
      %v6787 = vmul.f32 %v6769, %v4749
      %v6788 = vmul.f32 %v6769, %v4750
      %v6789 = vmul.f32 %v6769, %v4751
      %v6790 = vadd.f32 %v6747, %v6770
      %v6791 = vadd.f32 %v6748, %v6771
      %v6792 = vadd.f32 %v6749, %v6772
      %v6793 = vadd.f32 %v6750, %v6773
      %v6794 = vadd.f32 %v6751, %v6774
      %v6795 = vadd.f32 %v6752, %v6775
      %v6796 = vadd.f32 %v6753, %v6776
      %v6797 = vadd.f32 %v6754, %v6777
      %v6798 = vadd.f32 %v6755, %v6778
      %v6799 = vadd.f32 %v6756, %v6779
      %v6800 = vadd.f32 %v6757, %v6780
      %v6801 = vadd.f32 %v6758, %v6781
      %v6802 = vadd.f32 %v6759, %v6782
      %v6803 = vadd.f32 %v6760, %v6783
      %v6804 = vadd.f32 %v6761, %v6784
      %v6805 = vadd.f32 %v6762, %v6785
      %v6806 = vadd.f32 %v6763, %v6786
      %v6807 = vadd.f32 %v6764, %v6787
      %v6808 = vadd.f32 %v6765, %v6788
      %v6809 = vadd.f32 %v6766, %v6789
      %s6810 = sadd.s32 %s4981, 43
      %s6811 = sld [smem:[#allocation8 + %s6810]]
      %v6812 = vstv %s6811
      %v6813 = vmul.f32 %v6812, %v4752
      %v6814 = vmul.f32 %v6812, %v4753
      %v6815 = vmul.f32 %v6812, %v4754
      %v6816 = vmul.f32 %v6812, %v4755
      %v6817 = vmul.f32 %v6812, %v4756
      %v6818 = vmul.f32 %v6812, %v4757
      %v6819 = vmul.f32 %v6812, %v4758
      %v6820 = vmul.f32 %v6812, %v4759
      %v6821 = vmul.f32 %v6812, %v4760
      %v6822 = vmul.f32 %v6812, %v4761
      %v6823 = vmul.f32 %v6812, %v4762
      %v6824 = vmul.f32 %v6812, %v4763
      %v6825 = vmul.f32 %v6812, %v4764
      %v6826 = vmul.f32 %v6812, %v4765
      %v6827 = vmul.f32 %v6812, %v4766
      %v6828 = vmul.f32 %v6812, %v4767
      %v6829 = vmul.f32 %v6812, %v4768
      %v6830 = vmul.f32 %v6812, %v4769
      %v6831 = vmul.f32 %v6812, %v4770
      %v6832 = vmul.f32 %v6812, %v4771
      %v6833 = vadd.f32 %v6790, %v6813
      %v6834 = vadd.f32 %v6791, %v6814
      %v6835 = vadd.f32 %v6792, %v6815
      %v6836 = vadd.f32 %v6793, %v6816
      %v6837 = vadd.f32 %v6794, %v6817
      %v6838 = vadd.f32 %v6795, %v6818
      %v6839 = vadd.f32 %v6796, %v6819
      %v6840 = vadd.f32 %v6797, %v6820
      %v6841 = vadd.f32 %v6798, %v6821
      %v6842 = vadd.f32 %v6799, %v6822
      %v6843 = vadd.f32 %v6800, %v6823
      %v6844 = vadd.f32 %v6801, %v6824
      %v6845 = vadd.f32 %v6802, %v6825
      %v6846 = vadd.f32 %v6803, %v6826
      %v6847 = vadd.f32 %v6804, %v6827
      %v6848 = vadd.f32 %v6805, %v6828
      %v6849 = vadd.f32 %v6806, %v6829
      %v6850 = vadd.f32 %v6807, %v6830
      %v6851 = vadd.f32 %v6808, %v6831
      %v6852 = vadd.f32 %v6809, %v6832
      %s6853 = sadd.s32 %s4981, 44
      %s6854 = sld [smem:[#allocation8 + %s6853]]
      %v6855 = vstv %s6854
      %v6856 = vmul.f32 %v6855, %v4772
      %v6857 = vmul.f32 %v6855, %v4773
      %v6858 = vmul.f32 %v6855, %v4774
      %v6859 = vmul.f32 %v6855, %v4775
      %v6860 = vmul.f32 %v6855, %v4776
      %v6861 = vmul.f32 %v6855, %v4777
      %v6862 = vmul.f32 %v6855, %v4778
      %v6863 = vmul.f32 %v6855, %v4779
      %v6864 = vmul.f32 %v6855, %v4780
      %v6865 = vmul.f32 %v6855, %v4781
      %v6866 = vmul.f32 %v6855, %v4782
      %v6867 = vmul.f32 %v6855, %v4783
      %v6868 = vmul.f32 %v6855, %v4784
      %v6869 = vmul.f32 %v6855, %v4785
      %v6870 = vmul.f32 %v6855, %v4786
      %v6871 = vmul.f32 %v6855, %v4787
      %v6872 = vmul.f32 %v6855, %v4788
      %v6873 = vmul.f32 %v6855, %v4789
      %v6874 = vmul.f32 %v6855, %v4790
      %v6875 = vmul.f32 %v6855, %v4791
      %v6876 = vadd.f32 %v6833, %v6856
      %v6877 = vadd.f32 %v6834, %v6857
      %v6878 = vadd.f32 %v6835, %v6858
      %v6879 = vadd.f32 %v6836, %v6859
      %v6880 = vadd.f32 %v6837, %v6860
      %v6881 = vadd.f32 %v6838, %v6861
      %v6882 = vadd.f32 %v6839, %v6862
      %v6883 = vadd.f32 %v6840, %v6863
      %v6884 = vadd.f32 %v6841, %v6864
      %v6885 = vadd.f32 %v6842, %v6865
      %v6886 = vadd.f32 %v6843, %v6866
      %v6887 = vadd.f32 %v6844, %v6867
      %v6888 = vadd.f32 %v6845, %v6868
      %v6889 = vadd.f32 %v6846, %v6869
      %v6890 = vadd.f32 %v6847, %v6870
      %v6891 = vadd.f32 %v6848, %v6871
      %v6892 = vadd.f32 %v6849, %v6872
      %v6893 = vadd.f32 %v6850, %v6873
      %v6894 = vadd.f32 %v6851, %v6874
      %v6895 = vadd.f32 %v6852, %v6875
      %s6896 = sadd.s32 %s4981, 45
      %s6897 = sld [smem:[#allocation8 + %s6896]]
      %v6898 = vstv %s6897
      %v6899 = vmul.f32 %v6898, %v4793
      %v6900 = vmul.f32 %v6898, %v4794
      %v6901 = vmul.f32 %v6898, %v4795
      %v6902 = vmul.f32 %v6898, %v4796
      %v6903 = vmul.f32 %v6898, %v4797
      %v6904 = vmul.f32 %v6898, %v4798
      %v6905 = vmul.f32 %v6898, %v4799
      %v6906 = vmul.f32 %v6898, %v4800
      %v6907 = vmul.f32 %v6898, %v4801
      %v6908 = vmul.f32 %v6898, %v4802
      %v6909 = vmul.f32 %v6898, %v4803
      %v6910 = vmul.f32 %v6898, %v4804
      %v6911 = vmul.f32 %v6898, %v4805
      %v6912 = vmul.f32 %v6898, %v4806
      %v6913 = vmul.f32 %v6898, %v4807
      %v6914 = vmul.f32 %v6898, %v4808
      %v6915 = vmul.f32 %v6898, %v4809
      %v6916 = vmul.f32 %v6898, %v4810
      %v6917 = vmul.f32 %v6898, %v4811
      %v6918 = vmul.f32 %v6898, %v4812
      %v6919 = vadd.f32 %v6876, %v6899
      %v6920 = vadd.f32 %v6877, %v6900
      %v6921 = vadd.f32 %v6878, %v6901
      %v6922 = vadd.f32 %v6879, %v6902
      %v6923 = vadd.f32 %v6880, %v6903
      %v6924 = vadd.f32 %v6881, %v6904
      %v6925 = vadd.f32 %v6882, %v6905
      %v6926 = vadd.f32 %v6883, %v6906
      %v6927 = vadd.f32 %v6884, %v6907
      %v6928 = vadd.f32 %v6885, %v6908
      %v6929 = vadd.f32 %v6886, %v6909
      %v6930 = vadd.f32 %v6887, %v6910
      %v6931 = vadd.f32 %v6888, %v6911
      %v6932 = vadd.f32 %v6889, %v6912
      %v6933 = vadd.f32 %v6890, %v6913
      %v6934 = vadd.f32 %v6891, %v6914
      %v6935 = vadd.f32 %v6892, %v6915
      %v6936 = vadd.f32 %v6893, %v6916
      %v6937 = vadd.f32 %v6894, %v6917
      %v6938 = vadd.f32 %v6895, %v6918
      %s6939 = sadd.s32 %s4981, 46
      %s6940 = sld [smem:[#allocation8 + %s6939]]
      %v6941 = vstv %s6940
      %v6942 = vmul.f32 %v6941, %v4813
      %v6943 = vmul.f32 %v6941, %v4814
      %v6944 = vmul.f32 %v6941, %v4815
      %v6945 = vmul.f32 %v6941, %v4816
      %v6946 = vmul.f32 %v6941, %v4817
      %v6947 = vmul.f32 %v6941, %v4818
      %v6948 = vmul.f32 %v6941, %v4819
      %v6949 = vmul.f32 %v6941, %v4820
      %v6950 = vmul.f32 %v6941, %v4821
      %v6951 = vmul.f32 %v6941, %v4822
      %v6952 = vmul.f32 %v6941, %v4823
      %v6953 = vmul.f32 %v6941, %v4824
      %v6954 = vmul.f32 %v6941, %v4825
      %v6955 = vmul.f32 %v6941, %v4826
      %v6956 = vmul.f32 %v6941, %v4827
      %v6957 = vmul.f32 %v6941, %v4828
      %v6958 = vmul.f32 %v6941, %v4829
      %v6959 = vmul.f32 %v6941, %v4830
      %v6960 = vmul.f32 %v6941, %v4831
      %v6961 = vmul.f32 %v6941, %v4832
      %v6962 = vadd.f32 %v6919, %v6942
      %v6963 = vadd.f32 %v6920, %v6943
      %v6964 = vadd.f32 %v6921, %v6944
      %v6965 = vadd.f32 %v6922, %v6945
      %v6966 = vadd.f32 %v6923, %v6946
      %v6967 = vadd.f32 %v6924, %v6947
      %v6968 = vadd.f32 %v6925, %v6948
      %v6969 = vadd.f32 %v6926, %v6949
      %v6970 = vadd.f32 %v6927, %v6950
      %v6971 = vadd.f32 %v6928, %v6951
      %v6972 = vadd.f32 %v6929, %v6952
      %v6973 = vadd.f32 %v6930, %v6953
      %v6974 = vadd.f32 %v6931, %v6954
      %v6975 = vadd.f32 %v6932, %v6955
      %v6976 = vadd.f32 %v6933, %v6956
      %v6977 = vadd.f32 %v6934, %v6957
      %v6978 = vadd.f32 %v6935, %v6958
      %v6979 = vadd.f32 %v6936, %v6959
      %v6980 = vadd.f32 %v6937, %v6960
      %v6981 = vadd.f32 %v6938, %v6961
      %s6982 = sadd.s32 %s4981, 47
      %s6983 = sld [smem:[#allocation8 + %s6982]]
      %v6984 = vstv %s6983
      %v6985 = vmul.f32 %v6984, %v4833
      %v6986 = vmul.f32 %v6984, %v4834
      %v6987 = vmul.f32 %v6984, %v4835
      %v6988 = vmul.f32 %v6984, %v4836
      %v6989 = vmul.f32 %v6984, %v4837
      %v6990 = vmul.f32 %v6984, %v4838
      %v6991 = vmul.f32 %v6984, %v4839
      %v6992 = vmul.f32 %v6984, %v4840
      %v6993 = vmul.f32 %v6984, %v4841
      %v6994 = vmul.f32 %v6984, %v4842
      %v6995 = vmul.f32 %v6984, %v4843
      %v6996 = vmul.f32 %v6984, %v4844
      %v6997 = vmul.f32 %v6984, %v4845
      %v6998 = vmul.f32 %v6984, %v4846
      %v6999 = vmul.f32 %v6984, %v4847
      %v7000 = vmul.f32 %v6984, %v4848
      %v7001 = vmul.f32 %v6984, %v4849
      %v7002 = vmul.f32 %v6984, %v4850
      %v7003 = vmul.f32 %v6984, %v4851
      %v7004 = vmul.f32 %v6984, %v4852
      %v7005 = vadd.f32 %v6962, %v6985
      %v7006 = vadd.f32 %v6963, %v6986
      %v7007 = vadd.f32 %v6964, %v6987
      %v7008 = vadd.f32 %v6965, %v6988
      %v7009 = vadd.f32 %v6966, %v6989
      %v7010 = vadd.f32 %v6967, %v6990
      %v7011 = vadd.f32 %v6968, %v6991
      %v7012 = vadd.f32 %v6969, %v6992
      %v7013 = vadd.f32 %v6970, %v6993
      %v7014 = vadd.f32 %v6971, %v6994
      %v7015 = vadd.f32 %v6972, %v6995
      %v7016 = vadd.f32 %v6973, %v6996
      %v7017 = vadd.f32 %v6974, %v6997
      %v7018 = vadd.f32 %v6975, %v6998
      %v7019 = vadd.f32 %v6976, %v6999
      %v7020 = vadd.f32 %v6977, %v7000
      %v7021 = vadd.f32 %v6978, %v7001
      %v7022 = vadd.f32 %v6979, %v7002
      %v7023 = vadd.f32 %v6980, %v7003
      %v7024 = vadd.f32 %v6981, %v7004
      %s7025 = sadd.s32 %s4981, 48
      %s7026 = sld [smem:[#allocation8 + %s7025]]
      %v7027 = vstv %s7026
      %v7028 = vmul.f32 %v7027, %v4854
      %v7029 = vmul.f32 %v7027, %v4855
      %v7030 = vmul.f32 %v7027, %v4856
      %v7031 = vmul.f32 %v7027, %v4857
      %v7032 = vmul.f32 %v7027, %v4858
      %v7033 = vmul.f32 %v7027, %v4859
      %v7034 = vmul.f32 %v7027, %v4860
      %v7035 = vmul.f32 %v7027, %v4861
      %v7036 = vmul.f32 %v7027, %v4862
      %v7037 = vmul.f32 %v7027, %v4863
      %v7038 = vmul.f32 %v7027, %v4864
      %v7039 = vmul.f32 %v7027, %v4865
      %v7040 = vmul.f32 %v7027, %v4866
      %v7041 = vmul.f32 %v7027, %v4867
      %v7042 = vmul.f32 %v7027, %v4868
      %v7043 = vmul.f32 %v7027, %v4869
      %v7044 = vmul.f32 %v7027, %v4870
      %v7045 = vmul.f32 %v7027, %v4871
      %v7046 = vmul.f32 %v7027, %v4872
      %v7047 = vmul.f32 %v7027, %v4873
      %v7048 = vadd.f32 %v7005, %v7028
      %v7049 = vadd.f32 %v7006, %v7029
      %v7050 = vadd.f32 %v7007, %v7030
      %v7051 = vadd.f32 %v7008, %v7031
      %v7052 = vadd.f32 %v7009, %v7032
      %v7053 = vadd.f32 %v7010, %v7033
      %v7054 = vadd.f32 %v7011, %v7034
      %v7055 = vadd.f32 %v7012, %v7035
      %v7056 = vadd.f32 %v7013, %v7036
      %v7057 = vadd.f32 %v7014, %v7037
      %v7058 = vadd.f32 %v7015, %v7038
      %v7059 = vadd.f32 %v7016, %v7039
      %v7060 = vadd.f32 %v7017, %v7040
      %v7061 = vadd.f32 %v7018, %v7041
      %v7062 = vadd.f32 %v7019, %v7042
      %v7063 = vadd.f32 %v7020, %v7043
      %v7064 = vadd.f32 %v7021, %v7044
      %v7065 = vadd.f32 %v7022, %v7045
      %v7066 = vadd.f32 %v7023, %v7046
      %v7067 = vadd.f32 %v7024, %v7047
      %s7068 = sadd.s32 %s4981, 49
      %s7069 = sld [smem:[#allocation8 + %s7068]]
      %v7070 = vstv %s7069
      %v7071 = vmul.f32 %v7070, %v4874
      %v7072 = vmul.f32 %v7070, %v4875
      %v7073 = vmul.f32 %v7070, %v4876
      %v7074 = vmul.f32 %v7070, %v4877
      %v7075 = vmul.f32 %v7070, %v4878
      %v7076 = vmul.f32 %v7070, %v4879
      %v7077 = vmul.f32 %v7070, %v4880
      %v7078 = vmul.f32 %v7070, %v4881
      %v7079 = vmul.f32 %v7070, %v4882
      %v7080 = vmul.f32 %v7070, %v4883
      %v7081 = vmul.f32 %v7070, %v4884
      %v7082 = vmul.f32 %v7070, %v4885
      %v7083 = vmul.f32 %v7070, %v4886
      %v7084 = vmul.f32 %v7070, %v4887
      %v7085 = vmul.f32 %v7070, %v4888
      %v7086 = vmul.f32 %v7070, %v4889
      %v7087 = vmul.f32 %v7070, %v4890
      %v7088 = vmul.f32 %v7070, %v4891
      %v7089 = vmul.f32 %v7070, %v4892
      %v7090 = vmul.f32 %v7070, %v4893
      %v7091 = vadd.f32 %v7048, %v7071
      %v7092 = vadd.f32 %v7049, %v7072
      %v7093 = vadd.f32 %v7050, %v7073
      %v7094 = vadd.f32 %v7051, %v7074
      %v7095 = vadd.f32 %v7052, %v7075
      %v7096 = vadd.f32 %v7053, %v7076
      %v7097 = vadd.f32 %v7054, %v7077
      %v7098 = vadd.f32 %v7055, %v7078
      %v7099 = vadd.f32 %v7056, %v7079
      %v7100 = vadd.f32 %v7057, %v7080
      %v7101 = vadd.f32 %v7058, %v7081
      %v7102 = vadd.f32 %v7059, %v7082
      %v7103 = vadd.f32 %v7060, %v7083
      %v7104 = vadd.f32 %v7061, %v7084
      %v7105 = vadd.f32 %v7062, %v7085
      %v7106 = vadd.f32 %v7063, %v7086
      %v7107 = vadd.f32 %v7064, %v7087
      %v7108 = vadd.f32 %v7065, %v7088
      %v7109 = vadd.f32 %v7066, %v7089
      %v7110 = vadd.f32 %v7067, %v7090
      %s7111 = sadd.s32 %s4981, 50
      %s7112 = sld [smem:[#allocation8 + %s7111]]
      %v7113 = vstv %s7112
      %v7114 = vmul.f32 %v7113, %v4894
      %v7115 = vmul.f32 %v7113, %v4895
      %v7116 = vmul.f32 %v7113, %v4896
      %v7117 = vmul.f32 %v7113, %v4897
      %v7118 = vmul.f32 %v7113, %v4898
      %v7119 = vmul.f32 %v7113, %v4899
      %v7120 = vmul.f32 %v7113, %v4900
      %v7121 = vmul.f32 %v7113, %v4901
      %v7122 = vmul.f32 %v7113, %v4902
      %v7123 = vmul.f32 %v7113, %v4903
      %v7124 = vmul.f32 %v7113, %v4904
      %v7125 = vmul.f32 %v7113, %v4905
      %v7126 = vmul.f32 %v7113, %v4906
      %v7127 = vmul.f32 %v7113, %v4907
      %v7128 = vmul.f32 %v7113, %v4908
      %v7129 = vmul.f32 %v7113, %v4909
      %v7130 = vmul.f32 %v7113, %v4910
      %v7131 = vmul.f32 %v7113, %v4911
      %v7132 = vmul.f32 %v7113, %v4912
      %v7133 = vmul.f32 %v7113, %v4913
      %v7134 = vadd.f32 %v7091, %v7114
      %v7135 = vadd.f32 %v7092, %v7115
      %v7136 = vadd.f32 %v7093, %v7116
      %v7137 = vadd.f32 %v7094, %v7117
      %v7138 = vadd.f32 %v7095, %v7118
      %v7139 = vadd.f32 %v7096, %v7119
      %v7140 = vadd.f32 %v7097, %v7120
      %v7141 = vadd.f32 %v7098, %v7121
      %v7142 = vadd.f32 %v7099, %v7122
      %v7143 = vadd.f32 %v7100, %v7123
      %v7144 = vadd.f32 %v7101, %v7124
      %v7145 = vadd.f32 %v7102, %v7125
      %v7146 = vadd.f32 %v7103, %v7126
      %v7147 = vadd.f32 %v7104, %v7127
      %v7148 = vadd.f32 %v7105, %v7128
      %v7149 = vadd.f32 %v7106, %v7129
      %v7150 = vadd.f32 %v7107, %v7130
      %v7151 = vadd.f32 %v7108, %v7131
      %v7152 = vadd.f32 %v7109, %v7132
      %v7153 = vadd.f32 %v7110, %v7133
      %s7154 = sadd.s32 %s4981, 51
      %s7155 = sld [smem:[#allocation8 + %s7154]]
      %v7156 = vstv %s7155
      %v7157 = vmul.f32 %v7156, %v4915
      %v7158 = vmul.f32 %v7156, %v4916
      %v7159 = vmul.f32 %v7156, %v4917
      %v7160 = vmul.f32 %v7156, %v4918
      %v7161 = vmul.f32 %v7156, %v4919
      %v7162 = vmul.f32 %v7156, %v4920
      %v7163 = vmul.f32 %v7156, %v4921
      %v7164 = vmul.f32 %v7156, %v4922
      %v7165 = vmul.f32 %v7156, %v4923
      %v7166 = vmul.f32 %v7156, %v4924
      %v7167 = vmul.f32 %v7156, %v4925
      %v7168 = vmul.f32 %v7156, %v4926
      %v7169 = vmul.f32 %v7156, %v4927
      %v7170 = vmul.f32 %v7156, %v4928
      %v7171 = vmul.f32 %v7156, %v4929
      %v7172 = vmul.f32 %v7156, %v4930
      %v7173 = vmul.f32 %v7156, %v4931
      %v7174 = vmul.f32 %v7156, %v4932
      %v7175 = vmul.f32 %v7156, %v4933
      %v7176 = vmul.f32 %v7156, %v4934
      %v7177 = vadd.f32 %v7134, %v7157
      %v7178 = vadd.f32 %v7135, %v7158
      %v7179 = vadd.f32 %v7136, %v7159
      %v7180 = vadd.f32 %v7137, %v7160
      %v7181 = vadd.f32 %v7138, %v7161
      %v7182 = vadd.f32 %v7139, %v7162
      %v7183 = vadd.f32 %v7140, %v7163
      %v7184 = vadd.f32 %v7141, %v7164
      %v7185 = vadd.f32 %v7142, %v7165
      %v7186 = vadd.f32 %v7143, %v7166
      %v7187 = vadd.f32 %v7144, %v7167
      %v7188 = vadd.f32 %v7145, %v7168
      %v7189 = vadd.f32 %v7146, %v7169
      %v7190 = vadd.f32 %v7147, %v7170
      %v7191 = vadd.f32 %v7148, %v7171
      %v7192 = vadd.f32 %v7149, %v7172
      %v7193 = vadd.f32 %v7150, %v7173
      %v7194 = vadd.f32 %v7151, %v7174
      %v7195 = vadd.f32 %v7152, %v7175
      %v7196 = vadd.f32 %v7153, %v7176
      %s7197 = sadd.s32 %s4981, 52
      %s7198 = sld [smem:[#allocation8 + %s7197]]
      %v7199 = vstv %s7198
      %v7200 = vmul.f32 %v7199, %v4935
      %v7201 = vmul.f32 %v7199, %v4936
      %v7202 = vmul.f32 %v7199, %v4937
      %v7203 = vmul.f32 %v7199, %v4938
      %v7204 = vmul.f32 %v7199, %v4939
      %v7205 = vmul.f32 %v7199, %v4940
      %v7206 = vmul.f32 %v7199, %v4941
      %v7207 = vmul.f32 %v7199, %v4942
      %v7208 = vmul.f32 %v7199, %v4943
      %v7209 = vmul.f32 %v7199, %v4944
      %v7210 = vmul.f32 %v7199, %v4945
      %v7211 = vmul.f32 %v7199, %v4946
      %v7212 = vmul.f32 %v7199, %v4947
      %v7213 = vmul.f32 %v7199, %v4948
      %v7214 = vmul.f32 %v7199, %v4949
      %v7215 = vmul.f32 %v7199, %v4950
      %v7216 = vmul.f32 %v7199, %v4951
      %v7217 = vmul.f32 %v7199, %v4952
      %v7218 = vmul.f32 %v7199, %v4953
      %v7219 = vmul.f32 %v7199, %v4954
      %v7220 = vadd.f32 %v7177, %v7200
      %v7221 = vadd.f32 %v7178, %v7201
      %v7222 = vadd.f32 %v7179, %v7202
      %v7223 = vadd.f32 %v7180, %v7203
      %v7224 = vadd.f32 %v7181, %v7204
      %v7225 = vadd.f32 %v7182, %v7205
      %v7226 = vadd.f32 %v7183, %v7206
      %v7227 = vadd.f32 %v7184, %v7207
      %v7228 = vadd.f32 %v7185, %v7208
      %v7229 = vadd.f32 %v7186, %v7209
      %v7230 = vadd.f32 %v7187, %v7210
      %v7231 = vadd.f32 %v7188, %v7211
      %v7232 = vadd.f32 %v7189, %v7212
      %v7233 = vadd.f32 %v7190, %v7213
      %v7234 = vadd.f32 %v7191, %v7214
      %v7235 = vadd.f32 %v7192, %v7215
      %v7236 = vadd.f32 %v7193, %v7216
      %v7237 = vadd.f32 %v7194, %v7217
      %v7238 = vadd.f32 %v7195, %v7218
      %v7239 = vadd.f32 %v7196, %v7219
      %s7240 = sadd.s32 %s4981, 53
      %s7241 = sld [smem:[#allocation8 + %s7240]]
      %v7242 = vstv %s7241
      %v7243 = vmul.f32 %v7242, %v4955
      %v7244 = vmul.f32 %v7242, %v4956
      %v7245 = vmul.f32 %v7242, %v4957
      %v7246 = vmul.f32 %v7242, %v4958
      %v7247 = vmul.f32 %v7242, %v4959
      %v7248 = vmul.f32 %v7242, %v4960
      %v7249 = vmul.f32 %v7242, %v4961
      %v7250 = vmul.f32 %v7242, %v4962
      %v7251 = vmul.f32 %v7242, %v4963
      %v7252 = vmul.f32 %v7242, %v4964
      %v7253 = vmul.f32 %v7242, %v4965
      %v7254 = vmul.f32 %v7242, %v4966
      %v7255 = vmul.f32 %v7242, %v4967
      %v7256 = vmul.f32 %v7242, %v4968
      %v7257 = vmul.f32 %v7242, %v4969
      %v7258 = vmul.f32 %v7242, %v4970
      %v7259 = vmul.f32 %v7242, %v4971
      %v7260 = vmul.f32 %v7242, %v4972
      %v7261 = vmul.f32 %v7242, %v4973
      %v7262 = vmul.f32 %v7242, %v4974
      %v7263 = vadd.f32 %v7220, %v7243
      %v7264 = vadd.f32 %v7221, %v7244
      %v7265 = vadd.f32 %v7222, %v7245
      %v7266 = vadd.f32 %v7223, %v7246
      %v7267 = vadd.f32 %v7224, %v7247
      %v7268 = vadd.f32 %v7225, %v7248
      %v7269 = vadd.f32 %v7226, %v7249
      %v7270 = vadd.f32 %v7227, %v7250
      %v7271 = vadd.f32 %v7228, %v7251
      %v7272 = vadd.f32 %v7229, %v7252
      %v7273 = vadd.f32 %v7230, %v7253
      %v7274 = vadd.f32 %v7231, %v7254
      %v7275 = vadd.f32 %v7232, %v7255
      %v7276 = vadd.f32 %v7233, %v7256
      %v7277 = vadd.f32 %v7234, %v7257
      %v7278 = vadd.f32 %v7235, %v7258
      %v7279 = vadd.f32 %v7236, %v7259
      %v7280 = vadd.f32 %v7237, %v7260
      %v7281 = vadd.f32 %v7238, %v7261
      %v7282 = vadd.f32 %v7239, %v7262
      %s7283 = sld [smem:[#allocation9 + %s4976]]
      %v7284 = vstv %s7283
      %v7285 = vadd.f32 %v7263, %v7284
      %v7286 = vadd.f32 %v7264, %v7284
      %v7287 = vadd.f32 %v7265, %v7284
      %v7288 = vadd.f32 %v7266, %v7284
      %v7289 = vadd.f32 %v7267, %v7284
      %v7290 = vadd.f32 %v7268, %v7284
      %v7291 = vadd.f32 %v7269, %v7284
      %v7292 = vadd.f32 %v7270, %v7284
      %v7293 = vadd.f32 %v7271, %v7284
      %v7294 = vadd.f32 %v7272, %v7284
      %v7295 = vadd.f32 %v7273, %v7284
      %v7296 = vadd.f32 %v7274, %v7284
      %v7297 = vadd.f32 %v7275, %v7284
      %v7298 = vadd.f32 %v7276, %v7284
      %v7299 = vadd.f32 %v7277, %v7284
      %v7300 = vadd.f32 %v7278, %v7284
      %v7301 = vadd.f32 %v7279, %v7284
      %v7302 = vadd.f32 %v7280, %v7284
      %v7303 = vadd.f32 %v7281, %v7284
      %v7304 = vadd.f32 %v7282, %v7284
      %v7305 = vmax.f32 %v7285, 0.0
      %v7306 = vmax.f32 %v7286, 0.0
      %v7307 = vmax.f32 %v7287, 0.0
      %v7308 = vmax.f32 %v7288, 0.0
      %v7309 = vmax.f32 %v7289, 0.0
      %v7310 = vmax.f32 %v7290, 0.0
      %v7311 = vmax.f32 %v7291, 0.0
      %v7312 = vmax.f32 %v7292, 0.0
      %v7313 = vmax.f32 %v7293, 0.0
      %v7314 = vmax.f32 %v7294, 0.0
      %v7315 = vmax.f32 %v7295, 0.0
      %v7316 = vmax.f32 %v7296, 0.0
      %v7317 = vmax.f32 %v7297, 0.0
      %v7318 = vmax.f32 %v7298, 0.0
      %v7319 = vmax.f32 %v7299, 0.0
      %v7320 = vmax.f32 %v7300, 0.0
      %v7321 = vmax.f32 %v7301, 0.0
      %v7322 = vmax.f32 %v7302, 0.0
      %v7323 = vmax.f32 %v7303, 0.0
      %v7324 = vmax.f32 %v7304, 0.0
      %v7325 = vmax.f32 %v7305, %v7307
      %vm7326 = vcmask 1042432
      %v7327 = vsel %vm7326, %v7306, -inf
      %v7328 = vsel %vm7326, %v7308, -inf
      %v7329 = vmax.f32 %v7327, %v7328
      %v7330 = vmax.f32 %v7309, %v7311
      %v7331 = vsel %vm7326, %v7310, -inf
      %v7332 = vsel %vm7326, %v7312, -inf
      %v7333 = vmax.f32 %v7331, %v7332
      %v7334 = vmax.f32 %v7313, %v7315
      %v7335 = vsel %vm7326, %v7314, -inf
      %v7336 = vsel %vm7326, %v7316, -inf
      %v7337 = vmax.f32 %v7335, %v7336
      %v7338 = vmax.f32 %v7317, %v7319
      %v7339 = vsel %vm7326, %v7318, -inf
      %v7340 = vsel %vm7326, %v7320, -inf
      %v7341 = vmax.f32 %v7339, %v7340
      %v7342 = vmax.f32 %v7321, %v7323
      %v7343 = vsel %vm7326, %v7322, -inf
      %v7344 = vsel %vm7326, %v7324, -inf
      %v7345 = vmax.f32 %v7343, %v7344
      %vm7356 = vcmask 1046528
      %v7357 = vrot.slane %v7325, 1
      %v7358 = vrot.slane %v7329, 1
      %v7359 = vsel %vm7356, %v7357, %v7358
      %v7360 = vrot.slane %v7330, 1
      %v7361 = vrot.slane %v7333, 1
      %v7362 = vsel %vm7356, %v7360, %v7361
      %v7363 = vrot.slane %v7334, 1
      %v7364 = vrot.slane %v7337, 1
      %v7365 = vsel %vm7356, %v7363, %v7364
      %v7366 = vrot.slane %v7338, 1
      %v7367 = vrot.slane %v7341, 1
      %v7368 = vsel %vm7356, %v7366, %v7367
      %v7369 = vrot.slane %v7342, 1
      %v7370 = vrot.slane %v7345, 1
      %v7371 = vsel %vm7356, %v7369, %v7370
      %v7382 = vmax.f32 %v7325, %v7359
      %v7383 = vmax.f32 %v7329, %v7358
      %v7384 = vmax.f32 %v7330, %v7362
      %v7385 = vmax.f32 %v7333, %v7361
      %v7386 = vmax.f32 %v7334, %v7365
      %v7387 = vmax.f32 %v7337, %v7364
      %v7388 = vmax.f32 %v7338, %v7368
      %v7389 = vmax.f32 %v7341, %v7367
      %v7390 = vmax.f32 %v7342, %v7371
      %v7391 = vmax.f32 %v7345, %v7370
      %v7397 = vrot.slane %v7382, 1
      %v7398 = vrot.slane %v7384, 1
      %v7399 = vrot.slane %v7386, 1
      %v7400 = vrot.slane %v7388, 1
      %v7401 = vrot.slane %v7390, 1
      %v7407 = vrot.slane %v7382, 2
      %v7408 = vrot.slane %v7384, 2
      %v7409 = vrot.slane %v7386, 2
      %v7410 = vrot.slane %v7388, 2
      %v7411 = vrot.slane %v7390, 2
      %v7417 = vrot.slane %v7382, 3
      %v7418 = vrot.slane %v7384, 3
      %v7419 = vrot.slane %v7386, 3
      %v7420 = vrot.slane %v7388, 3
      %v7421 = vrot.slane %v7390, 3
      %v7432 = vrot.slane %v7383, 4
      %v7433 = vrot.slane %v7385, 4
      %v7434 = vrot.slane %v7387, 4
      %v7435 = vrot.slane %v7389, 4
      %v7436 = vrot.slane %v7391, 4
      %vm7442 = vcmask 1040384
      %v7443 = vsel %vm7442, %v7382, %v7397
      %v7444 = vsel %vm7442, %v7384, %v7398
      %v7445 = vsel %vm7442, %v7386, %v7399
      %v7446 = vsel %vm7442, %v7388, %v7400
      %v7447 = vsel %vm7442, %v7390, %v7401
      %vm7448 = vcmask 1041408
      %v7449 = vsel %vm7448, %v7443, %v7407
      %v7450 = vsel %vm7448, %v7444, %v7408
      %v7451 = vsel %vm7448, %v7445, %v7409
      %v7452 = vsel %vm7448, %v7446, %v7410
      %v7453 = vsel %vm7448, %v7447, %v7411
      %v7454 = vsel %vm7326, %v7449, %v7417
      %v7455 = vsel %vm7326, %v7450, %v7418
      %v7456 = vsel %vm7326, %v7451, %v7419
      %v7457 = vsel %vm7326, %v7452, %v7420
      %v7458 = vsel %vm7326, %v7453, %v7421
      %vm7459 = vcmask 1043456
      %v7460 = vsel %vm7459, %v7454, %v7432
      %v7461 = vsel %vm7459, %v7455, %v7433
      %v7462 = vsel %vm7459, %v7456, %v7434
      %v7463 = vsel %vm7459, %v7457, %v7435
      %v7464 = vsel %vm7459, %v7458, %v7436
      %v7466 = vrot.slane %v7461, 3
      %v7469 = vrot.slane %v7462, 6
      %v7472 = vrot.slane %v7463, 1
      %v7475 = vrot.slane %v7464, 4
      %vm7477 = vcmask 1044480
      %v7478 = vsel %vm7477, %v7460, %v7466
      %v7479 = vsel %vm7448, %v7466, %v7469
      %v7480 = vsel %vm7356, %v7479, %v7472
      %v7481 = vsel %vm7459, %v7472, %v7475
      %s7482 = smul.u32 %s4976, 32
      %s7483 = scalar_lea.vmem [#allocation3], %s7482
      %7484 = vst [vmem:[%s7483] sm:$0xff] %v7478
      %7485 = vst [vmem:[%s7483 + $0x8] sm:$0xff] %v7480
      %7486 = vst [vmem:[%s7483 + $0x10] sm:$0xff] %v7481
      %7487 = vst [vmem:[%s7483 + $0x18] sm:$0x1] %v7475
    $region73: #{forward.1} parent=1 // loop_footer
      %s4980 = sadd.s32 1, %s4976
    $region74: #{forward.1} parent=1 // loop_footer_branch
      %4975 = sbr.rel target = $region70
    $region75: #{forward.1} parent=1 // loop_exit
      _
    %v7488 = vld [vmem:[#allocation3] sm:$0xff]
    %v7489 = vld [vmem:[#allocation3 + $0x8] sm:$0xff]
    %v7490 = vld [vmem:[#allocation3 + $0x10] sm:$0xff]
    %v7491 = vld [vmem:[#allocation3 + $0x18] sm:$0x1]
    %s7492 = scalar_lea.vmem [#allocation3], 32
    %v7493 = vld [vmem:[%s7492] sm:$0xff]
    %v7494 = vld [vmem:[%s7492 + $0x8] sm:$0xff]
    %v7495 = vld [vmem:[%s7492 + $0x10] sm:$0xff]
    %v7496 = vld [vmem:[%s7492 + $0x18] sm:$0x1]
    %s7497 = scalar_lea.vmem [#allocation3], 64
    %v7498 = vld [vmem:[%s7497] sm:$0xff]
    %v7499 = vld [vmem:[%s7497 + $0x8] sm:$0xff]
    %v7500 = vld [vmem:[%s7497 + $0x10] sm:$0xff]
    %v7501 = vld [vmem:[%s7497 + $0x18] sm:$0x1]
    %s7502 = scalar_lea.vmem [#allocation3], 96
    %v7503 = vld [vmem:[%s7502] sm:$0xff]
    %v7504 = vld [vmem:[%s7502 + $0x8] sm:$0xff]
    %v7505 = vld [vmem:[%s7502 + $0x10] sm:$0xff]
    %v7506 = vld [vmem:[%s7502 + $0x18] sm:$0x1]
    %s7507 = scalar_lea.vmem [#allocation3], 128
    %v7508 = vld [vmem:[%s7507] sm:$0xff]
    %v7509 = vld [vmem:[%s7507 + $0x8] sm:$0xff]
    %v7510 = vld [vmem:[%s7507 + $0x10] sm:$0xff]
    %v7511 = vld [vmem:[%s7507 + $0x18] sm:$0x1]
    %s7512 = scalar_lea.vmem [#allocation3], 160
    %v7513 = vld [vmem:[%s7512] sm:$0xff]
    %v7514 = vld [vmem:[%s7512 + $0x8] sm:$0xff]
    %v7515 = vld [vmem:[%s7512 + $0x10] sm:$0xff]
    %v7516 = vld [vmem:[%s7512 + $0x18] sm:$0x1]
    %s7517 = scalar_lea.vmem [#allocation3], 192
    %v7518 = vld [vmem:[%s7517] sm:$0xff]
    %v7519 = vld [vmem:[%s7517 + $0x8] sm:$0xff]
    %v7520 = vld [vmem:[%s7517 + $0x10] sm:$0xff]
    %v7521 = vld [vmem:[%s7517 + $0x18] sm:$0x1]
    %s7522 = scalar_lea.vmem [#allocation3], 224
    %v7523 = vld [vmem:[%s7522] sm:$0xff]
    %v7524 = vld [vmem:[%s7522 + $0x8] sm:$0xff]
    %v7525 = vld [vmem:[%s7522 + $0x10] sm:$0xff]
    %v7526 = vld [vmem:[%s7522 + $0x18] sm:$0x1]
    %s7527 = scalar_lea.vmem [#allocation3], 256
    %v7528 = vld [vmem:[%s7527] sm:$0xff]
    %v7529 = vld [vmem:[%s7527 + $0x8] sm:$0xff]
    %v7530 = vld [vmem:[%s7527 + $0x10] sm:$0xff]
    %v7531 = vld [vmem:[%s7527 + $0x18] sm:$0x1]
    %s7532 = scalar_lea.vmem [#allocation3], 288
    %v7533 = vld [vmem:[%s7532] sm:$0xff]
    %v7534 = vld [vmem:[%s7532 + $0x8] sm:$0xff]
    %v7535 = vld [vmem:[%s7532 + $0x10] sm:$0xff]
    %v7536 = vld [vmem:[%s7532 + $0x18] sm:$0x1]
    %s7537 = scalar_lea.vmem [#allocation3], 320
    %v7538 = vld [vmem:[%s7537] sm:$0xff]
    %v7539 = vld [vmem:[%s7537 + $0x8] sm:$0xff]
    %v7540 = vld [vmem:[%s7537 + $0x10] sm:$0xff]
    %v7541 = vld [vmem:[%s7537 + $0x18] sm:$0x1]
    %s7542 = scalar_lea.vmem [#allocation3], 352
    %v7543 = vld [vmem:[%s7542] sm:$0xff]
    %v7544 = vld [vmem:[%s7542 + $0x8] sm:$0xff]
    %v7545 = vld [vmem:[%s7542 + $0x10] sm:$0xff]
    %v7546 = vld [vmem:[%s7542 + $0x18] sm:$0x1]
    %s7547 = scalar_lea.vmem [#allocation3], 384
    %v7548 = vld [vmem:[%s7547] sm:$0xff]
    %v7549 = vld [vmem:[%s7547 + $0x8] sm:$0xff]
    %v7550 = vld [vmem:[%s7547 + $0x10] sm:$0xff]
    %v7551 = vld [vmem:[%s7547 + $0x18] sm:$0x1]
    %s7552 = scalar_lea.vmem [#allocation3], 416
    %v7553 = vld [vmem:[%s7552] sm:$0xff]
    %v7554 = vld [vmem:[%s7552 + $0x8] sm:$0xff]
    %v7555 = vld [vmem:[%s7552 + $0x10] sm:$0xff]
    %v7556 = vld [vmem:[%s7552 + $0x18] sm:$0x1]
    %s7557 = scalar_lea.vmem [#allocation3], 448
    %v7558 = vld [vmem:[%s7557] sm:$0xff]
    %v7559 = vld [vmem:[%s7557 + $0x8] sm:$0xff]
    %v7560 = vld [vmem:[%s7557 + $0x10] sm:$0xff]
    %v7561 = vld [vmem:[%s7557 + $0x18] sm:$0x1]
    %s7562 = scalar_lea.vmem [#allocation3], 480
    %v7563 = vld [vmem:[%s7562] sm:$0xff]
    %v7564 = vld [vmem:[%s7562 + $0x8] sm:$0xff]
    %v7565 = vld [vmem:[%s7562 + $0x10] sm:$0xff]
    %v7566 = vld [vmem:[%s7562 + $0x18] sm:$0x1]
    %vm7571 = vcmask 1040384
    %v7572 = vrot.slane %v7493, 7
    %v7573 = vrot.slane %v7494, 7
    %v7574 = vsel %vm7571, %v7572, %v7573
    %v7575 = vrot.slane %v7495, 7
    %v7576 = vsel %vm7571, %v7573, %v7575
    %v7577 = vrot.slane %v7496, 7
    %v7578 = vsel %vm7571, %v7575, %v7577
    %vm7587 = vcmask 1041408
    %v7588 = vrot.slane %v7498, 6
    %v7589 = vrot.slane %v7499, 6
    %v7590 = vsel %vm7587, %v7588, %v7589
    %v7591 = vrot.slane %v7500, 6
    %v7592 = vsel %vm7587, %v7589, %v7591
    %v7593 = vrot.slane %v7501, 6
    %v7594 = vsel %vm7587, %v7591, %v7593
    %vm7603 = vcmask 1042432
    %v7604 = vrot.slane %v7503, 5
    %v7605 = vrot.slane %v7504, 5
    %v7606 = vsel %vm7603, %v7604, %v7605
    %v7607 = vrot.slane %v7505, 5
    %v7608 = vsel %vm7603, %v7605, %v7607
    %v7609 = vrot.slane %v7506, 5
    %v7610 = vsel %vm7603, %v7607, %v7609
    %vm7619 = vcmask 1043456
    %v7620 = vrot.slane %v7508, 4
    %v7621 = vrot.slane %v7509, 4
    %v7622 = vsel %vm7619, %v7620, %v7621
    %v7623 = vrot.slane %v7510, 4
    %v7624 = vsel %vm7619, %v7621, %v7623
    %v7625 = vrot.slane %v7511, 4
    %v7626 = vsel %vm7619, %v7623, %v7625
    %vm7635 = vcmask 1044480
    %v7636 = vrot.slane %v7513, 3
    %v7637 = vrot.slane %v7514, 3
    %v7638 = vsel %vm7635, %v7636, %v7637
    %v7639 = vrot.slane %v7515, 3
    %v7640 = vsel %vm7635, %v7637, %v7639
    %v7641 = vrot.slane %v7516, 3
    %v7642 = vsel %vm7635, %v7639, %v7641
    %vm7651 = vcmask 1045504
    %v7652 = vrot.slane %v7518, 2
    %v7653 = vrot.slane %v7519, 2
    %v7654 = vsel %vm7651, %v7652, %v7653
    %v7655 = vrot.slane %v7520, 2
    %v7656 = vsel %vm7651, %v7653, %v7655
    %v7657 = vrot.slane %v7521, 2
    %v7658 = vsel %vm7651, %v7655, %v7657
    %vm7667 = vcmask 1046528
    %v7668 = vrot.slane %v7523, 1
    %v7669 = vrot.slane %v7524, 1
    %v7670 = vsel %vm7667, %v7668, %v7669
    %v7671 = vrot.slane %v7525, 1
    %v7672 = vsel %vm7667, %v7669, %v7671
    %v7673 = vrot.slane %v7526, 1
    %v7674 = vsel %vm7667, %v7671, %v7673
    %v7683 = vrot.slane %v7533, 7
    %v7684 = vrot.slane %v7534, 7
    %v7685 = vsel %vm7571, %v7683, %v7684
    %v7686 = vrot.slane %v7535, 7
    %v7687 = vsel %vm7571, %v7684, %v7686
    %v7688 = vrot.slane %v7536, 7
    %v7689 = vsel %vm7571, %v7686, %v7688
    %v7698 = vrot.slane %v7538, 6
    %v7699 = vrot.slane %v7539, 6
    %v7700 = vsel %vm7587, %v7698, %v7699
    %v7701 = vrot.slane %v7540, 6
    %v7702 = vsel %vm7587, %v7699, %v7701
    %v7703 = vrot.slane %v7541, 6
    %v7704 = vsel %vm7587, %v7701, %v7703
    %v7713 = vrot.slane %v7543, 5
    %v7714 = vrot.slane %v7544, 5
    %v7715 = vsel %vm7603, %v7713, %v7714
    %v7716 = vrot.slane %v7545, 5
    %v7717 = vsel %vm7603, %v7714, %v7716
    %v7718 = vrot.slane %v7546, 5
    %v7719 = vsel %vm7603, %v7716, %v7718
    %v7728 = vrot.slane %v7548, 4
    %v7729 = vrot.slane %v7549, 4
    %v7730 = vsel %vm7619, %v7728, %v7729
    %v7731 = vrot.slane %v7550, 4
    %v7732 = vsel %vm7619, %v7729, %v7731
    %v7733 = vrot.slane %v7551, 4
    %v7734 = vsel %vm7619, %v7731, %v7733
    %v7743 = vrot.slane %v7553, 3
    %v7744 = vrot.slane %v7554, 3
    %v7745 = vsel %vm7635, %v7743, %v7744
    %v7746 = vrot.slane %v7555, 3
    %v7747 = vsel %vm7635, %v7744, %v7746
    %v7748 = vrot.slane %v7556, 3
    %v7749 = vsel %vm7635, %v7746, %v7748
    %v7758 = vrot.slane %v7558, 2
    %v7759 = vrot.slane %v7559, 2
    %v7760 = vsel %vm7651, %v7758, %v7759
    %v7761 = vrot.slane %v7560, 2
    %v7762 = vsel %vm7651, %v7759, %v7761
    %v7763 = vrot.slane %v7561, 2
    %v7764 = vsel %vm7651, %v7761, %v7763
    %v7773 = vrot.slane %v7563, 1
    %v7774 = vrot.slane %v7564, 1
    %v7775 = vsel %vm7667, %v7773, %v7774
    %v7776 = vrot.slane %v7565, 1
    %v7777 = vsel %vm7667, %v7774, %v7776
    %v7778 = vrot.slane %v7566, 1
    %v7779 = vsel %vm7667, %v7776, %v7778
    %v7784 = vsel %vm7571, %v7491, %v7572
    %v7785 = vsel %vm7587, %v7578, %v7588
    %v7786 = vsel %vm7603, %v7594, %v7604
    %v7787 = vsel %vm7619, %v7610, %v7620
    %v7788 = vsel %vm7635, %v7626, %v7636
    %v7789 = vsel %vm7651, %v7642, %v7652
    %v7790 = vsel %vm7667, %v7658, %v7668
    %v7791 = vsel %vm7571, %v7531, %v7683
    %v7792 = vsel %vm7587, %v7689, %v7698
    %v7793 = vsel %vm7603, %v7704, %v7713
    %v7794 = vsel %vm7619, %v7719, %v7728
    %v7795 = vsel %vm7635, %v7734, %v7743
    %v7796 = vsel %vm7651, %v7749, %v7758
    %v7797 = vsel %vm7667, %v7764, %v7773
    %v7798 = vld [vmem:[%s5] sm:$0xff]
    %v7799 = vld [vmem:[%s5 + $0x8] sm:$0xff]
    %v7800 = vld [vmem:[%s5 + $0x10] sm:$0xff]
    %v7801 = vld [vmem:[%s5 + $0x18] sm:$0xff]
    %v7802 = vld [vmem:[%s5 + $0x20] sm:$0xff]
    %v7803 = vld [vmem:[%s5 + $0x28] sm:$0xff]
    %v7804 = vld [vmem:[%s5 + $0x30] sm:$0xff]
    %v7805 = vld [vmem:[%s5 + $0x38] sm:$0xff]
    %v7806 = vld [vmem:[%s5 + $0x40] sm:$0xff]
    %v7807 = vld [vmem:[%s5 + $0x48] sm:$0xff]
    %v7808 = vld [vmem:[%s5 + $0x50] sm:$0xff]
    %v7809 = vld [vmem:[%s5 + $0x58] sm:$0xff]
    %v7810 = vld [vmem:[%s5 + $0x60] sm:$0xff]
    %v7811 = vld [vmem:[%s5 + $0x68] sm:$0xff]
    %v7812 = vld [vmem:[%s5 + $0x70] sm:$0xff]
    %v7813 = vld [vmem:[%s5 + $0x78] sm:$0xff]
    %v7814 = vld [vmem:[%s5 + $0x80] sm:$0xff]
    %v7815 = vld [vmem:[%s5 + $0x88] sm:$0xff]
    %v7816 = vld [vmem:[%s5 + $0x90] sm:$0xff]
    %v7817 = vld [vmem:[%s5 + $0x98] sm:$0xff]
    %v7818 = vld [vmem:[%s5 + $0xa0] sm:$0xff]
    %v7819 = vld [vmem:[%s5 + $0xa8] sm:$0xff]
    %v7820 = vld [vmem:[%s5 + $0xb0] sm:$0xff]
    %v7821 = vld [vmem:[%s5 + $0xb8] sm:$0xff]
    %v7822 = vld [vmem:[%s5 + $0xc0] sm:$0xff]
    %v7823 = vld [vmem:[%s5 + $0xc8] sm:$0xff]
    %v7824 = vld [vmem:[%s5 + $0xd0] sm:$0xff]
    %v7825 = vld [vmem:[%s5 + $0xd8] sm:$0xff]
    %v7826 = vld [vmem:[%s5 + $0xe0] sm:$0xff]
    %v7827 = vld [vmem:[%s5 + $0xe8] sm:$0xff]
    %v7828 = vld [vmem:[%s5 + $0xf0] sm:$0xff]
    %v7829 = vld [vmem:[%s5 + $0xf8] sm:$0xff]
    %v7830 = vld [vmem:[%s5 + $0x100] sm:$0xff]
    %v7831 = vld [vmem:[%s5 + $0x108] sm:$0xff]
    %v7832 = vld [vmem:[%s5 + $0x110] sm:$0xff]
    %v7833 = vld [vmem:[%s5 + $0x118] sm:$0xff]
    %v7834 = vld [vmem:[%s5 + $0x120] sm:$0xff]
    %v7835 = vld [vmem:[%s5 + $0x128] sm:$0xff]
    %v7836 = vld [vmem:[%s5 + $0x130] sm:$0xff]
    %v7837 = vld [vmem:[%s5 + $0x138] sm:$0xff]
    %v7838 = vld [vmem:[%s5 + $0x140] sm:$0xff]
    %v7839 = vld [vmem:[%s5 + $0x148] sm:$0xff]
    %v7840 = vld [vmem:[%s5 + $0x150] sm:$0xff]
    %v7841 = vld [vmem:[%s5 + $0x158] sm:$0xff]
    %v7842 = vld [vmem:[%s5 + $0x160] sm:$0xff]
    %v7843 = vld [vmem:[%s5 + $0x168] sm:$0xff]
    %v7844 = vld [vmem:[%s5 + $0x170] sm:$0xff]
    %v7845 = vld [vmem:[%s5 + $0x178] sm:$0xff]
    %v7846 = vld [vmem:[%s5 + $0x180] sm:$0xff]
    %v7847 = vld [vmem:[%s5 + $0x188] sm:$0xff]
    %v7848 = vld [vmem:[%s5 + $0x190] sm:$0xff]
    %v7849 = vld [vmem:[%s5 + $0x198] sm:$0xff]
    %v7850 = vld [vmem:[%s5 + $0x1a0] sm:$0xff]
    %v7851 = vld [vmem:[%s5 + $0x1a8] sm:$0xff]
    %v7852 = vld [vmem:[%s5 + $0x1b0] sm:$0xff]
    %v7853 = vld [vmem:[%s5 + $0x1b8] sm:$0xff]
    %v7854 = vld [vmem:[%s5 + $0x1c0] sm:$0xff]
    %v7855 = vld [vmem:[%s5 + $0x1c8] sm:$0xff]
    %v7856 = vld [vmem:[%s5 + $0x1d0] sm:$0xff]
    %v7857 = vld [vmem:[%s5 + $0x1d8] sm:$0xff]
    %v7858 = vld [vmem:[%s6] sm:$0xff]
    %v7859 = vld [vmem:[%s6 + $0x8] sm:$0xff]
    %v7860 = vld [vmem:[%s6 + $0x10] sm:$0xff]
    %v7861 = vld [vmem:[%s6 + $0x18] sm:$0xff]
    %v7862 = vld [vmem:[%s6 + $0x20] sm:$0xff]
    %v7863 = vld [vmem:[%s6 + $0x28] sm:$0xff]
    %v7864 = vld [vmem:[%s6 + $0x30] sm:$0xff]
    %v7865 = vld [vmem:[%s6 + $0x38] sm:$0xff]
    %v7866 = vld [vmem:[%s6 + $0x40] sm:$0xff]
    %v7867 = vld [vmem:[%s6 + $0x48] sm:$0xff]
    %v7868 = vld [vmem:[%s6 + $0x50] sm:$0xff]
    %v7869 = vld [vmem:[%s6 + $0x58] sm:$0xff]
    %v7870 = vld [vmem:[%s6 + $0x60] sm:$0xff]
    %v7871 = vld [vmem:[%s6 + $0x68] sm:$0xff]
    %v7872 = vld [vmem:[%s6 + $0x70] sm:$0xff]
    %7874 = vset.pattern.permute.xlu0 0
    %7875 = vperm.xlu0 %7874, %v7858
    %v7876 = vpop.permute.xlu0 %7875
    %7879 = vset.pattern.permute.xlu0 0
    %7880 = vperm.xlu0 %7879, %v7859
    %v7881 = vpop.permute.xlu0 %7880
    %7884 = vset.pattern.permute.xlu0 0
    %7885 = vperm.xlu0 %7884, %v7860
    %v7886 = vpop.permute.xlu0 %7885
    %7889 = vset.pattern.permute.xlu0 0
    %7890 = vperm.xlu0 %7889, %v7861
    %v7891 = vpop.permute.xlu0 %7890
    %7894 = vset.pattern.permute.xlu0 0
    %7895 = vperm.xlu0 %7894, %v7862
    %v7896 = vpop.permute.xlu0 %7895
    %7899 = vset.pattern.permute.xlu0 0
    %7900 = vperm.xlu0 %7899, %v7863
    %v7901 = vpop.permute.xlu0 %7900
    %7904 = vset.pattern.permute.xlu0 0
    %7905 = vperm.xlu0 %7904, %v7864
    %v7906 = vpop.permute.xlu0 %7905
    %7909 = vset.pattern.permute.xlu0 0
    %7910 = vperm.xlu0 %7909, %v7865
    %v7911 = vpop.permute.xlu0 %7910
    %7914 = vset.pattern.permute.xlu0 0
    %7915 = vperm.xlu0 %7914, %v7866
    %v7916 = vpop.permute.xlu0 %7915
    %7919 = vset.pattern.permute.xlu0 0
    %7920 = vperm.xlu0 %7919, %v7867
    %v7921 = vpop.permute.xlu0 %7920
    %7924 = vset.pattern.permute.xlu0 0
    %7925 = vperm.xlu0 %7924, %v7868
    %v7926 = vpop.permute.xlu0 %7925
    %7929 = vset.pattern.permute.xlu0 0
    %7930 = vperm.xlu0 %7929, %v7869
    %v7931 = vpop.permute.xlu0 %7930
    %7934 = vset.pattern.permute.xlu0 0
    %7935 = vperm.xlu0 %7934, %v7870
    %v7936 = vpop.permute.xlu0 %7935
    %7939 = vset.pattern.permute.xlu0 0
    %7940 = vperm.xlu0 %7939, %v7871
    %v7941 = vpop.permute.xlu0 %7940
    %7944 = vset.pattern.permute.xlu0 0
    %7945 = vperm.xlu0 %7944, %v7872
    %v7946 = vpop.permute.xlu0 %7945
    %vm7948 = vcmask 130048
    %v7950 = vsel %vm7948, %v7801, 0
    %v7953 = vsel %vm7948, %v7805, 0
    %v7956 = vsel %vm7948, %v7809, 0
    %v7959 = vsel %vm7948, %v7813, 0
    %v7962 = vsel %vm7948, %v7817, 0
    %v7965 = vsel %vm7948, %v7821, 0
    %v7968 = vsel %vm7948, %v7825, 0
    %v7971 = vsel %vm7948, %v7829, 0
    %v7974 = vsel %vm7948, %v7833, 0
    %v7977 = vsel %vm7948, %v7837, 0
    %v7980 = vsel %vm7948, %v7841, 0
    %v7983 = vsel %vm7948, %v7845, 0
    %v7986 = vsel %vm7948, %v7849, 0
    %v7989 = vsel %vm7948, %v7853, 0
    %v7992 = vsel %vm7948, %v7857, 0
    %7994 = vmatprep.subr.mxu0 0.0
    %7995 = vmatpush1.msra.mxu0 %v7788
    %7996 = vmatprep.subr.mxu0 0.0
    %7997 = vmatpush1.msra.mxu0 %v7624
    %7998 = vmatprep.subr.mxu0 0.0
    %7999 = vmatpush1.msra.mxu0 %v7622
    %8000 = vmatprep.subr.mxu0 0.0
    %8001 = vmatpush1.msra.mxu0 %v7787
    %8002 = vmatprep.subr.mxu0 0.0
    %8003 = vmatpush1.msra.mxu0 %v7608
    %8004 = vmatprep.subr.mxu0 0.0
    %8005 = vmatpush1.msra.mxu0 %v7606
    %8006 = vmatprep.subr.mxu0 0.0
    %8007 = vmatpush1.msra.mxu0 %v7786
    %8008 = vmatprep.subr.mxu0 0.0
    %8009 = vmatpush1.msra.mxu0 %v7592
    %8010 = vmatprep.subr.mxu0 0.0
    %8011 = vmatpush1.msra.mxu0 %v7590
    %8012 = vmatprep.subr.mxu0 0.0
    %8013 = vmatpush1.msra.mxu0 %v7785
    %8014 = vmatprep.subr.mxu0 0.0
    %8015 = vmatpush1.msra.mxu0 %v7576
    %8016 = vmatprep.subr.mxu0 0.0
    %8017 = vmatpush1.msra.mxu0 %v7574
    %8018 = vmatprep.subr.mxu0 0.0
    %8019 = vmatpush1.msra.mxu0 %v7784
    %8020 = vmatprep.subr.mxu0 0.0
    %8021 = vmatpush1.msra.mxu0 %v7490
    %8022 = vmatprep.subr.mxu0 0.0
    %8023 = vmatpush1.msra.mxu0 %v7489
    %8024 = vmatprep.subr.mxu0 0.0
    %8025 = vmatpush1.msra.mxu0 %v7488
    %8026 = vmatprep.subr.mxu0 0.0
    %8027 = vmatpush2.msra.mxu0 %v7792
    %8028 = vmatprep.subr.mxu0 0.0
    %8029 = vmatpush2.msra.mxu0 %v7687
    %8030 = vmatprep.subr.mxu0 0.0
    %8031 = vmatpush2.msra.mxu0 %v7685
    %8032 = vmatprep.subr.mxu0 0.0
    %8033 = vmatpush2.msra.mxu0 %v7791
    %8034 = vmatprep.subr.mxu0 0.0
    %8035 = vmatpush2.msra.mxu0 %v7530
    %8036 = vmatprep.subr.mxu0 0.0
    %8037 = vmatpush2.msra.mxu0 %v7529
    %8038 = vmatprep.subr.mxu0 0.0
    %8039 = vmatpush2.msra.mxu0 %v7528
    %8040 = vmatprep.subr.mxu0 0.0
    %8041 = vmatpush2.msra.mxu0 %v7674
    %8042 = vmatprep.subr.mxu0 0.0
    %8043 = vmatpush2.msra.mxu0 %v7672
    %8044 = vmatprep.subr.mxu0 0.0
    %8045 = vmatpush2.msra.mxu0 %v7670
    %8046 = vmatprep.subr.mxu0 0.0
    %8047 = vmatpush2.msra.mxu0 %v7790
    %8048 = vmatprep.subr.mxu0 0.0
    %8049 = vmatpush2.msra.mxu0 %v7656
    %8050 = vmatprep.subr.mxu0 0.0
    %8051 = vmatpush2.msra.mxu0 %v7654
    %8052 = vmatprep.subr.mxu0 0.0
    %8053 = vmatpush2.msra.mxu0 %v7789
    %8054 = vmatprep.subr.mxu0 0.0
    %8055 = vmatpush2.msra.mxu0 %v7640
    %8056 = vmatprep.subr.mxu0 0.0
    %8057 = vmatpush2.msra.mxu0 %v7638
    %8058 = vmatprep.mubr.f32.mxu0 %v7799
    %8059 = vmatmul.mubr.f32.gmra.mxu0 %v7798
    %v8060 = vpop.f32.mrf.mxu0
    %v8061 = vadd.f32 %v7876, %v8060
    %v8062 = vpop.f32.mrf.mxu0
    %8063 = vmatprep.mubr.f32.mxu0 %v7803
    %8064 = vmatmul.mubr.f32.gmra.mxu0 %v7802
    %v8065 = vpop.f32.mrf.mxu0
    %v8066 = vadd.f32 %v7881, %v8065
    %v8067 = vpop.f32.mrf.mxu0
    %8068 = vmatprep.mubr.f32.mxu0 %v7807
    %8069 = vmatmul.mubr.f32.gmra.mxu0 %v7806
    %v8070 = vpop.f32.mrf.mxu0
    %v8071 = vadd.f32 %v7886, %v8070
    %v8072 = vpop.f32.mrf.mxu0
    %8073 = vmatprep.mubr.f32.mxu0 %v7811
    %8074 = vmatmul.mubr.f32.gmra.mxu0 %v7810
    %v8075 = vpop.f32.mrf.mxu0
    %v8076 = vadd.f32 %v7891, %v8075
    %v8077 = vpop.f32.mrf.mxu0
    %8078 = vmatprep.mubr.f32.mxu0 %v7815
    %8079 = vmatmul.mubr.f32.gmra.mxu0 %v7814
    %v8080 = vpop.f32.mrf.mxu0
    %v8081 = vadd.f32 %v7896, %v8080
    %v8082 = vpop.f32.mrf.mxu0
    %8083 = vmatprep.mubr.f32.mxu0 %v7819
    %8084 = vmatmul.mubr.f32.gmra.mxu0 %v7818
    %v8085 = vpop.f32.mrf.mxu0
    %v8086 = vadd.f32 %v7901, %v8085
    %v8087 = vpop.f32.mrf.mxu0
    %8088 = vmatprep.mubr.f32.mxu0 %v7823
    %8089 = vmatmul.mubr.f32.gmra.mxu0 %v7822
    %v8090 = vpop.f32.mrf.mxu0
    %v8091 = vadd.f32 %v7906, %v8090
    %v8092 = vpop.f32.mrf.mxu0
    %8093 = vmatprep.mubr.f32.mxu0 %v7827
    %8094 = vmatmul.mubr.f32.gmra.mxu0 %v7826
    %v8095 = vpop.f32.mrf.mxu0
    %v8096 = vadd.f32 %v7911, %v8095
    %v8097 = vpop.f32.mrf.mxu0
    %8098 = vmatprep.mubr.f32.mxu0 %v7831
    %8099 = vmatmul.mubr.f32.gmra.mxu0 %v7830
    %v8100 = vpop.f32.mrf.mxu0
    %v8101 = vadd.f32 %v7916, %v8100
    %v8102 = vpop.f32.mrf.mxu0
    %8103 = vmatprep.mubr.f32.mxu0 %v7835
    %8104 = vmatmul.mubr.f32.gmra.mxu0 %v7834
    %v8105 = vpop.f32.mrf.mxu0
    %v8106 = vadd.f32 %v7921, %v8105
    %v8107 = vpop.f32.mrf.mxu0
    %8108 = vmatprep.mubr.f32.mxu0 %v7839
    %8109 = vmatmul.mubr.f32.gmra.mxu0 %v7838
    %v8110 = vpop.f32.mrf.mxu0
    %v8111 = vadd.f32 %v7926, %v8110
    %v8112 = vpop.f32.mrf.mxu0
    %8113 = vmatprep.mubr.f32.mxu0 %v7843
    %8114 = vmatmul.mubr.f32.gmra.mxu0 %v7842
    %v8115 = vpop.f32.mrf.mxu0
    %v8116 = vadd.f32 %v7931, %v8115
    %v8117 = vpop.f32.mrf.mxu0
    %8118 = vmatprep.mubr.f32.mxu0 %v7847
    %8119 = vmatmul.mubr.f32.gmra.mxu0 %v7846
    %v8120 = vpop.f32.mrf.mxu0
    %v8121 = vadd.f32 %v7936, %v8120
    %v8122 = vpop.f32.mrf.mxu0
    %8123 = vmatprep.mubr.f32.mxu0 %v7851
    %8124 = vmatmul.mubr.f32.gmra.mxu0 %v7850
    %v8125 = vpop.f32.mrf.mxu0
    %v8126 = vadd.f32 %v7941, %v8125
    %v8127 = vpop.f32.mrf.mxu0
    %8128 = vmatprep.mubr.f32.mxu0 %v7855
    %8129 = vmatmul.mubr.f32.gmra.mxu0 %v7854
    %v8130 = vpop.f32.mrf.mxu0
    %v8131 = vadd.f32 %v7946, %v8130
    %v8132 = vpop.f32.mrf.mxu0
    %8133 = vdwg.mxu0
    %8134 = vmatprep.subr.mxu0 0.0
    %8135 = vmatpush1.msra.mxu0 %v7775
    %8136 = vmatprep.subr.mxu0 0.0
    %8137 = vmatpush1.msra.mxu0 %v7797
    %8138 = vmatprep.subr.mxu0 0.0
    %8139 = vmatpush1.msra.mxu0 %v7762
    %8140 = vmatprep.subr.mxu0 0.0
    %8141 = vmatpush1.msra.mxu0 %v7760
    %8142 = vmatprep.subr.mxu0 0.0
    %8143 = vmatpush1.msra.mxu0 %v7796
    %8144 = vmatprep.subr.mxu0 0.0
    %8145 = vmatpush1.msra.mxu0 %v7747
    %8146 = vmatprep.subr.mxu0 0.0
    %8147 = vmatpush1.msra.mxu0 %v7745
    %8148 = vmatprep.subr.mxu0 0.0
    %8149 = vmatpush1.msra.mxu0 %v7795
    %8150 = vmatprep.subr.mxu0 0.0
    %8151 = vmatpush1.msra.mxu0 %v7732
    %8152 = vmatprep.subr.mxu0 0.0
    %8153 = vmatpush1.msra.mxu0 %v7730
    %8154 = vmatprep.subr.mxu0 0.0
    %8155 = vmatpush1.msra.mxu0 %v7794
    %8156 = vmatprep.subr.mxu0 0.0
    %8157 = vmatpush1.msra.mxu0 %v7717
    %8158 = vmatprep.subr.mxu0 0.0
    %8159 = vmatpush1.msra.mxu0 %v7715
    %8160 = vmatprep.subr.mxu0 0.0
    %8161 = vmatpush1.msra.mxu0 %v7793
    %8162 = vmatprep.subr.mxu0 0.0
    %8163 = vmatpush1.msra.mxu0 %v7702
    %8164 = vmatprep.subr.mxu0 0.0
    %8165 = vmatpush1.msra.mxu0 %v7700
    %8166 = vmatprep.subr.mxu0 0.0
    %8167 = vmatpush2.msra.mxu0 0.0
    %8168 = vmatprep.subr.mxu0 0.0
    %8169 = vmatpush2.msra.mxu0 0.0
    %8170 = vmatprep.subr.mxu0 0.0
    %8171 = vmatpush2.msra.mxu0 0.0
    %8172 = vmatprep.subr.mxu0 0.0
    %8173 = vmatpush2.msra.mxu0 0.0
    %8174 = vmatprep.subr.mxu0 0.0
    %8175 = vmatpush2.msra.mxu0 0.0
    %8176 = vmatprep.subr.mxu0 0.0
    %8177 = vmatpush2.msra.mxu0 0.0
    %8178 = vmatprep.subr.mxu0 0.0
    %8179 = vmatpush2.msra.mxu0 0.0
    %8180 = vmatprep.subr.mxu0 0.0
    %8181 = vmatpush2.msra.mxu0 0.0
    %8182 = vmatprep.subr.mxu0 0.0
    %8183 = vmatpush2.msra.mxu0 0.0
    %8184 = vmatprep.subr.mxu0 0.0
    %8185 = vmatpush2.msra.mxu0 0.0
    %8186 = vmatprep.subr.mxu0 0.0
    %8187 = vmatpush2.msra.mxu0 0.0
    %8188 = vmatprep.subr.mxu0 0.0
    %8189 = vmatpush2.msra.mxu0 0.0
    %8190 = vmatprep.subr.mxu0 0.0
    %8191 = vmatpush2.msra.mxu0 0.0
    %8192 = vmatprep.subr.mxu0 0.0
    %8193 = vmatpush2.msra.mxu0 0.0
    %8194 = vmatprep.subr.mxu0 0.0
    %8195 = vmatpush2.msra.mxu0 %v7779
    %8196 = vmatprep.subr.mxu0 0.0
    %8197 = vmatpush2.msra.mxu0 %v7777
    %8198 = vmatprep.mubr.f32.mxu0 %v7950
    %8199 = vmatmul.mubr.f32.gmra.mxu0 %v7800
    %v8200 = vpop.f32.mrf.mxu0
    %v8201 = vadd.f32 %v8061, %v8200
    %v8202 = vpop.f32.mrf.mxu0
    %8203 = vmatprep.mubr.f32.mxu0 %v7953
    %8204 = vmatmul.mubr.f32.gmra.mxu0 %v7804
    %v8205 = vpop.f32.mrf.mxu0
    %v8206 = vadd.f32 %v8066, %v8205
    %v8207 = vpop.f32.mrf.mxu0
    %8208 = vmatprep.mubr.f32.mxu0 %v7956
    %8209 = vmatmul.mubr.f32.gmra.mxu0 %v7808
    %v8210 = vpop.f32.mrf.mxu0
    %v8211 = vadd.f32 %v8071, %v8210
    %v8212 = vpop.f32.mrf.mxu0
    %8213 = vmatprep.mubr.f32.mxu0 %v7959
    %8214 = vmatmul.mubr.f32.gmra.mxu0 %v7812
    %v8215 = vpop.f32.mrf.mxu0
    %v8216 = vadd.f32 %v8076, %v8215
    %v8217 = vpop.f32.mrf.mxu0
    %8218 = vmatprep.mubr.f32.mxu0 %v7962
    %8219 = vmatmul.mubr.f32.gmra.mxu0 %v7816
    %v8220 = vpop.f32.mrf.mxu0
    %v8221 = vadd.f32 %v8081, %v8220
    %v8222 = vpop.f32.mrf.mxu0
    %8223 = vmatprep.mubr.f32.mxu0 %v7965
    %8224 = vmatmul.mubr.f32.gmra.mxu0 %v7820
    %v8225 = vpop.f32.mrf.mxu0
    %v8226 = vadd.f32 %v8086, %v8225
    %v8227 = vpop.f32.mrf.mxu0
    %8228 = vmatprep.mubr.f32.mxu0 %v7968
    %8229 = vmatmul.mubr.f32.gmra.mxu0 %v7824
    %v8230 = vpop.f32.mrf.mxu0
    %v8231 = vadd.f32 %v8091, %v8230
    %v8232 = vpop.f32.mrf.mxu0
    %8233 = vmatprep.mubr.f32.mxu0 %v7971
    %8234 = vmatmul.mubr.f32.gmra.mxu0 %v7828
    %v8235 = vpop.f32.mrf.mxu0
    %v8236 = vadd.f32 %v8096, %v8235
    %v8237 = vpop.f32.mrf.mxu0
    %8238 = vmatprep.mubr.f32.mxu0 %v7974
    %8239 = vmatmul.mubr.f32.gmra.mxu0 %v7832
    %v8240 = vpop.f32.mrf.mxu0
    %v8241 = vadd.f32 %v8101, %v8240
    %v8242 = vpop.f32.mrf.mxu0
    %8243 = vmatprep.mubr.f32.mxu0 %v7977
    %8244 = vmatmul.mubr.f32.gmra.mxu0 %v7836
    %v8245 = vpop.f32.mrf.mxu0
    %v8246 = vadd.f32 %v8106, %v8245
    %v8247 = vpop.f32.mrf.mxu0
    %8248 = vmatprep.mubr.f32.mxu0 %v7980
    %8249 = vmatmul.mubr.f32.gmra.mxu0 %v7840
    %v8250 = vpop.f32.mrf.mxu0
    %v8251 = vadd.f32 %v8111, %v8250
    %v8252 = vpop.f32.mrf.mxu0
    %8253 = vmatprep.mubr.f32.mxu0 %v7983
    %8254 = vmatmul.mubr.f32.gmra.mxu0 %v7844
    %v8255 = vpop.f32.mrf.mxu0
    %v8256 = vadd.f32 %v8116, %v8255
    %v8257 = vpop.f32.mrf.mxu0
    %8258 = vmatprep.mubr.f32.mxu0 %v7986
    %8259 = vmatmul.mubr.f32.gmra.mxu0 %v7848
    %v8260 = vpop.f32.mrf.mxu0
    %v8261 = vadd.f32 %v8121, %v8260
    %v8262 = vpop.f32.mrf.mxu0
    %8263 = vmatprep.mubr.f32.mxu0 %v7989
    %8264 = vmatmul.mubr.f32.gmra.mxu0 %v7852
    %v8265 = vpop.f32.mrf.mxu0
    %v8266 = vadd.f32 %v8126, %v8265
    %v8267 = vpop.f32.mrf.mxu0
    %8268 = vmatprep.mubr.f32.mxu0 %v7992
    %8269 = vmatmul.mubr.f32.gmra.mxu0 %v7856
    %v8270 = vpop.f32.mrf.mxu0
    %v8271 = vadd.f32 %v8131, %v8270
    %v8272 = vpop.f32.mrf.mxu0
    %8273 = vdwg.mxu0
    %v8274 = vmax.f32 %v8201, 0.0
    %v8275 = vmax.f32 %v8206, 0.0
    %v8276 = vmax.f32 %v8211, 0.0
    %v8277 = vmax.f32 %v8216, 0.0
    %v8278 = vmax.f32 %v8221, 0.0
    %v8279 = vmax.f32 %v8226, 0.0
    %v8280 = vmax.f32 %v8231, 0.0
    %v8281 = vmax.f32 %v8236, 0.0
    %v8282 = vmax.f32 %v8241, 0.0
    %v8283 = vmax.f32 %v8246, 0.0
    %v8284 = vmax.f32 %v8251, 0.0
    %v8285 = vmax.f32 %v8256, 0.0
    %v8286 = vmax.f32 %v8261, 0.0
    %v8287 = vmax.f32 %v8266, 0.0
    %v8288 = vmax.f32 %v8271, 0.0
    %v8289 = vld [vmem:[%s7] sm:$0xff]
    %v8290 = vld [vmem:[%s7 + $0x8] sm:$0xff]
    %v8291 = vld [vmem:[%s7 + $0x10] sm:$0xff]
    %v8292 = vld [vmem:[%s7 + $0x18] sm:$0xff]
    %v8293 = vld [vmem:[%s7 + $0x20] sm:$0xff]
    %v8294 = vld [vmem:[%s7 + $0x28] sm:$0xff]
    %v8295 = vld [vmem:[%s7 + $0x30] sm:$0xff]
    %v8296 = vld [vmem:[%s7 + $0x38] sm:$0xff]
    %v8297 = vld [vmem:[%s7 + $0x40] sm:$0xff]
    %v8298 = vld [vmem:[%s7 + $0x48] sm:$0xff]
    %v8299 = vld [vmem:[%s7 + $0x50] sm:$0xf]
    %v8300 = vld [vmem:[%s8] sm:$0xff]
    %v8301 = vld [vmem:[%s8 + $0x8] sm:$0xff]
    %v8302 = vld [vmem:[%s8 + $0x10] sm:$0xff]
    %v8303 = vld [vmem:[%s8 + $0x18] sm:$0xff]
    %v8304 = vld [vmem:[%s8 + $0x20] sm:$0xff]
    %v8305 = vld [vmem:[%s8 + $0x28] sm:$0xff]
    %v8306 = vld [vmem:[%s8 + $0x30] sm:$0xff]
    %v8307 = vld [vmem:[%s8 + $0x38] sm:$0xff]
    %v8308 = vld [vmem:[%s8 + $0x40] sm:$0xff]
    %v8309 = vld [vmem:[%s8 + $0x48] sm:$0xff]
    %v8310 = vld [vmem:[%s8 + $0x50] sm:$0xf]
    %8312 = vset.pattern.permute.xlu0 0
    %8313 = vperm.xlu0 %8312, %v8300
    %v8314 = vpop.permute.xlu0 %8313
    %8317 = vset.pattern.permute.xlu0 0
    %8318 = vperm.xlu0 %8317, %v8301
    %v8319 = vpop.permute.xlu0 %8318
    %8322 = vset.pattern.permute.xlu0 0
    %8323 = vperm.xlu0 %8322, %v8302
    %v8324 = vpop.permute.xlu0 %8323
    %8327 = vset.pattern.permute.xlu0 0
    %8328 = vperm.xlu0 %8327, %v8303
    %v8329 = vpop.permute.xlu0 %8328
    %8332 = vset.pattern.permute.xlu0 0
    %8333 = vperm.xlu0 %8332, %v8304
    %v8334 = vpop.permute.xlu0 %8333
    %8337 = vset.pattern.permute.xlu0 0
    %8338 = vperm.xlu0 %8337, %v8305
    %v8339 = vpop.permute.xlu0 %8338
    %8342 = vset.pattern.permute.xlu0 0
    %8343 = vperm.xlu0 %8342, %v8306
    %v8344 = vpop.permute.xlu0 %8343
    %8347 = vset.pattern.permute.xlu0 0
    %8348 = vperm.xlu0 %8347, %v8307
    %v8349 = vpop.permute.xlu0 %8348
    %8352 = vset.pattern.permute.xlu0 0
    %8353 = vperm.xlu0 %8352, %v8308
    %v8354 = vpop.permute.xlu0 %8353
    %8357 = vset.pattern.permute.xlu0 0
    %8358 = vperm.xlu0 %8357, %v8309
    %v8359 = vpop.permute.xlu0 %8358
    %8362 = vset.pattern.permute.xlu0 0
    %8363 = vperm.xlu0 %8362, %v8310
    %v8364 = vpop.permute.xlu0 %8363
    %vm8366 = vcmask 982016
    %v8368 = vsel %vm8366, %v8289, 0
    %v8371 = vsel %vm8366, %v8290, 0
    %v8374 = vsel %vm8366, %v8291, 0
    %v8377 = vsel %vm8366, %v8292, 0
    %v8380 = vsel %vm8366, %v8293, 0
    %v8383 = vsel %vm8366, %v8294, 0
    %v8386 = vsel %vm8366, %v8295, 0
    %v8389 = vsel %vm8366, %v8296, 0
    %v8392 = vsel %vm8366, %v8297, 0
    %v8395 = vsel %vm8366, %v8298, 0
    %v8398 = vsel %vm8366, %v8299, 0
    %8400 = vmatprep.subr.mxu0 0.0
    %8401 = vmatpush1.msra.mxu0 0.0
    %8402 = vmatprep.subr.mxu0 0.0
    %8403 = vmatpush1.msra.mxu0 %v8288
    %8404 = vmatprep.subr.mxu0 0.0
    %8405 = vmatpush1.msra.mxu0 %v8287
    %8406 = vmatprep.subr.mxu0 0.0
    %8407 = vmatpush1.msra.mxu0 %v8286
    %8408 = vmatprep.subr.mxu0 0.0
    %8409 = vmatpush1.msra.mxu0 %v8285
    %8410 = vmatprep.subr.mxu0 0.0
    %8411 = vmatpush1.msra.mxu0 %v8284
    %8412 = vmatprep.subr.mxu0 0.0
    %8413 = vmatpush1.msra.mxu0 %v8283
    %8414 = vmatprep.subr.mxu0 0.0
    %8415 = vmatpush1.msra.mxu0 %v8282
    %8416 = vmatprep.subr.mxu0 0.0
    %8417 = vmatpush1.msra.mxu0 %v8281
    %8418 = vmatprep.subr.mxu0 0.0
    %8419 = vmatpush1.msra.mxu0 %v8280
    %8420 = vmatprep.subr.mxu0 0.0
    %8421 = vmatpush1.msra.mxu0 %v8279
    %8422 = vmatprep.subr.mxu0 0.0
    %8423 = vmatpush1.msra.mxu0 %v8278
    %8424 = vmatprep.subr.mxu0 0.0
    %8425 = vmatpush1.msra.mxu0 %v8277
    %8426 = vmatprep.subr.mxu0 0.0
    %8427 = vmatpush1.msra.mxu0 %v8276
    %8428 = vmatprep.subr.mxu0 0.0
    %8429 = vmatpush1.msra.mxu0 %v8275
    %8430 = vmatprep.subr.mxu0 0.0
    %8431 = vmatpush1.msra.mxu0 %v8274
    %8432 = vmatprep.subr.mxu0 0.0
    %8433 = vmatpush2.msra.mxu0 0.0
    %8434 = vmatprep.subr.mxu0 0.0
    %8435 = vmatpush2.msra.mxu0 0.0
    %8436 = vmatprep.subr.mxu0 0.0
    %8437 = vmatpush2.msra.mxu0 0.0
    %8438 = vmatprep.subr.mxu0 0.0
    %8439 = vmatpush2.msra.mxu0 0.0
    %8440 = vmatprep.subr.mxu0 0.0
    %8441 = vmatpush2.msra.mxu0 0.0
    %8442 = vmatprep.subr.mxu0 0.0
    %8443 = vmatpush2.msra.mxu0 0.0
    %8444 = vmatprep.subr.mxu0 0.0
    %8445 = vmatpush2.msra.mxu0 0.0
    %8446 = vmatprep.subr.mxu0 0.0
    %8447 = vmatpush2.msra.mxu0 0.0
    %8448 = vmatprep.subr.mxu0 0.0
    %8449 = vmatpush2.msra.mxu0 0.0
    %8450 = vmatprep.subr.mxu0 0.0
    %8451 = vmatpush2.msra.mxu0 0.0
    %8452 = vmatprep.subr.mxu0 0.0
    %8453 = vmatpush2.msra.mxu0 0.0
    %8454 = vmatprep.subr.mxu0 0.0
    %8455 = vmatpush2.msra.mxu0 0.0
    %8456 = vmatprep.subr.mxu0 0.0
    %8457 = vmatpush2.msra.mxu0 0.0
    %8458 = vmatprep.subr.mxu0 0.0
    %8459 = vmatpush2.msra.mxu0 0.0
    %8460 = vmatprep.subr.mxu0 0.0
    %8461 = vmatpush2.msra.mxu0 0.0
    %8462 = vmatprep.subr.mxu0 0.0
    %8463 = vmatpush2.msra.mxu0 0.0
    %8464 = vmatprep.mubr.f32.mxu0 0.0
    %8465 = vmatmul.mubr.f32.gmra.mxu0 %v8368
    %v8466 = vpop.f32.mrf.mxu0
    %v8467 = vadd.f32 %v8314, %v8466
    %v8468 = vpop.f32.mrf.mxu0
    %8469 = vmatprep.mubr.f32.mxu0 0.0
    %8470 = vmatmul.mubr.f32.gmra.mxu0 %v8371
    %v8471 = vpop.f32.mrf.mxu0
    %v8472 = vadd.f32 %v8319, %v8471
    %v8473 = vpop.f32.mrf.mxu0
    %8474 = vmatprep.mubr.f32.mxu0 0.0
    %8475 = vmatmul.mubr.f32.gmra.mxu0 %v8374
    %v8476 = vpop.f32.mrf.mxu0
    %v8477 = vadd.f32 %v8324, %v8476
    %v8478 = vpop.f32.mrf.mxu0
    %8479 = vmatprep.mubr.f32.mxu0 0.0
    %8480 = vmatmul.mubr.f32.gmra.mxu0 %v8377
    %v8481 = vpop.f32.mrf.mxu0
    %v8482 = vadd.f32 %v8329, %v8481
    %v8483 = vpop.f32.mrf.mxu0
    %8484 = vmatprep.mubr.f32.mxu0 0.0
    %8485 = vmatmul.mubr.f32.gmra.mxu0 %v8380
    %v8486 = vpop.f32.mrf.mxu0
    %v8487 = vadd.f32 %v8334, %v8486
    %v8488 = vpop.f32.mrf.mxu0
    %8489 = vmatprep.mubr.f32.mxu0 0.0
    %8490 = vmatmul.mubr.f32.gmra.mxu0 %v8383
    %v8491 = vpop.f32.mrf.mxu0
    %v8492 = vadd.f32 %v8339, %v8491
    %v8493 = vpop.f32.mrf.mxu0
    %8494 = vmatprep.mubr.f32.mxu0 0.0
    %8495 = vmatmul.mubr.f32.gmra.mxu0 %v8386
    %v8496 = vpop.f32.mrf.mxu0
    %v8497 = vadd.f32 %v8344, %v8496
    %v8498 = vpop.f32.mrf.mxu0
    %8499 = vmatprep.mubr.f32.mxu0 0.0
    %8500 = vmatmul.mubr.f32.gmra.mxu0 %v8389
    %v8501 = vpop.f32.mrf.mxu0
    %v8502 = vadd.f32 %v8349, %v8501
    %v8503 = vpop.f32.mrf.mxu0
    %8504 = vmatprep.mubr.f32.mxu0 0.0
    %8505 = vmatmul.mubr.f32.gmra.mxu0 %v8392
    %v8506 = vpop.f32.mrf.mxu0
    %v8507 = vadd.f32 %v8354, %v8506
    %v8508 = vpop.f32.mrf.mxu0
    %8509 = vmatprep.mubr.f32.mxu0 0.0
    %8510 = vmatmul.mubr.f32.gmra.mxu0 %v8395
    %v8511 = vpop.f32.mrf.mxu0
    %v8512 = vadd.f32 %v8359, %v8511
    %v8513 = vpop.f32.mrf.mxu0
    %8514 = vmatprep.mubr.f32.mxu0 0.0
    %8515 = vmatmul.mubr.f32.gmra.mxu0 %v8398
    %v8516 = vpop.f32.mrf.mxu0
    %v8517 = vadd.f32 %v8364, %v8516
    %v8518 = vpop.f32.mrf.mxu0
    %8519 = vdwg.mxu0
    %v8520 = vmax.f32 %v8467, 0.0
    %v8521 = vmax.f32 %v8472, 0.0
    %v8522 = vmax.f32 %v8477, 0.0
    %v8523 = vmax.f32 %v8482, 0.0
    %v8524 = vmax.f32 %v8487, 0.0
    %v8525 = vmax.f32 %v8492, 0.0
    %v8526 = vmax.f32 %v8497, 0.0
    %v8527 = vmax.f32 %v8502, 0.0
    %v8528 = vmax.f32 %v8507, 0.0
    %v8529 = vmax.f32 %v8512, 0.0
    %v8530 = vmax.f32 %v8517, 0.0
    %v8531 = vld [vmem:[%s9] sm:$0xff]
    %v8532 = vld [vmem:[%s9 + $0x8] sm:$0x3]
    %v8533 = vld [vmem:[%s10] sm:$0xff]
    %v8534 = vld [vmem:[%s10 + $0x8] sm:$0x3]
    %8536 = vset.pattern.permute.xlu0 0
    %8537 = vperm.xlu0 %8536, %v8533
    %v8538 = vpop.permute.xlu0 %8537
    %8541 = vset.pattern.permute.xlu0 0
    %8542 = vperm.xlu0 %8541, %v8534
    %v8543 = vpop.permute.xlu0 %8542
    %vm8545 = vcmask 687104
    %v8547 = vsel %vm8545, %v8531, 0
    %v8550 = vsel %vm8545, %v8532, 0
    %v8553 = vsel %vm7619, %v8530, 0
    %8555 = vmatprep.subr.mxu0 0.0
    %8556 = vmatpush1.msra.mxu0 0.0
    %8557 = vmatprep.subr.mxu0 0.0
    %8558 = vmatpush1.msra.mxu0 0.0
    %8559 = vmatprep.subr.mxu0 0.0
    %8560 = vmatpush1.msra.mxu0 0.0
    %8561 = vmatprep.subr.mxu0 0.0
    %8562 = vmatpush1.msra.mxu0 0.0
    %8563 = vmatprep.subr.mxu0 0.0
    %8564 = vmatpush1.msra.mxu0 0.0
    %8565 = vmatprep.subr.mxu0 0.0
    %8566 = vmatpush1.msra.mxu0 %v8553
    %8567 = vmatprep.subr.mxu0 0.0
    %8568 = vmatpush1.msra.mxu0 %v8529
    %8569 = vmatprep.subr.mxu0 0.0
    %8570 = vmatpush1.msra.mxu0 %v8528
    %8571 = vmatprep.subr.mxu0 0.0
    %8572 = vmatpush1.msra.mxu0 %v8527
    %8573 = vmatprep.subr.mxu0 0.0
    %8574 = vmatpush1.msra.mxu0 %v8526
    %8575 = vmatprep.subr.mxu0 0.0
    %8576 = vmatpush1.msra.mxu0 %v8525
    %8577 = vmatprep.subr.mxu0 0.0
    %8578 = vmatpush1.msra.mxu0 %v8524
    %8579 = vmatprep.subr.mxu0 0.0
    %8580 = vmatpush1.msra.mxu0 %v8523
    %8581 = vmatprep.subr.mxu0 0.0
    %8582 = vmatpush1.msra.mxu0 %v8522
    %8583 = vmatprep.subr.mxu0 0.0
    %8584 = vmatpush1.msra.mxu0 %v8521
    %8585 = vmatprep.subr.mxu0 0.0
    %8586 = vmatpush1.msra.mxu0 %v8520
    %8587 = vmatprep.subr.mxu0 0.0
    %8588 = vmatpush2.msra.mxu0 0.0
    %8589 = vmatprep.subr.mxu0 0.0
    %8590 = vmatpush2.msra.mxu0 0.0
    %8591 = vmatprep.subr.mxu0 0.0
    %8592 = vmatpush2.msra.mxu0 0.0
    %8593 = vmatprep.subr.mxu0 0.0
    %8594 = vmatpush2.msra.mxu0 0.0
    %8595 = vmatprep.subr.mxu0 0.0
    %8596 = vmatpush2.msra.mxu0 0.0
    %8597 = vmatprep.subr.mxu0 0.0
    %8598 = vmatpush2.msra.mxu0 0.0
    %8599 = vmatprep.subr.mxu0 0.0
    %8600 = vmatpush2.msra.mxu0 0.0
    %8601 = vmatprep.subr.mxu0 0.0
    %8602 = vmatpush2.msra.mxu0 0.0
    %8603 = vmatprep.subr.mxu0 0.0
    %8604 = vmatpush2.msra.mxu0 0.0
    %8605 = vmatprep.subr.mxu0 0.0
    %8606 = vmatpush2.msra.mxu0 0.0
    %8607 = vmatprep.subr.mxu0 0.0
    %8608 = vmatpush2.msra.mxu0 0.0
    %8609 = vmatprep.subr.mxu0 0.0
    %8610 = vmatpush2.msra.mxu0 0.0
    %8611 = vmatprep.subr.mxu0 0.0
    %8612 = vmatpush2.msra.mxu0 0.0
    %8613 = vmatprep.subr.mxu0 0.0
    %8614 = vmatpush2.msra.mxu0 0.0
    %8615 = vmatprep.subr.mxu0 0.0
    %8616 = vmatpush2.msra.mxu0 0.0
    %8617 = vmatprep.subr.mxu0 0.0
    %8618 = vmatpush2.msra.mxu0 0.0
    %8619 = vmatprep.mubr.f32.mxu0 0.0
    %8620 = vmatmul.mubr.f32.gmra.mxu0 %v8547
    %v8621 = vpop.f32.mrf.mxu0
    %v8622 = vadd.f32 %v8538, %v8621
    %v8623 = vpop.f32.mrf.mxu0
    %8624 = vmatprep.mubr.f32.mxu0 0.0
    %8625 = vmatmul.mubr.f32.gmra.mxu0 %v8550
    %v8626 = vpop.f32.mrf.mxu0
    %v8627 = vadd.f32 %v8543, %v8626
    %v8628 = vpop.f32.mrf.mxu0
    %8629 = vdwg.mxu0
    %v8630 = vsel %vm7587, %v8627, -inf
    %v8631 = vmax.f32 %v8622, %v8630
    %v8632 = vrot.slane %v8631, 4
    %v8633 = vmax.f32 %v8631, %v8632
    %v8634 = vrot.slane %v8633, 2
    %v8635 = vmax.f32 %v8633, %v8634
    %v8636 = vrot.slane %v8635, 1
    %v8637 = vmax.f32 %v8635, %v8636
    %v8638 = vsub.f32 %v8622, %v8637
    %v8639 = vsub.f32 %v8627, %v8637
    %v8640 = vmul.f32 %v8638, 1.442695
    %v8641 = vpow.pop %v8640
    %v8642 = vmul.f32 %v8639, 1.442695
    %v8643 = vpow.pop %v8642
    %v8644 = vsel %vm7587, %v8643, 0.0
    %v8645 = vadd.f32 %v8641, %v8644
    %v8646 = vrot.slane %v8645, 4
    %v8647 = vadd.f32 %v8645, %v8646
    %v8648 = vrot.slane %v8647, 2
    %v8649 = vadd.f32 %v8647, %v8648
    %v8650 = vrot.slane %v8649, 1
    %v8651 = vadd.f32 %v8649, %v8650
    %v8652 = vlog2.pop %v8651
    %v8653 = vmul.f32 %v8652, 0.6931472
    %v8654 = vsub.f32 %v8638, %v8653
    %v8655 = vsub.f32 %v8639, %v8653
    %8656 = vst [vmem:[%s11] sm:$0xff] %v8654
    %8657 = vst [vmem:[%s11 + $0x8] sm:$0x3] %v8655
    // Predicated region
    $region76: #{forward.1} parent=1 // pred_check
      _
    $region77: #{forward.1} parent=1 // pred_check_branch
      %8659 = sbr.rel (0) target = $region79
    $region78: #{forward.1} parent=1 // pred_region
      _
    $region79: #{forward.1} parent=1 // pred_fallthru
      _
    // Predicated region
    $region80: #{forward.1} parent=1 // pred_check
      _
    $region81: #{forward.1} parent=1 // pred_check_branch
      %8661 = sbr.rel (0) target = $region83
    $region82: #{forward.1} parent=1 // pred_region
      _
    $region83: #{forward.1} parent=1 // pred_fallthru
      _
    %8662 = vsyncpa [#allocation5], 1
    %8663 = vsyncpa [#allocation7], 1
    %8664 = vsyncpa [#allocation10], 1

</llo_original>
